<compile_context>
chip_gen: v7x
topology: tpu7x:2x2x1
jax: 0.10.0
libtpu: 0.0.40
codegen_flags: <defaults>
</compile_context>

<pallas_src>
import functools

import numpy as np
import jax
import jax.numpy as jnp
from jax import lax
from jax.experimental import pallas as pl
from jax.experimental.pallas import tpu as pltpu

KERNEL = 5      # ConvTranspose2d kernel size
STRIDE = 2
PAD = 2
BN_EPS = 1e-5


# ------------------------------------------------------------------ helpers

def _nbytes(shape, dtype):
    return int(np.prod(shape)) * jnp.dtype(dtype).itemsize


def _vmem_limit_bytes(*block_bytes):
    """Explicit scoped-VMEM budget: double-buffer every block + headroom.

    Capped at 32 MiB -- comfortably below v7x's 64 MiB physical VMEM (and v5e/v6e's
    128 MiB) while being far above what these blocks actually need.
    """
    need = 2 * sum(int(b) for b in block_bytes) + (4 << 20)
    return int(min(need, 32 << 20))


def _row_tile(rows):
    """Batch-row tile: whole batch if small, else 256-row (8-aligned) tiles."""
    return rows if rows <= 256 else 256


# ------------------------------------------------------------------ kernels

def linear_kernel(z_ref, w_ref, b_ref, o_ref):
    """expand: (TB, z_dim) @ (z_dim, 2*2*dim) + bias."""
    o_ref[...] = jnp.dot(z_ref[...], w_ref[...],
                         preferred_element_type=jnp.float32) + b_ref[...]


def bn_stats_kernel(x_ref, gamma_ref, beta_ref, o_ref, *, inv_count):
    """Training-mode BatchNorm2d batch statistics over a (N*H*W, C) slab.

    Emits the folded affine: row 0 = gamma * rsqrt(var + eps), row 1 = beta - mean*scale,
    so the consuming conv kernel only needs a fused multiply-add per element.
    """
    x = x_ref[...]                                            # (R, C) f32
    mean = jnp.sum(x, axis=0, keepdims=True) * inv_count      # (1, C)
    d = x - mean
    var = jnp.sum(d * d, axis=0, keepdims=True) * inv_count   # biased var (PyTorch train BN)
    scale = gamma_ref[...] * lax.rsqrt(var + BN_EPS)
    o_ref[0:1, :] = scale
    o_ref[1:2, :] = beta_ref[...] - mean * scale


def fused_layer_kernel(x_ref, ss_ref, w_ref, b_ref, alpha_ref, o_ref, *, apply_tanh):
    """Fused BN-normalize + PReLU + ConvTranspose2d (+ Tanh) for one batch row-tile.

    x_ref   : (TB, H*W*Cin)          f32  activation tile, channel-minor layout
    ss_ref  : (2,  H*W*Cin)          f32  folded BN scale/shift (per channel, tiled)
    w_ref   : (H*W*Cin, Ho*Wo*Cout)  bf16 structured conv-transpose matrix
    b_ref   : (1, Ho*Wo*Cout)        f32  conv bias (per channel, tiled)
    alpha   : (1, H*W*Cin)           f32  shared PReLU slope (broadcast)
    """
    x = x_ref[...]
    xn = x * ss_ref[0:1, :] + ss_ref[1:2, :]                  # BatchNorm (f32)
    xn = jnp.where(xn > 0, xn, alpha_ref[...] * xn)           # PReLU
    y = jnp.dot(xn.astype(jnp.bfloat16), w_ref[...],          # bf16 MXU, f32 accumulate
                preferred_element_type=jnp.float32) + b_ref[...]
    if apply_tanh:
        y = jnp.tanh(y)
    o_ref[...] = y


# ------------------------------------------------------------------ wrappers

def pallas_linear(z, w, b):
    B, K = z.shape
    N = w.shape[1]
    tb = _row_tile(B)
    vlim = _vmem_limit_bytes(_nbytes((tb, K), jnp.float32),
                             _nbytes((K, N), jnp.float32),
                             _nbytes((1, N), jnp.float32),
                             _nbytes((tb, N), jnp.float32))
    return pl.pallas_call(
        linear_kernel,
        out_shape=jax.ShapeDtypeStruct((B, N), jnp.float32),
        grid=(pl.cdiv(B, tb),),
        in_specs=[pl.BlockSpec((tb, K), lambda i: (i, 0)),
                  pl.BlockSpec((K, N), lambda i: (0, 0)),
                  pl.BlockSpec((1, N), lambda i: (0, 0))],
        out_specs=pl.BlockSpec((tb, N), lambda i: (i, 0)),
        compiler_params=pltpu.CompilerParams(
            dimension_semantics=("parallel",),
            vmem_limit_bytes=vlim),
    )(z, w, b)


def pallas_bn_stats(x2d, gamma, beta):
    # Single block on purpose: batch statistics must be global over the whole
    # (N*H*W, C) slab (a few hundred rows at MNIST scale). For very large batches
    # this would become a row-tiled two-pass / accumulator scheme.
    R, C = x2d.shape
    vlim = _vmem_limit_bytes(_nbytes((R, C), jnp.float32),
                             _nbytes((2, C), jnp.float32))
    return pl.pallas_call(
        functools.partial(bn_stats_kernel, inv_count=1.0 / float(R)),
        out_shape=jax.ShapeDtypeStruct((2, C), jnp.float32),
        in_specs=[pl.BlockSpec(memory_space=pltpu.MemorySpace.VMEM)] * 3,
        out_specs=pl.BlockSpec(memory_space=pltpu.MemorySpace.VMEM),
        compiler_params=pltpu.CompilerParams(vmem_limit_bytes=vlim),
    )(x2d, gamma, beta)


def pallas_fused_layer(x, ss_fold, w_bf16, bias_fold, alpha_fold, apply_tanh):
    B, K = x.shape
    N = w_bf16.shape[1]
    tb = _row_tile(B)
    vlim = _vmem_limit_bytes(_nbytes((tb, K), jnp.float32),
                             _nbytes((2, K), jnp.float32),
                             _nbytes((K, N), jnp.bfloat16),
                             _nbytes((1, N), jnp.float32),
                             _nbytes((1, K), jnp.float32),
                             _nbytes((tb, N), jnp.float32))
    return pl.pallas_call(
        functools.partial(fused_layer_kernel, apply_tanh=apply_tanh),
        out_shape=jax.ShapeDtypeStruct((B, N), jnp.float32),
        grid=(pl.cdiv(B, tb),),
        in_specs=[pl.BlockSpec((tb, K), lambda i: (i, 0)),     # activation row-tile
                  pl.BlockSpec((2, K), lambda i: (0, 0)),      # BN scale/shift (resident)
                  pl.BlockSpec((K, N), lambda i: (0, 0)),      # structured conv weights
                  pl.BlockSpec((1, N), lambda i: (0, 0)),      # conv bias
                  pl.BlockSpec((1, K), lambda i: (0, 0))],     # PReLU alpha
        out_specs=pl.BlockSpec((tb, N), lambda i: (i, 0)),
        compiler_params=pltpu.CompilerParams(
            dimension_semantics=("parallel",),
            vmem_limit_bytes=vlim),
    )(x, ss_fold, w_bf16, bias_fold, alpha_fold)


# ------------------------------------------------------------------ parameter prep

def init_generator_params(key, input_dim=1, z_dim=32, dim=32):
    """Parameters in PyTorch layouts (Linear: (out,in); ConvTranspose2d: (Cin,Cout,k,k)).

    weights_init semantics: Conv* weights ~ N(0, 0.02); BatchNorm gamma ~ N(1, 0.02),
    beta = 0; PReLU single shared alpha = 0.25; Linear keeps a generic small init.
    """
    ks = jax.random.split(key, 16)
    params = {
        "lin_w": 0.05 * jax.random.normal(ks[0], (2 * 2 * dim, z_dim), jnp.float32),
        "lin_b": jnp.zeros((2 * 2 * dim,), jnp.float32),
    }
    chans = [dim, dim // 2, dim // 4, dim // 8, input_dim]
    for i in range(4):
        cin, cout = chans[i], chans[i + 1]
        params[f"bn_g{i}"] = 1.0 + 0.02 * jax.random.normal(ks[1 + 3 * i], (cin,), jnp.float32)
        params[f"bn_b{i}"] = jnp.zeros((cin,), jnp.float32)
        params[f"alpha{i}"] = jnp.float32(0.25)
        params[f"ct_w{i}"] = 0.02 * jax.random.normal(
            ks[2 + 3 * i], (cin, cout, KERNEL, KERNEL), jnp.float32)
        params[f"ct_b{i}"] = 0.01 * jax.random.normal(ks[3 + 3 * i], (cout,), jnp.float32)
    return params


def prepare_generator(params, input_dim=1, z_dim=32, dim=32):
    """One-time weight-side folding (kept out of the per-call forward graph)."""
    del z_dim  # shapes come from the params themselves
    chans = [dim, dim // 2, dim // 4, dim // 8, input_dim]
    spatial = [2]
    out_pads = [1, 0, 1, 1]
    for op in out_pads:
        spatial.append((spatial[-1] - 1) * STRIDE - 2 * PAD + KERNEL + op)  # 2,4,7,14,28

    # expand: permute Linear output columns from the PyTorch .view order (c, h, w)
    # to channel-minor (h, w, c) so every later layer sees a flat (B, H*W*C) slab.
    perm = np.empty((2 * 2 * dim,), np.int64)
    for h in range(2):
        for w in range(2):
            for c in range(dim):
                perm[(h * 2 + w) * dim + c] = c * 4 + h * 2 + w
    w_lin = jnp.asarray(params["lin_w"], jnp.float32)[perm, :].T        # (z_dim, 4*dim)
    b_lin = jnp.asarray(params["lin_b"], jnp.float32)[perm].reshape(1, -1)

    layers = []
    for i in range(4):
        cin, cout = chans[i], chans[i + 1]
        hin, hout = spatial[i], spatial[i + 1]
        k_in, n_out = hin * hin * cin, hout * hout * cout

        # S[t, h, oh] = 1  iff  oh == h*stride - pad + t  and  0 <= oh < hout.
        # This bakes stride-2 zero-dilation, padding and output_padding into a 0/1 map.
        S = np.zeros((KERNEL, hin, hout), np.float32)
        for t in range(KERNEL):
            for h in range(hin):
                oh = h * STRIDE - PAD + t
                if 0 <= oh < hout:
                    S[t, h, oh] = 1.0

        wt = jnp.asarray(params[f"ct_w{i}"], jnp.float32)               # (cin, cout, k, k)
        g = jnp.einsum("ahx,bwy,cdab->hwcxyd", S, S, wt)                # structured convT
        g = g.reshape(k_in, n_out).astype(jnp.bfloat16)

        layers.append(dict(
            w=g,
            bias=jnp.tile(jnp.asarray(params[f"ct_b{i}"], jnp.float32),
                          hout * hout).reshape(1, n_out),
            gamma=jnp.asarray(params[f"bn_g{i}"], jnp.float32).reshape(1, cin),
            beta=jnp.asarray(params[f"bn_b{i}"], jnp.float32).reshape(1, cin),
            alpha=jnp.full((1, k_in), params[f"alpha{i}"], jnp.float32),
        ))
    return {"w_lin": w_lin, "b_lin": b_lin, "layers": layers}


# ------------------------------------------------------------------ forward

@functools.partial(jax.jit, static_argnames=("input_dim",))
def generator_forward(prepared, z, input_dim=1):
    B = z.shape[0]
    # expand: Linear(z_dim -> 2*2*dim), output already in channel-minor (h, w, c) order
    x = pallas_linear(z.astype(jnp.float32), prepared["w_lin"], prepared["b_lin"])

    layers = prepared["layers"]
    for i, layer in enumerate(layers):
        cin = layer["gamma"].shape[1]
        hw = x.shape[1] // cin
        # (B, H*W*C) -> (B*H*W, C) is a free (contiguous) reshape of the same buffer.
        ss = pallas_bn_stats(x.reshape(B * hw, cin), layer["gamma"], layer["beta"])
        ss_fold = jnp.tile(ss, (1, hw))                      # (2, H*W*C), channel-minor
        x = pallas_fused_layer(x, ss_fold, layer["w"], layer["bias"], layer["alpha"],
                               apply_tanh=(i == len(layers) - 1))

    hout = int(round((x.shape[1] // input_dim) ** 0.5))      # 28
    return jnp.transpose(x.reshape(B, hout, hout, input_dim), (0, 3, 1, 2))   # NCHW


# ------------------------------------------------------------------ main

if __name__ == "__main__":
    key = jax.random.PRNGKey(0)
    k_param, k_z = jax.random.split(key)

    input_dim, z_dim, dim = 1, 32, 32          # small, structure-preserving sizes
    batch = 2

    params = init_generator_params(k_param, input_dim=input_dim, z_dim=z_dim, dim=dim)
    prepared = prepare_generator(params, input_dim=input_dim, z_dim=z_dim, dim=dim)
    z = jax.random.normal(k_z, (batch, z_dim), jnp.float32)

    out = generator_forward(prepared, z, input_dim=input_dim)
    out = jax.block_until_ready(out)

    # spatial chain: 2 -> 4 -> 7 -> 14 -> 28 (MNIST-sized output), NCHW like PyTorch
    assert out.shape == (batch, input_dim, 28, 28), out.shape
    assert bool(jnp.all(jnp.isfinite(out)))
    assert bool(jnp.all(jnp.abs(out) <= 1.0 + 1e-6))        # tanh range

    print("KERNEL_OK")
</pallas_src>

<mosaic_0001>
module attributes {stable_mosaic.version = 11 : i64} {
  func.func @bn_stats_kernel(%arg0: memref<8x32xf32, #tpu.memory_space<vmem>>, %arg1: memref<1x32xf32, #tpu.memory_space<vmem>>, %arg2: memref<1x32xf32, #tpu.memory_space<vmem>>, %arg3: memref<2x32xf32, #tpu.memory_space<vmem>>) attributes {dimension_semantics = [], scalar_prefetch = 0 : i64, scratch_operands = 0 : i64, tpu.core_type = #tpu.core_type<tc>} {
    %c0 = arith.constant 0 : index
    %c0_0 = arith.constant 0 : index
    %0 = vector.load %arg0[%c0, %c0_0] : memref<8x32xf32, #tpu.memory_space<vmem>>, vector<8x32xf32>
    %cst = arith.constant dense<0.000000e+00> : vector<32xf32>
    %1 = vector.multi_reduction <add>, %0, %cst [0] : vector<8x32xf32> to vector<32xf32>
    %2 = vector.shape_cast %1 : vector<32xf32> to vector<1x32xf32>
    %cst_1 = arith.constant 1.250000e-01 : f32
    %3 = vector.broadcast %cst_1 : f32 to vector<1x32xf32>
    %4 = arith.mulf %2, %3 : vector<1x32xf32>
    %5 = vector.broadcast %4 : vector<1x32xf32> to vector<8x32xf32>
    %6 = arith.subf %0, %5 : vector<8x32xf32>
    %7 = arith.mulf %6, %6 : vector<8x32xf32>
    %cst_2 = arith.constant dense<0.000000e+00> : vector<32xf32>
    %8 = vector.multi_reduction <add>, %7, %cst_2 [0] : vector<8x32xf32> to vector<32xf32>
    %9 = vector.shape_cast %8 : vector<32xf32> to vector<1x32xf32>
    %cst_3 = arith.constant 1.250000e-01 : f32
    %10 = vector.broadcast %cst_3 : f32 to vector<1x32xf32>
    %11 = arith.mulf %9, %10 : vector<1x32xf32>
    %c0_4 = arith.constant 0 : index
    %c0_5 = arith.constant 0 : index
    %12 = vector.load %arg1[%c0_4, %c0_5] : memref<1x32xf32, #tpu.memory_space<vmem>>, vector<1x32xf32>
    %cst_6 = arith.constant 9.99999974E-6 : f32
    %13 = vector.broadcast %cst_6 : f32 to vector<1x32xf32>
    %14 = arith.addf %11, %13 : vector<1x32xf32>
    %15 = math.rsqrt %14 : vector<1x32xf32>
    %16 = arith.mulf %12, %15 : vector<1x32xf32>
    %c0_7 = arith.constant 0 : index
    %c0_8 = arith.constant 0 : index
    %17 = vector.load %arg3[%c0_7, %c0_8] : memref<2x32xf32, #tpu.memory_space<vmem>>, vector<1x32xf32>
    tpu.vector_store %arg3[%c0_7, %c0_8], %16 {strides = array<i32>} : memref<2x32xf32, #tpu.memory_space<vmem>>, vector<1x32xf32>,
    %c0_9 = arith.constant 0 : index
    %c0_10 = arith.constant 0 : index
    %18 = vector.load %arg2[%c0_9, %c0_10] : memref<1x32xf32, #tpu.memory_space<vmem>>, vector<1x32xf32>
    %19 = arith.mulf %4, %16 : vector<1x32xf32>
    %20 = arith.subf %18, %19 : vector<1x32xf32>
    %c1 = arith.constant 1 : index
    %c0_11 = arith.constant 0 : index
    %21 = vector.load %arg3[%c1, %c0_11] : memref<2x32xf32, #tpu.memory_space<vmem>>, vector<1x32xf32>
    tpu.vector_store %arg3[%c1, %c0_11], %20 {strides = array<i32>} : memref<2x32xf32, #tpu.memory_space<vmem>>, vector<1x32xf32>,
    return
  }
}

module attributes {stable_mosaic.version = 11 : i64} {
  func.func @linear_kernel(%arg0: i32, %arg1: memref<2x32xf32, #tpu.memory_space<vmem>>, %arg2: memref<32x128xf32, #tpu.memory_space<vmem>>, %arg3: memref<1x128xf32, #tpu.memory_space<vmem>>, %arg4: memref<2x128xf32, #tpu.memory_space<vmem>>) attributes {dimension_semantics = [#tpu.dimension_semantics<parallel>], iteration_bounds = array<i64: 1>, scalar_prefetch = 0 : i64, scratch_operands = 0 : i64, tpu.core_type = #tpu.core_type<tc>, window_params = [{transform_indices = @transform_0, window_bounds = array<i64: 2, 32>}, {pipeline_mode = #tpu.pipeline_mode<synchronous>, transform_indices = @transform_1, window_bounds = array<i64: 32, 128>}, {pipeline_mode = #tpu.pipeline_mode<synchronous>, transform_indices = @transform_2, window_bounds = array<i64: 1, 128>}, {transform_indices = @transform_3, window_bounds = array<i64: 2, 128>}]} {
    %c0 = arith.constant 0 : index
    %c0_0 = arith.constant 0 : index
    %0 = vector.load %arg1[%c0, %c0_0] : memref<2x32xf32, #tpu.memory_space<vmem>>, vector<2x32xf32>
    %c0_1 = arith.constant 0 : index
    %c0_2 = arith.constant 0 : index
    %1 = vector.load %arg2[%c0_1, %c0_2] : memref<32x128xf32, #tpu.memory_space<vmem>>, vector<32x128xf32>
    %cst = arith.constant dense<0.000000e+00> : vector<2x128xf32>
    %2 = tpu.matmul %0, %1, %cst {dimension_numbers = #tpu.dot_dimension_numbers<[1], [0], [0], [1], [0, 0, 1, 1], [], []>} : vector<2x32xf32>, vector<32x128xf32>, vector<2x128xf32> -> vector<2x128xf32>
    %c0_3 = arith.constant 0 : index
    %c0_4 = arith.constant 0 : index
    %3 = vector.load %arg3[%c0_3, %c0_4] : memref<1x128xf32, #tpu.memory_space<vmem>>, vector<1x128xf32>
    %4 = vector.broadcast %3 : vector<1x128xf32> to vector<2x128xf32>
    %5 = arith.addf %2, %4 : vector<2x128xf32>
    %c0_5 = arith.constant 0 : index
    %c0_6 = arith.constant 0 : index
    %6 = vector.load %arg4[%c0_5, %c0_6] : memref<2x128xf32, #tpu.memory_space<vmem>>, vector<2x128xf32>
    tpu.vector_store %arg4[%c0_5, %c0_6], %5 {strides = array<i32>} : memref<2x128xf32, #tpu.memory_space<vmem>>, vector<2x128xf32>,
    return
  }
  func.func @transform_0(%arg0: i32) -> (i32, i32) {
    %c0_i32 = arith.constant 0 : i32
    %c0_i32_0 = arith.constant 0 : i32
    return %arg0, %c0_i32 : i32, i32
  }
  func.func @transform_1(%arg0: i32) -> (i32, i32) {
    %c0_i32 = arith.constant 0 : i32
    %c0_i32_0 = arith.constant 0 : i32
    %c0_i32_1 = arith.constant 0 : i32
    return %c0_i32, %c0_i32_0 : i32, i32
  }
  func.func @transform_2(%arg0: i32) -> (i32, i32) {
    %c0_i32 = arith.constant 0 : i32
    %c0_i32_0 = arith.constant 0 : i32
    %c0_i32_1 = arith.constant 0 : i32
    return %c0_i32, %c0_i32_0 : i32, i32
  }
  func.func @transform_3(%arg0: i32) -> (i32, i32) {
    %c0_i32 = arith.constant 0 : i32
    %c0_i32_0 = arith.constant 0 : i32
    return %arg0, %c0_i32 : i32, i32
  }
}

module attributes {stable_mosaic.version = 11 : i64} {
  func.func @fused_layer_kernel(%arg0: i32, %arg1: memref<2x128xf32, #tpu.memory_space<vmem>>, %arg2: memref<2x128xf32, #tpu.memory_space<vmem>>, %arg3: memref<128x256xbf16, #tpu.memory_space<vmem>>, %arg4: memref<1x256xf32, #tpu.memory_space<vmem>>, %arg5: memref<1x128xf32, #tpu.memory_space<vmem>>, %arg6: memref<2x256xf32, #tpu.memory_space<vmem>>) attributes {dimension_semantics = [#tpu.dimension_semantics<parallel>], iteration_bounds = array<i64: 1>, scalar_prefetch = 0 : i64, scratch_operands = 0 : i64, tpu.core_type = #tpu.core_type<tc>, window_params = [{transform_indices = @transform_0, window_bounds = array<i64: 2, 128>}, {pipeline_mode = #tpu.pipeline_mode<synchronous>, transform_indices = @transform_1, window_bounds = array<i64: 2, 128>}, {pipeline_mode = #tpu.pipeline_mode<synchronous>, transform_indices = @transform_2, window_bounds = array<i64: 128, 256>}, {pipeline_mode = #tpu.pipeline_mode<synchronous>, transform_indices = @transform_3, window_bounds = array<i64: 1, 256>}, {pipeline_mode = #tpu.pipeline_mode<synchronous>, transform_indices = @transform_4, window_bounds = array<i64: 1, 128>}, {transform_indices = @transform_5, window_bounds = array<i64: 2, 256>}]} {
    %c0 = arith.constant 0 : index
    %c0_0 = arith.constant 0 : index
    %0 = vector.load %arg1[%c0, %c0_0] : memref<2x128xf32, #tpu.memory_space<vmem>>, vector<2x128xf32>
    %c0_1 = arith.constant 0 : index
    %c0_2 = arith.constant 0 : index
    %1 = vector.load %arg2[%c0_1, %c0_2] : memref<2x128xf32, #tpu.memory_space<vmem>>, vector<1x128xf32>
    %2 = vector.broadcast %1 : vector<1x128xf32> to vector<2x128xf32>
    %3 = arith.mulf %0, %2 : vector<2x128xf32>
    %c1 = arith.constant 1 : index
    %c0_3 = arith.constant 0 : index
    %4 = vector.load %arg2[%c1, %c0_3] : memref<2x128xf32, #tpu.memory_space<vmem>>, vector<1x128xf32>
    %5 = vector.broadcast %4 : vector<1x128xf32> to vector<2x128xf32>
    %6 = arith.addf %3, %5 : vector<2x128xf32>
    %cst = arith.constant 0.000000e+00 : f32
    %7 = vector.broadcast %cst : f32 to vector<2x128xf32>
    %8 = arith.cmpf ogt, %6, %7 : vector<2x128xf32>
    %c0_4 = arith.constant 0 : index
    %c0_5 = arith.constant 0 : index
    %9 = vector.load %arg5[%c0_4, %c0_5] : memref<1x128xf32, #tpu.memory_space<vmem>>, vector<1x128xf32>
    %10 = vector.broadcast %9 : vector<1x128xf32> to vector<2x128xf32>
    %11 = arith.mulf %10, %6 : vector<2x128xf32>
    %12 = arith.select %8, %6, %11 : vector<2x128xi1>, vector<2x128xf32>
    %13 = arith.truncf %12 : vector<2x128xf32> to vector<2x128xbf16>
    %c0_6 = arith.constant 0 : index
    %c0_7 = arith.constant 0 : index
    %14 = vector.load %arg3[%c0_6, %c0_7] : memref<128x256xbf16, #tpu.memory_space<vmem>>, vector<128x256xbf16>
    %cst_8 = arith.constant dense<0.000000e+00> : vector<2x256xf32>
    %15 = tpu.matmul %13, %14, %cst_8 {dimension_numbers = #tpu.dot_dimension_numbers<[1], [0], [0], [1], [0, 0, 1, 1], [], []>} : vector<2x128xbf16>, vector<128x256xbf16>, vector<2x256xf32> -> vector<2x256xf32>
    %c0_9 = arith.constant 0 : index
    %c0_10 = arith.constant 0 : index
    %16 = vector.load %arg4[%c0_9, %c0_10] : memref<1x256xf32, #tpu.memory_space<vmem>>, vector<1x256xf32>
    %17 = vector.broadcast %16 : vector<1x256xf32> to vector<2x256xf32>
    %18 = arith.addf %15, %17 : vector<2x256xf32>
    %c0_11 = arith.constant 0 : index
    %c0_12 = arith.constant 0 : index
    %19 = vector.load %arg6[%c0_11, %c0_12] : memref<2x256xf32, #tpu.memory_space<vmem>>, vector<2x256xf32>
    tpu.vector_store %arg6[%c0_11, %c0_12], %18 {strides = array<i32>} : memref<2x256xf32, #tpu.memory_space<vmem>>, vector<2x256xf32>,
    return
  }
  func.func @transform_0(%arg0: i32) -> (i32, i32) {
    %c0_i32 = arith.constant 0 : i32
    %c0_i32_0 = arith.constant 0 : i32
    return %arg0, %c0_i32 : i32, i32
  }
  func.func @transform_1(%arg0: i32) -> (i32, i32) {
    %c0_i32 = arith.constant 0 : i32
    %c0_i32_0 = arith.constant 0 : i32
    %c0_i32_1 = arith.constant 0 : i32
    return %c0_i32, %c0_i32_0 : i32, i32
  }
  func.func @transform_2(%arg0: i32) -> (i32, i32) {
    %c0_i32 = arith.constant 0 : i32
    %c0_i32_0 = arith.constant 0 : i32
    %c0_i32_1 = arith.constant 0 : i32
    return %c0_i32, %c0_i32_0 : i32, i32
  }
  func.func @transform_3(%arg0: i32) -> (i32, i32) {
    %c0_i32 = arith.constant 0 : i32
    %c0_i32_0 = arith.constant 0 : i32
    %c0_i32_1 = arith.constant 0 : i32
    return %c0_i32, %c0_i32_0 : i32, i32
  }
  func.func @transform_4(%arg0: i32) -> (i32, i32) {
    %c0_i32 = arith.constant 0 : i32
    %c0_i32_0 = arith.constant 0 : i32
    %c0_i32_1 = arith.constant 0 : i32
    return %c0_i32, %c0_i32_0 : i32, i32
  }
  func.func @transform_5(%arg0: i32) -> (i32, i32) {
    %c0_i32 = arith.constant 0 : i32
    %c0_i32_0 = arith.constant 0 : i32
    return %arg0, %c0_i32 : i32, i32
  }
}

module attributes {stable_mosaic.version = 11 : i64} {
  func.func @bn_stats_kernel(%arg0: memref<32x16xf32, #tpu.memory_space<vmem>>, %arg1: memref<1x16xf32, #tpu.memory_space<vmem>>, %arg2: memref<1x16xf32, #tpu.memory_space<vmem>>, %arg3: memref<2x16xf32, #tpu.memory_space<vmem>>) attributes {dimension_semantics = [], scalar_prefetch = 0 : i64, scratch_operands = 0 : i64, tpu.core_type = #tpu.core_type<tc>} {
    %c0 = arith.constant 0 : index
    %c0_0 = arith.constant 0 : index
    %0 = vector.load %arg0[%c0, %c0_0] : memref<32x16xf32, #tpu.memory_space<vmem>>, vector<32x16xf32>
    %cst = arith.constant dense<0.000000e+00> : vector<16xf32>
    %1 = vector.multi_reduction <add>, %0, %cst [0] : vector<32x16xf32> to vector<16xf32>
    %2 = vector.shape_cast %1 : vector<16xf32> to vector<1x16xf32>
    %cst_1 = arith.constant 3.125000e-02 : f32
    %3 = vector.broadcast %cst_1 : f32 to vector<1x16xf32>
    %4 = arith.mulf %2, %3 : vector<1x16xf32>
    %5 = vector.broadcast %4 : vector<1x16xf32> to vector<32x16xf32>
    %6 = arith.subf %0, %5 : vector<32x16xf32>
    %7 = arith.mulf %6, %6 : vector<32x16xf32>
    %cst_2 = arith.constant dense<0.000000e+00> : vector<16xf32>
    %8 = vector.multi_reduction <add>, %7, %cst_2 [0] : vector<32x16xf32> to vector<16xf32>
    %9 = vector.shape_cast %8 : vector<16xf32> to vector<1x16xf32>
    %cst_3 = arith.constant 3.125000e-02 : f32
    %10 = vector.broadcast %cst_3 : f32 to vector<1x16xf32>
    %11 = arith.mulf %9, %10 : vector<1x16xf32>
    %c0_4 = arith.constant 0 : index
    %c0_5 = arith.constant 0 : index
    %12 = vector.load %arg1[%c0_4, %c0_5] : memref<1x16xf32, #tpu.memory_space<vmem>>, vector<1x16xf32>
    %cst_6 = arith.constant 9.99999974E-6 : f32
    %13 = vector.broadcast %cst_6 : f32 to vector<1x16xf32>
    %14 = arith.addf %11, %13 : vector<1x16xf32>
    %15 = math.rsqrt %14 : vector<1x16xf32>
    %16 = arith.mulf %12, %15 : vector<1x16xf32>
    %c0_7 = arith.constant 0 : index
    %c0_8 = arith.constant 0 : index
    %17 = vector.load %arg3[%c0_7, %c0_8] : memref<2x16xf32, #tpu.memory_space<vmem>>, vector<1x16xf32>
    tpu.vector_store %arg3[%c0_7, %c0_8], %16 {strides = array<i32>} : memref<2x16xf32, #tpu.memory_space<vmem>>, vector<1x16xf32>,
    %c0_9 = arith.constant 0 : index
    %c0_10 = arith.constant 0 : index
    %18 = vector.load %arg2[%c0_9, %c0_10] : memref<1x16xf32, #tpu.memory_space<vmem>>, vector<1x16xf32>
    %19 = arith.mulf %4, %16 : vector<1x16xf32>
    %20 = arith.subf %18, %19 : vector<1x16xf32>
    %c1 = arith.constant 1 : index
    %c0_11 = arith.constant 0 : index
    %21 = vector.load %arg3[%c1, %c0_11] : memref<2x16xf32, #tpu.memory_space<vmem>>, vector<1x16xf32>
    tpu.vector_store %arg3[%c1, %c0_11], %20 {strides = array<i32>} : memref<2x16xf32, #tpu.memory_space<vmem>>, vector<1x16xf32>,
    return
  }
}

module attributes {stable_mosaic.version = 11 : i64} {
  func.func @fused_layer_kernel(%arg0: i32, %arg1: memref<2x256xf32, #tpu.memory_space<vmem>>, %arg2: memref<2x256xf32, #tpu.memory_space<vmem>>, %arg3: memref<256x392xbf16, #tpu.memory_space<vmem>>, %arg4: memref<1x392xf32, #tpu.memory_space<vmem>>, %arg5: memref<1x256xf32, #tpu.memory_space<vmem>>, %arg6: memref<2x392xf32, #tpu.memory_space<vmem>>) attributes {dimension_semantics = [#tpu.dimension_semantics<parallel>], iteration_bounds = array<i64: 1>, scalar_prefetch = 0 : i64, scratch_operands = 0 : i64, tpu.core_type = #tpu.core_type<tc>, window_params = [{transform_indices = @transform_0, window_bounds = array<i64: 2, 256>}, {pipeline_mode = #tpu.pipeline_mode<synchronous>, transform_indices = @transform_1, window_bounds = array<i64: 2, 256>}, {pipeline_mode = #tpu.pipeline_mode<synchronous>, transform_indices = @transform_2, window_bounds = array<i64: 256, 392>}, {pipeline_mode = #tpu.pipeline_mode<synchronous>, transform_indices = @transform_3, window_bounds = array<i64: 1, 392>}, {pipeline_mode = #tpu.pipeline_mode<synchronous>, transform_indices = @transform_4, window_bounds = array<i64: 1, 256>}, {transform_indices = @transform_5, window_bounds = array<i64: 2, 392>}]} {
    %c0 = arith.constant 0 : index
    %c0_0 = arith.constant 0 : index
    %0 = vector.load %arg1[%c0, %c0_0] : memref<2x256xf32, #tpu.memory_space<vmem>>, vector<2x256xf32>
    %c0_1 = arith.constant 0 : index
    %c0_2 = arith.constant 0 : index
    %1 = vector.load %arg2[%c0_1, %c0_2] : memref<2x256xf32, #tpu.memory_space<vmem>>, vector<1x256xf32>
    %2 = vector.broadcast %1 : vector<1x256xf32> to vector<2x256xf32>
    %3 = arith.mulf %0, %2 : vector<2x256xf32>
    %c1 = arith.constant 1 : index
    %c0_3 = arith.constant 0 : index
    %4 = vector.load %arg2[%c1, %c0_3] : memref<2x256xf32, #tpu.memory_space<vmem>>, vector<1x256xf32>
    %5 = vector.broadcast %4 : vector<1x256xf32> to vector<2x256xf32>
    %6 = arith.addf %3, %5 : vector<2x256xf32>
    %cst = arith.constant 0.000000e+00 : f32
    %7 = vector.broadcast %cst : f32 to vector<2x256xf32>
    %8 = arith.cmpf ogt, %6, %7 : vector<2x256xf32>
    %c0_4 = arith.constant 0 : index
    %c0_5 = arith.constant 0 : index
    %9 = vector.load %arg5[%c0_4, %c0_5] : memref<1x256xf32, #tpu.memory_space<vmem>>, vector<1x256xf32>
    %10 = vector.broadcast %9 : vector<1x256xf32> to vector<2x256xf32>
    %11 = arith.mulf %10, %6 : vector<2x256xf32>
    %12 = arith.select %8, %6, %11 : vector<2x256xi1>, vector<2x256xf32>
    %13 = arith.truncf %12 : vector<2x256xf32> to vector<2x256xbf16>
    %c0_6 = arith.constant 0 : index
    %c0_7 = arith.constant 0 : index
    %14 = vector.load %arg3[%c0_6, %c0_7] : memref<256x392xbf16, #tpu.memory_space<vmem>>, vector<256x392xbf16>
    %cst_8 = arith.constant dense<0.000000e+00> : vector<2x392xf32>
    %15 = tpu.matmul %13, %14, %cst_8 {dimension_numbers = #tpu.dot_dimension_numbers<[1], [0], [0], [1], [0, 0, 1, 1], [], []>} : vector<2x256xbf16>, vector<256x392xbf16>, vector<2x392xf32> -> vector<2x392xf32>
    %c0_9 = arith.constant 0 : index
    %c0_10 = arith.constant 0 : index
    %16 = vector.load %arg4[%c0_9, %c0_10] : memref<1x392xf32, #tpu.memory_space<vmem>>, vector<1x392xf32>
    %17 = vector.broadcast %16 : vector<1x392xf32> to vector<2x392xf32>
    %18 = arith.addf %15, %17 : vector<2x392xf32>
    %c0_11 = arith.constant 0 : index
    %c0_12 = arith.constant 0 : index
    %19 = vector.load %arg6[%c0_11, %c0_12] : memref<2x392xf32, #tpu.memory_space<vmem>>, vector<2x392xf32>
    tpu.vector_store %arg6[%c0_11, %c0_12], %18 {strides = array<i32>} : memref<2x392xf32, #tpu.memory_space<vmem>>, vector<2x392xf32>,
    return
  }
  func.func @transform_0(%arg0: i32) -> (i32, i32) {
    %c0_i32 = arith.constant 0 : i32
    %c0_i32_0 = arith.constant 0 : i32
    return %arg0, %c0_i32 : i32, i32
  }
  func.func @transform_1(%arg0: i32) -> (i32, i32) {
    %c0_i32 = arith.constant 0 : i32
    %c0_i32_0 = arith.constant 0 : i32
    %c0_i32_1 = arith.constant 0 : i32
    return %c0_i32, %c0_i32_0 : i32, i32
  }
  func.func @transform_2(%arg0: i32) -> (i32, i32) {
    %c0_i32 = arith.constant 0 : i32
    %c0_i32_0 = arith.constant 0 : i32
    %c0_i32_1 = arith.constant 0 : i32
    return %c0_i32, %c0_i32_0 : i32, i32
  }
  func.func @transform_3(%arg0: i32) -> (i32, i32) {
    %c0_i32 = arith.constant 0 : i32
    %c0_i32_0 = arith.constant 0 : i32
    %c0_i32_1 = arith.constant 0 : i32
    return %c0_i32, %c0_i32_0 : i32, i32
  }
  func.func @transform_4(%arg0: i32) -> (i32, i32) {
    %c0_i32 = arith.constant 0 : i32
    %c0_i32_0 = arith.constant 0 : i32
    %c0_i32_1 = arith.constant 0 : i32
    return %c0_i32, %c0_i32_0 : i32, i32
  }
  func.func @transform_5(%arg0: i32) -> (i32, i32) {
    %c0_i32 = arith.constant 0 : i32
    %c0_i32_0 = arith.constant 0 : i32
    return %arg0, %c0_i32 : i32, i32
  }
}

module attributes {stable_mosaic.version = 11 : i64} {
  func.func @bn_stats_kernel(%arg0: memref<98x8xf32, #tpu.memory_space<vmem>>, %arg1: memref<1x8xf32, #tpu.memory_space<vmem>>, %arg2: memref<1x8xf32, #tpu.memory_space<vmem>>, %arg3: memref<2x8xf32, #tpu.memory_space<vmem>>) attributes {dimension_semantics = [], scalar_prefetch = 0 : i64, scratch_operands = 0 : i64, tpu.core_type = #tpu.core_type<tc>} {
    %c0 = arith.constant 0 : index
    %c0_0 = arith.constant 0 : index
    %0 = vector.load %arg0[%c0, %c0_0] : memref<98x8xf32, #tpu.memory_space<vmem>>, vector<98x8xf32>
    %cst = arith.constant dense<0.000000e+00> : vector<8xf32>
    %1 = vector.multi_reduction <add>, %0, %cst [0] : vector<98x8xf32> to vector<8xf32>
    %2 = vector.shape_cast %1 : vector<8xf32> to vector<1x8xf32>
    %cst_1 = arith.constant 0.0102040814 : f32
    %3 = vector.broadcast %cst_1 : f32 to vector<1x8xf32>
    %4 = arith.mulf %2, %3 : vector<1x8xf32>
    %5 = vector.broadcast %4 : vector<1x8xf32> to vector<98x8xf32>
    %6 = arith.subf %0, %5 : vector<98x8xf32>
    %7 = arith.mulf %6, %6 : vector<98x8xf32>
    %cst_2 = arith.constant dense<0.000000e+00> : vector<8xf32>
    %8 = vector.multi_reduction <add>, %7, %cst_2 [0] : vector<98x8xf32> to vector<8xf32>
    %9 = vector.shape_cast %8 : vector<8xf32> to vector<1x8xf32>
    %cst_3 = arith.constant 0.0102040814 : f32
    %10 = vector.broadcast %cst_3 : f32 to vector<1x8xf32>
    %11 = arith.mulf %9, %10 : vector<1x8xf32>
    %c0_4 = arith.constant 0 : index
    %c0_5 = arith.constant 0 : index
    %12 = vector.load %arg1[%c0_4, %c0_5] : memref<1x8xf32, #tpu.memory_space<vmem>>, vector<1x8xf32>
    %cst_6 = arith.constant 9.99999974E-6 : f32
    %13 = vector.broadcast %cst_6 : f32 to vector<1x8xf32>
    %14 = arith.addf %11, %13 : vector<1x8xf32>
    %15 = math.rsqrt %14 : vector<1x8xf32>
    %16 = arith.mulf %12, %15 : vector<1x8xf32>
    %c0_7 = arith.constant 0 : index
    %c0_8 = arith.constant 0 : index
    %17 = vector.load %arg3[%c0_7, %c0_8] : memref<2x8xf32, #tpu.memory_space<vmem>>, vector<1x8xf32>
    tpu.vector_store %arg3[%c0_7, %c0_8], %16 {strides = array<i32>} : memref<2x8xf32, #tpu.memory_space<vmem>>, vector<1x8xf32>,
    %c0_9 = arith.constant 0 : index
    %c0_10 = arith.constant 0 : index
    %18 = vector.load %arg2[%c0_9, %c0_10] : memref<1x8xf32, #tpu.memory_space<vmem>>, vector<1x8xf32>
    %19 = arith.mulf %4, %16 : vector<1x8xf32>
    %20 = arith.subf %18, %19 : vector<1x8xf32>
    %c1 = arith.constant 1 : index
    %c0_11 = arith.constant 0 : index
    %21 = vector.load %arg3[%c1, %c0_11] : memref<2x8xf32, #tpu.memory_space<vmem>>, vector<1x8xf32>
    tpu.vector_store %arg3[%c1, %c0_11], %20 {strides = array<i32>} : memref<2x8xf32, #tpu.memory_space<vmem>>, vector<1x8xf32>,
    return
  }
}

module attributes {stable_mosaic.version = 11 : i64} {
  func.func @fused_layer_kernel(%arg0: i32, %arg1: memref<2x392xf32, #tpu.memory_space<vmem>>, %arg2: memref<2x392xf32, #tpu.memory_space<vmem>>, %arg3: memref<392x784xbf16, #tpu.memory_space<vmem>>, %arg4: memref<1x784xf32, #tpu.memory_space<vmem>>, %arg5: memref<1x392xf32, #tpu.memory_space<vmem>>, %arg6: memref<2x784xf32, #tpu.memory_space<vmem>>) attributes {dimension_semantics = [#tpu.dimension_semantics<parallel>], iteration_bounds = array<i64: 1>, scalar_prefetch = 0 : i64, scratch_operands = 0 : i64, tpu.core_type = #tpu.core_type<tc>, window_params = [{transform_indices = @transform_0, window_bounds = array<i64: 2, 392>}, {pipeline_mode = #tpu.pipeline_mode<synchronous>, transform_indices = @transform_1, window_bounds = array<i64: 2, 392>}, {pipeline_mode = #tpu.pipeline_mode<synchronous>, transform_indices = @transform_2, window_bounds = array<i64: 392, 784>}, {pipeline_mode = #tpu.pipeline_mode<synchronous>, transform_indices = @transform_3, window_bounds = array<i64: 1, 784>}, {pipeline_mode = #tpu.pipeline_mode<synchronous>, transform_indices = @transform_4, window_bounds = array<i64: 1, 392>}, {transform_indices = @transform_5, window_bounds = array<i64: 2, 784>}]} {
    %c0 = arith.constant 0 : index
    %c0_0 = arith.constant 0 : index
    %0 = vector.load %arg1[%c0, %c0_0] : memref<2x392xf32, #tpu.memory_space<vmem>>, vector<2x392xf32>
    %c0_1 = arith.constant 0 : index
    %c0_2 = arith.constant 0 : index
    %1 = vector.load %arg2[%c0_1, %c0_2] : memref<2x392xf32, #tpu.memory_space<vmem>>, vector<1x392xf32>
    %2 = vector.broadcast %1 : vector<1x392xf32> to vector<2x392xf32>
    %3 = arith.mulf %0, %2 : vector<2x392xf32>
    %c1 = arith.constant 1 : index
    %c0_3 = arith.constant 0 : index
    %4 = vector.load %arg2[%c1, %c0_3] : memref<2x392xf32, #tpu.memory_space<vmem>>, vector<1x392xf32>
    %5 = vector.broadcast %4 : vector<1x392xf32> to vector<2x392xf32>
    %6 = arith.addf %3, %5 : vector<2x392xf32>
    %cst = arith.constant 0.000000e+00 : f32
    %7 = vector.broadcast %cst : f32 to vector<2x392xf32>
    %8 = arith.cmpf ogt, %6, %7 : vector<2x392xf32>
    %c0_4 = arith.constant 0 : index
    %c0_5 = arith.constant 0 : index
    %9 = vector.load %arg5[%c0_4, %c0_5] : memref<1x392xf32, #tpu.memory_space<vmem>>, vector<1x392xf32>
    %10 = vector.broadcast %9 : vector<1x392xf32> to vector<2x392xf32>
    %11 = arith.mulf %10, %6 : vector<2x392xf32>
    %12 = arith.select %8, %6, %11 : vector<2x392xi1>, vector<2x392xf32>
    %13 = arith.truncf %12 : vector<2x392xf32> to vector<2x392xbf16>
    %c0_6 = arith.constant 0 : index
    %c0_7 = arith.constant 0 : index
    %14 = vector.load %arg3[%c0_6, %c0_7] : memref<392x784xbf16, #tpu.memory_space<vmem>>, vector<392x784xbf16>
    %cst_8 = arith.constant dense<0.000000e+00> : vector<2x784xf32>
    %15 = tpu.matmul %13, %14, %cst_8 {dimension_numbers = #tpu.dot_dimension_numbers<[1], [0], [0], [1], [0, 0, 1, 1], [], []>} : vector<2x392xbf16>, vector<392x784xbf16>, vector<2x784xf32> -> vector<2x784xf32>
    %c0_9 = arith.constant 0 : index
    %c0_10 = arith.constant 0 : index
    %16 = vector.load %arg4[%c0_9, %c0_10] : memref<1x784xf32, #tpu.memory_space<vmem>>, vector<1x784xf32>
    %17 = vector.broadcast %16 : vector<1x784xf32> to vector<2x784xf32>
    %18 = arith.addf %15, %17 : vector<2x784xf32>
    %c0_11 = arith.constant 0 : index
    %c0_12 = arith.constant 0 : index
    %19 = vector.load %arg6[%c0_11, %c0_12] : memref<2x784xf32, #tpu.memory_space<vmem>>, vector<2x784xf32>
    tpu.vector_store %arg6[%c0_11, %c0_12], %18 {strides = array<i32>} : memref<2x784xf32, #tpu.memory_space<vmem>>, vector<2x784xf32>,
    return
  }
  func.func @transform_0(%arg0: i32) -> (i32, i32) {
    %c0_i32 = arith.constant 0 : i32
    %c0_i32_0 = arith.constant 0 : i32
    return %arg0, %c0_i32 : i32, i32
  }
  func.func @transform_1(%arg0: i32) -> (i32, i32) {
    %c0_i32 = arith.constant 0 : i32
    %c0_i32_0 = arith.constant 0 : i32
    %c0_i32_1 = arith.constant 0 : i32
    return %c0_i32, %c0_i32_0 : i32, i32
  }
  func.func @transform_2(%arg0: i32) -> (i32, i32) {
    %c0_i32 = arith.constant 0 : i32
    %c0_i32_0 = arith.constant 0 : i32
    %c0_i32_1 = arith.constant 0 : i32
    return %c0_i32, %c0_i32_0 : i32, i32
  }
  func.func @transform_3(%arg0: i32) -> (i32, i32) {
    %c0_i32 = arith.constant 0 : i32
    %c0_i32_0 = arith.constant 0 : i32
    %c0_i32_1 = arith.constant 0 : i32
    return %c0_i32, %c0_i32_0 : i32, i32
  }
  func.func @transform_4(%arg0: i32) -> (i32, i32) {
    %c0_i32 = arith.constant 0 : i32
    %c0_i32_0 = arith.constant 0 : i32
    %c0_i32_1 = arith.constant 0 : i32
    return %c0_i32, %c0_i32_0 : i32, i32
  }
  func.func @transform_5(%arg0: i32) -> (i32, i32) {
    %c0_i32 = arith.constant 0 : i32
    %c0_i32_0 = arith.constant 0 : i32
    return %arg0, %c0_i32 : i32, i32
  }
}

module attributes {stable_mosaic.version = 11 : i64} {
  func.func @bn_stats_kernel(%arg0: memref<392x4xf32, #tpu.memory_space<vmem>>, %arg1: memref<1x4xf32, #tpu.memory_space<vmem>>, %arg2: memref<1x4xf32, #tpu.memory_space<vmem>>, %arg3: memref<2x4xf32, #tpu.memory_space<vmem>>) attributes {dimension_semantics = [], scalar_prefetch = 0 : i64, scratch_operands = 0 : i64, tpu.core_type = #tpu.core_type<tc>} {
    %c0 = arith.constant 0 : index
    %c0_0 = arith.constant 0 : index
    %0 = vector.load %arg0[%c0, %c0_0] : memref<392x4xf32, #tpu.memory_space<vmem>>, vector<392x4xf32>
    %cst = arith.constant dense<0.000000e+00> : vector<4xf32>
    %1 = vector.multi_reduction <add>, %0, %cst [0] : vector<392x4xf32> to vector<4xf32>
    %2 = vector.shape_cast %1 : vector<4xf32> to vector<1x4xf32>
    %cst_1 = arith.constant 0.00255102036 : f32
    %3 = vector.broadcast %cst_1 : f32 to vector<1x4xf32>
    %4 = arith.mulf %2, %3 : vector<1x4xf32>
    %5 = vector.broadcast %4 : vector<1x4xf32> to vector<392x4xf32>
    %6 = arith.subf %0, %5 : vector<392x4xf32>
    %7 = arith.mulf %6, %6 : vector<392x4xf32>
    %cst_2 = arith.constant dense<0.000000e+00> : vector<4xf32>
    %8 = vector.multi_reduction <add>, %7, %cst_2 [0] : vector<392x4xf32> to vector<4xf32>
    %9 = vector.shape_cast %8 : vector<4xf32> to vector<1x4xf32>
    %cst_3 = arith.constant 0.00255102036 : f32
    %10 = vector.broadcast %cst_3 : f32 to vector<1x4xf32>
    %11 = arith.mulf %9, %10 : vector<1x4xf32>
    %c0_4 = arith.constant 0 : index
    %c0_5 = arith.constant 0 : index
    %12 = vector.load %arg1[%c0_4, %c0_5] : memref<1x4xf32, #tpu.memory_space<vmem>>, vector<1x4xf32>
    %cst_6 = arith.constant 9.99999974E-6 : f32
    %13 = vector.broadcast %cst_6 : f32 to vector<1x4xf32>
    %14 = arith.addf %11, %13 : vector<1x4xf32>
    %15 = math.rsqrt %14 : vector<1x4xf32>
    %16 = arith.mulf %12, %15 : vector<1x4xf32>
    %c0_7 = arith.constant 0 : index
    %c0_8 = arith.constant 0 : index
    %17 = vector.load %arg3[%c0_7, %c0_8] : memref<2x4xf32, #tpu.memory_space<vmem>>, vector<1x4xf32>
    tpu.vector_store %arg3[%c0_7, %c0_8], %16 {strides = array<i32>} : memref<2x4xf32, #tpu.memory_space<vmem>>, vector<1x4xf32>,
    %c0_9 = arith.constant 0 : index
    %c0_10 = arith.constant 0 : index
    %18 = vector.load %arg2[%c0_9, %c0_10] : memref<1x4xf32, #tpu.memory_space<vmem>>, vector<1x4xf32>
    %19 = arith.mulf %4, %16 : vector<1x4xf32>
    %20 = arith.subf %18, %19 : vector<1x4xf32>
    %c1 = arith.constant 1 : index
    %c0_11 = arith.constant 0 : index
    %21 = vector.load %arg3[%c1, %c0_11] : memref<2x4xf32, #tpu.memory_space<vmem>>, vector<1x4xf32>
    tpu.vector_store %arg3[%c1, %c0_11], %20 {strides = array<i32>} : memref<2x4xf32, #tpu.memory_space<vmem>>, vector<1x4xf32>,
    return
  }
}

module attributes {stable_mosaic.version = 11 : i64} {
  func.func @fused_layer_kernel(%arg0: i32, %arg1: memref<2x784xf32, #tpu.memory_space<vmem>>, %arg2: memref<2x784xf32, #tpu.memory_space<vmem>>, %arg3: memref<784x784xbf16, #tpu.memory_space<vmem>>, %arg4: memref<1x784xf32, #tpu.memory_space<vmem>>, %arg5: memref<1x784xf32, #tpu.memory_space<vmem>>, %arg6: memref<2x784xf32, #tpu.memory_space<vmem>>) attributes {dimension_semantics = [#tpu.dimension_semantics<parallel>], iteration_bounds = array<i64: 1>, scalar_prefetch = 0 : i64, scratch_operands = 0 : i64, tpu.core_type = #tpu.core_type<tc>, window_params = [{transform_indices = @transform_0, window_bounds = array<i64: 2, 784>}, {pipeline_mode = #tpu.pipeline_mode<synchronous>, transform_indices = @transform_1, window_bounds = array<i64: 2, 784>}, {pipeline_mode = #tpu.pipeline_mode<synchronous>, transform_indices = @transform_2, window_bounds = array<i64: 784, 784>}, {pipeline_mode = #tpu.pipeline_mode<synchronous>, transform_indices = @transform_3, window_bounds = array<i64: 1, 784>}, {pipeline_mode = #tpu.pipeline_mode<synchronous>, transform_indices = @transform_4, window_bounds = array<i64: 1, 784>}, {transform_indices = @transform_5, window_bounds = array<i64: 2, 784>}]} {
    %c0 = arith.constant 0 : index
    %c0_0 = arith.constant 0 : index
    %0 = vector.load %arg1[%c0, %c0_0] : memref<2x784xf32, #tpu.memory_space<vmem>>, vector<2x784xf32>
    %c0_1 = arith.constant 0 : index
    %c0_2 = arith.constant 0 : index
    %1 = vector.load %arg2[%c0_1, %c0_2] : memref<2x784xf32, #tpu.memory_space<vmem>>, vector<1x784xf32>
    %2 = vector.broadcast %1 : vector<1x784xf32> to vector<2x784xf32>
    %3 = arith.mulf %0, %2 : vector<2x784xf32>
    %c1 = arith.constant 1 : index
    %c0_3 = arith.constant 0 : index
    %4 = vector.load %arg2[%c1, %c0_3] : memref<2x784xf32, #tpu.memory_space<vmem>>, vector<1x784xf32>
    %5 = vector.broadcast %4 : vector<1x784xf32> to vector<2x784xf32>
    %6 = arith.addf %3, %5 : vector<2x784xf32>
    %cst = arith.constant 0.000000e+00 : f32
    %7 = vector.broadcast %cst : f32 to vector<2x784xf32>
    %8 = arith.cmpf ogt, %6, %7 : vector<2x784xf32>
    %c0_4 = arith.constant 0 : index
    %c0_5 = arith.constant 0 : index
    %9 = vector.load %arg5[%c0_4, %c0_5] : memref<1x784xf32, #tpu.memory_space<vmem>>, vector<1x784xf32>
    %10 = vector.broadcast %9 : vector<1x784xf32> to vector<2x784xf32>
    %11 = arith.mulf %10, %6 : vector<2x784xf32>
    %12 = arith.select %8, %6, %11 : vector<2x784xi1>, vector<2x784xf32>
    %13 = arith.truncf %12 : vector<2x784xf32> to vector<2x784xbf16>
    %c0_6 = arith.constant 0 : index
    %c0_7 = arith.constant 0 : index
    %14 = vector.load %arg3[%c0_6, %c0_7] : memref<784x784xbf16, #tpu.memory_space<vmem>>, vector<784x784xbf16>
    %cst_8 = arith.constant dense<0.000000e+00> : vector<2x784xf32>
    %15 = tpu.matmul %13, %14, %cst_8 {dimension_numbers = #tpu.dot_dimension_numbers<[1], [0], [0], [1], [0, 0, 1, 1], [], []>} : vector<2x784xbf16>, vector<784x784xbf16>, vector<2x784xf32> -> vector<2x784xf32>
    %c0_9 = arith.constant 0 : index
    %c0_10 = arith.constant 0 : index
    %16 = vector.load %arg4[%c0_9, %c0_10] : memref<1x784xf32, #tpu.memory_space<vmem>>, vector<1x784xf32>
    %17 = vector.broadcast %16 : vector<1x784xf32> to vector<2x784xf32>
    %18 = arith.addf %15, %17 : vector<2x784xf32>
    %19 = math.tanh %18 : vector<2x784xf32>
    %c0_11 = arith.constant 0 : index
    %c0_12 = arith.constant 0 : index
    %20 = vector.load %arg6[%c0_11, %c0_12] : memref<2x784xf32, #tpu.memory_space<vmem>>, vector<2x784xf32>
    tpu.vector_store %arg6[%c0_11, %c0_12], %19 {strides = array<i32>} : memref<2x784xf32, #tpu.memory_space<vmem>>, vector<2x784xf32>,
    return
  }
  func.func @transform_0(%arg0: i32) -> (i32, i32) {
    %c0_i32 = arith.constant 0 : i32
    %c0_i32_0 = arith.constant 0 : i32
    return %arg0, %c0_i32 : i32, i32
  }
  func.func @transform_1(%arg0: i32) -> (i32, i32) {
    %c0_i32 = arith.constant 0 : i32
    %c0_i32_0 = arith.constant 0 : i32
    %c0_i32_1 = arith.constant 0 : i32
    return %c0_i32, %c0_i32_0 : i32, i32
  }
  func.func @transform_2(%arg0: i32) -> (i32, i32) {
    %c0_i32 = arith.constant 0 : i32
    %c0_i32_0 = arith.constant 0 : i32
    %c0_i32_1 = arith.constant 0 : i32
    return %c0_i32, %c0_i32_0 : i32, i32
  }
  func.func @transform_3(%arg0: i32) -> (i32, i32) {
    %c0_i32 = arith.constant 0 : i32
    %c0_i32_0 = arith.constant 0 : i32
    %c0_i32_1 = arith.constant 0 : i32
    return %c0_i32, %c0_i32_0 : i32, i32
  }
  func.func @transform_4(%arg0: i32) -> (i32, i32) {
    %c0_i32 = arith.constant 0 : i32
    %c0_i32_0 = arith.constant 0 : i32
    %c0_i32_1 = arith.constant 0 : i32
    return %c0_i32, %c0_i32_0 : i32, i32
  }
  func.func @transform_5(%arg0: i32) -> (i32, i32) {
    %c0_i32 = arith.constant 0 : i32
    %c0_i32_0 = arith.constant 0 : i32
    return %arg0, %c0_i32 : i32, i32
  }
}

</mosaic_0001>

<llo_original>
// kernel: tile.24
$region0: #{tile.24}
  %s0 = inlined_call_operand.vmem [shape: f32[2,4,32], index: 0, kind: input, shape index: {}]
  %s1 = inlined_call_operand.vmem [shape: f32[2,128], index: 1, kind: output, shape index: {}]
  $region1: #{tile.24} parent=0
    #allocation0 [shape = 'u8[4096]{0}', space=vmem, size = 0x1000, scoped, tag = 'scoped mem for output reshape']
    #allocation1 [shape = 'u8[8192]{0}', space=vmem, size = 0x2000, scoped, tag = 'scoped mem for input reshape']
    %s3 = sshllo.u32 0, 4
    %s4 = scalar_lea.vmem %s0, 4
    %v5 = vld [vmem:[%s4] sm:%s3]
    %s6 = scalar_lea.vmem [#allocation1], 8
    %7 = vst [vmem:[%s6] sm:%s3] %v5
    %v8 = vld [vmem:[%s0] sm:%s3]
    %9 = vst [vmem:[#allocation1] sm:%s3] %v8
    %s10 = smov 3
    %v11 = vld [vmem:[#allocation1] ss:$8 sm:%s10]
    %vm12 = vcmask 261120
    %13 = vst.msk [vmem:[#allocation0] sm:$0x3] %vm12, %v11
    %s14 = scalar_lea.vmem [#allocation1], 3
    %s15 = smov 3
    %v16 = vld [vmem:[%s14] ss:$8 sm:%s15]
    %17 = vrot.lane.b32.xlu0 %v16, 96
    %v18 = vpop.permute.xlu0 %17
    %vm19 = vcmask 1048320
    %20 = vst.msk [vmem:[#allocation0] sm:$0x3] %vm19, %v18
    %s21 = scalar_lea.vmem [#allocation1], 2
    %s22 = smov 3
    %v23 = vld [vmem:[%s21] ss:$8 sm:%s22]
    %24 = vrot.lane.b32.xlu0 %v23, 64
    %v25 = vpop.permute.xlu0 %24
    %vm26 = vcmask 785920
    %27 = vst.msk [vmem:[#allocation0] sm:$0x3] %vm26, %v25
    %s28 = scalar_lea.vmem [#allocation1], 1
    %s29 = smov 3
    %v30 = vld [vmem:[%s28] ss:$8 sm:%s29]
    %31 = vrot.lane.b32.xlu0 %v30, 32
    %v32 = vpop.permute.xlu0 %31
    %vm33 = vcmask 523520
    %34 = vst.msk [vmem:[#allocation0] sm:$0x3] %vm33, %v32
    %s36 = sshllo.u32 0, 2
    %v38 = vld [vmem:[#allocation0] sm:%s36]
    %s39 = sshllo.u32 0, 2
    %40 = vst [vmem:[%s1] sm:%s39] %v38

// kernel: generator_forward.10
$region0: #{generator_forward.10}
  #allocation0 [shape = 'u32[]', space=smem, size = 0x4, offset = 0x4, fixed_abs, tag = 'smem constant byte address 0x4 - core index']
  #allocation1 [shape = 'u32[144,128]{1,0:T(1,128)}', space=vmem, size = 0x12000, scoped, tag = 'internal scratch']
  %s0 = inlined_call_operand.vmem [shape: f32[8,32], index: 0, kind: input, shape index: {}]
  %s1 = inlined_call_operand.hbm [shape: f32[1,32], index: 1, kind: input, shape index: {}]
  %s2 = inlined_call_operand.hbm [shape: f32[1,32], index: 2, kind: input, shape index: {}]
  %s3 = inlined_call_operand.vmem [shape: f32[2,32], index: 3, kind: output, shape index: {}]
  %s4 = sld [smem:[#allocation0]]
  $region30: #{generator_forward.10} parent=0
    _
  %s6 = ssub.s32 1, %s4
  %s7 = scalar_select 0, %s6, %s4
  $region1: #{generator_forward.10} parent=0
    #allocation2 [shape = 'u8[512]{0}', space=vmem, size = 0x400, scoped, tag = 'input window, operand 1, single buffered']
    #allocation3 [shape = 's32[1]{0}', space=sflag, size = 0x4, scoped, tag = 'scoped memory for generator_forward.10']
    #allocation4 [shape = 'u8[512]{0}', space=vmem, size = 0x400, scoped, tag = 'input window, operand 2, single buffered']
    #allocation5 [shape = 's32[1]{0}', space=sflag, size = 0x4, scoped, tag = 'scoped memory for generator_forward.10']
    %8 = vsyncpa [#allocation3], 0
    %9 = vsyncpa [#allocation5], 0
    // Predicated region
    $region2: #{generator_forward.10} parent=1 // pred_check
      _
    $region3: #{generator_forward.10} parent=1 // pred_check_branch
      %11 = sbr.rel (0) target = $region5
    $region4: #{generator_forward.10} parent=1 // pred_region
      _
    $region5: #{generator_forward.10} parent=1 // pred_fallthru
      _
    // Predicated region
    $region6: #{generator_forward.10} parent=1 // pred_check
      _
    $region7: #{generator_forward.10} parent=1 // pred_check_branch
      %13 = sbr.rel (0) target = $region9
    $region8: #{generator_forward.10} parent=1 // pred_region
      %s15 = ssub.s32 16, 16
      %16 = vsyncadd [#allocation3], %s15
      %s18 = sshll.u32 [#allocation2], 4
      %s19 = int_to_ptr.vmem [resolvable:$true] %s18
      %21 = dma.hbm_to_vmem [thread:$0]  %s1, 16, %s19, [#allocation3]
    $region9: #{generator_forward.10} parent=1 // pred_fallthru
      _
    // Predicated region
    $region10: #{generator_forward.10} parent=1 // pred_check
      _
    $region11: #{generator_forward.10} parent=1 // pred_check_branch
      %23 = sbr.rel (0) target = $region13
    $region12: #{generator_forward.10} parent=1 // pred_region
      %s25 = ssub.s32 16, 16
      %26 = vsyncadd [#allocation5], %s25
      %s28 = sshll.u32 [#allocation4], 4
      %s29 = int_to_ptr.vmem [resolvable:$true] %s28
      %31 = dma.hbm_to_vmem [thread:$0]  %s2, 16, %s29, [#allocation5]
    $region13: #{generator_forward.10} parent=1 // pred_fallthru
      _
    // Predicated region
    $region14: #{generator_forward.10} parent=1 // pred_check
      _
    $region15: #{generator_forward.10} parent=1 // pred_check_branch
      %33 = sbr.rel (0) target = $region17
    $region16: #{generator_forward.10} parent=1 // pred_region
      %34 = dma.done [#allocation3], 16
    $region17: #{generator_forward.10} parent=1 // pred_fallthru
      _
    // Predicated region
    $region18: #{generator_forward.10} parent=1 // pred_check
      _
    $region19: #{generator_forward.10} parent=1 // pred_check_branch
      %36 = sbr.rel (0) target = $region21
    $region20: #{generator_forward.10} parent=1 // pred_region
      %37 = dma.done [#allocation5], 16
    $region21: #{generator_forward.10} parent=1 // pred_fallthru
      _
    %v38 = vld [vmem:[%s0] sm:$0xff]
    %vm39 = vcmask 261120
    %v40 = vsel %vm39, %v38, 0.0
    %v41 = vrot.slane %v40, 4
    %v42 = vadd.f32 %v40, %v41
    %v43 = vrot.slane %v42, 2
    %v44 = vadd.f32 %v42, %v43
    %v45 = vrot.slane %v44, 1
    %v46 = vadd.f32 %v44, %v45
    %v47 = vmul.f32 %v46, 0.125
    %v48 = vsub.f32 %v38, %v47
    %v49 = vmul.f32 %v48, %v48
    %v50 = vsel %vm39, %v49, 0.0
    %v51 = vrot.slane %v50, 4
    %v52 = vadd.f32 %v50, %v51
    %v53 = vrot.slane %v52, 2
    %v54 = vadd.f32 %v52, %v53
    %v55 = vrot.slane %v54, 1
    %v56 = vadd.f32 %v54, %v55
    %v57 = vmul.f32 %v56, 0.125
    %v58 = vld [vmem:[#allocation2] sm:$0x1]
    %v59 = vadd.f32 %v57, 1e-05
    %v60 = vrsqrt.pop %v59
    %v61 = vmul.f32 %v58, %v60
    %vm62 = vcmask 253952
    %63 = vst.msk [vmem:[%s3] sm:$0x1] %vm62, %v61
    %v64 = vld [vmem:[#allocation4] sm:$0x1]
    %v65 = vmul.f32 %v47, %v61
    %v66 = vsub.f32 %v64, %v65
    %67 = vst.msk [vmem:[%s3 + $0x1] sm:$0x1] %vm62, %v66
    // Predicated region
    $region22: #{generator_forward.10} parent=1 // pred_check
      _
    $region23: #{generator_forward.10} parent=1 // pred_check_branch
      %69 = sbr.rel (0) target = $region25
    $region24: #{generator_forward.10} parent=1 // pred_region
      _
    $region25: #{generator_forward.10} parent=1 // pred_fallthru
      _
    // Predicated region
    $region26: #{generator_forward.10} parent=1 // pred_check
      _
    $region27: #{generator_forward.10} parent=1 // pred_check_branch
      %71 = sbr.rel (0) target = $region29
    $region28: #{generator_forward.10} parent=1 // pred_region
      _
    $region29: #{generator_forward.10} parent=1 // pred_fallthru
      _
    %72 = vsyncpa [#allocation3], 1
    %73 = vsyncpa [#allocation5], 1

// kernel: generator_forward.9
$region0: #{generator_forward.9}
  #allocation0 [shape = 'u32[]', space=smem, size = 0x4, offset = 0x4, fixed_abs, tag = 'smem constant byte address 0x4 - core index']
  #allocation1 [shape = 'u32[144,128]{1,0:T(1,128)}', space=vmem, size = 0x12000, scoped, tag = 'internal scratch']
  %s0 = inlined_call_operand.hbm [shape: f32[2,32], index: 0, kind: input, shape index: {}]
  %s1 = inlined_call_operand.hbm [shape: f32[32,128], index: 1, kind: input, shape index: {}]
  %s2 = inlined_call_operand.hbm [shape: f32[1,128], index: 2, kind: input, shape index: {}]
  %s3 = inlined_call_operand.vmem [shape: f32[2,128], index: 3, kind: output, shape index: {}]
  %s4 = sld [smem:[#allocation0]]
  $region34: #{generator_forward.9} parent=0
    _
  %s6 = ssub.s32 1, %s4
  %s7 = scalar_select 0, %s6, %s4
  $region1: #{generator_forward.9} parent=0
    #allocation2 [shape = 'u8[1024]{0}', space=vmem, size = 0x400, scoped, tag = 'input window, operand 0, single buffered']
    #allocation3 [shape = 's32[1]{0}', space=sflag, size = 0x4, scoped, tag = 'scoped memory for generator_forward.9']
    #allocation4 [shape = 'u8[16384]{0}', space=vmem, size = 0x4000, scoped, tag = 'input window, operand 1, single buffered']
    #allocation5 [shape = 's32[1]{0}', space=sflag, size = 0x4, scoped, tag = 'scoped memory for generator_forward.9']
    #allocation6 [shape = 'u8[512]{0}', space=vmem, size = 0x400, scoped, tag = 'input window, operand 2, single buffered']
    %8 = vsyncpa [#allocation3], 0
    %9 = vsyncpa [#allocation5], 0
    // Predicated region
    $region2: #{generator_forward.9} parent=1 // pred_check
      _
    $region3: #{generator_forward.9} parent=1 // pred_check_branch
      %11 = sbr.rel (0) target = $region5
    $region4: #{generator_forward.9} parent=1 // pred_region
      %s13 = ssub.s32 32, 32
      %14 = vsyncadd [#allocation3], %s13
      %s16 = sshll.u32 [#allocation2], 4
      %s17 = int_to_ptr.vmem [resolvable:$true] %s16
      %19 = dma.hbm_to_vmem [thread:$0]  %s0, 32, %s17, [#allocation3]
    $region5: #{generator_forward.9} parent=1 // pred_fallthru
      _
    // Predicated region
    $region6: #{generator_forward.9} parent=1 // pred_check
      _
    $region7: #{generator_forward.9} parent=1 // pred_check_branch
      %21 = sbr.rel (0) target = $region9
    $region8: #{generator_forward.9} parent=1 // pred_region
      %s23 = ssub.s32 512, 512
      %24 = vsyncadd [#allocation5], %s23
      %s25 = sshll.u32 [#allocation4], 4
      %s26 = int_to_ptr.vmem [resolvable:$true] %s25
      %31 = dma.hbm_to_vmem [thread:$0]  %s1, 512, %s26, [#allocation5], 128, 128, 8
    $region9: #{generator_forward.9} parent=1 // pred_fallthru
      _
    // Predicated region
    $region10: #{generator_forward.9} parent=1 // pred_check
      _
    $region11: #{generator_forward.9} parent=1 // pred_check_branch
      %33 = sbr.rel (0) target = $region13
    $region12: #{generator_forward.9} parent=1 // pred_region
      %s35 = ssub.s32 16, 16
      %36 = vsyncadd [#allocation5], %s35
      %s38 = sshll.u32 [#allocation6], 4
      %s39 = int_to_ptr.vmem [resolvable:$true] %s38
      %41 = dma.hbm_to_vmem [thread:$0]  %s2, 16, %s39, [#allocation5]
    $region13: #{generator_forward.9} parent=1 // pred_fallthru
      _
    // Predicated region
    $region14: #{generator_forward.9} parent=1 // pred_check
      _
    $region15: #{generator_forward.9} parent=1 // pred_check_branch
      %43 = sbr.rel (0) target = $region17
    $region16: #{generator_forward.9} parent=1 // pred_region
      %44 = dma.done [#allocation3], 32
    $region17: #{generator_forward.9} parent=1 // pred_fallthru
      _
    // Predicated region
    $region18: #{generator_forward.9} parent=1 // pred_check
      _
    $region19: #{generator_forward.9} parent=1 // pred_check_branch
      %46 = sbr.rel (0) target = $region21
    $region20: #{generator_forward.9} parent=1 // pred_region
      %47 = dma.done [#allocation5], 512
    $region21: #{generator_forward.9} parent=1 // pred_fallthru
      _
    // Predicated region
    $region22: #{generator_forward.9} parent=1 // pred_check
      _
    $region23: #{generator_forward.9} parent=1 // pred_check_branch
      %49 = sbr.rel (0) target = $region25
    $region24: #{generator_forward.9} parent=1 // pred_region
      %50 = dma.done [#allocation5], 16
    $region25: #{generator_forward.9} parent=1 // pred_fallthru
      _
    %v51 = vld [vmem:[#allocation2] sm:$0x3]
    %v52 = vld [vmem:[#allocation4] sm:$0xff]
    %v53 = vld [vmem:[#allocation4 + $0x8] sm:$0xff]
    %v54 = vld [vmem:[#allocation4 + $0x10] sm:$0xff]
    %v55 = vld [vmem:[#allocation4 + $0x18] sm:$0xff]
    %v56 = vld [vmem:[#allocation6] sm:$0x1]
    %v58 = vlaneseq
    %v59 = vshrl.u32 %v58, 7
    %v60 = vsub.s32 0, %v59
    %v61 = vrot.slane %v56, %v60
    %vm63 = vcmask 261120
    %v65 = vsel %vm63, %v51, 0
    %67 = vmatprep.subr.mxu0 0.0
    %68 = vmatpush1.msra.mxu0 %v52
    %69 = vmatprep.subr.mxu0 0.0
    %70 = vmatpush1.msra.mxu0 %v53
    %71 = vmatprep.subr.mxu0 0.0
    %72 = vmatpush1.msra.mxu0 %v54
    %73 = vmatprep.subr.mxu0 0.0
    %74 = vmatpush1.msra.mxu0 %v55
    %75 = vmatprep.subr.mxu0 0.0
    %76 = vmatpush1.msra.mxu0 0.0
    %77 = vmatprep.subr.mxu0 0.0
    %78 = vmatpush1.msra.mxu0 0.0
    %79 = vmatprep.subr.mxu0 0.0
    %80 = vmatpush1.msra.mxu0 0.0
    %81 = vmatprep.subr.mxu0 0.0
    %82 = vmatpush1.msra.mxu0 0.0
    %83 = vmatprep.subr.mxu0 0.0
    %84 = vmatpush1.msra.mxu0 0.0
    %85 = vmatprep.subr.mxu0 0.0
    %86 = vmatpush1.msra.mxu0 0.0
    %87 = vmatprep.subr.mxu0 0.0
    %88 = vmatpush1.msra.mxu0 0.0
    %89 = vmatprep.subr.mxu0 0.0
    %90 = vmatpush1.msra.mxu0 0.0
    %91 = vmatprep.subr.mxu0 0.0
    %92 = vmatpush1.msra.mxu0 0.0
    %93 = vmatprep.subr.mxu0 0.0
    %94 = vmatpush1.msra.mxu0 0.0
    %95 = vmatprep.subr.mxu0 0.0
    %96 = vmatpush1.msra.mxu0 0.0
    %97 = vmatprep.subr.mxu0 0.0
    %98 = vmatpush1.msra.mxu0 0.0
    %99 = vmatprep.subr.mxu0 0.0
    %100 = vmatpush1.msra.mxu0 0.0
    %101 = vmatprep.subr.mxu0 0.0
    %102 = vmatpush1.msra.mxu0 0.0
    %103 = vmatprep.subr.mxu0 0.0
    %104 = vmatpush1.msra.mxu0 0.0
    %105 = vmatprep.subr.mxu0 0.0
    %106 = vmatpush1.msra.mxu0 0.0
    %107 = vmatprep.subr.mxu0 0.0
    %108 = vmatpush1.msra.mxu0 0.0
    %109 = vmatprep.subr.mxu0 0.0
    %110 = vmatpush1.msra.mxu0 0.0
    %111 = vmatprep.subr.mxu0 0.0
    %112 = vmatpush1.msra.mxu0 0.0
    %113 = vmatprep.subr.mxu0 0.0
    %114 = vmatpush1.msra.mxu0 0.0
    %115 = vmatprep.subr.mxu0 0.0
    %116 = vmatpush1.msra.mxu0 0.0
    %117 = vmatprep.subr.mxu0 0.0
    %118 = vmatpush1.msra.mxu0 0.0
    %119 = vmatprep.subr.mxu0 0.0
    %120 = vmatpush1.msra.mxu0 0.0
    %121 = vmatprep.subr.mxu0 0.0
    %122 = vmatpush1.msra.mxu0 0.0
    %123 = vmatprep.subr.mxu0 0.0
    %124 = vmatpush1.msra.mxu0 0.0
    %125 = vmatprep.subr.mxu0 0.0
    %126 = vmatpush1.msra.mxu0 0.0
    %127 = vmatprep.subr.mxu0 0.0
    %128 = vmatpush1.msra.mxu0 0.0
    %129 = vmatprep.subr.mxu0 0.0
    %130 = vmatpush1.msra.mxu0 0.0
    %131 = vmatprep.mubr.f32.mxu0 0.0
    %132 = vmatmul.mubr.f32.gmra.mrb[0].mxu0 %v65
    %v133 = vpop.f32.mrb[0].mxu0
    %v134 = vadd.f32 %v61, %v133
    %v135 = vpop.f32.mrb[0].mxu0
    %136 = vdwg.mxu0
    %137 = vst [vmem:[%s3] sm:$0x3] %v134
    // Predicated region
    $region26: #{generator_forward.9} parent=1 // pred_check
      _
    $region27: #{generator_forward.9} parent=1 // pred_check_branch
      %139 = sbr.rel (0) target = $region29
    $region28: #{generator_forward.9} parent=1 // pred_region
      _
    $region29: #{generator_forward.9} parent=1 // pred_fallthru
      _
    // Predicated region
    $region30: #{generator_forward.9} parent=1 // pred_check
      _
    $region31: #{generator_forward.9} parent=1 // pred_check_branch
      %141 = sbr.rel (0) target = $region33
    $region32: #{generator_forward.9} parent=1 // pred_region
      _
    $region33: #{generator_forward.9} parent=1 // pred_fallthru
      _
    %142 = vsyncpa [#allocation3], 1
    %143 = vsyncpa [#allocation5], 1

// kernel: tile.29
$region0: #{tile.29}
  %s0 = inlined_call_operand.vmem [shape: f32[2,16,16], index: 0, kind: input, shape index: {}]
  %s1 = inlined_call_operand.vmem [shape: f32[2,256], index: 1, kind: output, shape index: {}]
  $region1: #{tile.29} parent=0
    #allocation0 [shape = 'u8[8192]{0}', space=vmem, size = 0x2000, scoped, tag = 'scoped mem for output reshape']
    %v2 = vld [vmem:[%s0] ss:$8 sm:$0xf]
    %vm3 = vcmask 130048
    %4 = vst.msk [vmem:[#allocation0] ss:$8 sm:$0x3] %vm3, %v2
    %s5 = scalar_lea.vmem [#allocation0], 4294967281
    %6 = vst.msk [vmem:[%s5] ss:$8 sm:$0xc] %vm3, %v2
    %s7 = scalar_lea.vmem %s0, 7
    %s8 = smov 3
    %v9 = vld [vmem:[%s7] ss:$16 sm:%s8]
    %s10 = scalar_lea.vmem %s0, 4294967279
    %s11 = smov 12
    %v12 = vld [vmem:[%s10] ss:$16 sm:%s11]
    %vm13 = vcmask 1043458
    %v14 = vsel %vm13, %v12, %v9
    %15 = vrot.lane.b32.xlu0 %v14, 112
    %v16 = vpop.permute.xlu0 %15
    %vm17 = vcmask 1048448
    %18 = vst.msk [vmem:[#allocation0] sm:$0x3] %vm17, %v16
    %s19 = scalar_lea.vmem [#allocation0], 6
    %20 = vst.msk [vmem:[%s19] sm:$0xc] %vm17, %v16
    %s21 = scalar_lea.vmem %s0, 6
    %s22 = smov 3
    %v23 = vld [vmem:[%s21] ss:$16 sm:%s22]
    %s24 = scalar_lea.vmem %s0, 4294967278
    %s25 = smov 12
    %v26 = vld [vmem:[%s24] ss:$16 sm:%s25]
    %vm27 = vcmask 1043458
    %v28 = vsel %vm27, %v26, %v23
    %29 = vrot.lane.b32.xlu0 %v28, 96
    %v30 = vpop.permute.xlu0 %29
    %vm31 = vcmask 917248
    %32 = vst.msk [vmem:[#allocation0] sm:$0x3] %vm31, %v30
    %s33 = scalar_lea.vmem [#allocation0], 6
    %34 = vst.msk [vmem:[%s33] sm:$0xc] %vm31, %v30
    %s35 = scalar_lea.vmem %s0, 5
    %s36 = smov 3
    %v37 = vld [vmem:[%s35] ss:$16 sm:%s36]
    %s38 = scalar_lea.vmem %s0, 4294967277
    %s39 = smov 12
    %v40 = vld [vmem:[%s38] ss:$16 sm:%s39]
    %vm41 = vcmask 1043458
    %v42 = vsel %vm41, %v40, %v37
    %43 = vrot.lane.b32.xlu0 %v42, 80
    %v44 = vpop.permute.xlu0 %43
    %vm45 = vcmask 786048
    %46 = vst.msk [vmem:[#allocation0] sm:$0x3] %vm45, %v44
    %s47 = scalar_lea.vmem [#allocation0], 6
    %48 = vst.msk [vmem:[%s47] sm:$0xc] %vm45, %v44
    %s49 = scalar_lea.vmem %s0, 4
    %s50 = smov 3
    %v51 = vld [vmem:[%s49] ss:$16 sm:%s50]
    %s52 = scalar_lea.vmem %s0, 4294967276
    %s53 = smov 12
    %v54 = vld [vmem:[%s52] ss:$16 sm:%s53]
    %vm55 = vcmask 1043458
    %v56 = vsel %vm55, %v54, %v51
    %57 = vrot.lane.b32.xlu0 %v56, 64
    %v58 = vpop.permute.xlu0 %57
    %vm59 = vcmask 654848
    %60 = vst.msk [vmem:[#allocation0] sm:$0x3] %vm59, %v58
    %s61 = scalar_lea.vmem [#allocation0], 6
    %62 = vst.msk [vmem:[%s61] sm:$0xc] %vm59, %v58
    %s63 = scalar_lea.vmem %s0, 3
    %s64 = smov 3
    %v65 = vld [vmem:[%s63] ss:$16 sm:%s64]
    %s66 = scalar_lea.vmem %s0, 4294967275
    %s67 = smov 12
    %v68 = vld [vmem:[%s66] ss:$16 sm:%s67]
    %vm69 = vcmask 1043458
    %v70 = vsel %vm69, %v68, %v65
    %71 = vrot.lane.b32.xlu0 %v70, 48
    %v72 = vpop.permute.xlu0 %71
    %vm73 = vcmask 523648
    %74 = vst.msk [vmem:[#allocation0] sm:$0x3] %vm73, %v72
    %s75 = scalar_lea.vmem [#allocation0], 6
    %76 = vst.msk [vmem:[%s75] sm:$0xc] %vm73, %v72
    %s77 = scalar_lea.vmem %s0, 2
    %s78 = smov 3
    %v79 = vld [vmem:[%s77] ss:$16 sm:%s78]
    %s80 = scalar_lea.vmem %s0, 4294967274
    %s81 = smov 12
    %v82 = vld [vmem:[%s80] ss:$16 sm:%s81]
    %vm83 = vcmask 1043458
    %v84 = vsel %vm83, %v82, %v79
    %85 = vrot.lane.b32.xlu0 %v84, 32
    %v86 = vpop.permute.xlu0 %85
    %vm87 = vcmask 392448
    %88 = vst.msk [vmem:[#allocation0] sm:$0x3] %vm87, %v86
    %s89 = scalar_lea.vmem [#allocation0], 6
    %90 = vst.msk [vmem:[%s89] sm:$0xc] %vm87, %v86
    %s91 = scalar_lea.vmem %s0, 1
    %s92 = smov 3
    %v93 = vld [vmem:[%s91] ss:$16 sm:%s92]
    %s94 = scalar_lea.vmem %s0, 4294967273
    %s95 = smov 12
    %v96 = vld [vmem:[%s94] ss:$16 sm:%s95]
    %vm97 = vcmask 1043458
    %v98 = vsel %vm97, %v96, %v93
    %99 = vrot.lane.b32.xlu0 %v98, 16
    %v100 = vpop.permute.xlu0 %99
    %vm101 = vcmask 261248
    %102 = vst.msk [vmem:[#allocation0] sm:$0x3] %vm101, %v100
    %s103 = scalar_lea.vmem [#allocation0], 6
    %104 = vst.msk [vmem:[%s103] sm:$0xc] %vm101, %v100
    %s106 = sshllo.u32 0, 2
    %v108 = vld [vmem:[#allocation0] sm:%s106]
    %s109 = sshllo.u32 0, 2
    %110 = vst [vmem:[%s1] sm:%s109] %v108
    %s111 = scalar_lea.vmem [#allocation0], 8
    %v112 = vld [vmem:[%s111] sm:%s106]
    %s113 = sshllo.u32 0, 2
    %s114 = scalar_lea.vmem %s1, 2
    %115 = vst [vmem:[%s114] sm:%s113] %v112

// kernel: generator_forward.11
$region0: #{generator_forward.11}
  #allocation0 [shape = 'u32[]', space=smem, size = 0x4, offset = 0x4, fixed_abs, tag = 'smem constant byte address 0x4 - core index']
  #allocation1 [shape = 'u32[144,128]{1,0:T(1,128)}', space=vmem, size = 0x12000, scoped, tag = 'internal scratch']
  %s0 = inlined_call_operand.vmem [shape: f32[2,128], index: 0, kind: input, shape index: {}]
  %s1 = inlined_call_operand.vmem [shape: f32[2,128], index: 1, kind: input, shape index: {}]
  %s2 = inlined_call_operand.hbm [shape: bf16[128,256], index: 2, kind: input, shape index: {}]
  %s3 = inlined_call_operand.hbm [shape: f32[1,256], index: 3, kind: input, shape index: {}]
  %s4 = inlined_call_operand.hbm [shape: f32[1,128], index: 4, kind: input, shape index: {}]
  %s5 = inlined_call_operand.vmem [shape: f32[2,256], index: 5, kind: output, shape index: {}]
  %s6 = sld [smem:[#allocation0]]
  $region42: #{generator_forward.11} parent=0
    _
  %s8 = ssub.s32 1, %s6
  %s9 = scalar_select 0, %s8, %s6
  $region1: #{generator_forward.11} parent=0
    #allocation2 [shape = 'u8[65536]{0}', space=vmem, size = 0x10000, scoped, tag = 'input window, operand 2, single buffered']
    #allocation3 [shape = 's32[1]{0}', space=sflag, size = 0x4, scoped, tag = 'scoped memory for generator_forward.11']
    #allocation4 [shape = 'u8[1024]{0}', space=vmem, size = 0x400, scoped, tag = 'input window, operand 3, single buffered']
    #allocation5 [shape = 's32[1]{0}', space=sflag, size = 0x4, scoped, tag = 'scoped memory for generator_forward.11']
    #allocation6 [shape = 'u8[512]{0}', space=vmem, size = 0x400, scoped, tag = 'input window, operand 4, single buffered']
    %10 = vsyncpa [#allocation3], 0
    %11 = vsyncpa [#allocation5], 0
    // Predicated region
    $region2: #{generator_forward.11} parent=1 // pred_check
      _
    $region3: #{generator_forward.11} parent=1 // pred_check_branch
      %13 = sbr.rel (0) target = $region5
    $region4: #{generator_forward.11} parent=1 // pred_region
      _
    $region5: #{generator_forward.11} parent=1 // pred_fallthru
      _
    // Predicated region
    $region6: #{generator_forward.11} parent=1 // pred_check
      _
    $region7: #{generator_forward.11} parent=1 // pred_check_branch
      %15 = sbr.rel (0) target = $region9
    $region8: #{generator_forward.11} parent=1 // pred_region
      _
    $region9: #{generator_forward.11} parent=1 // pred_fallthru
      _
    // Predicated region
    $region10: #{generator_forward.11} parent=1 // pred_check
      _
    $region11: #{generator_forward.11} parent=1 // pred_check_branch
      %17 = sbr.rel (0) target = $region13
    $region12: #{generator_forward.11} parent=1 // pred_region
      %s19 = ssub.s32 2048, 2048
      %20 = vsyncadd [#allocation3], %s19
      %s21 = sshll.u32 [#allocation2], 4
      %s22 = int_to_ptr.vmem [resolvable:$true] %s21
      %27 = dma.hbm_to_vmem [thread:$0]  %s2, 2048, %s22, [#allocation3], 128, 128, 8
    $region13: #{generator_forward.11} parent=1 // pred_fallthru
      _
    // Predicated region
    $region14: #{generator_forward.11} parent=1 // pred_check
      _
    $region15: #{generator_forward.11} parent=1 // pred_check_branch
      %29 = sbr.rel (0) target = $region17
    $region16: #{generator_forward.11} parent=1 // pred_region
      %s31 = ssub.s32 32, 32
      %32 = vsyncadd [#allocation5], %s31
      %s34 = sshll.u32 [#allocation4], 4
      %s35 = int_to_ptr.vmem [resolvable:$true] %s34
      %37 = dma.hbm_to_vmem [thread:$0]  %s3, 32, %s35, [#allocation5]
    $region17: #{generator_forward.11} parent=1 // pred_fallthru
      _
    // Predicated region
    $region18: #{generator_forward.11} parent=1 // pred_check
      _
    $region19: #{generator_forward.11} parent=1 // pred_check_branch
      %39 = sbr.rel (0) target = $region21
    $region20: #{generator_forward.11} parent=1 // pred_region
      %s41 = ssub.s32 16, 16
      %42 = vsyncadd [#allocation5], %s41
      %s44 = sshll.u32 [#allocation6], 4
      %s45 = int_to_ptr.vmem [resolvable:$true] %s44
      %47 = dma.hbm_to_vmem [thread:$0]  %s4, 16, %s45, [#allocation5]
    $region21: #{generator_forward.11} parent=1 // pred_fallthru
      _
    // Predicated region
    $region22: #{generator_forward.11} parent=1 // pred_check
      _
    $region23: #{generator_forward.11} parent=1 // pred_check_branch
      %49 = sbr.rel (0) target = $region25
    $region24: #{generator_forward.11} parent=1 // pred_region
      %50 = dma.done [#allocation3], 2048
    $region25: #{generator_forward.11} parent=1 // pred_fallthru
      _
    // Predicated region
    $region26: #{generator_forward.11} parent=1 // pred_check
      _
    $region27: #{generator_forward.11} parent=1 // pred_check_branch
      %52 = sbr.rel (0) target = $region29
    $region28: #{generator_forward.11} parent=1 // pred_region
      %53 = dma.done [#allocation5], 32
    $region29: #{generator_forward.11} parent=1 // pred_fallthru
      _
    // Predicated region
    $region30: #{generator_forward.11} parent=1 // pred_check
      _
    $region31: #{generator_forward.11} parent=1 // pred_check_branch
      %55 = sbr.rel (0) target = $region33
    $region32: #{generator_forward.11} parent=1 // pred_region
      %56 = dma.done [#allocation5], 16
    $region33: #{generator_forward.11} parent=1 // pred_fallthru
      _
    %v58 = vld [vmem:[%s0] sm:$0x3]
    %v59 = vld [vmem:[%s1] sm:$0x1]
    %v60 = vlaneseq
    %v61 = vshrl.u32 %v60, 7
    %v62 = vsub.s32 0, %v61
    %v63 = vrot.slane %v59, %v62
    %v64 = vmul.f32 %v58, %v63
    %v65 = vld [vmem:[%s1 + $0x1] sm:$0x1]
    %v66 = vlaneseq
    %v67 = vshrl.u32 %v66, 7
    %v68 = vsub.s32 0, %v67
    %v69 = vrot.slane %v65, %v68
    %v70 = vadd.f32 %v64, %v69
    %vm71 = vcmp.gt.f32.partialorder %v70, 0.0
    %v72 = vld [vmem:[#allocation6] sm:$0x1]
    %v74 = vlaneseq
    %v75 = vshrl.u32 %v74, 7
    %v76 = vsub.s32 0, %v75
    %v77 = vrot.slane %v72, %v76
    %v79 = vmul.f32 %v77, %v70
    %v80 = vsel %vm71, %v70, %v79
    %v81 = vpack.c.bf16 %v80, %v80
    %v82 = vld [vmem:[#allocation2] sm:$0xff]
    %v83 = vld [vmem:[#allocation2 + $0x8] sm:$0xff]
    %v84 = vld [vmem:[#allocation2 + $0x10] sm:$0xff]
    %v85 = vld [vmem:[#allocation2 + $0x18] sm:$0xff]
    %v86 = vld [vmem:[#allocation2 + $0x20] sm:$0xff]
    %v87 = vld [vmem:[#allocation2 + $0x28] sm:$0xff]
    %v88 = vld [vmem:[#allocation2 + $0x30] sm:$0xff]
    %v89 = vld [vmem:[#allocation2 + $0x38] sm:$0xff]
    %v90 = vld [vmem:[#allocation2 + $0x40] sm:$0xff]
    %v91 = vld [vmem:[#allocation2 + $0x48] sm:$0xff]
    %v92 = vld [vmem:[#allocation2 + $0x50] sm:$0xff]
    %v93 = vld [vmem:[#allocation2 + $0x58] sm:$0xff]
    %v94 = vld [vmem:[#allocation2 + $0x60] sm:$0xff]
    %v95 = vld [vmem:[#allocation2 + $0x68] sm:$0xff]
    %v96 = vld [vmem:[#allocation2 + $0x70] sm:$0xff]
    %v97 = vld [vmem:[#allocation2 + $0x78] sm:$0xff]
    %v98 = vld [vmem:[#allocation4] sm:$0x3]
    %v100 = vlaneseq
    %v101 = vshrl.u32 %v100, 7
    %v102 = vsub.s32 0, %v101
    %v103 = vrot.slane %v98, %v102
    %v104 = vlaneseq
    %v105 = vshrl.u32 %v104, 7
    %v106 = vsub.s32 1, %v105
    %v107 = vrot.slane %v98, %v106
    %v126 = vunpack.c.l.b16 %v82
    %v127 = vunpack.c.h.b16 %v82
    %v128 = vunpack.c.l.b16 %v83
    %v129 = vunpack.c.h.b16 %v83
    %v130 = vunpack.c.l.b16 %v84
    %v131 = vunpack.c.h.b16 %v84
    %v132 = vunpack.c.l.b16 %v85
    %v133 = vunpack.c.h.b16 %v85
    %v134 = vunpack.c.l.b16 %v86
    %v135 = vunpack.c.h.b16 %v86
    %v136 = vunpack.c.l.b16 %v87
    %v137 = vunpack.c.h.b16 %v87
    %v138 = vunpack.c.l.b16 %v88
    %v139 = vunpack.c.h.b16 %v88
    %v140 = vunpack.c.l.b16 %v89
    %v141 = vunpack.c.h.b16 %v89
    %v142 = vunpack.c.l.b16 %v90
    %v143 = vunpack.c.h.b16 %v90
    %v144 = vunpack.c.l.b16 %v91
    %v145 = vunpack.c.h.b16 %v91
    %v146 = vunpack.c.l.b16 %v92
    %v147 = vunpack.c.h.b16 %v92
    %v148 = vunpack.c.l.b16 %v93
    %v149 = vunpack.c.h.b16 %v93
    %v150 = vunpack.c.l.b16 %v94
    %v151 = vunpack.c.h.b16 %v94
    %v152 = vunpack.c.l.b16 %v95
    %v153 = vunpack.c.h.b16 %v95
    %v154 = vunpack.c.l.b16 %v96
    %v155 = vunpack.c.h.b16 %v96
    %v156 = vunpack.c.l.b16 %v97
    %v157 = vunpack.c.h.b16 %v97
    %v158 = vpack.c.b16 %v128, %v126
    %v159 = vpack.c.b16 %v129, %v127
    %v160 = vpack.c.b16 %v132, %v130
    %v161 = vpack.c.b16 %v133, %v131
    %v162 = vpack.c.b16 %v136, %v134
    %v163 = vpack.c.b16 %v137, %v135
    %v164 = vpack.c.b16 %v140, %v138
    %v165 = vpack.c.b16 %v141, %v139
    %v166 = vpack.c.b16 %v144, %v142
    %v167 = vpack.c.b16 %v145, %v143
    %v168 = vpack.c.b16 %v148, %v146
    %v169 = vpack.c.b16 %v149, %v147
    %v170 = vpack.c.b16 %v152, %v150
    %v171 = vpack.c.b16 %v153, %v151
    %v172 = vpack.c.b16 %v156, %v154
    %v173 = vpack.c.b16 %v157, %v155
    %190 = vmatprep.subr.bf16.mxu0 %v159
    %191 = vmatpush1.bf16.msra.mxu0 %v158
    %192 = vmatprep.subr.bf16.mxu0 %v161
    %193 = vmatpush1.bf16.msra.mxu0 %v160
    %194 = vmatprep.subr.bf16.mxu0 %v163
    %195 = vmatpush1.bf16.msra.mxu0 %v162
    %196 = vmatprep.subr.bf16.mxu0 %v165
    %197 = vmatpush1.bf16.msra.mxu0 %v164
    %198 = vmatprep.subr.bf16.mxu0 %v167
    %199 = vmatpush1.bf16.msra.mxu0 %v166
    %200 = vmatprep.subr.bf16.mxu0 %v169
    %201 = vmatpush1.bf16.msra.mxu0 %v168
    %202 = vmatprep.subr.bf16.mxu0 %v171
    %203 = vmatpush1.bf16.msra.mxu0 %v170
    %204 = vmatprep.subr.bf16.mxu0 %v173
    %205 = vmatpush1.bf16.msra.mxu0 %v172
    %206 = vmatprep.subr.bf16.mxu0 0
    %207 = vmatpush1.bf16.msra.mxu0 0
    %208 = vmatprep.subr.bf16.mxu0 0
    %209 = vmatpush1.bf16.msra.mxu0 0
    %210 = vmatprep.subr.bf16.mxu0 0
    %211 = vmatpush1.bf16.msra.mxu0 0
    %212 = vmatprep.subr.bf16.mxu0 0
    %213 = vmatpush1.bf16.msra.mxu0 0
    %214 = vmatprep.subr.bf16.mxu0 0
    %215 = vmatpush1.bf16.msra.mxu0 0
    %216 = vmatprep.subr.bf16.mxu0 0
    %217 = vmatpush1.bf16.msra.mxu0 0
    %218 = vmatprep.subr.bf16.mxu0 0
    %219 = vmatpush1.bf16.msra.mxu0 0
    %220 = vmatprep.subr.bf16.mxu0 0
    %221 = vmatpush1.bf16.msra.mxu0 0
    %222 = vmatprep.mubr.bf16.mxu0 0
    %223 = vmatmul.mubr.bf16.gmra.mrb[0].mxu0 %v81
    %v224 = vpop.f32.mrb[0].mxu0
    %v225 = vadd.f32 %v103, %v224
    %v226 = vpop.f32.mrb[0].mxu0
    %v227 = vadd.f32 %v107, %v226
    %v228 = vpop.f32.mrb[0].mxu0
    %v229 = vpop.f32.mrb[0].mxu0
    %230 = vdwg.mxu0
    %v233 = vcombine.low %v225, %v227
    %v235 = vunpack.c.l.s4 1983009808
    %v236 = vunpack.c.0.s8 %v235
    %v237 = vlaneseq
    %v238 = vshrl.u32 %v237, 7
    %v239 = vsub.s32 %v236, %v238
    %v240 = vrot.slane %v233, %v239
    %242 = vst [vmem:[%s5] sm:$0xf] %v240
    // Predicated region
    $region34: #{generator_forward.11} parent=1 // pred_check
      _
    $region35: #{generator_forward.11} parent=1 // pred_check_branch
      %244 = sbr.rel (0) target = $region37
    $region36: #{generator_forward.11} parent=1 // pred_region
      _
    $region37: #{generator_forward.11} parent=1 // pred_fallthru
      _
    // Predicated region
    $region38: #{generator_forward.11} parent=1 // pred_check
      _
    $region39: #{generator_forward.11} parent=1 // pred_check_branch
      %246 = sbr.rel (0) target = $region41
    $region40: #{generator_forward.11} parent=1 // pred_region
      _
    $region41: #{generator_forward.11} parent=1 // pred_fallthru
      _
    %247 = vsyncpa [#allocation3], 1
    %248 = vsyncpa [#allocation5], 1

// kernel: generator_forward.12
$region0: #{generator_forward.12}
  #allocation0 [shape = 'u32[]', space=smem, size = 0x4, offset = 0x4, fixed_abs, tag = 'smem constant byte address 0x4 - core index']
  #allocation1 [shape = 'u32[144,128]{1,0:T(1,128)}', space=vmem, size = 0x12000, scoped, tag = 'internal scratch']
  %s0 = inlined_call_operand.vmem [shape: f32[32,16], index: 0, kind: input, shape index: {}]
  %s1 = inlined_call_operand.hbm [shape: f32[1,16], index: 1, kind: input, shape index: {}]
  %s2 = inlined_call_operand.hbm [shape: f32[1,16], index: 2, kind: input, shape index: {}]
  %s3 = inlined_call_operand.vmem [shape: f32[2,16], index: 3, kind: output, shape index: {}]
  %s4 = sld [smem:[#allocation0]]
  $region30: #{generator_forward.12} parent=0
    _
  %s6 = ssub.s32 1, %s4
  %s7 = scalar_select 0, %s6, %s4
  $region1: #{generator_forward.12} parent=0
    #allocation2 [shape = 'u8[512]{0}', space=vmem, size = 0x400, scoped, tag = 'input window, operand 1, single buffered']
    #allocation3 [shape = 's32[1]{0}', space=sflag, size = 0x4, scoped, tag = 'scoped memory for generator_forward.12']
    #allocation4 [shape = 'u8[512]{0}', space=vmem, size = 0x400, scoped, tag = 'input window, operand 2, single buffered']
    #allocation5 [shape = 's32[1]{0}', space=sflag, size = 0x4, scoped, tag = 'scoped memory for generator_forward.12']
    %8 = vsyncpa [#allocation3], 0
    %9 = vsyncpa [#allocation5], 0
    // Predicated region
    $region2: #{generator_forward.12} parent=1 // pred_check
      _
    $region3: #{generator_forward.12} parent=1 // pred_check_branch
      %11 = sbr.rel (0) target = $region5
    $region4: #{generator_forward.12} parent=1 // pred_region
      _
    $region5: #{generator_forward.12} parent=1 // pred_fallthru
      _
    // Predicated region
    $region6: #{generator_forward.12} parent=1 // pred_check
      _
    $region7: #{generator_forward.12} parent=1 // pred_check_branch
      %13 = sbr.rel (0) target = $region9
    $region8: #{generator_forward.12} parent=1 // pred_region
      %s15 = ssub.s32 16, 16
      %16 = vsyncadd [#allocation3], %s15
      %s18 = sshll.u32 [#allocation2], 4
      %s19 = int_to_ptr.vmem [resolvable:$true] %s18
      %21 = dma.hbm_to_vmem [thread:$0]  %s1, 16, %s19, [#allocation3]
    $region9: #{generator_forward.12} parent=1 // pred_fallthru
      _
    // Predicated region
    $region10: #{generator_forward.12} parent=1 // pred_check
      _
    $region11: #{generator_forward.12} parent=1 // pred_check_branch
      %23 = sbr.rel (0) target = $region13
    $region12: #{generator_forward.12} parent=1 // pred_region
      %s25 = ssub.s32 16, 16
      %26 = vsyncadd [#allocation5], %s25
      %s28 = sshll.u32 [#allocation4], 4
      %s29 = int_to_ptr.vmem [resolvable:$true] %s28
      %31 = dma.hbm_to_vmem [thread:$0]  %s2, 16, %s29, [#allocation5]
    $region13: #{generator_forward.12} parent=1 // pred_fallthru
      _
    // Predicated region
    $region14: #{generator_forward.12} parent=1 // pred_check
      _
    $region15: #{generator_forward.12} parent=1 // pred_check_branch
      %33 = sbr.rel (0) target = $region17
    $region16: #{generator_forward.12} parent=1 // pred_region
      %34 = dma.done [#allocation3], 16
    $region17: #{generator_forward.12} parent=1 // pred_fallthru
      _
    // Predicated region
    $region18: #{generator_forward.12} parent=1 // pred_check
      _
    $region19: #{generator_forward.12} parent=1 // pred_check_branch
      %36 = sbr.rel (0) target = $region21
    $region20: #{generator_forward.12} parent=1 // pred_region
      %37 = dma.done [#allocation5], 16
    $region21: #{generator_forward.12} parent=1 // pred_fallthru
      _
    %v38 = vld [vmem:[%s0] sm:$0xff]
    %v39 = vld [vmem:[%s0 + $0x8] sm:$0xff]
    %v40 = vld [vmem:[%s0 + $0x10] sm:$0xff]
    %v41 = vld [vmem:[%s0 + $0x18] sm:$0xff]
    %vm42 = vcmask 130048
    %v43 = vsel %vm42, %v38, 0.0
    %v44 = vsel %vm42, %v39, 0.0
    %v45 = vadd.f32 %v43, %v44
    %v46 = vsel %vm42, %v40, 0.0
    %v47 = vadd.f32 %v45, %v46
    %v48 = vsel %vm42, %v41, 0.0
    %v49 = vadd.f32 %v47, %v48
    %v50 = vrot.slane %v49, 4
    %v51 = vadd.f32 %v49, %v50
    %v52 = vrot.slane %v51, 2
    %v53 = vadd.f32 %v51, %v52
    %v54 = vrot.slane %v53, 1
    %v55 = vadd.f32 %v53, %v54
    %v56 = vmul.f32 %v55, 0.03125
    %v57 = vsub.f32 %v38, %v56
    %v58 = vsub.f32 %v39, %v56
    %v59 = vsub.f32 %v40, %v56
    %v60 = vsub.f32 %v41, %v56
    %v61 = vmul.f32 %v57, %v57
    %v62 = vmul.f32 %v58, %v58
    %v63 = vmul.f32 %v59, %v59
    %v64 = vmul.f32 %v60, %v60
    %v65 = vsel %vm42, %v61, 0.0
    %v66 = vsel %vm42, %v62, 0.0
    %v67 = vadd.f32 %v65, %v66
    %v68 = vsel %vm42, %v63, 0.0
    %v69 = vadd.f32 %v67, %v68
    %v70 = vsel %vm42, %v64, 0.0
    %v71 = vadd.f32 %v69, %v70
    %v72 = vrot.slane %v71, 4
    %v73 = vadd.f32 %v71, %v72
    %v74 = vrot.slane %v73, 2
    %v75 = vadd.f32 %v73, %v74
    %v76 = vrot.slane %v75, 1
    %v77 = vadd.f32 %v75, %v76
    %v78 = vmul.f32 %v77, 0.03125
    %v79 = vld [vmem:[#allocation2] sm:$0x1]
    %v80 = vadd.f32 %v78, 1e-05
    %v81 = vrsqrt.pop %v80
    %v82 = vmul.f32 %v79, %v81
    %vm83 = vcmask 122880
    %84 = vst.msk [vmem:[%s3] sm:$0x1] %vm83, %v82
    %v85 = vld [vmem:[#allocation4] sm:$0x1]
    %v86 = vmul.f32 %v56, %v82
    %v87 = vsub.f32 %v85, %v86
    %88 = vst.msk [vmem:[%s3 + $0x1] sm:$0x1] %vm83, %v87
    // Predicated region
    $region22: #{generator_forward.12} parent=1 // pred_check
      _
    $region23: #{generator_forward.12} parent=1 // pred_check_branch
      %90 = sbr.rel (0) target = $region25
    $region24: #{generator_forward.12} parent=1 // pred_region
      _
    $region25: #{generator_forward.12} parent=1 // pred_fallthru
      _
    // Predicated region
    $region26: #{generator_forward.12} parent=1 // pred_check
      _
    $region27: #{generator_forward.12} parent=1 // pred_check_branch
      %92 = sbr.rel (0) target = $region29
    $region28: #{generator_forward.12} parent=1 // pred_region
      _
    $region29: #{generator_forward.12} parent=1 // pred_fallthru
      _
    %93 = vsyncpa [#allocation3], 1
    %94 = vsyncpa [#allocation5], 1

// kernel: tile.34
$region0: #{tile.34}
  %s0 = inlined_call_operand.vmem [shape: f32[2,49,8], index: 0, kind: input, shape index: {}]
  %s1 = inlined_call_operand.vmem [shape: f32[2,392], index: 1, kind: output, shape index: {}]
  $region1: #{tile.34} parent=0
    #allocation0 [shape = 'u8[16384]{0}', space=vmem, size = 0x4000, scoped, tag = 'scoped mem for output reshape']
    %s2 = smov 3
    %v3 = vld [vmem:[%s0] ss:$16 sm:%s2]
    %s4 = smov 12
    %v5 = vld [vmem:[%s0] ss:$16 sm:%s4]
    %vm6 = vcmask 1043458
    %v7 = vsel %vm6, %v5, %v3
    %vm8 = vcmask 64512
    %9 = vst.msk [vmem:[#allocation0] ss:$8 sm:$0xf] %vm8, %v7
    %s10 = scalar_lea.vmem %s0, 56
    %s11 = smov 3
    %v12 = vld [vmem:[%s10] ss:$16 sm:%s11]
    %s13 = scalar_lea.vmem %s0, 56
    %s14 = smov 12
    %v15 = vld [vmem:[%s13] ss:$16 sm:%s14]
    %vm16 = vcmask 1043458
    %v17 = vsel %vm16, %v15, %v12
    %vm18 = vcmask 64512
    %s19 = scalar_lea.vmem [#allocation0], 1
    %20 = vst.msk [vmem:[%s19] ss:$8 sm:$0xf] %vm18, %v17
    %s21 = scalar_lea.vmem %s0, 15
    %s22 = smov 3
    %v23 = vld [vmem:[%s21] ss:$56 sm:%s22]
    %s24 = scalar_lea.vmem %s0, 4294967215
    %s25 = smov 12
    %v26 = vld [vmem:[%s24] ss:$56 sm:%s25]
    %vm27 = vcmask 1043458
    %v28 = vsel %vm27, %v26, %v23
    %s29 = scalar_lea.vmem %s0, 4294967119
    %s30 = smov 48
    %v31 = vld [vmem:[%s29] ss:$56 sm:%s30]
    %vm32 = vcmask 1045508
    %v33 = vsel %vm32, %v31, %v28
    %34 = vrot.lane.b32.xlu0 %v33, 120
    %v35 = vpop.permute.xlu0 %34
    %vm36 = vcmask 1048512
    %37 = vst.msk [vmem:[#allocation0] sm:$0x3] %vm36, %v35
    %s38 = scalar_lea.vmem [#allocation0], 6
    %39 = vst.msk [vmem:[%s38] sm:$0xc] %vm36, %v35
    %s40 = scalar_lea.vmem [#allocation0], 12
    %41 = vst.msk [vmem:[%s40] sm:$0x30] %vm36, %v35
    %s42 = scalar_lea.vmem %s0, 14
    %s43 = smov 3
    %v44 = vld [vmem:[%s42] ss:$56 sm:%s43]
    %s45 = scalar_lea.vmem %s0, 4294967214
    %s46 = smov 12
    %v47 = vld [vmem:[%s45] ss:$56 sm:%s46]
    %vm48 = vcmask 1043458
    %v49 = vsel %vm48, %v47, %v44
    %s50 = scalar_lea.vmem %s0, 4294967118
    %s51 = smov 48
    %v52 = vld [vmem:[%s50] ss:$56 sm:%s51]
    %vm53 = vcmask 1045508
    %v54 = vsel %vm53, %v52, %v49
    %55 = vrot.lane.b32.xlu0 %v54, 112
    %v56 = vpop.permute.xlu0 %55
    %vm57 = vcmask 982912
    %58 = vst.msk [vmem:[#allocation0] sm:$0x3] %vm57, %v56
    %s59 = scalar_lea.vmem [#allocation0], 6
    %60 = vst.msk [vmem:[%s59] sm:$0xc] %vm57, %v56
    %s61 = scalar_lea.vmem [#allocation0], 12
    %62 = vst.msk [vmem:[%s61] sm:$0x30] %vm57, %v56
    %s63 = scalar_lea.vmem %s0, 13
    %s64 = smov 3
    %v65 = vld [vmem:[%s63] ss:$56 sm:%s64]
    %s66 = scalar_lea.vmem %s0, 4294967213
    %s67 = smov 12
    %v68 = vld [vmem:[%s66] ss:$56 sm:%s67]
    %vm69 = vcmask 1043458
    %v70 = vsel %vm69, %v68, %v65
    %s71 = scalar_lea.vmem %s0, 4294967117
    %s72 = smov 48
    %v73 = vld [vmem:[%s71] ss:$56 sm:%s72]
    %vm74 = vcmask 1045508
    %v75 = vsel %vm74, %v73, %v70
    %76 = vrot.lane.b32.xlu0 %v75, 104
    %v77 = vpop.permute.xlu0 %76
    %vm78 = vcmask 917312
    %79 = vst.msk [vmem:[#allocation0] sm:$0x3] %vm78, %v77
    %s80 = scalar_lea.vmem [#allocation0], 6
    %81 = vst.msk [vmem:[%s80] sm:$0xc] %vm78, %v77
    %s82 = scalar_lea.vmem [#allocation0], 12
    %83 = vst.msk [vmem:[%s82] sm:$0x30] %vm78, %v77
    %s84 = scalar_lea.vmem %s0, 12
    %s85 = smov 3
    %v86 = vld [vmem:[%s84] ss:$56 sm:%s85]
    %s87 = scalar_lea.vmem %s0, 4294967212
    %s88 = smov 12
    %v89 = vld [vmem:[%s87] ss:$56 sm:%s88]
    %vm90 = vcmask 1043458
    %v91 = vsel %vm90, %v89, %v86
    %s92 = scalar_lea.vmem %s0, 4294967116
    %s93 = smov 48
    %v94 = vld [vmem:[%s92] ss:$56 sm:%s93]
    %vm95 = vcmask 1045508
    %v96 = vsel %vm95, %v94, %v91
    %97 = vrot.lane.b32.xlu0 %v96, 96
    %v98 = vpop.permute.xlu0 %97
    %vm99 = vcmask 851712
    %100 = vst.msk [vmem:[#allocation0] sm:$0x3] %vm99, %v98
    %s101 = scalar_lea.vmem [#allocation0], 6
    %102 = vst.msk [vmem:[%s101] sm:$0xc] %vm99, %v98
    %s103 = scalar_lea.vmem [#allocation0], 12
    %104 = vst.msk [vmem:[%s103] sm:$0x30] %vm99, %v98
    %s105 = scalar_lea.vmem %s0, 11
    %s106 = smov 3
    %v107 = vld [vmem:[%s105] ss:$56 sm:%s106]
    %s108 = scalar_lea.vmem %s0, 4294967211
    %s109 = smov 12
    %v110 = vld [vmem:[%s108] ss:$56 sm:%s109]
    %vm111 = vcmask 1043458
    %v112 = vsel %vm111, %v110, %v107
    %s113 = scalar_lea.vmem %s0, 4294967115
    %s114 = smov 48
    %v115 = vld [vmem:[%s113] ss:$56 sm:%s114]
    %vm116 = vcmask 1045508
    %v117 = vsel %vm116, %v115, %v112
    %118 = vrot.lane.b32.xlu0 %v117, 88
    %v119 = vpop.permute.xlu0 %118
    %vm120 = vcmask 786112
    %121 = vst.msk [vmem:[#allocation0] sm:$0x3] %vm120, %v119
    %s122 = scalar_lea.vmem [#allocation0], 6
    %123 = vst.msk [vmem:[%s122] sm:$0xc] %vm120, %v119
    %s124 = scalar_lea.vmem [#allocation0], 12
    %125 = vst.msk [vmem:[%s124] sm:$0x30] %vm120, %v119
    %s126 = scalar_lea.vmem %s0, 10
    %s127 = smov 3
    %v128 = vld [vmem:[%s126] ss:$56 sm:%s127]
    %s129 = scalar_lea.vmem %s0, 4294967210
    %s130 = smov 12
    %v131 = vld [vmem:[%s129] ss:$56 sm:%s130]
    %vm132 = vcmask 1043458
    %v133 = vsel %vm132, %v131, %v128
    %s134 = scalar_lea.vmem %s0, 4294967114
    %s135 = smov 48
    %v136 = vld [vmem:[%s134] ss:$56 sm:%s135]
    %vm137 = vcmask 1045508
    %v138 = vsel %vm137, %v136, %v133
    %139 = vrot.lane.b32.xlu0 %v138, 80
    %v140 = vpop.permute.xlu0 %139
    %vm141 = vcmask 720512
    %142 = vst.msk [vmem:[#allocation0] sm:$0x3] %vm141, %v140
    %s143 = scalar_lea.vmem [#allocation0], 6
    %144 = vst.msk [vmem:[%s143] sm:$0xc] %vm141, %v140
    %s145 = scalar_lea.vmem [#allocation0], 12
    %146 = vst.msk [vmem:[%s145] sm:$0x30] %vm141, %v140
    %s147 = scalar_lea.vmem %s0, 9
    %s148 = smov 3
    %v149 = vld [vmem:[%s147] ss:$56 sm:%s148]
    %s150 = scalar_lea.vmem %s0, 4294967209
    %s151 = smov 12
    %v152 = vld [vmem:[%s150] ss:$56 sm:%s151]
    %vm153 = vcmask 1043458
    %v154 = vsel %vm153, %v152, %v149
    %s155 = scalar_lea.vmem %s0, 4294967113
    %s156 = smov 48
    %v157 = vld [vmem:[%s155] ss:$56 sm:%s156]
    %vm158 = vcmask 1045508
    %v159 = vsel %vm158, %v157, %v154
    %160 = vrot.lane.b32.xlu0 %v159, 72
    %v161 = vpop.permute.xlu0 %160
    %vm162 = vcmask 654912
    %163 = vst.msk [vmem:[#allocation0] sm:$0x3] %vm162, %v161
    %s164 = scalar_lea.vmem [#allocation0], 6
    %165 = vst.msk [vmem:[%s164] sm:$0xc] %vm162, %v161
    %s166 = scalar_lea.vmem [#allocation0], 12
    %167 = vst.msk [vmem:[%s166] sm:$0x30] %vm162, %v161
    %s168 = scalar_lea.vmem %s0, 8
    %s169 = smov 3
    %v170 = vld [vmem:[%s168] ss:$56 sm:%s169]
    %s171 = scalar_lea.vmem %s0, 4294967208
    %s172 = smov 12
    %v173 = vld [vmem:[%s171] ss:$56 sm:%s172]
    %vm174 = vcmask 1043458
    %v175 = vsel %vm174, %v173, %v170
    %s176 = scalar_lea.vmem %s0, 4294967112
    %s177 = smov 48
    %v178 = vld [vmem:[%s176] ss:$56 sm:%s177]
    %vm179 = vcmask 1045508
    %v180 = vsel %vm179, %v178, %v175
    %181 = vrot.lane.b32.xlu0 %v180, 64
    %v182 = vpop.permute.xlu0 %181
    %vm183 = vcmask 589312
    %184 = vst.msk [vmem:[#allocation0] sm:$0x3] %vm183, %v182
    %s185 = scalar_lea.vmem [#allocation0], 6
    %186 = vst.msk [vmem:[%s185] sm:$0xc] %vm183, %v182
    %s187 = scalar_lea.vmem [#allocation0], 12
    %188 = vst.msk [vmem:[%s187] sm:$0x30] %vm183, %v182
    %s189 = scalar_lea.vmem %s0, 7
    %s190 = smov 3
    %v191 = vld [vmem:[%s189] ss:$56 sm:%s190]
    %s192 = scalar_lea.vmem %s0, 4294967207
    %s193 = smov 12
    %v194 = vld [vmem:[%s192] ss:$56 sm:%s193]
    %vm195 = vcmask 1043458
    %v196 = vsel %vm195, %v194, %v191
    %s197 = scalar_lea.vmem %s0, 4294967111
    %s198 = smov 48
    %v199 = vld [vmem:[%s197] ss:$56 sm:%s198]
    %vm200 = vcmask 1045508
    %v201 = vsel %vm200, %v199, %v196
    %202 = vrot.lane.b32.xlu0 %v201, 56
    %v203 = vpop.permute.xlu0 %202
    %vm204 = vcmask 523712
    %205 = vst.msk [vmem:[#allocation0] sm:$0x3] %vm204, %v203
    %s206 = scalar_lea.vmem [#allocation0], 6
    %207 = vst.msk [vmem:[%s206] sm:$0xc] %vm204, %v203
    %s208 = scalar_lea.vmem [#allocation0], 12
    %209 = vst.msk [vmem:[%s208] sm:$0x30] %vm204, %v203
    %s210 = scalar_lea.vmem %s0, 6
    %s211 = smov 3
    %v212 = vld [vmem:[%s210] ss:$56 sm:%s211]
    %s213 = scalar_lea.vmem %s0, 4294967206
    %s214 = smov 12
    %v215 = vld [vmem:[%s213] ss:$56 sm:%s214]
    %vm216 = vcmask 1043458
    %v217 = vsel %vm216, %v215, %v212
    %s218 = scalar_lea.vmem %s0, 4294967110
    %s219 = smov 48
    %v220 = vld [vmem:[%s218] ss:$56 sm:%s219]
    %vm221 = vcmask 1045508
    %v222 = vsel %vm221, %v220, %v217
    %223 = vrot.lane.b32.xlu0 %v222, 48
    %v224 = vpop.permute.xlu0 %223
    %vm225 = vcmask 458112
    %226 = vst.msk [vmem:[#allocation0] sm:$0x3] %vm225, %v224
    %s227 = scalar_lea.vmem [#allocation0], 6
    %228 = vst.msk [vmem:[%s227] sm:$0xc] %vm225, %v224
    %s229 = scalar_lea.vmem [#allocation0], 12
    %230 = vst.msk [vmem:[%s229] sm:$0x30] %vm225, %v224
    %s231 = scalar_lea.vmem %s0, 5
    %s232 = smov 3
    %v233 = vld [vmem:[%s231] ss:$56 sm:%s232]
    %s234 = scalar_lea.vmem %s0, 4294967205
    %s235 = smov 12
    %v236 = vld [vmem:[%s234] ss:$56 sm:%s235]
    %vm237 = vcmask 1043458
    %v238 = vsel %vm237, %v236, %v233
    %s239 = scalar_lea.vmem %s0, 4294967109
    %s240 = smov 48
    %v241 = vld [vmem:[%s239] ss:$56 sm:%s240]
    %vm242 = vcmask 1045508
    %v243 = vsel %vm242, %v241, %v238
    %244 = vrot.lane.b32.xlu0 %v243, 40
    %v245 = vpop.permute.xlu0 %244
    %vm246 = vcmask 392512
    %247 = vst.msk [vmem:[#allocation0] sm:$0x3] %vm246, %v245
    %s248 = scalar_lea.vmem [#allocation0], 6
    %249 = vst.msk [vmem:[%s248] sm:$0xc] %vm246, %v245
    %s250 = scalar_lea.vmem [#allocation0], 12
    %251 = vst.msk [vmem:[%s250] sm:$0x30] %vm246, %v245
    %s252 = scalar_lea.vmem %s0, 4
    %s253 = smov 3
    %v254 = vld [vmem:[%s252] ss:$56 sm:%s253]
    %s255 = scalar_lea.vmem %s0, 4294967204
    %s256 = smov 12
    %v257 = vld [vmem:[%s255] ss:$56 sm:%s256]
    %vm258 = vcmask 1043458
    %v259 = vsel %vm258, %v257, %v254
    %s260 = scalar_lea.vmem %s0, 4294967108
    %s261 = smov 48
    %v262 = vld [vmem:[%s260] ss:$56 sm:%s261]
    %vm263 = vcmask 1045508
    %v264 = vsel %vm263, %v262, %v259
    %265 = vrot.lane.b32.xlu0 %v264, 32
    %v266 = vpop.permute.xlu0 %265
    %vm267 = vcmask 326912
    %268 = vst.msk [vmem:[#allocation0] sm:$0x3] %vm267, %v266
    %s269 = scalar_lea.vmem [#allocation0], 6
    %270 = vst.msk [vmem:[%s269] sm:$0xc] %vm267, %v266
    %s271 = scalar_lea.vmem [#allocation0], 12
    %272 = vst.msk [vmem:[%s271] sm:$0x30] %vm267, %v266
    %s273 = scalar_lea.vmem %s0, 3
    %s274 = smov 3
    %v275 = vld [vmem:[%s273] ss:$56 sm:%s274]
    %s276 = scalar_lea.vmem %s0, 4294967203
    %s277 = smov 12
    %v278 = vld [vmem:[%s276] ss:$56 sm:%s277]
    %vm279 = vcmask 1043458
    %v280 = vsel %vm279, %v278, %v275
    %s281 = scalar_lea.vmem %s0, 4294967107
    %s282 = smov 48
    %v283 = vld [vmem:[%s281] ss:$56 sm:%s282]
    %vm284 = vcmask 1045508
    %v285 = vsel %vm284, %v283, %v280
    %286 = vrot.lane.b32.xlu0 %v285, 24
    %v287 = vpop.permute.xlu0 %286
    %vm288 = vcmask 261312
    %289 = vst.msk [vmem:[#allocation0] sm:$0x3] %vm288, %v287
    %s290 = scalar_lea.vmem [#allocation0], 6
    %291 = vst.msk [vmem:[%s290] sm:$0xc] %vm288, %v287
    %s292 = scalar_lea.vmem [#allocation0], 12
    %293 = vst.msk [vmem:[%s292] sm:$0x30] %vm288, %v287
    %s294 = scalar_lea.vmem %s0, 2
    %s295 = smov 3
    %v296 = vld [vmem:[%s294] ss:$56 sm:%s295]
    %s297 = scalar_lea.vmem %s0, 4294967202
    %s298 = smov 12
    %v299 = vld [vmem:[%s297] ss:$56 sm:%s298]
    %vm300 = vcmask 1043458
    %v301 = vsel %vm300, %v299, %v296
    %s302 = scalar_lea.vmem %s0, 4294967106
    %s303 = smov 48
    %v304 = vld [vmem:[%s302] ss:$56 sm:%s303]
    %vm305 = vcmask 1045508
    %v306 = vsel %vm305, %v304, %v301
    %307 = vrot.lane.b32.xlu0 %v306, 16
    %v308 = vpop.permute.xlu0 %307
    %vm309 = vcmask 195712
    %310 = vst.msk [vmem:[#allocation0] sm:$0x3] %vm309, %v308
    %s311 = scalar_lea.vmem [#allocation0], 6
    %312 = vst.msk [vmem:[%s311] sm:$0xc] %vm309, %v308
    %s313 = scalar_lea.vmem [#allocation0], 12
    %314 = vst.msk [vmem:[%s313] sm:$0x30] %vm309, %v308
    %s315 = scalar_lea.vmem %s0, 1
    %s316 = smov 3
    %v317 = vld [vmem:[%s315] ss:$56 sm:%s316]
    %s318 = scalar_lea.vmem %s0, 4294967201
    %s319 = smov 12
    %v320 = vld [vmem:[%s318] ss:$56 sm:%s319]
    %vm321 = vcmask 1043458
    %v322 = vsel %vm321, %v320, %v317
    %s323 = scalar_lea.vmem %s0, 4294967105
    %s324 = smov 48
    %v325 = vld [vmem:[%s323] ss:$56 sm:%s324]
    %vm326 = vcmask 1045508
    %v327 = vsel %vm326, %v325, %v322
    %328 = vrot.lane.b32.xlu0 %v327, 8
    %v329 = vpop.permute.xlu0 %328
    %vm330 = vcmask 130112
    %331 = vst.msk [vmem:[#allocation0] sm:$0x3] %vm330, %v329
    %s332 = scalar_lea.vmem [#allocation0], 6
    %333 = vst.msk [vmem:[%s332] sm:$0xc] %vm330, %v329
    %s334 = scalar_lea.vmem [#allocation0], 12
    %335 = vst.msk [vmem:[%s334] sm:$0x30] %vm330, %v329
    %s337 = sshllo.u32 0, 2
    %v339 = vld [vmem:[#allocation0] sm:%s337]
    %s340 = sshllo.u32 0, 2
    %341 = vst [vmem:[%s1] sm:%s340] %v339
    %s342 = scalar_lea.vmem [#allocation0], 8
    %v343 = vld [vmem:[%s342] sm:%s337]
    %s344 = sshllo.u32 0, 2
    %s345 = scalar_lea.vmem %s1, 2
    %346 = vst [vmem:[%s345] sm:%s344] %v343
    %s347 = scalar_lea.vmem [#allocation0], 16
    %v348 = vld [vmem:[%s347] sm:%s337]
    %s349 = sshllo.u32 0, 2
    %s350 = smul.addr 2, 2
    %s351 = scalar_lea.vmem %s1, %s350
    %352 = vst [vmem:[%s351] sm:%s349] %v348
    %s353 = scalar_lea.vmem [#allocation0], 24
    %v354 = vld [vmem:[%s353] sm:%s337]
    %s355 = sshllo.u32 0, 2
    %s356 = smul.addr 2, 3
    %s357 = scalar_lea.vmem %s1, %s356
    %358 = vst [vmem:[%s357] sm:%s355] %v354

// kernel: generator_forward.13
$region0: #{generator_forward.13}
  #allocation0 [shape = 'u32[]', space=smem, size = 0x4, offset = 0x4, fixed_abs, tag = 'smem constant byte address 0x4 - core index']
  #allocation1 [shape = 'u32[144,128]{1,0:T(1,128)}', space=vmem, size = 0x12000, scoped, tag = 'internal scratch']
  %s0 = inlined_call_operand.vmem [shape: f32[2,256], index: 0, kind: input, shape index: {}]
  %s1 = inlined_call_operand.vmem [shape: f32[2,256], index: 1, kind: input, shape index: {}]
  %s2 = inlined_call_operand.vmem [shape: bf16[256,392], index: 2, kind: input, shape index: {}]
  %s3 = inlined_call_operand.hbm [shape: f32[1,392], index: 3, kind: input, shape index: {}]
  %s4 = inlined_call_operand.hbm [shape: f32[1,256], index: 4, kind: input, shape index: {}]
  %s5 = inlined_call_operand.vmem [shape: f32[2,392], index: 5, kind: output, shape index: {}]
  %s6 = sld [smem:[#allocation0]]
  $region38: #{generator_forward.13} parent=0
    _
  %s8 = ssub.s32 1, %s6
  %s9 = scalar_select 0, %s8, %s6
  $region1: #{generator_forward.13} parent=0
    #allocation2 [shape = 'u8[2048]{0}', space=vmem, size = 0x800, scoped, tag = 'input window, operand 3, single buffered']
    #allocation3 [shape = 's32[1]{0}', space=sflag, size = 0x4, scoped, tag = 'scoped memory for generator_forward.13']
    #allocation4 [shape = 'u8[1024]{0}', space=vmem, size = 0x400, scoped, tag = 'input window, operand 4, single buffered']
    #allocation5 [shape = 's32[1]{0}', space=sflag, size = 0x4, scoped, tag = 'scoped memory for generator_forward.13']
    %10 = vsyncpa [#allocation3], 0
    %11 = vsyncpa [#allocation5], 0
    // Predicated region
    $region2: #{generator_forward.13} parent=1 // pred_check
      _
    $region3: #{generator_forward.13} parent=1 // pred_check_branch
      %13 = sbr.rel (0) target = $region5
    $region4: #{generator_forward.13} parent=1 // pred_region
      _
    $region5: #{generator_forward.13} parent=1 // pred_fallthru
      _
    // Predicated region
    $region6: #{generator_forward.13} parent=1 // pred_check
      _
    $region7: #{generator_forward.13} parent=1 // pred_check_branch
      %15 = sbr.rel (0) target = $region9
    $region8: #{generator_forward.13} parent=1 // pred_region
      _
    $region9: #{generator_forward.13} parent=1 // pred_fallthru
      _
    // Predicated region
    $region10: #{generator_forward.13} parent=1 // pred_check
      _
    $region11: #{generator_forward.13} parent=1 // pred_check_branch
      %17 = sbr.rel (0) target = $region13
    $region12: #{generator_forward.13} parent=1 // pred_region
      _
    $region13: #{generator_forward.13} parent=1 // pred_fallthru
      _
    // Predicated region
    $region14: #{generator_forward.13} parent=1 // pred_check
      _
    $region15: #{generator_forward.13} parent=1 // pred_check_branch
      %19 = sbr.rel (0) target = $region17
    $region16: #{generator_forward.13} parent=1 // pred_region
      %s21 = ssub.s32 64, 64
      %22 = vsyncadd [#allocation3], %s21
      %s24 = sshll.u32 [#allocation2], 4
      %s25 = int_to_ptr.vmem [resolvable:$true] %s24
      %27 = dma.hbm_to_vmem [thread:$0]  %s3, 64, %s25, [#allocation3]
    $region17: #{generator_forward.13} parent=1 // pred_fallthru
      _
    // Predicated region
    $region18: #{generator_forward.13} parent=1 // pred_check
      _
    $region19: #{generator_forward.13} parent=1 // pred_check_branch
      %29 = sbr.rel (0) target = $region21
    $region20: #{generator_forward.13} parent=1 // pred_region
      %s31 = ssub.s32 32, 32
      %32 = vsyncadd [#allocation5], %s31
      %s34 = sshll.u32 [#allocation4], 4
      %s35 = int_to_ptr.vmem [resolvable:$true] %s34
      %37 = dma.hbm_to_vmem [thread:$0]  %s4, 32, %s35, [#allocation5]
    $region21: #{generator_forward.13} parent=1 // pred_fallthru
      _
    // Predicated region
    $region22: #{generator_forward.13} parent=1 // pred_check
      _
    $region23: #{generator_forward.13} parent=1 // pred_check_branch
      %39 = sbr.rel (0) target = $region25
    $region24: #{generator_forward.13} parent=1 // pred_region
      %40 = dma.done [#allocation3], 64
    $region25: #{generator_forward.13} parent=1 // pred_fallthru
      _
    // Predicated region
    $region26: #{generator_forward.13} parent=1 // pred_check
      _
    $region27: #{generator_forward.13} parent=1 // pred_check_branch
      %42 = sbr.rel (0) target = $region29
    $region28: #{generator_forward.13} parent=1 // pred_region
      %43 = dma.done [#allocation5], 32
    $region29: #{generator_forward.13} parent=1 // pred_fallthru
      _
    %v44 = vld [vmem:[%s0] sm:$0xf]
    %v45 = vld [vmem:[%s1] ss:$2 sm:$0x3]
    %v47 = vlaneseq
    %v48 = vshrl.u32 %v47, 7
    %v49 = vsub.s32 0, %v48
    %v50 = vrot.slane %v45, %v49
    %v51 = vlaneseq
    %v52 = vshrl.u32 %v51, 7
    %v53 = vsub.s32 1, %v52
    %v54 = vrot.slane %v45, %v53
    %v55 = vcombine.low %v50, %v54
    %v57 = vunpack.c.l.s4 1983009808
    %v58 = vunpack.c.0.s8 %v57
    %v59 = vlaneseq
    %v60 = vshrl.u32 %v59, 7
    %v61 = vsub.s32 %v58, %v60
    %v62 = vrot.slane %v55, %v61
    %v64 = vmul.f32 %v44, %v62
    %s65 = scalar_lea.vmem %s1, 1
    %v66 = vld [vmem:[%s65] ss:$2 sm:$0x3]
    %v68 = vlaneseq
    %v69 = vshrl.u32 %v68, 7
    %v70 = vsub.s32 0, %v69
    %v71 = vrot.slane %v66, %v70
    %v72 = vlaneseq
    %v73 = vshrl.u32 %v72, 7
    %v74 = vsub.s32 1, %v73
    %v75 = vrot.slane %v66, %v74
    %v76 = vcombine.low %v71, %v75
    %v78 = vunpack.c.l.s4 1983009808
    %v79 = vunpack.c.0.s8 %v78
    %v80 = vlaneseq
    %v81 = vshrl.u32 %v80, 7
    %v82 = vsub.s32 %v79, %v81
    %v83 = vrot.slane %v76, %v82
    %v85 = vadd.f32 %v64, %v83
    %vm86 = vcmp.gt.f32.partialorder %v85, 0.0
    %v87 = vld [vmem:[#allocation4] sm:$0x3]
    %v89 = vlaneseq
    %v90 = vshrl.u32 %v89, 7
    %v91 = vsub.s32 0, %v90
    %v92 = vrot.slane %v87, %v91
    %v93 = vlaneseq
    %v94 = vshrl.u32 %v93, 7
    %v95 = vsub.s32 1, %v94
    %v96 = vrot.slane %v87, %v95
    %v101 = vunpack.c.l.s4 1983009808
    %v102 = vunpack.c.0.s8 %v101
    %v103 = vlaneseq
    %v104 = vshrl.u32 %v103, 7
    %v105 = vsub.s32 %v102, %v104
    %v106 = vrot.slane %v85, %v105
    %v107 = vcombine.high %v106, %v106
    %v110 = vmul.f32 %v92, %v106
    %v111 = vmul.f32 %v96, %v107
    %v114 = vcombine.low %v110, %v111
    %v116 = vunpack.c.l.s4 1983009808
    %v117 = vunpack.c.0.s8 %v116
    %v118 = vlaneseq
    %v119 = vshrl.u32 %v118, 7
    %v120 = vsub.s32 %v117, %v119
    %v121 = vrot.slane %v114, %v120
    %v123 = vsel %vm86, %v85, %v121
    %v126 = vunpack.c.l.s4 1983009808
    %v127 = vunpack.c.0.s8 %v126
    %v128 = vlaneseq
    %v129 = vshrl.u32 %v128, 7
    %v130 = vsub.s32 %v127, %v129
    %v131 = vrot.slane %v123, %v130
    %v132 = vcombine.high %v131, %v131
    %v135 = vpack.c.bf16 %v131, %v131
    %v136 = vpack.c.bf16 %v132, %v132
    %v137 = vld [vmem:[%s2] sm:$0xff]
    %v138 = vld [vmem:[%s2 + $0x8] sm:$0xff]
    %v139 = vld [vmem:[%s2 + $0x10] sm:$0xff]
    %v140 = vld [vmem:[%s2 + $0x18] sm:$0xff]
    %v141 = vld [vmem:[%s2 + $0x20] sm:$0xff]
    %v142 = vld [vmem:[%s2 + $0x28] sm:$0xff]
    %v143 = vld [vmem:[%s2 + $0x30] sm:$0xff]
    %v144 = vld [vmem:[%s2 + $0x38] sm:$0xff]
    %v145 = vld [vmem:[%s2 + $0x40] sm:$0xff]
    %v146 = vld [vmem:[%s2 + $0x48] sm:$0xff]
    %v147 = vld [vmem:[%s2 + $0x50] sm:$0xff]
    %v148 = vld [vmem:[%s2 + $0x58] sm:$0xff]
    %v149 = vld [vmem:[%s2 + $0x60] sm:$0xff]
    %v150 = vld [vmem:[%s2 + $0x68] sm:$0xff]
    %v151 = vld [vmem:[%s2 + $0x70] sm:$0xff]
    %v152 = vld [vmem:[%s2 + $0x78] sm:$0xff]
    %v153 = vld [vmem:[%s2 + $0x80] sm:$0xff]
    %v154 = vld [vmem:[%s2 + $0x88] sm:$0xff]
    %v155 = vld [vmem:[%s2 + $0x90] sm:$0xff]
    %v156 = vld [vmem:[%s2 + $0x98] sm:$0xff]
    %v157 = vld [vmem:[%s2 + $0xa0] sm:$0xff]
    %v158 = vld [vmem:[%s2 + $0xa8] sm:$0xff]
    %v159 = vld [vmem:[%s2 + $0xb0] sm:$0xff]
    %v160 = vld [vmem:[%s2 + $0xb8] sm:$0xff]
    %v161 = vld [vmem:[%s2 + $0xc0] sm:$0xff]
    %v162 = vld [vmem:[%s2 + $0xc8] sm:$0xff]
    %v163 = vld [vmem:[%s2 + $0xd0] sm:$0xff]
    %v164 = vld [vmem:[%s2 + $0xd8] sm:$0xff]
    %v165 = vld [vmem:[%s2 + $0xe0] sm:$0xff]
    %v166 = vld [vmem:[%s2 + $0xe8] sm:$0xff]
    %v167 = vld [vmem:[%s2 + $0xf0] sm:$0xff]
    %v168 = vld [vmem:[%s2 + $0xf8] sm:$0xff]
    %v169 = vld [vmem:[%s2 + $0x100] sm:$0xff]
    %v170 = vld [vmem:[%s2 + $0x108] sm:$0xff]
    %v171 = vld [vmem:[%s2 + $0x110] sm:$0xff]
    %v172 = vld [vmem:[%s2 + $0x118] sm:$0xff]
    %v173 = vld [vmem:[%s2 + $0x120] sm:$0xff]
    %v174 = vld [vmem:[%s2 + $0x128] sm:$0xff]
    %v175 = vld [vmem:[%s2 + $0x130] sm:$0xff]
    %v176 = vld [vmem:[%s2 + $0x138] sm:$0xff]
    %v177 = vld [vmem:[%s2 + $0x140] sm:$0xff]
    %v178 = vld [vmem:[%s2 + $0x148] sm:$0xff]
    %v179 = vld [vmem:[%s2 + $0x150] sm:$0xff]
    %v180 = vld [vmem:[%s2 + $0x158] sm:$0xff]
    %v181 = vld [vmem:[%s2 + $0x160] sm:$0xff]
    %v182 = vld [vmem:[%s2 + $0x168] sm:$0xff]
    %v183 = vld [vmem:[%s2 + $0x170] sm:$0xff]
    %v184 = vld [vmem:[%s2 + $0x178] sm:$0xff]
    %v185 = vld [vmem:[%s2 + $0x180] sm:$0xff]
    %v186 = vld [vmem:[%s2 + $0x188] sm:$0xff]
    %v187 = vld [vmem:[%s2 + $0x190] sm:$0xff]
    %v188 = vld [vmem:[%s2 + $0x198] sm:$0xff]
    %v189 = vld [vmem:[%s2 + $0x1a0] sm:$0xff]
    %v190 = vld [vmem:[%s2 + $0x1a8] sm:$0xff]
    %v191 = vld [vmem:[%s2 + $0x1b0] sm:$0xff]
    %v192 = vld [vmem:[%s2 + $0x1b8] sm:$0xff]
    %v193 = vld [vmem:[%s2 + $0x1c0] sm:$0xff]
    %v194 = vld [vmem:[%s2 + $0x1c8] sm:$0xff]
    %v195 = vld [vmem:[%s2 + $0x1d0] sm:$0xff]
    %v196 = vld [vmem:[%s2 + $0x1d8] sm:$0xff]
    %v197 = vld [vmem:[%s2 + $0x1e0] sm:$0xff]
    %v198 = vld [vmem:[%s2 + $0x1e8] sm:$0xff]
    %v199 = vld [vmem:[%s2 + $0x1f0] sm:$0xff]
    %v200 = vld [vmem:[%s2 + $0x1f8] sm:$0xff]
    %v201 = vld [vmem:[#allocation2] sm:$0xf]
    %v203 = vlaneseq
    %v204 = vshrl.u32 %v203, 7
    %v205 = vsub.s32 0, %v204
    %v206 = vrot.slane %v201, %v205
    %v207 = vlaneseq
    %v208 = vshrl.u32 %v207, 7
    %v209 = vsub.s32 1, %v208
    %v210 = vrot.slane %v201, %v209
    %v211 = vlaneseq
    %v212 = vshrl.u32 %v211, 7
    %v213 = vsub.s32 2, %v212
    %v214 = vrot.slane %v201, %v213
    %v215 = vlaneseq
    %v216 = vshrl.u32 %v215, 7
    %v217 = vsub.s32 3, %v216
    %v218 = vrot.slane %v201, %v217
    %v287 = vunpack.c.l.b16 %v137
    %v288 = vunpack.c.h.b16 %v137
    %v289 = vunpack.c.l.b16 %v138
    %v290 = vunpack.c.h.b16 %v138
    %v291 = vunpack.c.l.b16 %v139
    %v292 = vunpack.c.h.b16 %v139
    %v293 = vunpack.c.l.b16 %v140
    %v294 = vunpack.c.h.b16 %v140
    %v295 = vunpack.c.l.b16 %v141
    %v296 = vunpack.c.h.b16 %v141
    %v297 = vunpack.c.l.b16 %v142
    %v298 = vunpack.c.h.b16 %v142
    %v299 = vunpack.c.l.b16 %v143
    %v300 = vunpack.c.h.b16 %v143
    %v301 = vunpack.c.l.b16 %v144
    %v302 = vunpack.c.h.b16 %v144
    %v303 = vunpack.c.l.b16 %v145
    %v304 = vunpack.c.h.b16 %v145
    %v305 = vunpack.c.l.b16 %v146
    %v306 = vunpack.c.h.b16 %v146
    %v307 = vunpack.c.l.b16 %v147
    %v308 = vunpack.c.h.b16 %v147
    %v309 = vunpack.c.l.b16 %v148
    %v310 = vunpack.c.h.b16 %v148
    %v311 = vunpack.c.l.b16 %v149
    %v312 = vunpack.c.h.b16 %v149
    %v313 = vunpack.c.l.b16 %v150
    %v314 = vunpack.c.h.b16 %v150
    %v315 = vunpack.c.l.b16 %v151
    %v316 = vunpack.c.h.b16 %v151
    %v317 = vunpack.c.l.b16 %v152
    %v318 = vunpack.c.h.b16 %v152
    %v319 = vunpack.c.l.b16 %v153
    %v320 = vunpack.c.h.b16 %v153
    %v321 = vunpack.c.l.b16 %v154
    %v322 = vunpack.c.h.b16 %v154
    %v323 = vunpack.c.l.b16 %v155
    %v324 = vunpack.c.h.b16 %v155
    %v325 = vunpack.c.l.b16 %v156
    %v326 = vunpack.c.h.b16 %v156
    %v327 = vunpack.c.l.b16 %v157
    %v328 = vunpack.c.h.b16 %v157
    %v329 = vunpack.c.l.b16 %v158
    %v330 = vunpack.c.h.b16 %v158
    %v331 = vunpack.c.l.b16 %v159
    %v332 = vunpack.c.h.b16 %v159
    %v333 = vunpack.c.l.b16 %v160
    %v334 = vunpack.c.h.b16 %v160
    %v335 = vunpack.c.l.b16 %v161
    %v336 = vunpack.c.h.b16 %v161
    %v337 = vunpack.c.l.b16 %v162
    %v338 = vunpack.c.h.b16 %v162
    %v339 = vunpack.c.l.b16 %v163
    %v340 = vunpack.c.h.b16 %v163
    %v341 = vunpack.c.l.b16 %v164
    %v342 = vunpack.c.h.b16 %v164
    %v343 = vunpack.c.l.b16 %v165
    %v344 = vunpack.c.h.b16 %v165
    %v345 = vunpack.c.l.b16 %v166
    %v346 = vunpack.c.h.b16 %v166
    %v347 = vunpack.c.l.b16 %v167
    %v348 = vunpack.c.h.b16 %v167
    %v349 = vunpack.c.l.b16 %v168
    %v350 = vunpack.c.h.b16 %v168
    %v351 = vunpack.c.l.b16 %v169
    %v352 = vunpack.c.h.b16 %v169
    %v353 = vunpack.c.l.b16 %v170
    %v354 = vunpack.c.h.b16 %v170
    %v355 = vunpack.c.l.b16 %v171
    %v356 = vunpack.c.h.b16 %v171
    %v357 = vunpack.c.l.b16 %v172
    %v358 = vunpack.c.h.b16 %v172
    %v359 = vunpack.c.l.b16 %v173
    %v360 = vunpack.c.h.b16 %v173
    %v361 = vunpack.c.l.b16 %v174
    %v362 = vunpack.c.h.b16 %v174
    %v363 = vunpack.c.l.b16 %v175
    %v364 = vunpack.c.h.b16 %v175
    %v365 = vunpack.c.l.b16 %v176
    %v366 = vunpack.c.h.b16 %v176
    %v367 = vunpack.c.l.b16 %v177
    %v368 = vunpack.c.h.b16 %v177
    %v369 = vunpack.c.l.b16 %v178
    %v370 = vunpack.c.h.b16 %v178
    %v371 = vunpack.c.l.b16 %v179
    %v372 = vunpack.c.h.b16 %v179
    %v373 = vunpack.c.l.b16 %v180
    %v374 = vunpack.c.h.b16 %v180
    %v375 = vunpack.c.l.b16 %v181
    %v376 = vunpack.c.h.b16 %v181
    %v377 = vunpack.c.l.b16 %v182
    %v378 = vunpack.c.h.b16 %v182
    %v379 = vunpack.c.l.b16 %v183
    %v380 = vunpack.c.h.b16 %v183
    %v381 = vunpack.c.l.b16 %v184
    %v382 = vunpack.c.h.b16 %v184
    %v383 = vunpack.c.l.b16 %v185
    %v384 = vunpack.c.h.b16 %v185
    %v385 = vunpack.c.l.b16 %v186
    %v386 = vunpack.c.h.b16 %v186
    %v387 = vunpack.c.l.b16 %v187
    %v388 = vunpack.c.h.b16 %v187
    %v389 = vunpack.c.l.b16 %v188
    %v390 = vunpack.c.h.b16 %v188
    %v391 = vunpack.c.l.b16 %v189
    %v392 = vunpack.c.h.b16 %v189
    %v393 = vunpack.c.l.b16 %v190
    %v394 = vunpack.c.h.b16 %v190
    %v395 = vunpack.c.l.b16 %v191
    %v396 = vunpack.c.h.b16 %v191
    %v397 = vunpack.c.l.b16 %v192
    %v398 = vunpack.c.h.b16 %v192
    %v399 = vunpack.c.l.b16 %v193
    %v400 = vunpack.c.h.b16 %v193
    %v401 = vunpack.c.l.b16 %v194
    %v402 = vunpack.c.h.b16 %v194
    %v403 = vunpack.c.l.b16 %v195
    %v404 = vunpack.c.h.b16 %v195
    %v405 = vunpack.c.l.b16 %v196
    %v406 = vunpack.c.h.b16 %v196
    %v407 = vunpack.c.l.b16 %v197
    %v408 = vunpack.c.h.b16 %v197
    %v409 = vunpack.c.l.b16 %v198
    %v410 = vunpack.c.h.b16 %v198
    %v411 = vunpack.c.l.b16 %v199
    %v412 = vunpack.c.h.b16 %v199
    %v413 = vunpack.c.l.b16 %v200
    %v414 = vunpack.c.h.b16 %v200
    %v415 = vpack.c.b16 %v291, %v287
    %v416 = vpack.c.b16 %v292, %v288
    %v417 = vpack.c.b16 %v293, %v289
    %v418 = vpack.c.b16 %v294, %v290
    %v419 = vpack.c.b16 %v299, %v295
    %v420 = vpack.c.b16 %v300, %v296
    %v421 = vpack.c.b16 %v301, %v297
    %v422 = vpack.c.b16 %v302, %v298
    %v423 = vpack.c.b16 %v307, %v303
    %v424 = vpack.c.b16 %v308, %v304
    %v425 = vpack.c.b16 %v309, %v305
    %v426 = vpack.c.b16 %v310, %v306
    %v427 = vpack.c.b16 %v315, %v311
    %v428 = vpack.c.b16 %v316, %v312
    %v429 = vpack.c.b16 %v317, %v313
    %v430 = vpack.c.b16 %v318, %v314
    %v431 = vpack.c.b16 %v323, %v319
    %v432 = vpack.c.b16 %v324, %v320
    %v433 = vpack.c.b16 %v325, %v321
    %v434 = vpack.c.b16 %v326, %v322
    %v435 = vpack.c.b16 %v331, %v327
    %v436 = vpack.c.b16 %v332, %v328
    %v437 = vpack.c.b16 %v333, %v329
    %v438 = vpack.c.b16 %v334, %v330
    %v439 = vpack.c.b16 %v339, %v335
    %v440 = vpack.c.b16 %v340, %v336
    %v441 = vpack.c.b16 %v341, %v337
    %v442 = vpack.c.b16 %v342, %v338
    %v443 = vpack.c.b16 %v347, %v343
    %v444 = vpack.c.b16 %v348, %v344
    %v445 = vpack.c.b16 %v349, %v345
    %v446 = vpack.c.b16 %v350, %v346
    %v447 = vpack.c.b16 %v355, %v351
    %v448 = vpack.c.b16 %v356, %v352
    %v449 = vpack.c.b16 %v357, %v353
    %v450 = vpack.c.b16 %v358, %v354
    %v451 = vpack.c.b16 %v363, %v359
    %v452 = vpack.c.b16 %v364, %v360
    %v453 = vpack.c.b16 %v365, %v361
    %v454 = vpack.c.b16 %v366, %v362
    %v455 = vpack.c.b16 %v371, %v367
    %v456 = vpack.c.b16 %v372, %v368
    %v457 = vpack.c.b16 %v373, %v369
    %v458 = vpack.c.b16 %v374, %v370
    %v459 = vpack.c.b16 %v379, %v375
    %v460 = vpack.c.b16 %v380, %v376
    %v461 = vpack.c.b16 %v381, %v377
    %v462 = vpack.c.b16 %v382, %v378
    %v463 = vpack.c.b16 %v387, %v383
    %v464 = vpack.c.b16 %v388, %v384
    %v465 = vpack.c.b16 %v389, %v385
    %v466 = vpack.c.b16 %v390, %v386
    %v467 = vpack.c.b16 %v395, %v391
    %v468 = vpack.c.b16 %v396, %v392
    %v469 = vpack.c.b16 %v397, %v393
    %v470 = vpack.c.b16 %v398, %v394
    %v471 = vpack.c.b16 %v403, %v399
    %v472 = vpack.c.b16 %v404, %v400
    %v473 = vpack.c.b16 %v405, %v401
    %v474 = vpack.c.b16 %v406, %v402
    %v475 = vpack.c.b16 %v411, %v407
    %v476 = vpack.c.b16 %v412, %v408
    %v477 = vpack.c.b16 %v413, %v409
    %v478 = vpack.c.b16 %v414, %v410
    %543 = vmatprep.subr.bf16.mxu0 %v416
    %544 = vmatpush1.bf16.msra.mxu0 %v415
    %545 = vmatprep.subr.bf16.mxu0 %v420
    %546 = vmatpush1.bf16.msra.mxu0 %v419
    %547 = vmatprep.subr.bf16.mxu0 %v424
    %548 = vmatpush1.bf16.msra.mxu0 %v423
    %549 = vmatprep.subr.bf16.mxu0 %v428
    %550 = vmatpush1.bf16.msra.mxu0 %v427
    %551 = vmatprep.subr.bf16.mxu0 %v432
    %552 = vmatpush1.bf16.msra.mxu0 %v431
    %553 = vmatprep.subr.bf16.mxu0 %v436
    %554 = vmatpush1.bf16.msra.mxu0 %v435
    %555 = vmatprep.subr.bf16.mxu0 %v440
    %556 = vmatpush1.bf16.msra.mxu0 %v439
    %557 = vmatprep.subr.bf16.mxu0 %v444
    %558 = vmatpush1.bf16.msra.mxu0 %v443
    %559 = vmatprep.subr.bf16.mxu0 %v448
    %560 = vmatpush1.bf16.msra.mxu0 %v447
    %561 = vmatprep.subr.bf16.mxu0 %v452
    %562 = vmatpush1.bf16.msra.mxu0 %v451
    %563 = vmatprep.subr.bf16.mxu0 %v456
    %564 = vmatpush1.bf16.msra.mxu0 %v455
    %565 = vmatprep.subr.bf16.mxu0 %v460
    %566 = vmatpush1.bf16.msra.mxu0 %v459
    %567 = vmatprep.subr.bf16.mxu0 %v464
    %568 = vmatpush1.bf16.msra.mxu0 %v463
    %569 = vmatprep.subr.bf16.mxu0 %v468
    %570 = vmatpush1.bf16.msra.mxu0 %v467
    %571 = vmatprep.subr.bf16.mxu0 %v472
    %572 = vmatpush1.bf16.msra.mxu0 %v471
    %573 = vmatprep.subr.bf16.mxu0 %v476
    %574 = vmatpush1.bf16.msra.mxu0 %v475
    %575 = vmatprep.mubr.bf16.mxu0 %v136
    %576 = vmatmul.mubr.bf16.gmra.mrb[0].mxu0 %v135
    %v577 = vpop.f32.mrb[0].mxu0
    %v578 = vadd.f32 %v206, %v577
    %v579 = vpop.f32.mrb[0].mxu0
    %v580 = vadd.f32 %v210, %v579
    %v581 = vpop.f32.mrb[0].mxu0
    %v582 = vpop.f32.mrb[0].mxu0
    %583 = vdwg.mxu0
    %584 = vmatprep.subr.bf16.mxu0 %v418
    %585 = vmatpush1.bf16.msra.mxu0 %v417
    %586 = vmatprep.subr.bf16.mxu0 %v422
    %587 = vmatpush1.bf16.msra.mxu0 %v421
    %588 = vmatprep.subr.bf16.mxu0 %v426
    %589 = vmatpush1.bf16.msra.mxu0 %v425
    %590 = vmatprep.subr.bf16.mxu0 %v430
    %591 = vmatpush1.bf16.msra.mxu0 %v429
    %592 = vmatprep.subr.bf16.mxu0 %v434
    %593 = vmatpush1.bf16.msra.mxu0 %v433
    %594 = vmatprep.subr.bf16.mxu0 %v438
    %595 = vmatpush1.bf16.msra.mxu0 %v437
    %596 = vmatprep.subr.bf16.mxu0 %v442
    %597 = vmatpush1.bf16.msra.mxu0 %v441
    %598 = vmatprep.subr.bf16.mxu0 %v446
    %599 = vmatpush1.bf16.msra.mxu0 %v445
    %600 = vmatprep.subr.bf16.mxu0 %v450
    %601 = vmatpush1.bf16.msra.mxu0 %v449
    %602 = vmatprep.subr.bf16.mxu0 %v454
    %603 = vmatpush1.bf16.msra.mxu0 %v453
    %604 = vmatprep.subr.bf16.mxu0 %v458
    %605 = vmatpush1.bf16.msra.mxu0 %v457
    %606 = vmatprep.subr.bf16.mxu0 %v462
    %607 = vmatpush1.bf16.msra.mxu0 %v461
    %608 = vmatprep.subr.bf16.mxu0 %v466
    %609 = vmatpush1.bf16.msra.mxu0 %v465
    %610 = vmatprep.subr.bf16.mxu0 %v470
    %611 = vmatpush1.bf16.msra.mxu0 %v469
    %612 = vmatprep.subr.bf16.mxu0 %v474
    %613 = vmatpush1.bf16.msra.mxu0 %v473
    %614 = vmatprep.subr.bf16.mxu0 %v478
    %615 = vmatpush1.bf16.msra.mxu0 %v477
    %616 = vmatprep.mubr.bf16.mxu0 %v136
    %617 = vmatmul.mubr.bf16.gmra.mrb[0].mxu0 %v135
    %v618 = vpop.f32.mrb[0].mxu0
    %v619 = vadd.f32 %v214, %v618
    %v620 = vpop.f32.mrb[0].mxu0
    %v621 = vadd.f32 %v218, %v620
    %v622 = vpop.f32.mrb[0].mxu0
    %v623 = vpop.f32.mrb[0].mxu0
    %624 = vdwg.mxu0
    %v629 = vcombine.low %v578, %v580
    %v630 = vcombine.low %v619, %v621
    %v632 = vunpack.c.l.s4 1983009808
    %v633 = vunpack.c.0.s8 %v632
    %v634 = vlaneseq
    %v635 = vshrl.u32 %v634, 7
    %v636 = vsub.s32 %v633, %v635
    %v637 = vrot.slane %v629, %v636
    %v639 = vunpack.c.l.s4 1983009808
    %v640 = vunpack.c.0.s8 %v639
    %v641 = vlaneseq
    %v642 = vshrl.u32 %v641, 7
    %v643 = vsub.s32 %v640, %v642
    %v644 = vrot.slane %v630, %v643
    %v645 = vcombine.low %v637, %v644
    %vm647 = vcmask 1041408
    %vm648 = vcmask 1043458
    %vm649 = vmor %vm648, %vm647
    %vm650 = vcmask 1045508
    %vm651 = vmor %vm650, %vm649
    %vm652 = vcmask 64518
    %vm653 = vmor %vm652, %vm651
    %654 = vst.msk [vmem:[%s5] sm:$0xff] %vm653, %v645
    // Predicated region
    $region30: #{generator_forward.13} parent=1 // pred_check
      _
    $region31: #{generator_forward.13} parent=1 // pred_check_branch
      %656 = sbr.rel (0) target = $region33
    $region32: #{generator_forward.13} parent=1 // pred_region
      _
    $region33: #{generator_forward.13} parent=1 // pred_fallthru
      _
    // Predicated region
    $region34: #{generator_forward.13} parent=1 // pred_check
      _
    $region35: #{generator_forward.13} parent=1 // pred_check_branch
      %658 = sbr.rel (0) target = $region37
    $region36: #{generator_forward.13} parent=1 // pred_region
      _
    $region37: #{generator_forward.13} parent=1 // pred_fallthru
      _
    %659 = vsyncpa [#allocation3], 1
    %660 = vsyncpa [#allocation5], 1

// kernel: generator_forward.14
$region0: #{generator_forward.14}
  #allocation0 [shape = 'u32[]', space=smem, size = 0x4, offset = 0x4, fixed_abs, tag = 'smem constant byte address 0x4 - core index']
  #allocation1 [shape = 'u32[144,128]{1,0:T(1,128)}', space=vmem, size = 0x12000, scoped, tag = 'internal scratch']
  %s0 = inlined_call_operand.vmem [shape: f32[98,8], index: 0, kind: input, shape index: {}]
  %s1 = inlined_call_operand.hbm [shape: f32[1,8], index: 1, kind: input, shape index: {}]
  %s2 = inlined_call_operand.hbm [shape: f32[1,8], index: 2, kind: input, shape index: {}]
  %s3 = inlined_call_operand.vmem [shape: f32[2,8], index: 3, kind: output, shape index: {}]
  %s4 = sld [smem:[#allocation0]]
  $region30: #{generator_forward.14} parent=0
    _
  %s6 = ssub.s32 1, %s4
  %s7 = scalar_select 0, %s6, %s4
  $region1: #{generator_forward.14} parent=0
    #allocation2 [shape = 'u8[512]{0}', space=vmem, size = 0x400, scoped, tag = 'input window, operand 1, single buffered']
    #allocation3 [shape = 's32[1]{0}', space=sflag, size = 0x4, scoped, tag = 'scoped memory for generator_forward.14']
    #allocation4 [shape = 'u8[512]{0}', space=vmem, size = 0x400, scoped, tag = 'input window, operand 2, single buffered']
    #allocation5 [shape = 's32[1]{0}', space=sflag, size = 0x4, scoped, tag = 'scoped memory for generator_forward.14']
    %8 = vsyncpa [#allocation3], 0
    %9 = vsyncpa [#allocation5], 0
    // Predicated region
    $region2: #{generator_forward.14} parent=1 // pred_check
      _
    $region3: #{generator_forward.14} parent=1 // pred_check_branch
      %11 = sbr.rel (0) target = $region5
    $region4: #{generator_forward.14} parent=1 // pred_region
      _
    $region5: #{generator_forward.14} parent=1 // pred_fallthru
      _
    // Predicated region
    $region6: #{generator_forward.14} parent=1 // pred_check
      _
    $region7: #{generator_forward.14} parent=1 // pred_check_branch
      %13 = sbr.rel (0) target = $region9
    $region8: #{generator_forward.14} parent=1 // pred_region
      %s15 = ssub.s32 16, 16
      %16 = vsyncadd [#allocation3], %s15
      %s18 = sshll.u32 [#allocation2], 4
      %s19 = int_to_ptr.vmem [resolvable:$true] %s18
      %21 = dma.hbm_to_vmem [thread:$0]  %s1, 16, %s19, [#allocation3]
    $region9: #{generator_forward.14} parent=1 // pred_fallthru
      _
    // Predicated region
    $region10: #{generator_forward.14} parent=1 // pred_check
      _
    $region11: #{generator_forward.14} parent=1 // pred_check_branch
      %23 = sbr.rel (0) target = $region13
    $region12: #{generator_forward.14} parent=1 // pred_region
      %s25 = ssub.s32 16, 16
      %26 = vsyncadd [#allocation5], %s25
      %s28 = sshll.u32 [#allocation4], 4
      %s29 = int_to_ptr.vmem [resolvable:$true] %s28
      %31 = dma.hbm_to_vmem [thread:$0]  %s2, 16, %s29, [#allocation5]
    $region13: #{generator_forward.14} parent=1 // pred_fallthru
      _
    // Predicated region
    $region14: #{generator_forward.14} parent=1 // pred_check
      _
    $region15: #{generator_forward.14} parent=1 // pred_check_branch
      %33 = sbr.rel (0) target = $region17
    $region16: #{generator_forward.14} parent=1 // pred_region
      %34 = dma.done [#allocation3], 16
    $region17: #{generator_forward.14} parent=1 // pred_fallthru
      _
    // Predicated region
    $region18: #{generator_forward.14} parent=1 // pred_check
      _
    $region19: #{generator_forward.14} parent=1 // pred_check_branch
      %36 = sbr.rel (0) target = $region21
    $region20: #{generator_forward.14} parent=1 // pred_region
      %37 = dma.done [#allocation5], 16
    $region21: #{generator_forward.14} parent=1 // pred_fallthru
      _
    %v38 = vld [vmem:[%s0] sm:$0xff]
    %v39 = vld [vmem:[%s0 + $0x8] sm:$0xff]
    %v40 = vld [vmem:[%s0 + $0x10] sm:$0xff]
    %v41 = vld [vmem:[%s0 + $0x18] sm:$0xff]
    %v42 = vld [vmem:[%s0 + $0x20] sm:$0xff]
    %v43 = vld [vmem:[%s0 + $0x28] sm:$0xff]
    %v44 = vld [vmem:[%s0 + $0x30] sm:$0xff]
    %v45 = vld [vmem:[%s0 + $0x38] sm:$0xff]
    %v46 = vld [vmem:[%s0 + $0x40] sm:$0xff]
    %v47 = vld [vmem:[%s0 + $0x48] sm:$0xff]
    %v48 = vld [vmem:[%s0 + $0x50] sm:$0xff]
    %v49 = vld [vmem:[%s0 + $0x58] sm:$0xff]
    %v50 = vld [vmem:[%s0 + $0x60] sm:$0x3]
    %vm51 = vcmask 64512
    %v52 = vsel %vm51, %v38, 0.0
    %v53 = vsel %vm51, %v39, 0.0
    %v54 = vadd.f32 %v52, %v53
    %v55 = vsel %vm51, %v40, 0.0
    %v56 = vadd.f32 %v54, %v55
    %v57 = vsel %vm51, %v41, 0.0
    %v58 = vadd.f32 %v56, %v57
    %v59 = vsel %vm51, %v42, 0.0
    %v60 = vadd.f32 %v58, %v59
    %v61 = vsel %vm51, %v43, 0.0
    %v62 = vadd.f32 %v60, %v61
    %v63 = vsel %vm51, %v44, 0.0
    %v64 = vadd.f32 %v62, %v63
    %v65 = vsel %vm51, %v45, 0.0
    %v66 = vadd.f32 %v64, %v65
    %v67 = vsel %vm51, %v46, 0.0
    %v68 = vadd.f32 %v66, %v67
    %v69 = vsel %vm51, %v47, 0.0
    %v70 = vadd.f32 %v68, %v69
    %v71 = vsel %vm51, %v48, 0.0
    %v72 = vadd.f32 %v70, %v71
    %v73 = vsel %vm51, %v49, 0.0
    %v74 = vadd.f32 %v72, %v73
    %vm75 = vcmask 58368
    %v76 = vsel %vm75, %v50, 0.0
    %v77 = vadd.f32 %v74, %v76
    %v78 = vrot.slane %v77, 4
    %v79 = vadd.f32 %v77, %v78
    %v80 = vrot.slane %v79, 2
    %v81 = vadd.f32 %v79, %v80
    %v82 = vrot.slane %v81, 1
    %v83 = vadd.f32 %v81, %v82
    %v84 = vmul.f32 %v83, 0.010204081
    %v85 = vsub.f32 %v38, %v84
    %v86 = vsub.f32 %v39, %v84
    %v87 = vsub.f32 %v40, %v84
    %v88 = vsub.f32 %v41, %v84
    %v89 = vsub.f32 %v42, %v84
    %v90 = vsub.f32 %v43, %v84
    %v91 = vsub.f32 %v44, %v84
    %v92 = vsub.f32 %v45, %v84
    %v93 = vsub.f32 %v46, %v84
    %v94 = vsub.f32 %v47, %v84
    %v95 = vsub.f32 %v48, %v84
    %v96 = vsub.f32 %v49, %v84
    %v97 = vsub.f32 %v50, %v84
    %v98 = vmul.f32 %v85, %v85
    %v99 = vmul.f32 %v86, %v86
    %v100 = vmul.f32 %v87, %v87
    %v101 = vmul.f32 %v88, %v88
    %v102 = vmul.f32 %v89, %v89
    %v103 = vmul.f32 %v90, %v90
    %v104 = vmul.f32 %v91, %v91
    %v105 = vmul.f32 %v92, %v92
    %v106 = vmul.f32 %v93, %v93
    %v107 = vmul.f32 %v94, %v94
    %v108 = vmul.f32 %v95, %v95
    %v109 = vmul.f32 %v96, %v96
    %v110 = vmul.f32 %v97, %v97
    %v111 = vsel %vm51, %v98, 0.0
    %v112 = vsel %vm51, %v99, 0.0
    %v113 = vadd.f32 %v111, %v112
    %v114 = vsel %vm51, %v100, 0.0
    %v115 = vadd.f32 %v113, %v114
    %v116 = vsel %vm51, %v101, 0.0
    %v117 = vadd.f32 %v115, %v116
    %v118 = vsel %vm51, %v102, 0.0
    %v119 = vadd.f32 %v117, %v118
    %v120 = vsel %vm51, %v103, 0.0
    %v121 = vadd.f32 %v119, %v120
    %v122 = vsel %vm51, %v104, 0.0
    %v123 = vadd.f32 %v121, %v122
    %v124 = vsel %vm51, %v105, 0.0
    %v125 = vadd.f32 %v123, %v124
    %v126 = vsel %vm51, %v106, 0.0
    %v127 = vadd.f32 %v125, %v126
    %v128 = vsel %vm51, %v107, 0.0
    %v129 = vadd.f32 %v127, %v128
    %v130 = vsel %vm51, %v108, 0.0
    %v131 = vadd.f32 %v129, %v130
    %v132 = vsel %vm51, %v109, 0.0
    %v133 = vadd.f32 %v131, %v132
    %v134 = vsel %vm75, %v110, 0.0
    %v135 = vadd.f32 %v133, %v134
    %v136 = vrot.slane %v135, 4
    %v137 = vadd.f32 %v135, %v136
    %v138 = vrot.slane %v137, 2
    %v139 = vadd.f32 %v137, %v138
    %v140 = vrot.slane %v139, 1
    %v141 = vadd.f32 %v139, %v140
    %v142 = vmul.f32 %v141, 0.010204081
    %v143 = vld [vmem:[#allocation2] sm:$0x1]
    %v144 = vadd.f32 %v142, 1e-05
    %v145 = vrsqrt.pop %v144
    %v146 = vmul.f32 %v143, %v145
    %vm147 = vcmask 57344
    %148 = vst.msk [vmem:[%s3] sm:$0x1] %vm147, %v146
    %v149 = vld [vmem:[#allocation4] sm:$0x1]
    %v150 = vmul.f32 %v84, %v146
    %v151 = vsub.f32 %v149, %v150
    %152 = vst.msk [vmem:[%s3 + $0x1] sm:$0x1] %vm147, %v151
    // Predicated region
    $region22: #{generator_forward.14} parent=1 // pred_check
      _
    $region23: #{generator_forward.14} parent=1 // pred_check_branch
      %154 = sbr.rel (0) target = $region25
    $region24: #{generator_forward.14} parent=1 // pred_region
      _
    $region25: #{generator_forward.14} parent=1 // pred_fallthru
      _
    // Predicated region
    $region26: #{generator_forward.14} parent=1 // pred_check
      _
    $region27: #{generator_forward.14} parent=1 // pred_check_branch
      %156 = sbr.rel (0) target = $region29
    $region28: #{generator_forward.14} parent=1 // pred_region
      _
    $region29: #{generator_forward.14} parent=1 // pred_fallthru
      _
    %157 = vsyncpa [#allocation3], 1
    %158 = vsyncpa [#allocation5], 1

// kernel: tile.39
$region0: #{tile.39}
  %s0 = inlined_call_operand.vmem [shape: f32[2,196,4], index: 0, kind: input, shape index: {}]
  %s1 = inlined_call_operand.vmem [shape: f32[2,784], index: 1, kind: output, shape index: {}]
  $region1: #{tile.39} parent=0
    #allocation0 [shape = 'u8[28672]{0}', space=vmem, size = 0x7000, scoped, tag = 'scoped mem for output reshape']
    %v2 = vld [vmem:[%s0] sm:$0x1]
    %s3 = scalar_lea.vmem %s0, 31
    %v4 = vld [vmem:[%s3] sm:$0x2]
    %vm5 = vcmask 1041409
    %v6 = vsel %vm5, %v4, %v2
    %s7 = scalar_lea.vmem %s0, 62
    %v8 = vld [vmem:[%s7] sm:$0x4]
    %vm9 = vcmask 1042434
    %v10 = vsel %vm9, %v8, %v6
    %s11 = scalar_lea.vmem %s0, 93
    %v12 = vld [vmem:[%s11] sm:$0x8]
    %vm13 = vcmask 1043459
    %v14 = vsel %vm13, %v12, %v10
    %s15 = scalar_lea.vmem %s0, 124
    %v16 = vld [vmem:[%s15] sm:$0x10]
    %vm17 = vcmask 1044484
    %v18 = vsel %vm17, %v16, %v14
    %s19 = scalar_lea.vmem %s0, 155
    %v20 = vld [vmem:[%s19] sm:$0x20]
    %vm21 = vcmask 1045509
    %v22 = vsel %vm21, %v20, %v18
    %s23 = scalar_lea.vmem %s0, 186
    %v24 = vld [vmem:[%s23] sm:$0x40]
    %vm25 = vcmask 1046534
    %v26 = vsel %vm25, %v24, %v22
    %vm27 = vcmask 31744
    %28 = vst.msk [vmem:[#allocation0] ss:$8 sm:$0xf] %vm27, %v26
    %29 = vst.msk [vmem:[#allocation0] ss:$8 sm:$0x70] %vm27, %v26
    %s30 = scalar_lea.vmem %s0, 200
    %v31 = vld [vmem:[%s30] sm:$0x1]
    %s32 = scalar_lea.vmem %s0, 231
    %v33 = vld [vmem:[%s32] sm:$0x2]
    %vm34 = vcmask 1041409
    %v35 = vsel %vm34, %v33, %v31
    %s36 = scalar_lea.vmem %s0, 262
    %v37 = vld [vmem:[%s36] sm:$0x4]
    %vm38 = vcmask 1042434
    %v39 = vsel %vm38, %v37, %v35
    %s40 = scalar_lea.vmem %s0, 293
    %v41 = vld [vmem:[%s40] sm:$0x8]
    %vm42 = vcmask 1043459
    %v43 = vsel %vm42, %v41, %v39
    %s44 = scalar_lea.vmem %s0, 324
    %v45 = vld [vmem:[%s44] sm:$0x10]
    %vm46 = vcmask 1044484
    %v47 = vsel %vm46, %v45, %v43
    %s48 = scalar_lea.vmem %s0, 355
    %v49 = vld [vmem:[%s48] sm:$0x20]
    %vm50 = vcmask 1045509
    %v51 = vsel %vm50, %v49, %v47
    %s52 = scalar_lea.vmem %s0, 386
    %v53 = vld [vmem:[%s52] sm:$0x40]
    %vm54 = vcmask 1046534
    %v55 = vsel %vm54, %v53, %v51
    %vm56 = vcmask 31744
    %s57 = scalar_lea.vmem [#allocation0], 1
    %58 = vst.msk [vmem:[%s57] ss:$8 sm:$0xf] %vm56, %v55
    %s59 = scalar_lea.vmem [#allocation0], 1
    %60 = vst.msk [vmem:[%s59] ss:$8 sm:$0x70] %vm56, %v55
    %s61 = scalar_lea.vmem %s0, 31
    %s62 = smov 3
    %v63 = vld [vmem:[%s61] ss:$200 sm:%s62]
    %s64 = scalar_lea.vmem %s0, 4294966959
    %s65 = smov 12
    %v66 = vld [vmem:[%s64] ss:$200 sm:%s65]
    %vm67 = vcmask 1043458
    %v68 = vsel %vm67, %v66, %v63
    %s69 = scalar_lea.vmem %s0, 4294966591
    %s70 = smov 48
    %v71 = vld [vmem:[%s69] ss:$200 sm:%s70]
    %vm72 = vcmask 1045508
    %v73 = vsel %vm72, %v71, %v68
    %s74 = scalar_lea.vmem %s0, 4294966223
    %s75 = smov 192
    %v76 = vld [vmem:[%s74] ss:$200 sm:%s75]
    %vm77 = vcmask 1047558
    %v78 = vsel %vm77, %v76, %v73
    %79 = vrot.lane.b32.xlu0 %v78, 124
    %v80 = vpop.permute.xlu0 %79
    %vm81 = vcmask 1048544
    %82 = vst.msk [vmem:[#allocation0] sm:$0x3] %vm81, %v80
    %s83 = scalar_lea.vmem [#allocation0], 6
    %84 = vst.msk [vmem:[%s83] sm:$0xc] %vm81, %v80
    %s85 = scalar_lea.vmem [#allocation0], 12
    %86 = vst.msk [vmem:[%s85] sm:$0x30] %vm81, %v80
    %s87 = scalar_lea.vmem [#allocation0], 18
    %88 = vst.msk [vmem:[%s87] sm:$0xc0] %vm81, %v80
    %s89 = scalar_lea.vmem %s0, 159
    %s90 = smov 3
    %v91 = vld [vmem:[%s89] ss:$200 sm:%s90]
    %s92 = scalar_lea.vmem %s0, 4294967087
    %s93 = smov 12
    %v94 = vld [vmem:[%s92] ss:$200 sm:%s93]
    %vm95 = vcmask 1043458
    %v96 = vsel %vm95, %v94, %v91
    %97 = vrot.lane.b32.xlu0 %v96, 124
    %v98 = vpop.permute.xlu0 %97
    %vm99 = vcmask 1048544
    %s100 = scalar_lea.vmem [#allocation0], 32
    %101 = vst.msk [vmem:[%s100] sm:$0x3] %vm99, %v98
    %s102 = scalar_lea.vmem [#allocation0], 38
    %103 = vst.msk [vmem:[%s102] sm:$0xc] %vm99, %v98
    %s104 = scalar_lea.vmem %s0, 30
    %s105 = smov 3
    %v106 = vld [vmem:[%s104] ss:$200 sm:%s105]
    %s107 = scalar_lea.vmem %s0, 4294966958
    %s108 = smov 12
    %v109 = vld [vmem:[%s107] ss:$200 sm:%s108]
    %vm110 = vcmask 1043458
    %v111 = vsel %vm110, %v109, %v106
    %s112 = scalar_lea.vmem %s0, 4294966590
    %s113 = smov 48
    %v114 = vld [vmem:[%s112] ss:$200 sm:%s113]
    %vm115 = vcmask 1045508
    %v116 = vsel %vm115, %v114, %v111
    %s117 = scalar_lea.vmem %s0, 4294966222
    %s118 = smov 192
    %v119 = vld [vmem:[%s117] ss:$200 sm:%s118]
    %vm120 = vcmask 1047558
    %v121 = vsel %vm120, %v119, %v116
    %122 = vrot.lane.b32.xlu0 %v121, 120
    %v123 = vpop.permute.xlu0 %122
    %vm124 = vcmask 1015744
    %125 = vst.msk [vmem:[#allocation0] sm:$0x3] %vm124, %v123
    %s126 = scalar_lea.vmem [#allocation0], 6
    %127 = vst.msk [vmem:[%s126] sm:$0xc] %vm124, %v123
    %s128 = scalar_lea.vmem [#allocation0], 12
    %129 = vst.msk [vmem:[%s128] sm:$0x30] %vm124, %v123
    %s130 = scalar_lea.vmem [#allocation0], 18
    %131 = vst.msk [vmem:[%s130] sm:$0xc0] %vm124, %v123
    %s132 = scalar_lea.vmem %s0, 158
    %s133 = smov 3
    %v134 = vld [vmem:[%s132] ss:$200 sm:%s133]
    %s135 = scalar_lea.vmem %s0, 4294967086
    %s136 = smov 12
    %v137 = vld [vmem:[%s135] ss:$200 sm:%s136]
    %vm138 = vcmask 1043458
    %v139 = vsel %vm138, %v137, %v134
    %140 = vrot.lane.b32.xlu0 %v139, 120
    %v141 = vpop.permute.xlu0 %140
    %vm142 = vcmask 1015744
    %s143 = scalar_lea.vmem [#allocation0], 32
    %144 = vst.msk [vmem:[%s143] sm:$0x3] %vm142, %v141
    %s145 = scalar_lea.vmem [#allocation0], 38
    %146 = vst.msk [vmem:[%s145] sm:$0xc] %vm142, %v141
    %s147 = scalar_lea.vmem %s0, 29
    %s148 = smov 3
    %v149 = vld [vmem:[%s147] ss:$200 sm:%s148]
    %s150 = scalar_lea.vmem %s0, 4294966957
    %s151 = smov 12
    %v152 = vld [vmem:[%s150] ss:$200 sm:%s151]
    %vm153 = vcmask 1043458
    %v154 = vsel %vm153, %v152, %v149
    %s155 = scalar_lea.vmem %s0, 4294966589
    %s156 = smov 48
    %v157 = vld [vmem:[%s155] ss:$200 sm:%s156]
    %vm158 = vcmask 1045508
    %v159 = vsel %vm158, %v157, %v154
    %s160 = scalar_lea.vmem %s0, 4294966221
    %s161 = smov 192
    %v162 = vld [vmem:[%s160] ss:$200 sm:%s161]
    %vm163 = vcmask 1047558
    %v164 = vsel %vm163, %v162, %v159
    %165 = vrot.lane.b32.xlu0 %v164, 116
    %v166 = vpop.permute.xlu0 %165
    %vm167 = vcmask 982944
    %168 = vst.msk [vmem:[#allocation0] sm:$0x3] %vm167, %v166
    %s169 = scalar_lea.vmem [#allocation0], 6
    %170 = vst.msk [vmem:[%s169] sm:$0xc] %vm167, %v166
    %s171 = scalar_lea.vmem [#allocation0], 12
    %172 = vst.msk [vmem:[%s171] sm:$0x30] %vm167, %v166
    %s173 = scalar_lea.vmem [#allocation0], 18
    %174 = vst.msk [vmem:[%s173] sm:$0xc0] %vm167, %v166
    %s175 = scalar_lea.vmem %s0, 157
    %s176 = smov 3
    %v177 = vld [vmem:[%s175] ss:$200 sm:%s176]
    %s178 = scalar_lea.vmem %s0, 4294967085
    %s179 = smov 12
    %v180 = vld [vmem:[%s178] ss:$200 sm:%s179]
    %vm181 = vcmask 1043458
    %v182 = vsel %vm181, %v180, %v177
    %183 = vrot.lane.b32.xlu0 %v182, 116
    %v184 = vpop.permute.xlu0 %183
    %vm185 = vcmask 982944
    %s186 = scalar_lea.vmem [#allocation0], 32
    %187 = vst.msk [vmem:[%s186] sm:$0x3] %vm185, %v184
    %s188 = scalar_lea.vmem [#allocation0], 38
    %189 = vst.msk [vmem:[%s188] sm:$0xc] %vm185, %v184
    %s190 = scalar_lea.vmem %s0, 28
    %s191 = smov 3
    %v192 = vld [vmem:[%s190] ss:$200 sm:%s191]
    %s193 = scalar_lea.vmem %s0, 4294966956
    %s194 = smov 12
    %v195 = vld [vmem:[%s193] ss:$200 sm:%s194]
    %vm196 = vcmask 1043458
    %v197 = vsel %vm196, %v195, %v192
    %s198 = scalar_lea.vmem %s0, 4294966588
    %s199 = smov 48
    %v200 = vld [vmem:[%s198] ss:$200 sm:%s199]
    %vm201 = vcmask 1045508
    %v202 = vsel %vm201, %v200, %v197
    %s203 = scalar_lea.vmem %s0, 4294966220
    %s204 = smov 192
    %v205 = vld [vmem:[%s203] ss:$200 sm:%s204]
    %vm206 = vcmask 1047558
    %v207 = vsel %vm206, %v205, %v202
    %208 = vrot.lane.b32.xlu0 %v207, 112
    %v209 = vpop.permute.xlu0 %208
    %vm210 = vcmask 950144
    %211 = vst.msk [vmem:[#allocation0] sm:$0x3] %vm210, %v209
    %s212 = scalar_lea.vmem [#allocation0], 6
    %213 = vst.msk [vmem:[%s212] sm:$0xc] %vm210, %v209
    %s214 = scalar_lea.vmem [#allocation0], 12
    %215 = vst.msk [vmem:[%s214] sm:$0x30] %vm210, %v209
    %s216 = scalar_lea.vmem [#allocation0], 18
    %217 = vst.msk [vmem:[%s216] sm:$0xc0] %vm210, %v209
    %s218 = scalar_lea.vmem %s0, 156
    %s219 = smov 3
    %v220 = vld [vmem:[%s218] ss:$200 sm:%s219]
    %s221 = scalar_lea.vmem %s0, 4294967084
    %s222 = smov 12
    %v223 = vld [vmem:[%s221] ss:$200 sm:%s222]
    %vm224 = vcmask 1043458
    %v225 = vsel %vm224, %v223, %v220
    %226 = vrot.lane.b32.xlu0 %v225, 112
    %v227 = vpop.permute.xlu0 %226
    %vm228 = vcmask 950144
    %s229 = scalar_lea.vmem [#allocation0], 32
    %230 = vst.msk [vmem:[%s229] sm:$0x3] %vm228, %v227
    %s231 = scalar_lea.vmem [#allocation0], 38
    %232 = vst.msk [vmem:[%s231] sm:$0xc] %vm228, %v227
    %s233 = scalar_lea.vmem %s0, 27
    %s234 = smov 3
    %v235 = vld [vmem:[%s233] ss:$200 sm:%s234]
    %s236 = scalar_lea.vmem %s0, 4294966955
    %s237 = smov 12
    %v238 = vld [vmem:[%s236] ss:$200 sm:%s237]
    %vm239 = vcmask 1043458
    %v240 = vsel %vm239, %v238, %v235
    %s241 = scalar_lea.vmem %s0, 4294966587
    %s242 = smov 48
    %v243 = vld [vmem:[%s241] ss:$200 sm:%s242]
    %vm244 = vcmask 1045508
    %v245 = vsel %vm244, %v243, %v240
    %s246 = scalar_lea.vmem %s0, 4294966219
    %s247 = smov 192
    %v248 = vld [vmem:[%s246] ss:$200 sm:%s247]
    %vm249 = vcmask 1047558
    %v250 = vsel %vm249, %v248, %v245
    %251 = vrot.lane.b32.xlu0 %v250, 108
    %v252 = vpop.permute.xlu0 %251
    %vm253 = vcmask 917344
    %254 = vst.msk [vmem:[#allocation0] sm:$0x3] %vm253, %v252
    %s255 = scalar_lea.vmem [#allocation0], 6
    %256 = vst.msk [vmem:[%s255] sm:$0xc] %vm253, %v252
    %s257 = scalar_lea.vmem [#allocation0], 12
    %258 = vst.msk [vmem:[%s257] sm:$0x30] %vm253, %v252
    %s259 = scalar_lea.vmem [#allocation0], 18
    %260 = vst.msk [vmem:[%s259] sm:$0xc0] %vm253, %v252
    %s261 = scalar_lea.vmem %s0, 155
    %s262 = smov 3
    %v263 = vld [vmem:[%s261] ss:$200 sm:%s262]
    %s264 = scalar_lea.vmem %s0, 4294967083
    %s265 = smov 12
    %v266 = vld [vmem:[%s264] ss:$200 sm:%s265]
    %vm267 = vcmask 1043458
    %v268 = vsel %vm267, %v266, %v263
    %269 = vrot.lane.b32.xlu0 %v268, 108
    %v270 = vpop.permute.xlu0 %269
    %vm271 = vcmask 917344
    %s272 = scalar_lea.vmem [#allocation0], 32
    %273 = vst.msk [vmem:[%s272] sm:$0x3] %vm271, %v270
    %s274 = scalar_lea.vmem [#allocation0], 38
    %275 = vst.msk [vmem:[%s274] sm:$0xc] %vm271, %v270
    %s276 = scalar_lea.vmem %s0, 26
    %s277 = smov 3
    %v278 = vld [vmem:[%s276] ss:$200 sm:%s277]
    %s279 = scalar_lea.vmem %s0, 4294966954
    %s280 = smov 12
    %v281 = vld [vmem:[%s279] ss:$200 sm:%s280]
    %vm282 = vcmask 1043458
    %v283 = vsel %vm282, %v281, %v278
    %s284 = scalar_lea.vmem %s0, 4294966586
    %s285 = smov 48
    %v286 = vld [vmem:[%s284] ss:$200 sm:%s285]
    %vm287 = vcmask 1045508
    %v288 = vsel %vm287, %v286, %v283
    %s289 = scalar_lea.vmem %s0, 4294966218
    %s290 = smov 192
    %v291 = vld [vmem:[%s289] ss:$200 sm:%s290]
    %vm292 = vcmask 1047558
    %v293 = vsel %vm292, %v291, %v288
    %294 = vrot.lane.b32.xlu0 %v293, 104
    %v295 = vpop.permute.xlu0 %294
    %vm296 = vcmask 884544
    %297 = vst.msk [vmem:[#allocation0] sm:$0x3] %vm296, %v295
    %s298 = scalar_lea.vmem [#allocation0], 6
    %299 = vst.msk [vmem:[%s298] sm:$0xc] %vm296, %v295
    %s300 = scalar_lea.vmem [#allocation0], 12
    %301 = vst.msk [vmem:[%s300] sm:$0x30] %vm296, %v295
    %s302 = scalar_lea.vmem [#allocation0], 18
    %303 = vst.msk [vmem:[%s302] sm:$0xc0] %vm296, %v295
    %s304 = scalar_lea.vmem %s0, 154
    %s305 = smov 3
    %v306 = vld [vmem:[%s304] ss:$200 sm:%s305]
    %s307 = scalar_lea.vmem %s0, 4294967082
    %s308 = smov 12
    %v309 = vld [vmem:[%s307] ss:$200 sm:%s308]
    %vm310 = vcmask 1043458
    %v311 = vsel %vm310, %v309, %v306
    %312 = vrot.lane.b32.xlu0 %v311, 104
    %v313 = vpop.permute.xlu0 %312
    %vm314 = vcmask 884544
    %s315 = scalar_lea.vmem [#allocation0], 32
    %316 = vst.msk [vmem:[%s315] sm:$0x3] %vm314, %v313
    %s317 = scalar_lea.vmem [#allocation0], 38
    %318 = vst.msk [vmem:[%s317] sm:$0xc] %vm314, %v313
    %s319 = scalar_lea.vmem %s0, 25
    %s320 = smov 3
    %v321 = vld [vmem:[%s319] ss:$200 sm:%s320]
    %s322 = scalar_lea.vmem %s0, 4294966953
    %s323 = smov 12
    %v324 = vld [vmem:[%s322] ss:$200 sm:%s323]
    %vm325 = vcmask 1043458
    %v326 = vsel %vm325, %v324, %v321
    %s327 = scalar_lea.vmem %s0, 4294966585
    %s328 = smov 48
    %v329 = vld [vmem:[%s327] ss:$200 sm:%s328]
    %vm330 = vcmask 1045508
    %v331 = vsel %vm330, %v329, %v326
    %s332 = scalar_lea.vmem %s0, 4294966217
    %s333 = smov 192
    %v334 = vld [vmem:[%s332] ss:$200 sm:%s333]
    %vm335 = vcmask 1047558
    %v336 = vsel %vm335, %v334, %v331
    %337 = vrot.lane.b32.xlu0 %v336, 100
    %v338 = vpop.permute.xlu0 %337
    %vm339 = vcmask 851744
    %340 = vst.msk [vmem:[#allocation0] sm:$0x3] %vm339, %v338
    %s341 = scalar_lea.vmem [#allocation0], 6
    %342 = vst.msk [vmem:[%s341] sm:$0xc] %vm339, %v338
    %s343 = scalar_lea.vmem [#allocation0], 12
    %344 = vst.msk [vmem:[%s343] sm:$0x30] %vm339, %v338
    %s345 = scalar_lea.vmem [#allocation0], 18
    %346 = vst.msk [vmem:[%s345] sm:$0xc0] %vm339, %v338
    %s347 = scalar_lea.vmem %s0, 153
    %s348 = smov 3
    %v349 = vld [vmem:[%s347] ss:$200 sm:%s348]
    %s350 = scalar_lea.vmem %s0, 4294967081
    %s351 = smov 12
    %v352 = vld [vmem:[%s350] ss:$200 sm:%s351]
    %vm353 = vcmask 1043458
    %v354 = vsel %vm353, %v352, %v349
    %355 = vrot.lane.b32.xlu0 %v354, 100
    %v356 = vpop.permute.xlu0 %355
    %vm357 = vcmask 851744
    %s358 = scalar_lea.vmem [#allocation0], 32
    %359 = vst.msk [vmem:[%s358] sm:$0x3] %vm357, %v356
    %s360 = scalar_lea.vmem [#allocation0], 38
    %361 = vst.msk [vmem:[%s360] sm:$0xc] %vm357, %v356
    %s362 = scalar_lea.vmem %s0, 24
    %s363 = smov 3
    %v364 = vld [vmem:[%s362] ss:$200 sm:%s363]
    %s365 = scalar_lea.vmem %s0, 4294966952
    %s366 = smov 12
    %v367 = vld [vmem:[%s365] ss:$200 sm:%s366]
    %vm368 = vcmask 1043458
    %v369 = vsel %vm368, %v367, %v364
    %s370 = scalar_lea.vmem %s0, 4294966584
    %s371 = smov 48
    %v372 = vld [vmem:[%s370] ss:$200 sm:%s371]
    %vm373 = vcmask 1045508
    %v374 = vsel %vm373, %v372, %v369
    %s375 = scalar_lea.vmem %s0, 4294966216
    %s376 = smov 192
    %v377 = vld [vmem:[%s375] ss:$200 sm:%s376]
    %vm378 = vcmask 1047558
    %v379 = vsel %vm378, %v377, %v374
    %380 = vrot.lane.b32.xlu0 %v379, 96
    %v381 = vpop.permute.xlu0 %380
    %vm382 = vcmask 818944
    %383 = vst.msk [vmem:[#allocation0] sm:$0x3] %vm382, %v381
    %s384 = scalar_lea.vmem [#allocation0], 6
    %385 = vst.msk [vmem:[%s384] sm:$0xc] %vm382, %v381
    %s386 = scalar_lea.vmem [#allocation0], 12
    %387 = vst.msk [vmem:[%s386] sm:$0x30] %vm382, %v381
    %s388 = scalar_lea.vmem [#allocation0], 18
    %389 = vst.msk [vmem:[%s388] sm:$0xc0] %vm382, %v381
    %s390 = scalar_lea.vmem %s0, 152
    %s391 = smov 3
    %v392 = vld [vmem:[%s390] ss:$200 sm:%s391]
    %s393 = scalar_lea.vmem %s0, 4294967080
    %s394 = smov 12
    %v395 = vld [vmem:[%s393] ss:$200 sm:%s394]
    %vm396 = vcmask 1043458
    %v397 = vsel %vm396, %v395, %v392
    %398 = vrot.lane.b32.xlu0 %v397, 96
    %v399 = vpop.permute.xlu0 %398
    %vm400 = vcmask 818944
    %s401 = scalar_lea.vmem [#allocation0], 32
    %402 = vst.msk [vmem:[%s401] sm:$0x3] %vm400, %v399
    %s403 = scalar_lea.vmem [#allocation0], 38
    %404 = vst.msk [vmem:[%s403] sm:$0xc] %vm400, %v399
    %s405 = scalar_lea.vmem %s0, 23
    %s406 = smov 3
    %v407 = vld [vmem:[%s405] ss:$200 sm:%s406]
    %s408 = scalar_lea.vmem %s0, 4294966951
    %s409 = smov 12
    %v410 = vld [vmem:[%s408] ss:$200 sm:%s409]
    %vm411 = vcmask 1043458
    %v412 = vsel %vm411, %v410, %v407
    %s413 = scalar_lea.vmem %s0, 4294966583
    %s414 = smov 48
    %v415 = vld [vmem:[%s413] ss:$200 sm:%s414]
    %vm416 = vcmask 1045508
    %v417 = vsel %vm416, %v415, %v412
    %s418 = scalar_lea.vmem %s0, 4294966215
    %s419 = smov 192
    %v420 = vld [vmem:[%s418] ss:$200 sm:%s419]
    %vm421 = vcmask 1047558
    %v422 = vsel %vm421, %v420, %v417
    %423 = vrot.lane.b32.xlu0 %v422, 92
    %v424 = vpop.permute.xlu0 %423
    %vm425 = vcmask 786144
    %426 = vst.msk [vmem:[#allocation0] sm:$0x3] %vm425, %v424
    %s427 = scalar_lea.vmem [#allocation0], 6
    %428 = vst.msk [vmem:[%s427] sm:$0xc] %vm425, %v424
    %s429 = scalar_lea.vmem [#allocation0], 12
    %430 = vst.msk [vmem:[%s429] sm:$0x30] %vm425, %v424
    %s431 = scalar_lea.vmem [#allocation0], 18
    %432 = vst.msk [vmem:[%s431] sm:$0xc0] %vm425, %v424
    %s433 = scalar_lea.vmem %s0, 151
    %s434 = smov 3
    %v435 = vld [vmem:[%s433] ss:$200 sm:%s434]
    %s436 = scalar_lea.vmem %s0, 4294967079
    %s437 = smov 12
    %v438 = vld [vmem:[%s436] ss:$200 sm:%s437]
    %vm439 = vcmask 1043458
    %v440 = vsel %vm439, %v438, %v435
    %441 = vrot.lane.b32.xlu0 %v440, 92
    %v442 = vpop.permute.xlu0 %441
    %vm443 = vcmask 786144
    %s444 = scalar_lea.vmem [#allocation0], 32
    %445 = vst.msk [vmem:[%s444] sm:$0x3] %vm443, %v442
    %s446 = scalar_lea.vmem [#allocation0], 38
    %447 = vst.msk [vmem:[%s446] sm:$0xc] %vm443, %v442
    %s448 = scalar_lea.vmem %s0, 22
    %s449 = smov 3
    %v450 = vld [vmem:[%s448] ss:$200 sm:%s449]
    %s451 = scalar_lea.vmem %s0, 4294966950
    %s452 = smov 12
    %v453 = vld [vmem:[%s451] ss:$200 sm:%s452]
    %vm454 = vcmask 1043458
    %v455 = vsel %vm454, %v453, %v450
    %s456 = scalar_lea.vmem %s0, 4294966582
    %s457 = smov 48
    %v458 = vld [vmem:[%s456] ss:$200 sm:%s457]
    %vm459 = vcmask 1045508
    %v460 = vsel %vm459, %v458, %v455
    %s461 = scalar_lea.vmem %s0, 4294966214
    %s462 = smov 192
    %v463 = vld [vmem:[%s461] ss:$200 sm:%s462]
    %vm464 = vcmask 1047558
    %v465 = vsel %vm464, %v463, %v460
    %466 = vrot.lane.b32.xlu0 %v465, 88
    %v467 = vpop.permute.xlu0 %466
    %vm468 = vcmask 753344
    %469 = vst.msk [vmem:[#allocation0] sm:$0x3] %vm468, %v467
    %s470 = scalar_lea.vmem [#allocation0], 6
    %471 = vst.msk [vmem:[%s470] sm:$0xc] %vm468, %v467
    %s472 = scalar_lea.vmem [#allocation0], 12
    %473 = vst.msk [vmem:[%s472] sm:$0x30] %vm468, %v467
    %s474 = scalar_lea.vmem [#allocation0], 18
    %475 = vst.msk [vmem:[%s474] sm:$0xc0] %vm468, %v467
    %s476 = scalar_lea.vmem %s0, 150
    %s477 = smov 3
    %v478 = vld [vmem:[%s476] ss:$200 sm:%s477]
    %s479 = scalar_lea.vmem %s0, 4294967078
    %s480 = smov 12
    %v481 = vld [vmem:[%s479] ss:$200 sm:%s480]
    %vm482 = vcmask 1043458
    %v483 = vsel %vm482, %v481, %v478
    %484 = vrot.lane.b32.xlu0 %v483, 88
    %v485 = vpop.permute.xlu0 %484
    %vm486 = vcmask 753344
    %s487 = scalar_lea.vmem [#allocation0], 32
    %488 = vst.msk [vmem:[%s487] sm:$0x3] %vm486, %v485
    %s489 = scalar_lea.vmem [#allocation0], 38
    %490 = vst.msk [vmem:[%s489] sm:$0xc] %vm486, %v485
    %s491 = scalar_lea.vmem %s0, 21
    %s492 = smov 3
    %v493 = vld [vmem:[%s491] ss:$200 sm:%s492]
    %s494 = scalar_lea.vmem %s0, 4294966949
    %s495 = smov 12
    %v496 = vld [vmem:[%s494] ss:$200 sm:%s495]
    %vm497 = vcmask 1043458
    %v498 = vsel %vm497, %v496, %v493
    %s499 = scalar_lea.vmem %s0, 4294966581
    %s500 = smov 48
    %v501 = vld [vmem:[%s499] ss:$200 sm:%s500]
    %vm502 = vcmask 1045508
    %v503 = vsel %vm502, %v501, %v498
    %s504 = scalar_lea.vmem %s0, 4294966213
    %s505 = smov 192
    %v506 = vld [vmem:[%s504] ss:$200 sm:%s505]
    %vm507 = vcmask 1047558
    %v508 = vsel %vm507, %v506, %v503
    %509 = vrot.lane.b32.xlu0 %v508, 84
    %v510 = vpop.permute.xlu0 %509
    %vm511 = vcmask 720544
    %512 = vst.msk [vmem:[#allocation0] sm:$0x3] %vm511, %v510
    %s513 = scalar_lea.vmem [#allocation0], 6
    %514 = vst.msk [vmem:[%s513] sm:$0xc] %vm511, %v510
    %s515 = scalar_lea.vmem [#allocation0], 12
    %516 = vst.msk [vmem:[%s515] sm:$0x30] %vm511, %v510
    %s517 = scalar_lea.vmem [#allocation0], 18
    %518 = vst.msk [vmem:[%s517] sm:$0xc0] %vm511, %v510
    %s519 = scalar_lea.vmem %s0, 149
    %s520 = smov 3
    %v521 = vld [vmem:[%s519] ss:$200 sm:%s520]
    %s522 = scalar_lea.vmem %s0, 4294967077
    %s523 = smov 12
    %v524 = vld [vmem:[%s522] ss:$200 sm:%s523]
    %vm525 = vcmask 1043458
    %v526 = vsel %vm525, %v524, %v521
    %527 = vrot.lane.b32.xlu0 %v526, 84
    %v528 = vpop.permute.xlu0 %527
    %vm529 = vcmask 720544
    %s530 = scalar_lea.vmem [#allocation0], 32
    %531 = vst.msk [vmem:[%s530] sm:$0x3] %vm529, %v528
    %s532 = scalar_lea.vmem [#allocation0], 38
    %533 = vst.msk [vmem:[%s532] sm:$0xc] %vm529, %v528
    %s534 = scalar_lea.vmem %s0, 20
    %s535 = smov 3
    %v536 = vld [vmem:[%s534] ss:$200 sm:%s535]
    %s537 = scalar_lea.vmem %s0, 4294966948
    %s538 = smov 12
    %v539 = vld [vmem:[%s537] ss:$200 sm:%s538]
    %vm540 = vcmask 1043458
    %v541 = vsel %vm540, %v539, %v536
    %s542 = scalar_lea.vmem %s0, 4294966580
    %s543 = smov 48
    %v544 = vld [vmem:[%s542] ss:$200 sm:%s543]
    %vm545 = vcmask 1045508
    %v546 = vsel %vm545, %v544, %v541
    %s547 = scalar_lea.vmem %s0, 4294966212
    %s548 = smov 192
    %v549 = vld [vmem:[%s547] ss:$200 sm:%s548]
    %vm550 = vcmask 1047558
    %v551 = vsel %vm550, %v549, %v546
    %552 = vrot.lane.b32.xlu0 %v551, 80
    %v553 = vpop.permute.xlu0 %552
    %vm554 = vcmask 687744
    %555 = vst.msk [vmem:[#allocation0] sm:$0x3] %vm554, %v553
    %s556 = scalar_lea.vmem [#allocation0], 6
    %557 = vst.msk [vmem:[%s556] sm:$0xc] %vm554, %v553
    %s558 = scalar_lea.vmem [#allocation0], 12
    %559 = vst.msk [vmem:[%s558] sm:$0x30] %vm554, %v553
    %s560 = scalar_lea.vmem [#allocation0], 18
    %561 = vst.msk [vmem:[%s560] sm:$0xc0] %vm554, %v553
    %s562 = scalar_lea.vmem %s0, 148
    %s563 = smov 3
    %v564 = vld [vmem:[%s562] ss:$200 sm:%s563]
    %s565 = scalar_lea.vmem %s0, 4294967076
    %s566 = smov 12
    %v567 = vld [vmem:[%s565] ss:$200 sm:%s566]
    %vm568 = vcmask 1043458
    %v569 = vsel %vm568, %v567, %v564
    %570 = vrot.lane.b32.xlu0 %v569, 80
    %v571 = vpop.permute.xlu0 %570
    %vm572 = vcmask 687744
    %s573 = scalar_lea.vmem [#allocation0], 32
    %574 = vst.msk [vmem:[%s573] sm:$0x3] %vm572, %v571
    %s575 = scalar_lea.vmem [#allocation0], 38
    %576 = vst.msk [vmem:[%s575] sm:$0xc] %vm572, %v571
    %s577 = scalar_lea.vmem %s0, 19
    %s578 = smov 3
    %v579 = vld [vmem:[%s577] ss:$200 sm:%s578]
    %s580 = scalar_lea.vmem %s0, 4294966947
    %s581 = smov 12
    %v582 = vld [vmem:[%s580] ss:$200 sm:%s581]
    %vm583 = vcmask 1043458
    %v584 = vsel %vm583, %v582, %v579
    %s585 = scalar_lea.vmem %s0, 4294966579
    %s586 = smov 48
    %v587 = vld [vmem:[%s585] ss:$200 sm:%s586]
    %vm588 = vcmask 1045508
    %v589 = vsel %vm588, %v587, %v584
    %s590 = scalar_lea.vmem %s0, 4294966211
    %s591 = smov 192
    %v592 = vld [vmem:[%s590] ss:$200 sm:%s591]
    %vm593 = vcmask 1047558
    %v594 = vsel %vm593, %v592, %v589
    %595 = vrot.lane.b32.xlu0 %v594, 76
    %v596 = vpop.permute.xlu0 %595
    %vm597 = vcmask 654944
    %598 = vst.msk [vmem:[#allocation0] sm:$0x3] %vm597, %v596
    %s599 = scalar_lea.vmem [#allocation0], 6
    %600 = vst.msk [vmem:[%s599] sm:$0xc] %vm597, %v596
    %s601 = scalar_lea.vmem [#allocation0], 12
    %602 = vst.msk [vmem:[%s601] sm:$0x30] %vm597, %v596
    %s603 = scalar_lea.vmem [#allocation0], 18
    %604 = vst.msk [vmem:[%s603] sm:$0xc0] %vm597, %v596
    %s605 = scalar_lea.vmem %s0, 147
    %s606 = smov 3
    %v607 = vld [vmem:[%s605] ss:$200 sm:%s606]
    %s608 = scalar_lea.vmem %s0, 4294967075
    %s609 = smov 12
    %v610 = vld [vmem:[%s608] ss:$200 sm:%s609]
    %vm611 = vcmask 1043458
    %v612 = vsel %vm611, %v610, %v607
    %613 = vrot.lane.b32.xlu0 %v612, 76
    %v614 = vpop.permute.xlu0 %613
    %vm615 = vcmask 654944
    %s616 = scalar_lea.vmem [#allocation0], 32
    %617 = vst.msk [vmem:[%s616] sm:$0x3] %vm615, %v614
    %s618 = scalar_lea.vmem [#allocation0], 38
    %619 = vst.msk [vmem:[%s618] sm:$0xc] %vm615, %v614
    %s620 = scalar_lea.vmem %s0, 18
    %s621 = smov 3
    %v622 = vld [vmem:[%s620] ss:$200 sm:%s621]
    %s623 = scalar_lea.vmem %s0, 4294966946
    %s624 = smov 12
    %v625 = vld [vmem:[%s623] ss:$200 sm:%s624]
    %vm626 = vcmask 1043458
    %v627 = vsel %vm626, %v625, %v622
    %s628 = scalar_lea.vmem %s0, 4294966578
    %s629 = smov 48
    %v630 = vld [vmem:[%s628] ss:$200 sm:%s629]
    %vm631 = vcmask 1045508
    %v632 = vsel %vm631, %v630, %v627
    %s633 = scalar_lea.vmem %s0, 4294966210
    %s634 = smov 192
    %v635 = vld [vmem:[%s633] ss:$200 sm:%s634]
    %vm636 = vcmask 1047558
    %v637 = vsel %vm636, %v635, %v632
    %638 = vrot.lane.b32.xlu0 %v637, 72
    %v639 = vpop.permute.xlu0 %638
    %vm640 = vcmask 622144
    %641 = vst.msk [vmem:[#allocation0] sm:$0x3] %vm640, %v639
    %s642 = scalar_lea.vmem [#allocation0], 6
    %643 = vst.msk [vmem:[%s642] sm:$0xc] %vm640, %v639
    %s644 = scalar_lea.vmem [#allocation0], 12
    %645 = vst.msk [vmem:[%s644] sm:$0x30] %vm640, %v639
    %s646 = scalar_lea.vmem [#allocation0], 18
    %647 = vst.msk [vmem:[%s646] sm:$0xc0] %vm640, %v639
    %s648 = scalar_lea.vmem %s0, 146
    %s649 = smov 3
    %v650 = vld [vmem:[%s648] ss:$200 sm:%s649]
    %s651 = scalar_lea.vmem %s0, 4294967074
    %s652 = smov 12
    %v653 = vld [vmem:[%s651] ss:$200 sm:%s652]
    %vm654 = vcmask 1043458
    %v655 = vsel %vm654, %v653, %v650
    %656 = vrot.lane.b32.xlu0 %v655, 72
    %v657 = vpop.permute.xlu0 %656
    %vm658 = vcmask 622144
    %s659 = scalar_lea.vmem [#allocation0], 32
    %660 = vst.msk [vmem:[%s659] sm:$0x3] %vm658, %v657
    %s661 = scalar_lea.vmem [#allocation0], 38
    %662 = vst.msk [vmem:[%s661] sm:$0xc] %vm658, %v657
    %s663 = scalar_lea.vmem %s0, 17
    %s664 = smov 3
    %v665 = vld [vmem:[%s663] ss:$200 sm:%s664]
    %s666 = scalar_lea.vmem %s0, 4294966945
    %s667 = smov 12
    %v668 = vld [vmem:[%s666] ss:$200 sm:%s667]
    %vm669 = vcmask 1043458
    %v670 = vsel %vm669, %v668, %v665
    %s671 = scalar_lea.vmem %s0, 4294966577
    %s672 = smov 48
    %v673 = vld [vmem:[%s671] ss:$200 sm:%s672]
    %vm674 = vcmask 1045508
    %v675 = vsel %vm674, %v673, %v670
    %s676 = scalar_lea.vmem %s0, 4294966209
    %s677 = smov 192
    %v678 = vld [vmem:[%s676] ss:$200 sm:%s677]
    %vm679 = vcmask 1047558
    %v680 = vsel %vm679, %v678, %v675
    %681 = vrot.lane.b32.xlu0 %v680, 68
    %v682 = vpop.permute.xlu0 %681
    %vm683 = vcmask 589344
    %684 = vst.msk [vmem:[#allocation0] sm:$0x3] %vm683, %v682
    %s685 = scalar_lea.vmem [#allocation0], 6
    %686 = vst.msk [vmem:[%s685] sm:$0xc] %vm683, %v682
    %s687 = scalar_lea.vmem [#allocation0], 12
    %688 = vst.msk [vmem:[%s687] sm:$0x30] %vm683, %v682
    %s689 = scalar_lea.vmem [#allocation0], 18
    %690 = vst.msk [vmem:[%s689] sm:$0xc0] %vm683, %v682
    %s691 = scalar_lea.vmem %s0, 145
    %s692 = smov 3
    %v693 = vld [vmem:[%s691] ss:$200 sm:%s692]
    %s694 = scalar_lea.vmem %s0, 4294967073
    %s695 = smov 12
    %v696 = vld [vmem:[%s694] ss:$200 sm:%s695]
    %vm697 = vcmask 1043458
    %v698 = vsel %vm697, %v696, %v693
    %699 = vrot.lane.b32.xlu0 %v698, 68
    %v700 = vpop.permute.xlu0 %699
    %vm701 = vcmask 589344
    %s702 = scalar_lea.vmem [#allocation0], 32
    %703 = vst.msk [vmem:[%s702] sm:$0x3] %vm701, %v700
    %s704 = scalar_lea.vmem [#allocation0], 38
    %705 = vst.msk [vmem:[%s704] sm:$0xc] %vm701, %v700
    %s706 = scalar_lea.vmem %s0, 16
    %s707 = smov 3
    %v708 = vld [vmem:[%s706] ss:$200 sm:%s707]
    %s709 = scalar_lea.vmem %s0, 4294966944
    %s710 = smov 12
    %v711 = vld [vmem:[%s709] ss:$200 sm:%s710]
    %vm712 = vcmask 1043458
    %v713 = vsel %vm712, %v711, %v708
    %s714 = scalar_lea.vmem %s0, 4294966576
    %s715 = smov 48
    %v716 = vld [vmem:[%s714] ss:$200 sm:%s715]
    %vm717 = vcmask 1045508
    %v718 = vsel %vm717, %v716, %v713
    %s719 = scalar_lea.vmem %s0, 4294966208
    %s720 = smov 192
    %v721 = vld [vmem:[%s719] ss:$200 sm:%s720]
    %vm722 = vcmask 1047558
    %v723 = vsel %vm722, %v721, %v718
    %724 = vrot.lane.b32.xlu0 %v723, 64
    %v725 = vpop.permute.xlu0 %724
    %vm726 = vcmask 556544
    %727 = vst.msk [vmem:[#allocation0] sm:$0x3] %vm726, %v725
    %s728 = scalar_lea.vmem [#allocation0], 6
    %729 = vst.msk [vmem:[%s728] sm:$0xc] %vm726, %v725
    %s730 = scalar_lea.vmem [#allocation0], 12
    %731 = vst.msk [vmem:[%s730] sm:$0x30] %vm726, %v725
    %s732 = scalar_lea.vmem [#allocation0], 18
    %733 = vst.msk [vmem:[%s732] sm:$0xc0] %vm726, %v725
    %s734 = scalar_lea.vmem %s0, 144
    %s735 = smov 3
    %v736 = vld [vmem:[%s734] ss:$200 sm:%s735]
    %s737 = scalar_lea.vmem %s0, 4294967072
    %s738 = smov 12
    %v739 = vld [vmem:[%s737] ss:$200 sm:%s738]
    %vm740 = vcmask 1043458
    %v741 = vsel %vm740, %v739, %v736
    %742 = vrot.lane.b32.xlu0 %v741, 64
    %v743 = vpop.permute.xlu0 %742
    %vm744 = vcmask 556544
    %s745 = scalar_lea.vmem [#allocation0], 32
    %746 = vst.msk [vmem:[%s745] sm:$0x3] %vm744, %v743
    %s747 = scalar_lea.vmem [#allocation0], 38
    %748 = vst.msk [vmem:[%s747] sm:$0xc] %vm744, %v743
    %s749 = scalar_lea.vmem %s0, 15
    %s750 = smov 3
    %v751 = vld [vmem:[%s749] ss:$200 sm:%s750]
    %s752 = scalar_lea.vmem %s0, 4294966943
    %s753 = smov 12
    %v754 = vld [vmem:[%s752] ss:$200 sm:%s753]
    %vm755 = vcmask 1043458
    %v756 = vsel %vm755, %v754, %v751
    %s757 = scalar_lea.vmem %s0, 4294966575
    %s758 = smov 48
    %v759 = vld [vmem:[%s757] ss:$200 sm:%s758]
    %vm760 = vcmask 1045508
    %v761 = vsel %vm760, %v759, %v756
    %s762 = scalar_lea.vmem %s0, 4294966207
    %s763 = smov 192
    %v764 = vld [vmem:[%s762] ss:$200 sm:%s763]
    %vm765 = vcmask 1047558
    %v766 = vsel %vm765, %v764, %v761
    %767 = vrot.lane.b32.xlu0 %v766, 60
    %v768 = vpop.permute.xlu0 %767
    %vm769 = vcmask 523744
    %770 = vst.msk [vmem:[#allocation0] sm:$0x3] %vm769, %v768
    %s771 = scalar_lea.vmem [#allocation0], 6
    %772 = vst.msk [vmem:[%s771] sm:$0xc] %vm769, %v768
    %s773 = scalar_lea.vmem [#allocation0], 12
    %774 = vst.msk [vmem:[%s773] sm:$0x30] %vm769, %v768
    %s775 = scalar_lea.vmem [#allocation0], 18
    %776 = vst.msk [vmem:[%s775] sm:$0xc0] %vm769, %v768
    %s777 = scalar_lea.vmem %s0, 143
    %s778 = smov 3
    %v779 = vld [vmem:[%s777] ss:$200 sm:%s778]
    %s780 = scalar_lea.vmem %s0, 4294967071
    %s781 = smov 12
    %v782 = vld [vmem:[%s780] ss:$200 sm:%s781]
    %vm783 = vcmask 1043458
    %v784 = vsel %vm783, %v782, %v779
    %785 = vrot.lane.b32.xlu0 %v784, 60
    %v786 = vpop.permute.xlu0 %785
    %vm787 = vcmask 523744
    %s788 = scalar_lea.vmem [#allocation0], 32
    %789 = vst.msk [vmem:[%s788] sm:$0x3] %vm787, %v786
    %s790 = scalar_lea.vmem [#allocation0], 38
    %791 = vst.msk [vmem:[%s790] sm:$0xc] %vm787, %v786
    %s792 = scalar_lea.vmem %s0, 14
    %s793 = smov 3
    %v794 = vld [vmem:[%s792] ss:$200 sm:%s793]
    %s795 = scalar_lea.vmem %s0, 4294966942
    %s796 = smov 12
    %v797 = vld [vmem:[%s795] ss:$200 sm:%s796]
    %vm798 = vcmask 1043458
    %v799 = vsel %vm798, %v797, %v794
    %s800 = scalar_lea.vmem %s0, 4294966574
    %s801 = smov 48
    %v802 = vld [vmem:[%s800] ss:$200 sm:%s801]
    %vm803 = vcmask 1045508
    %v804 = vsel %vm803, %v802, %v799
    %s805 = scalar_lea.vmem %s0, 4294966206
    %s806 = smov 192
    %v807 = vld [vmem:[%s805] ss:$200 sm:%s806]
    %vm808 = vcmask 1047558
    %v809 = vsel %vm808, %v807, %v804
    %810 = vrot.lane.b32.xlu0 %v809, 56
    %v811 = vpop.permute.xlu0 %810
    %vm812 = vcmask 490944
    %813 = vst.msk [vmem:[#allocation0] sm:$0x3] %vm812, %v811
    %s814 = scalar_lea.vmem [#allocation0], 6
    %815 = vst.msk [vmem:[%s814] sm:$0xc] %vm812, %v811
    %s816 = scalar_lea.vmem [#allocation0], 12
    %817 = vst.msk [vmem:[%s816] sm:$0x30] %vm812, %v811
    %s818 = scalar_lea.vmem [#allocation0], 18
    %819 = vst.msk [vmem:[%s818] sm:$0xc0] %vm812, %v811
    %s820 = scalar_lea.vmem %s0, 142
    %s821 = smov 3
    %v822 = vld [vmem:[%s820] ss:$200 sm:%s821]
    %s823 = scalar_lea.vmem %s0, 4294967070
    %s824 = smov 12
    %v825 = vld [vmem:[%s823] ss:$200 sm:%s824]
    %vm826 = vcmask 1043458
    %v827 = vsel %vm826, %v825, %v822
    %828 = vrot.lane.b32.xlu0 %v827, 56
    %v829 = vpop.permute.xlu0 %828
    %vm830 = vcmask 490944
    %s831 = scalar_lea.vmem [#allocation0], 32
    %832 = vst.msk [vmem:[%s831] sm:$0x3] %vm830, %v829
    %s833 = scalar_lea.vmem [#allocation0], 38
    %834 = vst.msk [vmem:[%s833] sm:$0xc] %vm830, %v829
    %s835 = scalar_lea.vmem %s0, 13
    %s836 = smov 3
    %v837 = vld [vmem:[%s835] ss:$200 sm:%s836]
    %s838 = scalar_lea.vmem %s0, 4294966941
    %s839 = smov 12
    %v840 = vld [vmem:[%s838] ss:$200 sm:%s839]
    %vm841 = vcmask 1043458
    %v842 = vsel %vm841, %v840, %v837
    %s843 = scalar_lea.vmem %s0, 4294966573
    %s844 = smov 48
    %v845 = vld [vmem:[%s843] ss:$200 sm:%s844]
    %vm846 = vcmask 1045508
    %v847 = vsel %vm846, %v845, %v842
    %s848 = scalar_lea.vmem %s0, 4294966205
    %s849 = smov 192
    %v850 = vld [vmem:[%s848] ss:$200 sm:%s849]
    %vm851 = vcmask 1047558
    %v852 = vsel %vm851, %v850, %v847
    %853 = vrot.lane.b32.xlu0 %v852, 52
    %v854 = vpop.permute.xlu0 %853
    %vm855 = vcmask 458144
    %856 = vst.msk [vmem:[#allocation0] sm:$0x3] %vm855, %v854
    %s857 = scalar_lea.vmem [#allocation0], 6
    %858 = vst.msk [vmem:[%s857] sm:$0xc] %vm855, %v854
    %s859 = scalar_lea.vmem [#allocation0], 12
    %860 = vst.msk [vmem:[%s859] sm:$0x30] %vm855, %v854
    %s861 = scalar_lea.vmem [#allocation0], 18
    %862 = vst.msk [vmem:[%s861] sm:$0xc0] %vm855, %v854
    %s863 = scalar_lea.vmem %s0, 141
    %s864 = smov 3
    %v865 = vld [vmem:[%s863] ss:$200 sm:%s864]
    %s866 = scalar_lea.vmem %s0, 4294967069
    %s867 = smov 12
    %v868 = vld [vmem:[%s866] ss:$200 sm:%s867]
    %vm869 = vcmask 1043458
    %v870 = vsel %vm869, %v868, %v865
    %871 = vrot.lane.b32.xlu0 %v870, 52
    %v872 = vpop.permute.xlu0 %871
    %vm873 = vcmask 458144
    %s874 = scalar_lea.vmem [#allocation0], 32
    %875 = vst.msk [vmem:[%s874] sm:$0x3] %vm873, %v872
    %s876 = scalar_lea.vmem [#allocation0], 38
    %877 = vst.msk [vmem:[%s876] sm:$0xc] %vm873, %v872
    %s878 = scalar_lea.vmem %s0, 12
    %s879 = smov 3
    %v880 = vld [vmem:[%s878] ss:$200 sm:%s879]
    %s881 = scalar_lea.vmem %s0, 4294966940
    %s882 = smov 12
    %v883 = vld [vmem:[%s881] ss:$200 sm:%s882]
    %vm884 = vcmask 1043458
    %v885 = vsel %vm884, %v883, %v880
    %s886 = scalar_lea.vmem %s0, 4294966572
    %s887 = smov 48
    %v888 = vld [vmem:[%s886] ss:$200 sm:%s887]
    %vm889 = vcmask 1045508
    %v890 = vsel %vm889, %v888, %v885
    %s891 = scalar_lea.vmem %s0, 4294966204
    %s892 = smov 192
    %v893 = vld [vmem:[%s891] ss:$200 sm:%s892]
    %vm894 = vcmask 1047558
    %v895 = vsel %vm894, %v893, %v890
    %896 = vrot.lane.b32.xlu0 %v895, 48
    %v897 = vpop.permute.xlu0 %896
    %vm898 = vcmask 425344
    %899 = vst.msk [vmem:[#allocation0] sm:$0x3] %vm898, %v897
    %s900 = scalar_lea.vmem [#allocation0], 6
    %901 = vst.msk [vmem:[%s900] sm:$0xc] %vm898, %v897
    %s902 = scalar_lea.vmem [#allocation0], 12
    %903 = vst.msk [vmem:[%s902] sm:$0x30] %vm898, %v897
    %s904 = scalar_lea.vmem [#allocation0], 18
    %905 = vst.msk [vmem:[%s904] sm:$0xc0] %vm898, %v897
    %s906 = scalar_lea.vmem %s0, 140
    %s907 = smov 3
    %v908 = vld [vmem:[%s906] ss:$200 sm:%s907]
    %s909 = scalar_lea.vmem %s0, 4294967068
    %s910 = smov 12
    %v911 = vld [vmem:[%s909] ss:$200 sm:%s910]
    %vm912 = vcmask 1043458
    %v913 = vsel %vm912, %v911, %v908
    %914 = vrot.lane.b32.xlu0 %v913, 48
    %v915 = vpop.permute.xlu0 %914
    %vm916 = vcmask 425344
    %s917 = scalar_lea.vmem [#allocation0], 32
    %918 = vst.msk [vmem:[%s917] sm:$0x3] %vm916, %v915
    %s919 = scalar_lea.vmem [#allocation0], 38
    %920 = vst.msk [vmem:[%s919] sm:$0xc] %vm916, %v915
    %s921 = scalar_lea.vmem %s0, 11
    %s922 = smov 3
    %v923 = vld [vmem:[%s921] ss:$200 sm:%s922]
    %s924 = scalar_lea.vmem %s0, 4294966939
    %s925 = smov 12
    %v926 = vld [vmem:[%s924] ss:$200 sm:%s925]
    %vm927 = vcmask 1043458
    %v928 = vsel %vm927, %v926, %v923
    %s929 = scalar_lea.vmem %s0, 4294966571
    %s930 = smov 48
    %v931 = vld [vmem:[%s929] ss:$200 sm:%s930]
    %vm932 = vcmask 1045508
    %v933 = vsel %vm932, %v931, %v928
    %s934 = scalar_lea.vmem %s0, 4294966203
    %s935 = smov 192
    %v936 = vld [vmem:[%s934] ss:$200 sm:%s935]
    %vm937 = vcmask 1047558
    %v938 = vsel %vm937, %v936, %v933
    %939 = vrot.lane.b32.xlu0 %v938, 44
    %v940 = vpop.permute.xlu0 %939
    %vm941 = vcmask 392544
    %942 = vst.msk [vmem:[#allocation0] sm:$0x3] %vm941, %v940
    %s943 = scalar_lea.vmem [#allocation0], 6
    %944 = vst.msk [vmem:[%s943] sm:$0xc] %vm941, %v940
    %s945 = scalar_lea.vmem [#allocation0], 12
    %946 = vst.msk [vmem:[%s945] sm:$0x30] %vm941, %v940
    %s947 = scalar_lea.vmem [#allocation0], 18
    %948 = vst.msk [vmem:[%s947] sm:$0xc0] %vm941, %v940
    %s949 = scalar_lea.vmem %s0, 139
    %s950 = smov 3
    %v951 = vld [vmem:[%s949] ss:$200 sm:%s950]
    %s952 = scalar_lea.vmem %s0, 4294967067
    %s953 = smov 12
    %v954 = vld [vmem:[%s952] ss:$200 sm:%s953]
    %vm955 = vcmask 1043458
    %v956 = vsel %vm955, %v954, %v951
    %957 = vrot.lane.b32.xlu0 %v956, 44
    %v958 = vpop.permute.xlu0 %957
    %vm959 = vcmask 392544
    %s960 = scalar_lea.vmem [#allocation0], 32
    %961 = vst.msk [vmem:[%s960] sm:$0x3] %vm959, %v958
    %s962 = scalar_lea.vmem [#allocation0], 38
    %963 = vst.msk [vmem:[%s962] sm:$0xc] %vm959, %v958
    %s964 = scalar_lea.vmem %s0, 10
    %s965 = smov 3
    %v966 = vld [vmem:[%s964] ss:$200 sm:%s965]
    %s967 = scalar_lea.vmem %s0, 4294966938
    %s968 = smov 12
    %v969 = vld [vmem:[%s967] ss:$200 sm:%s968]
    %vm970 = vcmask 1043458
    %v971 = vsel %vm970, %v969, %v966
    %s972 = scalar_lea.vmem %s0, 4294966570
    %s973 = smov 48
    %v974 = vld [vmem:[%s972] ss:$200 sm:%s973]
    %vm975 = vcmask 1045508
    %v976 = vsel %vm975, %v974, %v971
    %s977 = scalar_lea.vmem %s0, 4294966202
    %s978 = smov 192
    %v979 = vld [vmem:[%s977] ss:$200 sm:%s978]
    %vm980 = vcmask 1047558
    %v981 = vsel %vm980, %v979, %v976
    %982 = vrot.lane.b32.xlu0 %v981, 40
    %v983 = vpop.permute.xlu0 %982
    %vm984 = vcmask 359744
    %985 = vst.msk [vmem:[#allocation0] sm:$0x3] %vm984, %v983
    %s986 = scalar_lea.vmem [#allocation0], 6
    %987 = vst.msk [vmem:[%s986] sm:$0xc] %vm984, %v983
    %s988 = scalar_lea.vmem [#allocation0], 12
    %989 = vst.msk [vmem:[%s988] sm:$0x30] %vm984, %v983
    %s990 = scalar_lea.vmem [#allocation0], 18
    %991 = vst.msk [vmem:[%s990] sm:$0xc0] %vm984, %v983
    %s992 = scalar_lea.vmem %s0, 138
    %s993 = smov 3
    %v994 = vld [vmem:[%s992] ss:$200 sm:%s993]
    %s995 = scalar_lea.vmem %s0, 4294967066
    %s996 = smov 12
    %v997 = vld [vmem:[%s995] ss:$200 sm:%s996]
    %vm998 = vcmask 1043458
    %v999 = vsel %vm998, %v997, %v994
    %1000 = vrot.lane.b32.xlu0 %v999, 40
    %v1001 = vpop.permute.xlu0 %1000
    %vm1002 = vcmask 359744
    %s1003 = scalar_lea.vmem [#allocation0], 32
    %1004 = vst.msk [vmem:[%s1003] sm:$0x3] %vm1002, %v1001
    %s1005 = scalar_lea.vmem [#allocation0], 38
    %1006 = vst.msk [vmem:[%s1005] sm:$0xc] %vm1002, %v1001
    %s1007 = scalar_lea.vmem %s0, 9
    %s1008 = smov 3
    %v1009 = vld [vmem:[%s1007] ss:$200 sm:%s1008]
    %s1010 = scalar_lea.vmem %s0, 4294966937
    %s1011 = smov 12
    %v1012 = vld [vmem:[%s1010] ss:$200 sm:%s1011]
    %vm1013 = vcmask 1043458
    %v1014 = vsel %vm1013, %v1012, %v1009
    %s1015 = scalar_lea.vmem %s0, 4294966569
    %s1016 = smov 48
    %v1017 = vld [vmem:[%s1015] ss:$200 sm:%s1016]
    %vm1018 = vcmask 1045508
    %v1019 = vsel %vm1018, %v1017, %v1014
    %s1020 = scalar_lea.vmem %s0, 4294966201
    %s1021 = smov 192
    %v1022 = vld [vmem:[%s1020] ss:$200 sm:%s1021]
    %vm1023 = vcmask 1047558
    %v1024 = vsel %vm1023, %v1022, %v1019
    %1025 = vrot.lane.b32.xlu0 %v1024, 36
    %v1026 = vpop.permute.xlu0 %1025
    %vm1027 = vcmask 326944
    %1028 = vst.msk [vmem:[#allocation0] sm:$0x3] %vm1027, %v1026
    %s1029 = scalar_lea.vmem [#allocation0], 6
    %1030 = vst.msk [vmem:[%s1029] sm:$0xc] %vm1027, %v1026
    %s1031 = scalar_lea.vmem [#allocation0], 12
    %1032 = vst.msk [vmem:[%s1031] sm:$0x30] %vm1027, %v1026
    %s1033 = scalar_lea.vmem [#allocation0], 18
    %1034 = vst.msk [vmem:[%s1033] sm:$0xc0] %vm1027, %v1026
    %s1035 = scalar_lea.vmem %s0, 137
    %s1036 = smov 3
    %v1037 = vld [vmem:[%s1035] ss:$200 sm:%s1036]
    %s1038 = scalar_lea.vmem %s0, 4294967065
    %s1039 = smov 12
    %v1040 = vld [vmem:[%s1038] ss:$200 sm:%s1039]
    %vm1041 = vcmask 1043458
    %v1042 = vsel %vm1041, %v1040, %v1037
    %1043 = vrot.lane.b32.xlu0 %v1042, 36
    %v1044 = vpop.permute.xlu0 %1043
    %vm1045 = vcmask 326944
    %s1046 = scalar_lea.vmem [#allocation0], 32
    %1047 = vst.msk [vmem:[%s1046] sm:$0x3] %vm1045, %v1044
    %s1048 = scalar_lea.vmem [#allocation0], 38
    %1049 = vst.msk [vmem:[%s1048] sm:$0xc] %vm1045, %v1044
    %s1050 = scalar_lea.vmem %s0, 8
    %s1051 = smov 3
    %v1052 = vld [vmem:[%s1050] ss:$200 sm:%s1051]
    %s1053 = scalar_lea.vmem %s0, 4294966936
    %s1054 = smov 12
    %v1055 = vld [vmem:[%s1053] ss:$200 sm:%s1054]
    %vm1056 = vcmask 1043458
    %v1057 = vsel %vm1056, %v1055, %v1052
    %s1058 = scalar_lea.vmem %s0, 4294966568
    %s1059 = smov 48
    %v1060 = vld [vmem:[%s1058] ss:$200 sm:%s1059]
    %vm1061 = vcmask 1045508
    %v1062 = vsel %vm1061, %v1060, %v1057
    %s1063 = scalar_lea.vmem %s0, 4294966200
    %s1064 = smov 192
    %v1065 = vld [vmem:[%s1063] ss:$200 sm:%s1064]
    %vm1066 = vcmask 1047558
    %v1067 = vsel %vm1066, %v1065, %v1062
    %1068 = vrot.lane.b32.xlu0 %v1067, 32
    %v1069 = vpop.permute.xlu0 %1068
    %vm1070 = vcmask 294144
    %1071 = vst.msk [vmem:[#allocation0] sm:$0x3] %vm1070, %v1069
    %s1072 = scalar_lea.vmem [#allocation0], 6
    %1073 = vst.msk [vmem:[%s1072] sm:$0xc] %vm1070, %v1069
    %s1074 = scalar_lea.vmem [#allocation0], 12
    %1075 = vst.msk [vmem:[%s1074] sm:$0x30] %vm1070, %v1069
    %s1076 = scalar_lea.vmem [#allocation0], 18
    %1077 = vst.msk [vmem:[%s1076] sm:$0xc0] %vm1070, %v1069
    %s1078 = scalar_lea.vmem %s0, 136
    %s1079 = smov 3
    %v1080 = vld [vmem:[%s1078] ss:$200 sm:%s1079]
    %s1081 = scalar_lea.vmem %s0, 4294967064
    %s1082 = smov 12
    %v1083 = vld [vmem:[%s1081] ss:$200 sm:%s1082]
    %vm1084 = vcmask 1043458
    %v1085 = vsel %vm1084, %v1083, %v1080
    %1086 = vrot.lane.b32.xlu0 %v1085, 32
    %v1087 = vpop.permute.xlu0 %1086
    %vm1088 = vcmask 294144
    %s1089 = scalar_lea.vmem [#allocation0], 32
    %1090 = vst.msk [vmem:[%s1089] sm:$0x3] %vm1088, %v1087
    %s1091 = scalar_lea.vmem [#allocation0], 38
    %1092 = vst.msk [vmem:[%s1091] sm:$0xc] %vm1088, %v1087
    %s1093 = scalar_lea.vmem %s0, 7
    %s1094 = smov 3
    %v1095 = vld [vmem:[%s1093] ss:$200 sm:%s1094]
    %s1096 = scalar_lea.vmem %s0, 4294966935
    %s1097 = smov 12
    %v1098 = vld [vmem:[%s1096] ss:$200 sm:%s1097]
    %vm1099 = vcmask 1043458
    %v1100 = vsel %vm1099, %v1098, %v1095
    %s1101 = scalar_lea.vmem %s0, 4294966567
    %s1102 = smov 48
    %v1103 = vld [vmem:[%s1101] ss:$200 sm:%s1102]
    %vm1104 = vcmask 1045508
    %v1105 = vsel %vm1104, %v1103, %v1100
    %s1106 = scalar_lea.vmem %s0, 4294966199
    %s1107 = smov 192
    %v1108 = vld [vmem:[%s1106] ss:$200 sm:%s1107]
    %vm1109 = vcmask 1047558
    %v1110 = vsel %vm1109, %v1108, %v1105
    %1111 = vrot.lane.b32.xlu0 %v1110, 28
    %v1112 = vpop.permute.xlu0 %1111
    %vm1113 = vcmask 261344
    %1114 = vst.msk [vmem:[#allocation0] sm:$0x3] %vm1113, %v1112
    %s1115 = scalar_lea.vmem [#allocation0], 6
    %1116 = vst.msk [vmem:[%s1115] sm:$0xc] %vm1113, %v1112
    %s1117 = scalar_lea.vmem [#allocation0], 12
    %1118 = vst.msk [vmem:[%s1117] sm:$0x30] %vm1113, %v1112
    %s1119 = scalar_lea.vmem [#allocation0], 18
    %1120 = vst.msk [vmem:[%s1119] sm:$0xc0] %vm1113, %v1112
    %s1121 = scalar_lea.vmem %s0, 135
    %s1122 = smov 3
    %v1123 = vld [vmem:[%s1121] ss:$200 sm:%s1122]
    %s1124 = scalar_lea.vmem %s0, 4294967063
    %s1125 = smov 12
    %v1126 = vld [vmem:[%s1124] ss:$200 sm:%s1125]
    %vm1127 = vcmask 1043458
    %v1128 = vsel %vm1127, %v1126, %v1123
    %1129 = vrot.lane.b32.xlu0 %v1128, 28
    %v1130 = vpop.permute.xlu0 %1129
    %vm1131 = vcmask 261344
    %s1132 = scalar_lea.vmem [#allocation0], 32
    %1133 = vst.msk [vmem:[%s1132] sm:$0x3] %vm1131, %v1130
    %s1134 = scalar_lea.vmem [#allocation0], 38
    %1135 = vst.msk [vmem:[%s1134] sm:$0xc] %vm1131, %v1130
    %s1136 = scalar_lea.vmem %s0, 6
    %s1137 = smov 3
    %v1138 = vld [vmem:[%s1136] ss:$200 sm:%s1137]
    %s1139 = scalar_lea.vmem %s0, 4294966934
    %s1140 = smov 12
    %v1141 = vld [vmem:[%s1139] ss:$200 sm:%s1140]
    %vm1142 = vcmask 1043458
    %v1143 = vsel %vm1142, %v1141, %v1138
    %s1144 = scalar_lea.vmem %s0, 4294966566
    %s1145 = smov 48
    %v1146 = vld [vmem:[%s1144] ss:$200 sm:%s1145]
    %vm1147 = vcmask 1045508
    %v1148 = vsel %vm1147, %v1146, %v1143
    %s1149 = scalar_lea.vmem %s0, 4294966198
    %s1150 = smov 192
    %v1151 = vld [vmem:[%s1149] ss:$200 sm:%s1150]
    %vm1152 = vcmask 1047558
    %v1153 = vsel %vm1152, %v1151, %v1148
    %1154 = vrot.lane.b32.xlu0 %v1153, 24
    %v1155 = vpop.permute.xlu0 %1154
    %vm1156 = vcmask 228544
    %1157 = vst.msk [vmem:[#allocation0] sm:$0x3] %vm1156, %v1155
    %s1158 = scalar_lea.vmem [#allocation0], 6
    %1159 = vst.msk [vmem:[%s1158] sm:$0xc] %vm1156, %v1155
    %s1160 = scalar_lea.vmem [#allocation0], 12
    %1161 = vst.msk [vmem:[%s1160] sm:$0x30] %vm1156, %v1155
    %s1162 = scalar_lea.vmem [#allocation0], 18
    %1163 = vst.msk [vmem:[%s1162] sm:$0xc0] %vm1156, %v1155
    %s1164 = scalar_lea.vmem %s0, 134
    %s1165 = smov 3
    %v1166 = vld [vmem:[%s1164] ss:$200 sm:%s1165]
    %s1167 = scalar_lea.vmem %s0, 4294967062
    %s1168 = smov 12
    %v1169 = vld [vmem:[%s1167] ss:$200 sm:%s1168]
    %vm1170 = vcmask 1043458
    %v1171 = vsel %vm1170, %v1169, %v1166
    %1172 = vrot.lane.b32.xlu0 %v1171, 24
    %v1173 = vpop.permute.xlu0 %1172
    %vm1174 = vcmask 228544
    %s1175 = scalar_lea.vmem [#allocation0], 32
    %1176 = vst.msk [vmem:[%s1175] sm:$0x3] %vm1174, %v1173
    %s1177 = scalar_lea.vmem [#allocation0], 38
    %1178 = vst.msk [vmem:[%s1177] sm:$0xc] %vm1174, %v1173
    %s1179 = scalar_lea.vmem %s0, 5
    %s1180 = smov 3
    %v1181 = vld [vmem:[%s1179] ss:$200 sm:%s1180]
    %s1182 = scalar_lea.vmem %s0, 4294966933
    %s1183 = smov 12
    %v1184 = vld [vmem:[%s1182] ss:$200 sm:%s1183]
    %vm1185 = vcmask 1043458
    %v1186 = vsel %vm1185, %v1184, %v1181
    %s1187 = scalar_lea.vmem %s0, 4294966565
    %s1188 = smov 48
    %v1189 = vld [vmem:[%s1187] ss:$200 sm:%s1188]
    %vm1190 = vcmask 1045508
    %v1191 = vsel %vm1190, %v1189, %v1186
    %s1192 = scalar_lea.vmem %s0, 4294966197
    %s1193 = smov 192
    %v1194 = vld [vmem:[%s1192] ss:$200 sm:%s1193]
    %vm1195 = vcmask 1047558
    %v1196 = vsel %vm1195, %v1194, %v1191
    %1197 = vrot.lane.b32.xlu0 %v1196, 20
    %v1198 = vpop.permute.xlu0 %1197
    %vm1199 = vcmask 195744
    %1200 = vst.msk [vmem:[#allocation0] sm:$0x3] %vm1199, %v1198
    %s1201 = scalar_lea.vmem [#allocation0], 6
    %1202 = vst.msk [vmem:[%s1201] sm:$0xc] %vm1199, %v1198
    %s1203 = scalar_lea.vmem [#allocation0], 12
    %1204 = vst.msk [vmem:[%s1203] sm:$0x30] %vm1199, %v1198
    %s1205 = scalar_lea.vmem [#allocation0], 18
    %1206 = vst.msk [vmem:[%s1205] sm:$0xc0] %vm1199, %v1198
    %s1207 = scalar_lea.vmem %s0, 133
    %s1208 = smov 3
    %v1209 = vld [vmem:[%s1207] ss:$200 sm:%s1208]
    %s1210 = scalar_lea.vmem %s0, 4294967061
    %s1211 = smov 12
    %v1212 = vld [vmem:[%s1210] ss:$200 sm:%s1211]
    %vm1213 = vcmask 1043458
    %v1214 = vsel %vm1213, %v1212, %v1209
    %1215 = vrot.lane.b32.xlu0 %v1214, 20
    %v1216 = vpop.permute.xlu0 %1215
    %vm1217 = vcmask 195744
    %s1218 = scalar_lea.vmem [#allocation0], 32
    %1219 = vst.msk [vmem:[%s1218] sm:$0x3] %vm1217, %v1216
    %s1220 = scalar_lea.vmem [#allocation0], 38
    %1221 = vst.msk [vmem:[%s1220] sm:$0xc] %vm1217, %v1216
    %s1222 = scalar_lea.vmem %s0, 4
    %s1223 = smov 3
    %v1224 = vld [vmem:[%s1222] ss:$200 sm:%s1223]
    %s1225 = scalar_lea.vmem %s0, 4294966932
    %s1226 = smov 12
    %v1227 = vld [vmem:[%s1225] ss:$200 sm:%s1226]
    %vm1228 = vcmask 1043458
    %v1229 = vsel %vm1228, %v1227, %v1224
    %s1230 = scalar_lea.vmem %s0, 4294966564
    %s1231 = smov 48
    %v1232 = vld [vmem:[%s1230] ss:$200 sm:%s1231]
    %vm1233 = vcmask 1045508
    %v1234 = vsel %vm1233, %v1232, %v1229
    %s1235 = scalar_lea.vmem %s0, 4294966196
    %s1236 = smov 192
    %v1237 = vld [vmem:[%s1235] ss:$200 sm:%s1236]
    %vm1238 = vcmask 1047558
    %v1239 = vsel %vm1238, %v1237, %v1234
    %1240 = vrot.lane.b32.xlu0 %v1239, 16
    %v1241 = vpop.permute.xlu0 %1240
    %vm1242 = vcmask 162944
    %1243 = vst.msk [vmem:[#allocation0] sm:$0x3] %vm1242, %v1241
    %s1244 = scalar_lea.vmem [#allocation0], 6
    %1245 = vst.msk [vmem:[%s1244] sm:$0xc] %vm1242, %v1241
    %s1246 = scalar_lea.vmem [#allocation0], 12
    %1247 = vst.msk [vmem:[%s1246] sm:$0x30] %vm1242, %v1241
    %s1248 = scalar_lea.vmem [#allocation0], 18
    %1249 = vst.msk [vmem:[%s1248] sm:$0xc0] %vm1242, %v1241
    %s1250 = scalar_lea.vmem %s0, 132
    %s1251 = smov 3
    %v1252 = vld [vmem:[%s1250] ss:$200 sm:%s1251]
    %s1253 = scalar_lea.vmem %s0, 4294967060
    %s1254 = smov 12
    %v1255 = vld [vmem:[%s1253] ss:$200 sm:%s1254]
    %vm1256 = vcmask 1043458
    %v1257 = vsel %vm1256, %v1255, %v1252
    %1258 = vrot.lane.b32.xlu0 %v1257, 16
    %v1259 = vpop.permute.xlu0 %1258
    %vm1260 = vcmask 162944
    %s1261 = scalar_lea.vmem [#allocation0], 32
    %1262 = vst.msk [vmem:[%s1261] sm:$0x3] %vm1260, %v1259
    %s1263 = scalar_lea.vmem [#allocation0], 38
    %1264 = vst.msk [vmem:[%s1263] sm:$0xc] %vm1260, %v1259
    %s1265 = scalar_lea.vmem %s0, 3
    %s1266 = smov 3
    %v1267 = vld [vmem:[%s1265] ss:$200 sm:%s1266]
    %s1268 = scalar_lea.vmem %s0, 4294966931
    %s1269 = smov 12
    %v1270 = vld [vmem:[%s1268] ss:$200 sm:%s1269]
    %vm1271 = vcmask 1043458
    %v1272 = vsel %vm1271, %v1270, %v1267
    %s1273 = scalar_lea.vmem %s0, 4294966563
    %s1274 = smov 48
    %v1275 = vld [vmem:[%s1273] ss:$200 sm:%s1274]
    %vm1276 = vcmask 1045508
    %v1277 = vsel %vm1276, %v1275, %v1272
    %s1278 = scalar_lea.vmem %s0, 4294966195
    %s1279 = smov 192
    %v1280 = vld [vmem:[%s1278] ss:$200 sm:%s1279]
    %vm1281 = vcmask 1047558
    %v1282 = vsel %vm1281, %v1280, %v1277
    %1283 = vrot.lane.b32.xlu0 %v1282, 12
    %v1284 = vpop.permute.xlu0 %1283
    %vm1285 = vcmask 130144
    %1286 = vst.msk [vmem:[#allocation0] sm:$0x3] %vm1285, %v1284
    %s1287 = scalar_lea.vmem [#allocation0], 6
    %1288 = vst.msk [vmem:[%s1287] sm:$0xc] %vm1285, %v1284
    %s1289 = scalar_lea.vmem [#allocation0], 12
    %1290 = vst.msk [vmem:[%s1289] sm:$0x30] %vm1285, %v1284
    %s1291 = scalar_lea.vmem [#allocation0], 18
    %1292 = vst.msk [vmem:[%s1291] sm:$0xc0] %vm1285, %v1284
    %s1293 = scalar_lea.vmem %s0, 131
    %s1294 = smov 3
    %v1295 = vld [vmem:[%s1293] ss:$200 sm:%s1294]
    %s1296 = scalar_lea.vmem %s0, 4294967059
    %s1297 = smov 12
    %v1298 = vld [vmem:[%s1296] ss:$200 sm:%s1297]
    %vm1299 = vcmask 1043458
    %v1300 = vsel %vm1299, %v1298, %v1295
    %s1301 = scalar_lea.vmem %s0, 4294966691
    %s1302 = smov 48
    %v1303 = vld [vmem:[%s1301] ss:$200 sm:%s1302]
    %vm1304 = vcmask 1045508
    %v1305 = vsel %vm1304, %v1303, %v1300
    %1306 = vrot.lane.b32.xlu0 %v1305, 12
    %v1307 = vpop.permute.xlu0 %1306
    %vm1308 = vcmask 130144
    %s1309 = scalar_lea.vmem [#allocation0], 32
    %1310 = vst.msk [vmem:[%s1309] sm:$0x3] %vm1308, %v1307
    %s1311 = scalar_lea.vmem [#allocation0], 38
    %1312 = vst.msk [vmem:[%s1311] sm:$0xc] %vm1308, %v1307
    %s1313 = scalar_lea.vmem [#allocation0], 44
    %1314 = vst.msk [vmem:[%s1313] sm:$0x30] %vm1308, %v1307
    %s1315 = scalar_lea.vmem %s0, 2
    %s1316 = smov 3
    %v1317 = vld [vmem:[%s1315] ss:$200 sm:%s1316]
    %s1318 = scalar_lea.vmem %s0, 4294966930
    %s1319 = smov 12
    %v1320 = vld [vmem:[%s1318] ss:$200 sm:%s1319]
    %vm1321 = vcmask 1043458
    %v1322 = vsel %vm1321, %v1320, %v1317
    %s1323 = scalar_lea.vmem %s0, 4294966562
    %s1324 = smov 48
    %v1325 = vld [vmem:[%s1323] ss:$200 sm:%s1324]
    %vm1326 = vcmask 1045508
    %v1327 = vsel %vm1326, %v1325, %v1322
    %s1328 = scalar_lea.vmem %s0, 4294966194
    %s1329 = smov 192
    %v1330 = vld [vmem:[%s1328] ss:$200 sm:%s1329]
    %vm1331 = vcmask 1047558
    %v1332 = vsel %vm1331, %v1330, %v1327
    %1333 = vrot.lane.b32.xlu0 %v1332, 8
    %v1334 = vpop.permute.xlu0 %1333
    %vm1335 = vcmask 97344
    %1336 = vst.msk [vmem:[#allocation0] sm:$0x3] %vm1335, %v1334
    %s1337 = scalar_lea.vmem [#allocation0], 6
    %1338 = vst.msk [vmem:[%s1337] sm:$0xc] %vm1335, %v1334
    %s1339 = scalar_lea.vmem [#allocation0], 12
    %1340 = vst.msk [vmem:[%s1339] sm:$0x30] %vm1335, %v1334
    %s1341 = scalar_lea.vmem [#allocation0], 18
    %1342 = vst.msk [vmem:[%s1341] sm:$0xc0] %vm1335, %v1334
    %s1343 = scalar_lea.vmem %s0, 130
    %s1344 = smov 3
    %v1345 = vld [vmem:[%s1343] ss:$200 sm:%s1344]
    %s1346 = scalar_lea.vmem %s0, 4294967058
    %s1347 = smov 12
    %v1348 = vld [vmem:[%s1346] ss:$200 sm:%s1347]
    %vm1349 = vcmask 1043458
    %v1350 = vsel %vm1349, %v1348, %v1345
    %s1351 = scalar_lea.vmem %s0, 4294966690
    %s1352 = smov 48
    %v1353 = vld [vmem:[%s1351] ss:$200 sm:%s1352]
    %vm1354 = vcmask 1045508
    %v1355 = vsel %vm1354, %v1353, %v1350
    %1356 = vrot.lane.b32.xlu0 %v1355, 8
    %v1357 = vpop.permute.xlu0 %1356
    %vm1358 = vcmask 97344
    %s1359 = scalar_lea.vmem [#allocation0], 32
    %1360 = vst.msk [vmem:[%s1359] sm:$0x3] %vm1358, %v1357
    %s1361 = scalar_lea.vmem [#allocation0], 38
    %1362 = vst.msk [vmem:[%s1361] sm:$0xc] %vm1358, %v1357
    %s1363 = scalar_lea.vmem [#allocation0], 44
    %1364 = vst.msk [vmem:[%s1363] sm:$0x30] %vm1358, %v1357
    %s1365 = scalar_lea.vmem %s0, 1
    %s1366 = smov 3
    %v1367 = vld [vmem:[%s1365] ss:$200 sm:%s1366]
    %s1368 = scalar_lea.vmem %s0, 4294966929
    %s1369 = smov 12
    %v1370 = vld [vmem:[%s1368] ss:$200 sm:%s1369]
    %vm1371 = vcmask 1043458
    %v1372 = vsel %vm1371, %v1370, %v1367
    %s1373 = scalar_lea.vmem %s0, 4294966561
    %s1374 = smov 48
    %v1375 = vld [vmem:[%s1373] ss:$200 sm:%s1374]
    %vm1376 = vcmask 1045508
    %v1377 = vsel %vm1376, %v1375, %v1372
    %s1378 = scalar_lea.vmem %s0, 4294966193
    %s1379 = smov 192
    %v1380 = vld [vmem:[%s1378] ss:$200 sm:%s1379]
    %vm1381 = vcmask 1047558
    %v1382 = vsel %vm1381, %v1380, %v1377
    %1383 = vrot.lane.b32.xlu0 %v1382, 4
    %v1384 = vpop.permute.xlu0 %1383
    %vm1385 = vcmask 64544
    %1386 = vst.msk [vmem:[#allocation0] sm:$0x3] %vm1385, %v1384
    %s1387 = scalar_lea.vmem [#allocation0], 6
    %1388 = vst.msk [vmem:[%s1387] sm:$0xc] %vm1385, %v1384
    %s1389 = scalar_lea.vmem [#allocation0], 12
    %1390 = vst.msk [vmem:[%s1389] sm:$0x30] %vm1385, %v1384
    %s1391 = scalar_lea.vmem [#allocation0], 18
    %1392 = vst.msk [vmem:[%s1391] sm:$0xc0] %vm1385, %v1384
    %s1393 = scalar_lea.vmem %s0, 129
    %s1394 = smov 3
    %v1395 = vld [vmem:[%s1393] ss:$200 sm:%s1394]
    %s1396 = scalar_lea.vmem %s0, 4294967057
    %s1397 = smov 12
    %v1398 = vld [vmem:[%s1396] ss:$200 sm:%s1397]
    %vm1399 = vcmask 1043458
    %v1400 = vsel %vm1399, %v1398, %v1395
    %s1401 = scalar_lea.vmem %s0, 4294966689
    %s1402 = smov 48
    %v1403 = vld [vmem:[%s1401] ss:$200 sm:%s1402]
    %vm1404 = vcmask 1045508
    %v1405 = vsel %vm1404, %v1403, %v1400
    %1406 = vrot.lane.b32.xlu0 %v1405, 4
    %v1407 = vpop.permute.xlu0 %1406
    %vm1408 = vcmask 64544
    %s1409 = scalar_lea.vmem [#allocation0], 32
    %1410 = vst.msk [vmem:[%s1409] sm:$0x3] %vm1408, %v1407
    %s1411 = scalar_lea.vmem [#allocation0], 38
    %1412 = vst.msk [vmem:[%s1411] sm:$0xc] %vm1408, %v1407
    %s1413 = scalar_lea.vmem [#allocation0], 44
    %1414 = vst.msk [vmem:[%s1413] sm:$0x30] %vm1408, %v1407
    %s1416 = sshllo.u32 0, 2
    %v1418 = vld [vmem:[#allocation0] sm:%s1416]
    %s1419 = sshllo.u32 0, 2
    %1420 = vst [vmem:[%s1] sm:%s1419] %v1418
    %s1421 = scalar_lea.vmem [#allocation0], 8
    %v1422 = vld [vmem:[%s1421] sm:%s1416]
    %s1423 = sshllo.u32 0, 2
    %s1424 = scalar_lea.vmem %s1, 2
    %1425 = vst [vmem:[%s1424] sm:%s1423] %v1422
    %s1426 = scalar_lea.vmem [#allocation0], 16
    %v1427 = vld [vmem:[%s1426] sm:%s1416]
    %s1428 = sshllo.u32 0, 2
    %s1429 = smul.addr 2, 2
    %s1430 = scalar_lea.vmem %s1, %s1429
    %1431 = vst [vmem:[%s1430] sm:%s1428] %v1427
    %s1432 = scalar_lea.vmem [#allocation0], 24
    %v1433 = vld [vmem:[%s1432] sm:%s1416]
    %s1434 = sshllo.u32 0, 2
    %s1435 = smul.addr 2, 3
    %s1436 = scalar_lea.vmem %s1, %s1435
    %1437 = vst [vmem:[%s1436] sm:%s1434] %v1433
    %s1438 = scalar_lea.vmem [#allocation0], 32
    %v1439 = vld [vmem:[%s1438] sm:%s1416]
    %s1440 = sshllo.u32 0, 2
    %s1441 = smul.addr 2, 4
    %s1442 = scalar_lea.vmem %s1, %s1441
    %1443 = vst [vmem:[%s1442] sm:%s1440] %v1439
    %s1444 = scalar_lea.vmem [#allocation0], 40
    %v1445 = vld [vmem:[%s1444] sm:%s1416]
    %s1446 = sshllo.u32 0, 2
    %s1447 = smul.addr 2, 5
    %s1448 = scalar_lea.vmem %s1, %s1447
    %1449 = vst [vmem:[%s1448] sm:%s1446] %v1445
    %s1450 = scalar_lea.vmem [#allocation0], 48
    %v1451 = vld [vmem:[%s1450] sm:%s1416]
    %s1452 = sshllo.u32 0, 2
    %s1453 = smul.addr 2, 6
    %s1454 = scalar_lea.vmem %s1, %s1453
    %1455 = vst [vmem:[%s1454] sm:%s1452] %v1451

// kernel: generator_forward.16
$region0: #{generator_forward.16}
  #allocation0 [shape = 'u32[]', space=smem, size = 0x4, offset = 0x4, fixed_abs, tag = 'smem constant byte address 0x4 - core index']
  #allocation1 [shape = 'u32[144,128]{1,0:T(1,128)}', space=vmem, size = 0x12000, scoped, tag = 'internal scratch']
  %s0 = inlined_call_operand.vmem [shape: f32[392,4], index: 0, kind: input, shape index: {}]
  %s1 = inlined_call_operand.vmem [shape: f32[1,4], index: 1, kind: input, shape index: {}]
  %s2 = inlined_call_operand.vmem [shape: f32[1,4], index: 2, kind: input, shape index: {}]
  %s3 = inlined_call_operand.vmem [shape: f32[2,4], index: 3, kind: output, shape index: {}]
  %s4 = sld [smem:[#allocation0]]
  $region22: #{generator_forward.16} parent=0
    _
  %s6 = ssub.s32 1, %s4
  %s7 = scalar_select 0, %s6, %s4
  // Predicated region
  $region2: #{generator_forward.16} parent=0 // pred_check
    _
  $region3: #{generator_forward.16} parent=0 // pred_check_branch
    %9 = sbr.rel (0) target = $region5
  $region4: #{generator_forward.16} parent=0 // pred_region
    _
  $region5: #{generator_forward.16} parent=0 // pred_fallthru
    _
  // Predicated region
  $region6: #{generator_forward.16} parent=0 // pred_check
    _
  $region7: #{generator_forward.16} parent=0 // pred_check_branch
    %11 = sbr.rel (0) target = $region9
  $region8: #{generator_forward.16} parent=0 // pred_region
    _
  $region9: #{generator_forward.16} parent=0 // pred_fallthru
    _
  // Predicated region
  $region10: #{generator_forward.16} parent=0 // pred_check
    _
  $region11: #{generator_forward.16} parent=0 // pred_check_branch
    %13 = sbr.rel (0) target = $region13
  $region12: #{generator_forward.16} parent=0 // pred_region
    _
  $region13: #{generator_forward.16} parent=0 // pred_fallthru
    _
  %v14 = vld [vmem:[%s0] sm:$0xff]
  %v15 = vld [vmem:[%s0 + $0x8] sm:$0xff]
  %v16 = vld [vmem:[%s0 + $0x10] sm:$0xff]
  %v17 = vld [vmem:[%s0 + $0x18] sm:$0xff]
  %v18 = vld [vmem:[%s0 + $0x20] sm:$0xff]
  %v19 = vld [vmem:[%s0 + $0x28] sm:$0xff]
  %v20 = vld [vmem:[%s0 + $0x30] sm:$0xff]
  %v21 = vld [vmem:[%s0 + $0x38] sm:$0xff]
  %v22 = vld [vmem:[%s0 + $0x40] sm:$0xff]
  %v23 = vld [vmem:[%s0 + $0x48] sm:$0xff]
  %v24 = vld [vmem:[%s0 + $0x50] sm:$0xff]
  %v25 = vld [vmem:[%s0 + $0x58] sm:$0xff]
  %v26 = vld [vmem:[%s0 + $0x60] sm:$0xff]
  %v27 = vld [vmem:[%s0 + $0x68] sm:$0xff]
  %v28 = vld [vmem:[%s0 + $0x70] sm:$0xff]
  %v29 = vld [vmem:[%s0 + $0x78] sm:$0xff]
  %v30 = vld [vmem:[%s0 + $0x80] sm:$0xff]
  %v31 = vld [vmem:[%s0 + $0x88] sm:$0xff]
  %v32 = vld [vmem:[%s0 + $0x90] sm:$0xff]
  %v33 = vld [vmem:[%s0 + $0x98] sm:$0xff]
  %v34 = vld [vmem:[%s0 + $0xa0] sm:$0xff]
  %v35 = vld [vmem:[%s0 + $0xa8] sm:$0xff]
  %v36 = vld [vmem:[%s0 + $0xb0] sm:$0xff]
  %v37 = vld [vmem:[%s0 + $0xb8] sm:$0xff]
  %v38 = vld [vmem:[%s0 + $0xc0] sm:$0xff]
  %v39 = vld [vmem:[%s0 + $0xc8] sm:$0xff]
  %v40 = vld [vmem:[%s0 + $0xd0] sm:$0xff]
  %v41 = vld [vmem:[%s0 + $0xd8] sm:$0xff]
  %v42 = vld [vmem:[%s0 + $0xe0] sm:$0xff]
  %v43 = vld [vmem:[%s0 + $0xe8] sm:$0xff]
  %v44 = vld [vmem:[%s0 + $0xf0] sm:$0xff]
  %v45 = vld [vmem:[%s0 + $0xf8] sm:$0xff]
  %v46 = vld [vmem:[%s0 + $0x100] sm:$0xff]
  %v47 = vld [vmem:[%s0 + $0x108] sm:$0xff]
  %v48 = vld [vmem:[%s0 + $0x110] sm:$0xff]
  %v49 = vld [vmem:[%s0 + $0x118] sm:$0xff]
  %v50 = vld [vmem:[%s0 + $0x120] sm:$0xff]
  %v51 = vld [vmem:[%s0 + $0x128] sm:$0xff]
  %v52 = vld [vmem:[%s0 + $0x130] sm:$0xff]
  %v53 = vld [vmem:[%s0 + $0x138] sm:$0xff]
  %v54 = vld [vmem:[%s0 + $0x140] sm:$0xff]
  %v55 = vld [vmem:[%s0 + $0x148] sm:$0xff]
  %v56 = vld [vmem:[%s0 + $0x150] sm:$0xff]
  %v57 = vld [vmem:[%s0 + $0x158] sm:$0xff]
  %v58 = vld [vmem:[%s0 + $0x160] sm:$0xff]
  %v59 = vld [vmem:[%s0 + $0x168] sm:$0xff]
  %v60 = vld [vmem:[%s0 + $0x170] sm:$0xff]
  %v61 = vld [vmem:[%s0 + $0x178] sm:$0xff]
  %v62 = vld [vmem:[%s0 + $0x180] sm:$0xff]
  %vm63 = vcmask 31744
  %v64 = vsel %vm63, %v14, 0.0
  %v65 = vsel %vm63, %v15, 0.0
  %v66 = vadd.f32 %v64, %v65
  %v67 = vsel %vm63, %v16, 0.0
  %v68 = vadd.f32 %v66, %v67
  %v69 = vsel %vm63, %v17, 0.0
  %v70 = vadd.f32 %v68, %v69
  %v71 = vsel %vm63, %v18, 0.0
  %v72 = vadd.f32 %v70, %v71
  %v73 = vsel %vm63, %v19, 0.0
  %v74 = vadd.f32 %v72, %v73
  %v75 = vsel %vm63, %v20, 0.0
  %v76 = vadd.f32 %v74, %v75
  %v77 = vsel %vm63, %v21, 0.0
  %v78 = vadd.f32 %v76, %v77
  %v79 = vsel %vm63, %v22, 0.0
  %v80 = vadd.f32 %v78, %v79
  %v81 = vsel %vm63, %v23, 0.0
  %v82 = vadd.f32 %v80, %v81
  %v83 = vsel %vm63, %v24, 0.0
  %v84 = vadd.f32 %v82, %v83
  %v85 = vsel %vm63, %v25, 0.0
  %v86 = vadd.f32 %v84, %v85
  %v87 = vsel %vm63, %v26, 0.0
  %v88 = vadd.f32 %v86, %v87
  %v89 = vsel %vm63, %v27, 0.0
  %v90 = vadd.f32 %v88, %v89
  %v91 = vsel %vm63, %v28, 0.0
  %v92 = vadd.f32 %v90, %v91
  %v93 = vsel %vm63, %v29, 0.0
  %v94 = vadd.f32 %v92, %v93
  %v95 = vsel %vm63, %v30, 0.0
  %v96 = vadd.f32 %v94, %v95
  %v97 = vsel %vm63, %v31, 0.0
  %v98 = vadd.f32 %v96, %v97
  %v99 = vsel %vm63, %v32, 0.0
  %v100 = vadd.f32 %v98, %v99
  %v101 = vsel %vm63, %v33, 0.0
  %v102 = vadd.f32 %v100, %v101
  %v103 = vsel %vm63, %v34, 0.0
  %v104 = vadd.f32 %v102, %v103
  %v105 = vsel %vm63, %v35, 0.0
  %v106 = vadd.f32 %v104, %v105
  %v107 = vsel %vm63, %v36, 0.0
  %v108 = vadd.f32 %v106, %v107
  %v109 = vsel %vm63, %v37, 0.0
  %v110 = vadd.f32 %v108, %v109
  %v111 = vsel %vm63, %v38, 0.0
  %v112 = vadd.f32 %v110, %v111
  %v113 = vsel %vm63, %v39, 0.0
  %v114 = vadd.f32 %v112, %v113
  %v115 = vsel %vm63, %v40, 0.0
  %v116 = vadd.f32 %v114, %v115
  %v117 = vsel %vm63, %v41, 0.0
  %v118 = vadd.f32 %v116, %v117
  %v119 = vsel %vm63, %v42, 0.0
  %v120 = vadd.f32 %v118, %v119
  %v121 = vsel %vm63, %v43, 0.0
  %v122 = vadd.f32 %v120, %v121
  %v123 = vsel %vm63, %v44, 0.0
  %v124 = vadd.f32 %v122, %v123
  %v125 = vsel %vm63, %v45, 0.0
  %v126 = vadd.f32 %v124, %v125
  %v127 = vsel %vm63, %v46, 0.0
  %v128 = vadd.f32 %v126, %v127
  %v129 = vsel %vm63, %v47, 0.0
  %v130 = vadd.f32 %v128, %v129
  %v131 = vsel %vm63, %v48, 0.0
  %v132 = vadd.f32 %v130, %v131
  %v133 = vsel %vm63, %v49, 0.0
  %v134 = vadd.f32 %v132, %v133
  %v135 = vsel %vm63, %v50, 0.0
  %v136 = vadd.f32 %v134, %v135
  %v137 = vsel %vm63, %v51, 0.0
  %v138 = vadd.f32 %v136, %v137
  %v139 = vsel %vm63, %v52, 0.0
  %v140 = vadd.f32 %v138, %v139
  %v141 = vsel %vm63, %v53, 0.0
  %v142 = vadd.f32 %v140, %v141
  %v143 = vsel %vm63, %v54, 0.0
  %v144 = vadd.f32 %v142, %v143
  %v145 = vsel %vm63, %v55, 0.0
  %v146 = vadd.f32 %v144, %v145
  %v147 = vsel %vm63, %v56, 0.0
  %v148 = vadd.f32 %v146, %v147
  %v149 = vsel %vm63, %v57, 0.0
  %v150 = vadd.f32 %v148, %v149
  %v151 = vsel %vm63, %v58, 0.0
  %v152 = vadd.f32 %v150, %v151
  %v153 = vsel %vm63, %v59, 0.0
  %v154 = vadd.f32 %v152, %v153
  %v155 = vsel %vm63, %v60, 0.0
  %v156 = vadd.f32 %v154, %v155
  %v157 = vsel %vm63, %v61, 0.0
  %v158 = vadd.f32 %v156, %v157
  %v159 = vsel %vm63, %v62, 0.0
  %v160 = vadd.f32 %v158, %v159
  %v161 = vrot.slane %v160, 4
  %v162 = vadd.f32 %v160, %v161
  %v163 = vrot.slane %v162, 2
  %v164 = vadd.f32 %v162, %v163
  %v165 = vrot.slane %v164, 1
  %v166 = vadd.f32 %v164, %v165
  %v167 = vmul.f32 %v166, 0.0025510204
  %v168 = vsub.f32 %v14, %v167
  %v169 = vsub.f32 %v15, %v167
  %v170 = vsub.f32 %v16, %v167
  %v171 = vsub.f32 %v17, %v167
  %v172 = vsub.f32 %v18, %v167
  %v173 = vsub.f32 %v19, %v167
  %v174 = vsub.f32 %v20, %v167
  %v175 = vsub.f32 %v21, %v167
  %v176 = vsub.f32 %v22, %v167
  %v177 = vsub.f32 %v23, %v167
  %v178 = vsub.f32 %v24, %v167
  %v179 = vsub.f32 %v25, %v167
  %v180 = vsub.f32 %v26, %v167
  %v181 = vsub.f32 %v27, %v167
  %v182 = vsub.f32 %v28, %v167
  %v183 = vsub.f32 %v29, %v167
  %v184 = vsub.f32 %v30, %v167
  %v185 = vsub.f32 %v31, %v167
  %v186 = vsub.f32 %v32, %v167
  %v187 = vsub.f32 %v33, %v167
  %v188 = vsub.f32 %v34, %v167
  %v189 = vsub.f32 %v35, %v167
  %v190 = vsub.f32 %v36, %v167
  %v191 = vsub.f32 %v37, %v167
  %v192 = vsub.f32 %v38, %v167
  %v193 = vsub.f32 %v39, %v167
  %v194 = vsub.f32 %v40, %v167
  %v195 = vsub.f32 %v41, %v167
  %v196 = vsub.f32 %v42, %v167
  %v197 = vsub.f32 %v43, %v167
  %v198 = vsub.f32 %v44, %v167
  %v199 = vsub.f32 %v45, %v167
  %v200 = vsub.f32 %v46, %v167
  %v201 = vsub.f32 %v47, %v167
  %v202 = vsub.f32 %v48, %v167
  %v203 = vsub.f32 %v49, %v167
  %v204 = vsub.f32 %v50, %v167
  %v205 = vsub.f32 %v51, %v167
  %v206 = vsub.f32 %v52, %v167
  %v207 = vsub.f32 %v53, %v167
  %v208 = vsub.f32 %v54, %v167
  %v209 = vsub.f32 %v55, %v167
  %v210 = vsub.f32 %v56, %v167
  %v211 = vsub.f32 %v57, %v167
  %v212 = vsub.f32 %v58, %v167
  %v213 = vsub.f32 %v59, %v167
  %v214 = vsub.f32 %v60, %v167
  %v215 = vsub.f32 %v61, %v167
  %v216 = vsub.f32 %v62, %v167
  %v217 = vmul.f32 %v168, %v168
  %v218 = vmul.f32 %v169, %v169
  %v219 = vmul.f32 %v170, %v170
  %v220 = vmul.f32 %v171, %v171
  %v221 = vmul.f32 %v172, %v172
  %v222 = vmul.f32 %v173, %v173
  %v223 = vmul.f32 %v174, %v174
  %v224 = vmul.f32 %v175, %v175
  %v225 = vmul.f32 %v176, %v176
  %v226 = vmul.f32 %v177, %v177
  %v227 = vmul.f32 %v178, %v178
  %v228 = vmul.f32 %v179, %v179
  %v229 = vmul.f32 %v180, %v180
  %v230 = vmul.f32 %v181, %v181
  %v231 = vmul.f32 %v182, %v182
  %v232 = vmul.f32 %v183, %v183
  %v233 = vmul.f32 %v184, %v184
  %v234 = vmul.f32 %v185, %v185
  %v235 = vmul.f32 %v186, %v186
  %v236 = vmul.f32 %v187, %v187
  %v237 = vmul.f32 %v188, %v188
  %v238 = vmul.f32 %v189, %v189
  %v239 = vmul.f32 %v190, %v190
  %v240 = vmul.f32 %v191, %v191
  %v241 = vmul.f32 %v192, %v192
  %v242 = vmul.f32 %v193, %v193
  %v243 = vmul.f32 %v194, %v194
  %v244 = vmul.f32 %v195, %v195
  %v245 = vmul.f32 %v196, %v196
  %v246 = vmul.f32 %v197, %v197
  %v247 = vmul.f32 %v198, %v198
  %v248 = vmul.f32 %v199, %v199
  %v249 = vmul.f32 %v200, %v200
  %v250 = vmul.f32 %v201, %v201
  %v251 = vmul.f32 %v202, %v202
  %v252 = vmul.f32 %v203, %v203
  %v253 = vmul.f32 %v204, %v204
  %v254 = vmul.f32 %v205, %v205
  %v255 = vmul.f32 %v206, %v206
  %v256 = vmul.f32 %v207, %v207
  %v257 = vmul.f32 %v208, %v208
  %v258 = vmul.f32 %v209, %v209
  %v259 = vmul.f32 %v210, %v210
  %v260 = vmul.f32 %v211, %v211
  %v261 = vmul.f32 %v212, %v212
  %v262 = vmul.f32 %v213, %v213
  %v263 = vmul.f32 %v214, %v214
  %v264 = vmul.f32 %v215, %v215
  %v265 = vmul.f32 %v216, %v216
  %v266 = vsel %vm63, %v217, 0.0
  %v267 = vsel %vm63, %v218, 0.0
  %v268 = vadd.f32 %v266, %v267
  %v269 = vsel %vm63, %v219, 0.0
  %v270 = vadd.f32 %v268, %v269
  %v271 = vsel %vm63, %v220, 0.0
  %v272 = vadd.f32 %v270, %v271
  %v273 = vsel %vm63, %v221, 0.0
  %v274 = vadd.f32 %v272, %v273
  %v275 = vsel %vm63, %v222, 0.0
  %v276 = vadd.f32 %v274, %v275
  %v277 = vsel %vm63, %v223, 0.0
  %v278 = vadd.f32 %v276, %v277
  %v279 = vsel %vm63, %v224, 0.0
  %v280 = vadd.f32 %v278, %v279
  %v281 = vsel %vm63, %v225, 0.0
  %v282 = vadd.f32 %v280, %v281
  %v283 = vsel %vm63, %v226, 0.0
  %v284 = vadd.f32 %v282, %v283
  %v285 = vsel %vm63, %v227, 0.0
  %v286 = vadd.f32 %v284, %v285
  %v287 = vsel %vm63, %v228, 0.0
  %v288 = vadd.f32 %v286, %v287
  %v289 = vsel %vm63, %v229, 0.0
  %v290 = vadd.f32 %v288, %v289
  %v291 = vsel %vm63, %v230, 0.0
  %v292 = vadd.f32 %v290, %v291
  %v293 = vsel %vm63, %v231, 0.0
  %v294 = vadd.f32 %v292, %v293
  %v295 = vsel %vm63, %v232, 0.0
  %v296 = vadd.f32 %v294, %v295
  %v297 = vsel %vm63, %v233, 0.0
  %v298 = vadd.f32 %v296, %v297
  %v299 = vsel %vm63, %v234, 0.0
  %v300 = vadd.f32 %v298, %v299
  %v301 = vsel %vm63, %v235, 0.0
  %v302 = vadd.f32 %v300, %v301
  %v303 = vsel %vm63, %v236, 0.0
  %v304 = vadd.f32 %v302, %v303
  %v305 = vsel %vm63, %v237, 0.0
  %v306 = vadd.f32 %v304, %v305
  %v307 = vsel %vm63, %v238, 0.0
  %v308 = vadd.f32 %v306, %v307
  %v309 = vsel %vm63, %v239, 0.0
  %v310 = vadd.f32 %v308, %v309
  %v311 = vsel %vm63, %v240, 0.0
  %v312 = vadd.f32 %v310, %v311
  %v313 = vsel %vm63, %v241, 0.0
  %v314 = vadd.f32 %v312, %v313
  %v315 = vsel %vm63, %v242, 0.0
  %v316 = vadd.f32 %v314, %v315
  %v317 = vsel %vm63, %v243, 0.0
  %v318 = vadd.f32 %v316, %v317
  %v319 = vsel %vm63, %v244, 0.0
  %v320 = vadd.f32 %v318, %v319
  %v321 = vsel %vm63, %v245, 0.0
  %v322 = vadd.f32 %v320, %v321
  %v323 = vsel %vm63, %v246, 0.0
  %v324 = vadd.f32 %v322, %v323
  %v325 = vsel %vm63, %v247, 0.0
  %v326 = vadd.f32 %v324, %v325
  %v327 = vsel %vm63, %v248, 0.0
  %v328 = vadd.f32 %v326, %v327
  %v329 = vsel %vm63, %v249, 0.0
  %v330 = vadd.f32 %v328, %v329
  %v331 = vsel %vm63, %v250, 0.0
  %v332 = vadd.f32 %v330, %v331
  %v333 = vsel %vm63, %v251, 0.0
  %v334 = vadd.f32 %v332, %v333
  %v335 = vsel %vm63, %v252, 0.0
  %v336 = vadd.f32 %v334, %v335
  %v337 = vsel %vm63, %v253, 0.0
  %v338 = vadd.f32 %v336, %v337
  %v339 = vsel %vm63, %v254, 0.0
  %v340 = vadd.f32 %v338, %v339
  %v341 = vsel %vm63, %v255, 0.0
  %v342 = vadd.f32 %v340, %v341
  %v343 = vsel %vm63, %v256, 0.0
  %v344 = vadd.f32 %v342, %v343
  %v345 = vsel %vm63, %v257, 0.0
  %v346 = vadd.f32 %v344, %v345
  %v347 = vsel %vm63, %v258, 0.0
  %v348 = vadd.f32 %v346, %v347
  %v349 = vsel %vm63, %v259, 0.0
  %v350 = vadd.f32 %v348, %v349
  %v351 = vsel %vm63, %v260, 0.0
  %v352 = vadd.f32 %v350, %v351
  %v353 = vsel %vm63, %v261, 0.0
  %v354 = vadd.f32 %v352, %v353
  %v355 = vsel %vm63, %v262, 0.0
  %v356 = vadd.f32 %v354, %v355
  %v357 = vsel %vm63, %v263, 0.0
  %v358 = vadd.f32 %v356, %v357
  %v359 = vsel %vm63, %v264, 0.0
  %v360 = vadd.f32 %v358, %v359
  %v361 = vsel %vm63, %v265, 0.0
  %v362 = vadd.f32 %v360, %v361
  %v363 = vrot.slane %v362, 4
  %v364 = vadd.f32 %v362, %v363
  %v365 = vrot.slane %v364, 2
  %v366 = vadd.f32 %v364, %v365
  %v367 = vrot.slane %v366, 1
  %v368 = vadd.f32 %v366, %v367
  %v369 = vmul.f32 %v368, 0.0025510204
  %v370 = vld [vmem:[%s1] sm:$0x1]
  %v371 = vadd.f32 %v369, 1e-05
  %v372 = vrsqrt.pop %v371
  %v373 = vmul.f32 %v370, %v372
  %vm374 = vcmask 24576
  %375 = vst.msk [vmem:[%s3] sm:$0x1] %vm374, %v373
  %v376 = vld [vmem:[%s2] sm:$0x1]
  %v377 = vmul.f32 %v167, %v373
  %v378 = vsub.f32 %v376, %v377
  %379 = vst.msk [vmem:[%s3 + $0x1] sm:$0x1] %vm374, %v378
  // Predicated region
  $region14: #{generator_forward.16} parent=0 // pred_check
    _
  $region15: #{generator_forward.16} parent=0 // pred_check_branch
    %381 = sbr.rel (0) target = $region17
  $region16: #{generator_forward.16} parent=0 // pred_region
    _
  $region17: #{generator_forward.16} parent=0 // pred_fallthru
    _
  // Predicated region
  $region18: #{generator_forward.16} parent=0 // pred_check
    _
  $region19: #{generator_forward.16} parent=0 // pred_check_branch
    %383 = sbr.rel (0) target = $region21
  $region20: #{generator_forward.16} parent=0 // pred_region
    _
  $region21: #{generator_forward.16} parent=0 // pred_fallthru
    _

// kernel: generator_forward.15
$region0: #{generator_forward.15}
  #allocation0 [shape = 'u32[]', space=smem, size = 0x4, offset = 0x4, fixed_abs, tag = 'smem constant byte address 0x4 - core index']
  #allocation1 [shape = 'u32[144,128]{1,0:T(1,128)}', space=vmem, size = 0x12000, scoped, tag = 'internal scratch']
  %s0 = inlined_call_operand.vmem [shape: f32[2,392], index: 0, kind: input, shape index: {}]
  %s1 = inlined_call_operand.vmem [shape: f32[2,392], index: 1, kind: input, shape index: {}]
  %s2 = inlined_call_operand.hbm [shape: bf16[392,784], index: 2, kind: input, shape index: {}]
  %s3 = inlined_call_operand.hbm [shape: f32[1,784], index: 3, kind: input, shape index: {}]
  %s4 = inlined_call_operand.hbm [shape: f32[1,392], index: 4, kind: input, shape index: {}]
  %s5 = inlined_call_operand.vmem [shape: f32[2,784], index: 5, kind: output, shape index: {}]
  %s6 = sld [smem:[#allocation0]]
  $region42: #{generator_forward.15} parent=0
    _
  %s8 = ssub.s32 1, %s6
  %s9 = scalar_select 0, %s8, %s6
  $region1: #{generator_forward.15} parent=0
    #allocation2 [shape = 'u8[702464]{0}', space=vmem, size = 0xab800, scoped, tag = 'input window, operand 2, single buffered']
    #allocation3 [shape = 's32[1]{0}', space=sflag, size = 0x4, scoped, tag = 'scoped memory for generator_forward.15']
    #allocation4 [shape = 'u8[3584]{0}', space=vmem, size = 0x1000, scoped, tag = 'input window, operand 3, single buffered']
    #allocation5 [shape = 's32[1]{0}', space=sflag, size = 0x4, scoped, tag = 'scoped memory for generator_forward.15']
    #allocation6 [shape = 'u8[2048]{0}', space=vmem, size = 0x800, scoped, tag = 'input window, operand 4, single buffered']
    %10 = vsyncpa [#allocation3], 0
    %11 = vsyncpa [#allocation5], 0
    // Predicated region
    $region2: #{generator_forward.15} parent=1 // pred_check
      _
    $region3: #{generator_forward.15} parent=1 // pred_check_branch
      %13 = sbr.rel (0) target = $region5
    $region4: #{generator_forward.15} parent=1 // pred_region
      _
    $region5: #{generator_forward.15} parent=1 // pred_fallthru
      _
    // Predicated region
    $region6: #{generator_forward.15} parent=1 // pred_check
      _
    $region7: #{generator_forward.15} parent=1 // pred_check_branch
      %15 = sbr.rel (0) target = $region9
    $region8: #{generator_forward.15} parent=1 // pred_region
      _
    $region9: #{generator_forward.15} parent=1 // pred_fallthru
      _
    // Predicated region
    $region10: #{generator_forward.15} parent=1 // pred_check
      _
    $region11: #{generator_forward.15} parent=1 // pred_check_branch
      %17 = sbr.rel (0) target = $region13
    $region12: #{generator_forward.15} parent=1 // pred_region
      %s19 = ssub.s32 21952, 21952
      %20 = vsyncadd [#allocation3], %s19
      %s21 = sshll.u32 [#allocation2], 4
      %s22 = int_to_ptr.vmem [resolvable:$true] %s21
      %27 = dma.hbm_to_vmem [thread:$0]  %s2, 21952, %s22, [#allocation3], 448, 448, 28
    $region13: #{generator_forward.15} parent=1 // pred_fallthru
      _
    // Predicated region
    $region14: #{generator_forward.15} parent=1 // pred_check
      _
    $region15: #{generator_forward.15} parent=1 // pred_check_branch
      %29 = sbr.rel (0) target = $region17
    $region16: #{generator_forward.15} parent=1 // pred_region
      %s31 = ssub.s32 112, 112
      %32 = vsyncadd [#allocation5], %s31
      %s34 = sshll.u32 [#allocation4], 4
      %s35 = int_to_ptr.vmem [resolvable:$true] %s34
      %37 = dma.hbm_to_vmem [thread:$0]  %s3, 112, %s35, [#allocation5]
    $region17: #{generator_forward.15} parent=1 // pred_fallthru
      _
    // Predicated region
    $region18: #{generator_forward.15} parent=1 // pred_check
      _
    $region19: #{generator_forward.15} parent=1 // pred_check_branch
      %39 = sbr.rel (0) target = $region21
    $region20: #{generator_forward.15} parent=1 // pred_region
      %s41 = ssub.s32 64, 64
      %42 = vsyncadd [#allocation5], %s41
      %s44 = sshll.u32 [#allocation6], 4
      %s45 = int_to_ptr.vmem [resolvable:$true] %s44
      %47 = dma.hbm_to_vmem [thread:$0]  %s4, 64, %s45, [#allocation5]
    $region21: #{generator_forward.15} parent=1 // pred_fallthru
      _
    // Predicated region
    $region22: #{generator_forward.15} parent=1 // pred_check
      _
    $region23: #{generator_forward.15} parent=1 // pred_check_branch
      %49 = sbr.rel (0) target = $region25
    $region24: #{generator_forward.15} parent=1 // pred_region
      %50 = dma.done [#allocation3], 21952
    $region25: #{generator_forward.15} parent=1 // pred_fallthru
      _
    // Predicated region
    $region26: #{generator_forward.15} parent=1 // pred_check
      _
    $region27: #{generator_forward.15} parent=1 // pred_check_branch
      %52 = sbr.rel (0) target = $region29
    $region28: #{generator_forward.15} parent=1 // pred_region
      %53 = dma.done [#allocation5], 112
    $region29: #{generator_forward.15} parent=1 // pred_fallthru
      _
    // Predicated region
    $region30: #{generator_forward.15} parent=1 // pred_check
      _
    $region31: #{generator_forward.15} parent=1 // pred_check_branch
      %55 = sbr.rel (0) target = $region33
    $region32: #{generator_forward.15} parent=1 // pred_region
      %56 = dma.done [#allocation5], 64
    $region33: #{generator_forward.15} parent=1 // pred_fallthru
      _
    %v58 = vld [vmem:[%s0] sm:$0xff]
    %v59 = vld [vmem:[%s1] ss:$2 sm:$0xf]
    %v61 = vlaneseq
    %v62 = vshrl.u32 %v61, 7
    %v63 = vsub.s32 0, %v62
    %v64 = vrot.slane %v59, %v63
    %v65 = vlaneseq
    %v66 = vshrl.u32 %v65, 7
    %v67 = vsub.s32 1, %v66
    %v68 = vrot.slane %v59, %v67
    %v69 = vlaneseq
    %v70 = vshrl.u32 %v69, 7
    %v71 = vsub.s32 2, %v70
    %v72 = vrot.slane %v59, %v71
    %v73 = vlaneseq
    %v74 = vshrl.u32 %v73, 7
    %v75 = vsub.s32 3, %v74
    %v76 = vrot.slane %v59, %v75
    %v77 = vcombine.low %v64, %v68
    %v78 = vcombine.low %v72, %v76
    %v80 = vunpack.c.l.s4 1983009808
    %v81 = vunpack.c.0.s8 %v80
    %v82 = vlaneseq
    %v83 = vshrl.u32 %v82, 7
    %v84 = vsub.s32 %v81, %v83
    %v85 = vrot.slane %v77, %v84
    %v87 = vunpack.c.l.s4 1983009808
    %v88 = vunpack.c.0.s8 %v87
    %v89 = vlaneseq
    %v90 = vshrl.u32 %v89, 7
    %v91 = vsub.s32 %v88, %v90
    %v92 = vrot.slane %v78, %v91
    %v93 = vcombine.low %v85, %v92
    %v95 = vmul.f32 %v58, %v93
    %s96 = scalar_lea.vmem %s1, 1
    %v97 = vld [vmem:[%s96] ss:$2 sm:$0xf]
    %v99 = vlaneseq
    %v100 = vshrl.u32 %v99, 7
    %v101 = vsub.s32 0, %v100
    %v102 = vrot.slane %v97, %v101
    %v103 = vlaneseq
    %v104 = vshrl.u32 %v103, 7
    %v105 = vsub.s32 1, %v104
    %v106 = vrot.slane %v97, %v105
    %v107 = vlaneseq
    %v108 = vshrl.u32 %v107, 7
    %v109 = vsub.s32 2, %v108
    %v110 = vrot.slane %v97, %v109
    %v111 = vlaneseq
    %v112 = vshrl.u32 %v111, 7
    %v113 = vsub.s32 3, %v112
    %v114 = vrot.slane %v97, %v113
    %v115 = vcombine.low %v102, %v106
    %v116 = vcombine.low %v110, %v114
    %v118 = vunpack.c.l.s4 1983009808
    %v119 = vunpack.c.0.s8 %v118
    %v120 = vlaneseq
    %v121 = vshrl.u32 %v120, 7
    %v122 = vsub.s32 %v119, %v121
    %v123 = vrot.slane %v115, %v122
    %v125 = vunpack.c.l.s4 1983009808
    %v126 = vunpack.c.0.s8 %v125
    %v127 = vlaneseq
    %v128 = vshrl.u32 %v127, 7
    %v129 = vsub.s32 %v126, %v128
    %v130 = vrot.slane %v116, %v129
    %v131 = vcombine.low %v123, %v130
    %v133 = vadd.f32 %v95, %v131
    %vm134 = vcmp.gt.f32.partialorder %v133, 0.0
    %v135 = vld [vmem:[#allocation6] sm:$0xf]
    %v137 = vlaneseq
    %v138 = vshrl.u32 %v137, 7
    %v139 = vsub.s32 0, %v138
    %v140 = vrot.slane %v135, %v139
    %v141 = vlaneseq
    %v142 = vshrl.u32 %v141, 7
    %v143 = vsub.s32 1, %v142
    %v144 = vrot.slane %v135, %v143
    %v145 = vlaneseq
    %v146 = vshrl.u32 %v145, 7
    %v147 = vsub.s32 2, %v146
    %v148 = vrot.slane %v135, %v147
    %v149 = vlaneseq
    %v150 = vshrl.u32 %v149, 7
    %v151 = vsub.s32 3, %v150
    %v152 = vrot.slane %v135, %v151
    %v158 = vcombine.high %v133, %v133
    %v160 = vunpack.c.l.s4 1983009808
    %v161 = vunpack.c.0.s8 %v160
    %v162 = vlaneseq
    %v163 = vshrl.u32 %v162, 7
    %v164 = vsub.s32 %v161, %v163
    %v165 = vrot.slane %v133, %v164
    %v167 = vunpack.c.l.s4 1983009808
    %v168 = vunpack.c.0.s8 %v167
    %v169 = vlaneseq
    %v170 = vshrl.u32 %v169, 7
    %v171 = vsub.s32 %v168, %v170
    %v172 = vrot.slane %v158, %v171
    %v173 = vcombine.high %v165, %v165
    %v174 = vcombine.high %v172, %v172
    %v179 = vmul.f32 %v140, %v165
    %v180 = vmul.f32 %v144, %v173
    %v181 = vmul.f32 %v148, %v172
    %v182 = vmul.f32 %v152, %v174
    %v187 = vcombine.low %v179, %v180
    %v188 = vcombine.low %v181, %v182
    %v190 = vunpack.c.l.s4 1983009808
    %v191 = vunpack.c.0.s8 %v190
    %v192 = vlaneseq
    %v193 = vshrl.u32 %v192, 7
    %v194 = vsub.s32 %v191, %v193
    %v195 = vrot.slane %v187, %v194
    %v197 = vunpack.c.l.s4 1983009808
    %v198 = vunpack.c.0.s8 %v197
    %v199 = vlaneseq
    %v200 = vshrl.u32 %v199, 7
    %v201 = vsub.s32 %v198, %v200
    %v202 = vrot.slane %v188, %v201
    %v203 = vcombine.low %v195, %v202
    %v205 = vsel %vm134, %v133, %v203
    %v207 = vcombine.high %v205, %v205
    %v209 = vunpack.c.l.s4 1983009808
    %v210 = vunpack.c.0.s8 %v209
    %v211 = vlaneseq
    %v212 = vshrl.u32 %v211, 7
    %v213 = vsub.s32 %v210, %v212
    %v214 = vrot.slane %v205, %v213
    %v216 = vunpack.c.l.s4 1983009808
    %v217 = vunpack.c.0.s8 %v216
    %v218 = vlaneseq
    %v219 = vshrl.u32 %v218, 7
    %v220 = vsub.s32 %v217, %v219
    %v221 = vrot.slane %v207, %v220
    %v222 = vcombine.high %v214, %v214
    %v223 = vcombine.high %v221, %v221
    %v228 = vpack.c.bf16 %v214, %v214
    %v229 = vpack.c.bf16 %v222, %v222
    %v230 = vpack.c.bf16 %v221, %v221
    %v231 = vpack.c.bf16 %v223, %v223
    %v232 = vld [vmem:[#allocation2] sm:$0xff]
    %v233 = vld [vmem:[#allocation2 + $0x8] sm:$0xff]
    %v234 = vld [vmem:[#allocation2 + $0x10] sm:$0xff]
    %v235 = vld [vmem:[#allocation2 + $0x18] sm:$0xf]
    %v236 = vld [vmem:[#allocation2 + $0x1c] sm:$0xff]
    %v237 = vld [vmem:[#allocation2 + $0x24] sm:$0xff]
    %v238 = vld [vmem:[#allocation2 + $0x2c] sm:$0xff]
    %v239 = vld [vmem:[#allocation2 + $0x34] sm:$0xf]
    %v240 = vld [vmem:[#allocation2 + $0x38] sm:$0xff]
    %v241 = vld [vmem:[#allocation2 + $0x40] sm:$0xff]
    %v242 = vld [vmem:[#allocation2 + $0x48] sm:$0xff]
    %v243 = vld [vmem:[#allocation2 + $0x50] sm:$0xf]
    %v244 = vld [vmem:[#allocation2 + $0x54] sm:$0xff]
    %v245 = vld [vmem:[#allocation2 + $0x5c] sm:$0xff]
    %v246 = vld [vmem:[#allocation2 + $0x64] sm:$0xff]
    %v247 = vld [vmem:[#allocation2 + $0x6c] sm:$0xf]
    %v248 = vld [vmem:[#allocation2 + $0x70] sm:$0xff]
    %v249 = vld [vmem:[#allocation2 + $0x78] sm:$0xff]
    %v250 = vld [vmem:[#allocation2 + $0x80] sm:$0xff]
    %v251 = vld [vmem:[#allocation2 + $0x88] sm:$0xf]
    %v252 = vld [vmem:[#allocation2 + $0x8c] sm:$0xff]
    %v253 = vld [vmem:[#allocation2 + $0x94] sm:$0xff]
    %v254 = vld [vmem:[#allocation2 + $0x9c] sm:$0xff]
    %v255 = vld [vmem:[#allocation2 + $0xa4] sm:$0xf]
    %v256 = vld [vmem:[#allocation2 + $0xa8] sm:$0xff]
    %v257 = vld [vmem:[#allocation2 + $0xb0] sm:$0xff]
    %v258 = vld [vmem:[#allocation2 + $0xb8] sm:$0xff]
    %v259 = vld [vmem:[#allocation2 + $0xc0] sm:$0xf]
    %v260 = vld [vmem:[#allocation2 + $0xc4] sm:$0xff]
    %v261 = vld [vmem:[#allocation2 + $0xcc] sm:$0xff]
    %v262 = vld [vmem:[#allocation2 + $0xd4] sm:$0xff]
    %v263 = vld [vmem:[#allocation2 + $0xdc] sm:$0xf]
    %v264 = vld [vmem:[#allocation2 + $0xe0] sm:$0xff]
    %v265 = vld [vmem:[#allocation2 + $0xe8] sm:$0xff]
    %v266 = vld [vmem:[#allocation2 + $0xf0] sm:$0xff]
    %v267 = vld [vmem:[#allocation2 + $0xf8] sm:$0xf]
    %v268 = vld [vmem:[#allocation2 + $0xfc] sm:$0xff]
    %v269 = vld [vmem:[#allocation2 + $0x104] sm:$0xff]
    %v270 = vld [vmem:[#allocation2 + $0x10c] sm:$0xff]
    %v271 = vld [vmem:[#allocation2 + $0x114] sm:$0xf]
    %v272 = vld [vmem:[#allocation2 + $0x118] sm:$0xff]
    %v273 = vld [vmem:[#allocation2 + $0x120] sm:$0xff]
    %v274 = vld [vmem:[#allocation2 + $0x128] sm:$0xff]
    %v275 = vld [vmem:[#allocation2 + $0x130] sm:$0xf]
    %v276 = vld [vmem:[#allocation2 + $0x134] sm:$0xff]
    %v277 = vld [vmem:[#allocation2 + $0x13c] sm:$0xff]
    %v278 = vld [vmem:[#allocation2 + $0x144] sm:$0xff]
    %v279 = vld [vmem:[#allocation2 + $0x14c] sm:$0xf]
    %v280 = vld [vmem:[#allocation2 + $0x150] sm:$0xff]
    %v281 = vld [vmem:[#allocation2 + $0x158] sm:$0xff]
    %v282 = vld [vmem:[#allocation2 + $0x160] sm:$0xff]
    %v283 = vld [vmem:[#allocation2 + $0x168] sm:$0xf]
    %v284 = vld [vmem:[#allocation2 + $0x16c] sm:$0xff]
    %v285 = vld [vmem:[#allocation2 + $0x174] sm:$0xff]
    %v286 = vld [vmem:[#allocation2 + $0x17c] sm:$0xff]
    %v287 = vld [vmem:[#allocation2 + $0x184] sm:$0xf]
    %v288 = vld [vmem:[#allocation2 + $0x188] sm:$0xff]
    %v289 = vld [vmem:[#allocation2 + $0x190] sm:$0xff]
    %v290 = vld [vmem:[#allocation2 + $0x198] sm:$0xff]
    %v291 = vld [vmem:[#allocation2 + $0x1a0] sm:$0xf]
    %v292 = vld [vmem:[#allocation2 + $0x1a4] sm:$0xff]
    %v293 = vld [vmem:[#allocation2 + $0x1ac] sm:$0xff]
    %v294 = vld [vmem:[#allocation2 + $0x1b4] sm:$0xff]
    %v295 = vld [vmem:[#allocation2 + $0x1bc] sm:$0xf]
    %v296 = vld [vmem:[#allocation2 + $0x1c0] sm:$0xff]
    %v297 = vld [vmem:[#allocation2 + $0x1c8] sm:$0xff]
    %v298 = vld [vmem:[#allocation2 + $0x1d0] sm:$0xff]
    %v299 = vld [vmem:[#allocation2 + $0x1d8] sm:$0xf]
    %v300 = vld [vmem:[#allocation2 + $0x1dc] sm:$0xff]
    %v301 = vld [vmem:[#allocation2 + $0x1e4] sm:$0xff]
    %v302 = vld [vmem:[#allocation2 + $0x1ec] sm:$0xff]
    %v303 = vld [vmem:[#allocation2 + $0x1f4] sm:$0xf]
    %v304 = vld [vmem:[#allocation2 + $0x1f8] sm:$0xff]
    %v305 = vld [vmem:[#allocation2 + $0x200] sm:$0xff]
    %v306 = vld [vmem:[#allocation2 + $0x208] sm:$0xff]
    %v307 = vld [vmem:[#allocation2 + $0x210] sm:$0xf]
    %v308 = vld [vmem:[#allocation2 + $0x214] sm:$0xff]
    %v309 = vld [vmem:[#allocation2 + $0x21c] sm:$0xff]
    %v310 = vld [vmem:[#allocation2 + $0x224] sm:$0xff]
    %v311 = vld [vmem:[#allocation2 + $0x22c] sm:$0xf]
    %v312 = vld [vmem:[#allocation2 + $0x230] sm:$0xff]
    %v313 = vld [vmem:[#allocation2 + $0x238] sm:$0xff]
    %v314 = vld [vmem:[#allocation2 + $0x240] sm:$0xff]
    %v315 = vld [vmem:[#allocation2 + $0x248] sm:$0xf]
    %v316 = vld [vmem:[#allocation2 + $0x24c] sm:$0xff]
    %v317 = vld [vmem:[#allocation2 + $0x254] sm:$0xff]
    %v318 = vld [vmem:[#allocation2 + $0x25c] sm:$0xff]
    %v319 = vld [vmem:[#allocation2 + $0x264] sm:$0xf]
    %v320 = vld [vmem:[#allocation2 + $0x268] sm:$0xff]
    %v321 = vld [vmem:[#allocation2 + $0x270] sm:$0xff]
    %v322 = vld [vmem:[#allocation2 + $0x278] sm:$0xff]
    %v323 = vld [vmem:[#allocation2 + $0x280] sm:$0xf]
    %v324 = vld [vmem:[#allocation2 + $0x284] sm:$0xff]
    %v325 = vld [vmem:[#allocation2 + $0x28c] sm:$0xff]
    %v326 = vld [vmem:[#allocation2 + $0x294] sm:$0xff]
    %v327 = vld [vmem:[#allocation2 + $0x29c] sm:$0xf]
    %v328 = vld [vmem:[#allocation2 + $0x2a0] sm:$0xff]
    %v329 = vld [vmem:[#allocation2 + $0x2a8] sm:$0xff]
    %v330 = vld [vmem:[#allocation2 + $0x2b0] sm:$0xff]
    %v331 = vld [vmem:[#allocation2 + $0x2b8] sm:$0xf]
    %v332 = vld [vmem:[#allocation2 + $0x2bc] sm:$0xff]
    %v333 = vld [vmem:[#allocation2 + $0x2c4] sm:$0xff]
    %v334 = vld [vmem:[#allocation2 + $0x2cc] sm:$0xff]
    %v335 = vld [vmem:[#allocation2 + $0x2d4] sm:$0xf]
    %v336 = vld [vmem:[#allocation2 + $0x2d8] sm:$0xff]
    %v337 = vld [vmem:[#allocation2 + $0x2e0] sm:$0xff]
    %v338 = vld [vmem:[#allocation2 + $0x2e8] sm:$0xff]
    %v339 = vld [vmem:[#allocation2 + $0x2f0] sm:$0xf]
    %v340 = vld [vmem:[#allocation2 + $0x2f4] sm:$0xff]
    %v341 = vld [vmem:[#allocation2 + $0x2fc] sm:$0xff]
    %v342 = vld [vmem:[#allocation2 + $0x304] sm:$0xff]
    %v343 = vld [vmem:[#allocation2 + $0x30c] sm:$0xf]
    %v344 = vld [vmem:[#allocation2 + $0x310] sm:$0xff]
    %v345 = vld [vmem:[#allocation2 + $0x318] sm:$0xff]
    %v346 = vld [vmem:[#allocation2 + $0x320] sm:$0xff]
    %v347 = vld [vmem:[#allocation2 + $0x328] sm:$0xf]
    %v348 = vld [vmem:[#allocation2 + $0x32c] sm:$0xff]
    %v349 = vld [vmem:[#allocation2 + $0x334] sm:$0xff]
    %v350 = vld [vmem:[#allocation2 + $0x33c] sm:$0xff]
    %v351 = vld [vmem:[#allocation2 + $0x344] sm:$0xf]
    %v352 = vld [vmem:[#allocation2 + $0x348] sm:$0xff]
    %v353 = vld [vmem:[#allocation2 + $0x350] sm:$0xff]
    %v354 = vld [vmem:[#allocation2 + $0x358] sm:$0xff]
    %v355 = vld [vmem:[#allocation2 + $0x360] sm:$0xf]
    %v356 = vld [vmem:[#allocation2 + $0x364] sm:$0xff]
    %v357 = vld [vmem:[#allocation2 + $0x36c] sm:$0xff]
    %v358 = vld [vmem:[#allocation2 + $0x374] sm:$0xff]
    %v359 = vld [vmem:[#allocation2 + $0x37c] sm:$0xf]
    %v360 = vld [vmem:[#allocation2 + $0x380] sm:$0xff]
    %v361 = vld [vmem:[#allocation2 + $0x388] sm:$0xff]
    %v362 = vld [vmem:[#allocation2 + $0x390] sm:$0xff]
    %v363 = vld [vmem:[#allocation2 + $0x398] sm:$0xf]
    %v364 = vld [vmem:[#allocation2 + $0x39c] sm:$0xff]
    %v365 = vld [vmem:[#allocation2 + $0x3a4] sm:$0xff]
    %v366 = vld [vmem:[#allocation2 + $0x3ac] sm:$0xff]
    %v367 = vld [vmem:[#allocation2 + $0x3b4] sm:$0xf]
    %v368 = vld [vmem:[#allocation2 + $0x3b8] sm:$0xff]
    %v369 = vld [vmem:[#allocation2 + $0x3c0] sm:$0xff]
    %v370 = vld [vmem:[#allocation2 + $0x3c8] sm:$0xff]
    %v371 = vld [vmem:[#allocation2 + $0x3d0] sm:$0xf]
    %v372 = vld [vmem:[#allocation2 + $0x3d4] sm:$0xff]
    %v373 = vld [vmem:[#allocation2 + $0x3dc] sm:$0xff]
    %v374 = vld [vmem:[#allocation2 + $0x3e4] sm:$0xff]
    %v375 = vld [vmem:[#allocation2 + $0x3ec] sm:$0xf]
    %v376 = vld [vmem:[#allocation2 + $0x3f0] sm:$0xff]
    %v377 = vld [vmem:[#allocation2 + $0x3f8] sm:$0xff]
    %v378 = vld [vmem:[#allocation2 + $0x400] sm:$0xff]
    %v379 = vld [vmem:[#allocation2 + $0x408] sm:$0xf]
    %v380 = vld [vmem:[#allocation2 + $0x40c] sm:$0xff]
    %v381 = vld [vmem:[#allocation2 + $0x414] sm:$0xff]
    %v382 = vld [vmem:[#allocation2 + $0x41c] sm:$0xff]
    %v383 = vld [vmem:[#allocation2 + $0x424] sm:$0xf]
    %v384 = vld [vmem:[#allocation2 + $0x428] sm:$0xff]
    %v385 = vld [vmem:[#allocation2 + $0x430] sm:$0xff]
    %v386 = vld [vmem:[#allocation2 + $0x438] sm:$0xff]
    %v387 = vld [vmem:[#allocation2 + $0x440] sm:$0xf]
    %v388 = vld [vmem:[#allocation2 + $0x444] sm:$0xff]
    %v389 = vld [vmem:[#allocation2 + $0x44c] sm:$0xff]
    %v390 = vld [vmem:[#allocation2 + $0x454] sm:$0xff]
    %v391 = vld [vmem:[#allocation2 + $0x45c] sm:$0xf]
    %v392 = vld [vmem:[#allocation2 + $0x460] sm:$0xff]
    %v393 = vld [vmem:[#allocation2 + $0x468] sm:$0xff]
    %v394 = vld [vmem:[#allocation2 + $0x470] sm:$0xff]
    %v395 = vld [vmem:[#allocation2 + $0x478] sm:$0xf]
    %v396 = vld [vmem:[#allocation2 + $0x47c] sm:$0xff]
    %v397 = vld [vmem:[#allocation2 + $0x484] sm:$0xff]
    %v398 = vld [vmem:[#allocation2 + $0x48c] sm:$0xff]
    %v399 = vld [vmem:[#allocation2 + $0x494] sm:$0xf]
    %v400 = vld [vmem:[#allocation2 + $0x498] sm:$0xff]
    %v401 = vld [vmem:[#allocation2 + $0x4a0] sm:$0xff]
    %v402 = vld [vmem:[#allocation2 + $0x4a8] sm:$0xff]
    %v403 = vld [vmem:[#allocation2 + $0x4b0] sm:$0xf]
    %v404 = vld [vmem:[#allocation2 + $0x4b4] sm:$0xff]
    %v405 = vld [vmem:[#allocation2 + $0x4bc] sm:$0xff]
    %v406 = vld [vmem:[#allocation2 + $0x4c4] sm:$0xff]
    %v407 = vld [vmem:[#allocation2 + $0x4cc] sm:$0xf]
    %v408 = vld [vmem:[#allocation2 + $0x4d0] sm:$0xff]
    %v409 = vld [vmem:[#allocation2 + $0x4d8] sm:$0xff]
    %v410 = vld [vmem:[#allocation2 + $0x4e0] sm:$0xff]
    %v411 = vld [vmem:[#allocation2 + $0x4e8] sm:$0xf]
    %v412 = vld [vmem:[#allocation2 + $0x4ec] sm:$0xff]
    %v413 = vld [vmem:[#allocation2 + $0x4f4] sm:$0xff]
    %v414 = vld [vmem:[#allocation2 + $0x4fc] sm:$0xff]
    %v415 = vld [vmem:[#allocation2 + $0x504] sm:$0xf]
    %v416 = vld [vmem:[#allocation2 + $0x508] sm:$0xff]
    %v417 = vld [vmem:[#allocation2 + $0x510] sm:$0xff]
    %v418 = vld [vmem:[#allocation2 + $0x518] sm:$0xff]
    %v419 = vld [vmem:[#allocation2 + $0x520] sm:$0xf]
    %v420 = vld [vmem:[#allocation2 + $0x524] sm:$0xff]
    %v421 = vld [vmem:[#allocation2 + $0x52c] sm:$0xff]
    %v422 = vld [vmem:[#allocation2 + $0x534] sm:$0xff]
    %v423 = vld [vmem:[#allocation2 + $0x53c] sm:$0xf]
    %v424 = vld [vmem:[#allocation2 + $0x540] sm:$0xff]
    %v425 = vld [vmem:[#allocation2 + $0x548] sm:$0xff]
    %v426 = vld [vmem:[#allocation2 + $0x550] sm:$0xff]
    %v427 = vld [vmem:[#allocation2 + $0x558] sm:$0xf]
    %v428 = vld [vmem:[#allocation4] sm:$0x7f]
    %v430 = vlaneseq
    %v431 = vshrl.u32 %v430, 7
    %v432 = vsub.s32 0, %v431
    %v433 = vrot.slane %v428, %v432
    %v434 = vlaneseq
    %v435 = vshrl.u32 %v434, 7
    %v436 = vsub.s32 1, %v435
    %v437 = vrot.slane %v428, %v436
    %v438 = vlaneseq
    %v439 = vshrl.u32 %v438, 7
    %v440 = vsub.s32 2, %v439
    %v441 = vrot.slane %v428, %v440
    %v442 = vlaneseq
    %v443 = vshrl.u32 %v442, 7
    %v444 = vsub.s32 3, %v443
    %v445 = vrot.slane %v428, %v444
    %v446 = vlaneseq
    %v447 = vshrl.u32 %v446, 7
    %v448 = vsub.s32 4, %v447
    %v449 = vrot.slane %v428, %v448
    %v450 = vlaneseq
    %v451 = vshrl.u32 %v450, 7
    %v452 = vsub.s32 5, %v451
    %v453 = vrot.slane %v428, %v452
    %v454 = vlaneseq
    %v455 = vshrl.u32 %v454, 7
    %v456 = vsub.s32 6, %v455
    %v457 = vrot.slane %v428, %v456
    %v661 = vunpack.c.l.b16 %v232
    %v662 = vunpack.c.h.b16 %v232
    %v663 = vunpack.c.l.b16 %v233
    %v664 = vunpack.c.h.b16 %v233
    %v665 = vunpack.c.l.b16 %v234
    %v666 = vunpack.c.h.b16 %v234
    %v667 = vunpack.c.l.b16 %v235
    %v668 = vunpack.c.l.b16 %v236
    %v669 = vunpack.c.h.b16 %v236
    %v670 = vunpack.c.l.b16 %v237
    %v671 = vunpack.c.h.b16 %v237
    %v672 = vunpack.c.l.b16 %v238
    %v673 = vunpack.c.h.b16 %v238
    %v674 = vunpack.c.l.b16 %v239
    %v675 = vunpack.c.l.b16 %v240
    %v676 = vunpack.c.h.b16 %v240
    %v677 = vunpack.c.l.b16 %v241
    %v678 = vunpack.c.h.b16 %v241
    %v679 = vunpack.c.l.b16 %v242
    %v680 = vunpack.c.h.b16 %v242
    %v681 = vunpack.c.l.b16 %v243
    %v682 = vunpack.c.l.b16 %v244
    %v683 = vunpack.c.h.b16 %v244
    %v684 = vunpack.c.l.b16 %v245
    %v685 = vunpack.c.h.b16 %v245
    %v686 = vunpack.c.l.b16 %v246
    %v687 = vunpack.c.h.b16 %v246
    %v688 = vunpack.c.l.b16 %v247
    %v689 = vunpack.c.l.b16 %v248
    %v690 = vunpack.c.h.b16 %v248
    %v691 = vunpack.c.l.b16 %v249
    %v692 = vunpack.c.h.b16 %v249
    %v693 = vunpack.c.l.b16 %v250
    %v694 = vunpack.c.h.b16 %v250
    %v695 = vunpack.c.l.b16 %v251
    %v696 = vunpack.c.l.b16 %v252
    %v697 = vunpack.c.h.b16 %v252
    %v698 = vunpack.c.l.b16 %v253
    %v699 = vunpack.c.h.b16 %v253
    %v700 = vunpack.c.l.b16 %v254
    %v701 = vunpack.c.h.b16 %v254
    %v702 = vunpack.c.l.b16 %v255
    %v703 = vunpack.c.l.b16 %v256
    %v704 = vunpack.c.h.b16 %v256
    %v705 = vunpack.c.l.b16 %v257
    %v706 = vunpack.c.h.b16 %v257
    %v707 = vunpack.c.l.b16 %v258
    %v708 = vunpack.c.h.b16 %v258
    %v709 = vunpack.c.l.b16 %v259
    %v710 = vunpack.c.l.b16 %v260
    %v711 = vunpack.c.h.b16 %v260
    %v712 = vunpack.c.l.b16 %v261
    %v713 = vunpack.c.h.b16 %v261
    %v714 = vunpack.c.l.b16 %v262
    %v715 = vunpack.c.h.b16 %v262
    %v716 = vunpack.c.l.b16 %v263
    %v717 = vunpack.c.l.b16 %v264
    %v718 = vunpack.c.h.b16 %v264
    %v719 = vunpack.c.l.b16 %v265
    %v720 = vunpack.c.h.b16 %v265
    %v721 = vunpack.c.l.b16 %v266
    %v722 = vunpack.c.h.b16 %v266
    %v723 = vunpack.c.l.b16 %v267
    %v724 = vunpack.c.l.b16 %v268
    %v725 = vunpack.c.h.b16 %v268
    %v726 = vunpack.c.l.b16 %v269
    %v727 = vunpack.c.h.b16 %v269
    %v728 = vunpack.c.l.b16 %v270
    %v729 = vunpack.c.h.b16 %v270
    %v730 = vunpack.c.l.b16 %v271
    %v731 = vunpack.c.l.b16 %v272
    %v732 = vunpack.c.h.b16 %v272
    %v733 = vunpack.c.l.b16 %v273
    %v734 = vunpack.c.h.b16 %v273
    %v735 = vunpack.c.l.b16 %v274
    %v736 = vunpack.c.h.b16 %v274
    %v737 = vunpack.c.l.b16 %v275
    %v738 = vunpack.c.l.b16 %v276
    %v739 = vunpack.c.h.b16 %v276
    %v740 = vunpack.c.l.b16 %v277
    %v741 = vunpack.c.h.b16 %v277
    %v742 = vunpack.c.l.b16 %v278
    %v743 = vunpack.c.h.b16 %v278
    %v744 = vunpack.c.l.b16 %v279
    %v745 = vunpack.c.l.b16 %v280
    %v746 = vunpack.c.h.b16 %v280
    %v747 = vunpack.c.l.b16 %v281
    %v748 = vunpack.c.h.b16 %v281
    %v749 = vunpack.c.l.b16 %v282
    %v750 = vunpack.c.h.b16 %v282
    %v751 = vunpack.c.l.b16 %v283
    %v752 = vunpack.c.l.b16 %v284
    %v753 = vunpack.c.h.b16 %v284
    %v754 = vunpack.c.l.b16 %v285
    %v755 = vunpack.c.h.b16 %v285
    %v756 = vunpack.c.l.b16 %v286
    %v757 = vunpack.c.h.b16 %v286
    %v758 = vunpack.c.l.b16 %v287
    %v759 = vunpack.c.l.b16 %v288
    %v760 = vunpack.c.h.b16 %v288
    %v761 = vunpack.c.l.b16 %v289
    %v762 = vunpack.c.h.b16 %v289
    %v763 = vunpack.c.l.b16 %v290
    %v764 = vunpack.c.h.b16 %v290
    %v765 = vunpack.c.l.b16 %v291
    %v766 = vunpack.c.l.b16 %v292
    %v767 = vunpack.c.h.b16 %v292
    %v768 = vunpack.c.l.b16 %v293
    %v769 = vunpack.c.h.b16 %v293
    %v770 = vunpack.c.l.b16 %v294
    %v771 = vunpack.c.h.b16 %v294
    %v772 = vunpack.c.l.b16 %v295
    %v773 = vunpack.c.l.b16 %v296
    %v774 = vunpack.c.h.b16 %v296
    %v775 = vunpack.c.l.b16 %v297
    %v776 = vunpack.c.h.b16 %v297
    %v777 = vunpack.c.l.b16 %v298
    %v778 = vunpack.c.h.b16 %v298
    %v779 = vunpack.c.l.b16 %v299
    %v780 = vunpack.c.l.b16 %v300
    %v781 = vunpack.c.h.b16 %v300
    %v782 = vunpack.c.l.b16 %v301
    %v783 = vunpack.c.h.b16 %v301
    %v784 = vunpack.c.l.b16 %v302
    %v785 = vunpack.c.h.b16 %v302
    %v786 = vunpack.c.l.b16 %v303
    %v787 = vunpack.c.l.b16 %v304
    %v788 = vunpack.c.h.b16 %v304
    %v789 = vunpack.c.l.b16 %v305
    %v790 = vunpack.c.h.b16 %v305
    %v791 = vunpack.c.l.b16 %v306
    %v792 = vunpack.c.h.b16 %v306
    %v793 = vunpack.c.l.b16 %v307
    %v794 = vunpack.c.l.b16 %v308
    %v795 = vunpack.c.h.b16 %v308
    %v796 = vunpack.c.l.b16 %v309
    %v797 = vunpack.c.h.b16 %v309
    %v798 = vunpack.c.l.b16 %v310
    %v799 = vunpack.c.h.b16 %v310
    %v800 = vunpack.c.l.b16 %v311
    %v801 = vunpack.c.l.b16 %v312
    %v802 = vunpack.c.h.b16 %v312
    %v803 = vunpack.c.l.b16 %v313
    %v804 = vunpack.c.h.b16 %v313
    %v805 = vunpack.c.l.b16 %v314
    %v806 = vunpack.c.h.b16 %v314
    %v807 = vunpack.c.l.b16 %v315
    %v808 = vunpack.c.l.b16 %v316
    %v809 = vunpack.c.h.b16 %v316
    %v810 = vunpack.c.l.b16 %v317
    %v811 = vunpack.c.h.b16 %v317
    %v812 = vunpack.c.l.b16 %v318
    %v813 = vunpack.c.h.b16 %v318
    %v814 = vunpack.c.l.b16 %v319
    %v815 = vunpack.c.l.b16 %v320
    %v816 = vunpack.c.h.b16 %v320
    %v817 = vunpack.c.l.b16 %v321
    %v818 = vunpack.c.h.b16 %v321
    %v819 = vunpack.c.l.b16 %v322
    %v820 = vunpack.c.h.b16 %v322
    %v821 = vunpack.c.l.b16 %v323
    %v822 = vunpack.c.l.b16 %v324
    %v823 = vunpack.c.h.b16 %v324
    %v824 = vunpack.c.l.b16 %v325
    %v825 = vunpack.c.h.b16 %v325
    %v826 = vunpack.c.l.b16 %v326
    %v827 = vunpack.c.h.b16 %v326
    %v828 = vunpack.c.l.b16 %v327
    %v829 = vunpack.c.l.b16 %v328
    %v830 = vunpack.c.h.b16 %v328
    %v831 = vunpack.c.l.b16 %v329
    %v832 = vunpack.c.h.b16 %v329
    %v833 = vunpack.c.l.b16 %v330
    %v834 = vunpack.c.h.b16 %v330
    %v835 = vunpack.c.l.b16 %v331
    %v836 = vunpack.c.l.b16 %v332
    %v837 = vunpack.c.h.b16 %v332
    %v838 = vunpack.c.l.b16 %v333
    %v839 = vunpack.c.h.b16 %v333
    %v840 = vunpack.c.l.b16 %v334
    %v841 = vunpack.c.h.b16 %v334
    %v842 = vunpack.c.l.b16 %v335
    %v843 = vunpack.c.l.b16 %v336
    %v844 = vunpack.c.h.b16 %v336
    %v845 = vunpack.c.l.b16 %v337
    %v846 = vunpack.c.h.b16 %v337
    %v847 = vunpack.c.l.b16 %v338
    %v848 = vunpack.c.h.b16 %v338
    %v849 = vunpack.c.l.b16 %v339
    %v850 = vunpack.c.l.b16 %v340
    %v851 = vunpack.c.h.b16 %v340
    %v852 = vunpack.c.l.b16 %v341
    %v853 = vunpack.c.h.b16 %v341
    %v854 = vunpack.c.l.b16 %v342
    %v855 = vunpack.c.h.b16 %v342
    %v856 = vunpack.c.l.b16 %v343
    %v857 = vunpack.c.l.b16 %v344
    %v858 = vunpack.c.h.b16 %v344
    %v859 = vunpack.c.l.b16 %v345
    %v860 = vunpack.c.h.b16 %v345
    %v861 = vunpack.c.l.b16 %v346
    %v862 = vunpack.c.h.b16 %v346
    %v863 = vunpack.c.l.b16 %v347
    %v864 = vunpack.c.l.b16 %v348
    %v865 = vunpack.c.h.b16 %v348
    %v866 = vunpack.c.l.b16 %v349
    %v867 = vunpack.c.h.b16 %v349
    %v868 = vunpack.c.l.b16 %v350
    %v869 = vunpack.c.h.b16 %v350
    %v870 = vunpack.c.l.b16 %v351
    %v871 = vunpack.c.l.b16 %v352
    %v872 = vunpack.c.h.b16 %v352
    %v873 = vunpack.c.l.b16 %v353
    %v874 = vunpack.c.h.b16 %v353
    %v875 = vunpack.c.l.b16 %v354
    %v876 = vunpack.c.h.b16 %v354
    %v877 = vunpack.c.l.b16 %v355
    %v878 = vunpack.c.l.b16 %v356
    %v879 = vunpack.c.h.b16 %v356
    %v880 = vunpack.c.l.b16 %v357
    %v881 = vunpack.c.h.b16 %v357
    %v882 = vunpack.c.l.b16 %v358
    %v883 = vunpack.c.h.b16 %v358
    %v884 = vunpack.c.l.b16 %v359
    %v885 = vunpack.c.l.b16 %v360
    %v886 = vunpack.c.h.b16 %v360
    %v887 = vunpack.c.l.b16 %v361
    %v888 = vunpack.c.h.b16 %v361
    %v889 = vunpack.c.l.b16 %v362
    %v890 = vunpack.c.h.b16 %v362
    %v891 = vunpack.c.l.b16 %v363
    %v892 = vunpack.c.l.b16 %v364
    %v893 = vunpack.c.h.b16 %v364
    %v894 = vunpack.c.l.b16 %v365
    %v895 = vunpack.c.h.b16 %v365
    %v896 = vunpack.c.l.b16 %v366
    %v897 = vunpack.c.h.b16 %v366
    %v898 = vunpack.c.l.b16 %v367
    %v899 = vunpack.c.l.b16 %v368
    %v900 = vunpack.c.h.b16 %v368
    %v901 = vunpack.c.l.b16 %v369
    %v902 = vunpack.c.h.b16 %v369
    %v903 = vunpack.c.l.b16 %v370
    %v904 = vunpack.c.h.b16 %v370
    %v905 = vunpack.c.l.b16 %v371
    %v906 = vunpack.c.l.b16 %v372
    %v907 = vunpack.c.h.b16 %v372
    %v908 = vunpack.c.l.b16 %v373
    %v909 = vunpack.c.h.b16 %v373
    %v910 = vunpack.c.l.b16 %v374
    %v911 = vunpack.c.h.b16 %v374
    %v912 = vunpack.c.l.b16 %v375
    %v913 = vunpack.c.l.b16 %v376
    %v914 = vunpack.c.h.b16 %v376
    %v915 = vunpack.c.l.b16 %v377
    %v916 = vunpack.c.h.b16 %v377
    %v917 = vunpack.c.l.b16 %v378
    %v918 = vunpack.c.h.b16 %v378
    %v919 = vunpack.c.l.b16 %v379
    %v920 = vunpack.c.l.b16 %v380
    %v921 = vunpack.c.h.b16 %v380
    %v922 = vunpack.c.l.b16 %v381
    %v923 = vunpack.c.h.b16 %v381
    %v924 = vunpack.c.l.b16 %v382
    %v925 = vunpack.c.h.b16 %v382
    %v926 = vunpack.c.l.b16 %v383
    %v927 = vunpack.c.l.b16 %v384
    %v928 = vunpack.c.h.b16 %v384
    %v929 = vunpack.c.l.b16 %v385
    %v930 = vunpack.c.h.b16 %v385
    %v931 = vunpack.c.l.b16 %v386
    %v932 = vunpack.c.h.b16 %v386
    %v933 = vunpack.c.l.b16 %v387
    %v934 = vunpack.c.l.b16 %v388
    %v935 = vunpack.c.h.b16 %v388
    %v936 = vunpack.c.l.b16 %v389
    %v937 = vunpack.c.h.b16 %v389
    %v938 = vunpack.c.l.b16 %v390
    %v939 = vunpack.c.h.b16 %v390
    %v940 = vunpack.c.l.b16 %v391
    %v941 = vunpack.c.l.b16 %v392
    %v942 = vunpack.c.h.b16 %v392
    %v943 = vunpack.c.l.b16 %v393
    %v944 = vunpack.c.h.b16 %v393
    %v945 = vunpack.c.l.b16 %v394
    %v946 = vunpack.c.h.b16 %v394
    %v947 = vunpack.c.l.b16 %v395
    %v948 = vunpack.c.l.b16 %v396
    %v949 = vunpack.c.h.b16 %v396
    %v950 = vunpack.c.l.b16 %v397
    %v951 = vunpack.c.h.b16 %v397
    %v952 = vunpack.c.l.b16 %v398
    %v953 = vunpack.c.h.b16 %v398
    %v954 = vunpack.c.l.b16 %v399
    %v955 = vunpack.c.l.b16 %v400
    %v956 = vunpack.c.h.b16 %v400
    %v957 = vunpack.c.l.b16 %v401
    %v958 = vunpack.c.h.b16 %v401
    %v959 = vunpack.c.l.b16 %v402
    %v960 = vunpack.c.h.b16 %v402
    %v961 = vunpack.c.l.b16 %v403
    %v962 = vunpack.c.l.b16 %v404
    %v963 = vunpack.c.h.b16 %v404
    %v964 = vunpack.c.l.b16 %v405
    %v965 = vunpack.c.h.b16 %v405
    %v966 = vunpack.c.l.b16 %v406
    %v967 = vunpack.c.h.b16 %v406
    %v968 = vunpack.c.l.b16 %v407
    %v969 = vunpack.c.l.b16 %v408
    %v970 = vunpack.c.h.b16 %v408
    %v971 = vunpack.c.l.b16 %v409
    %v972 = vunpack.c.h.b16 %v409
    %v973 = vunpack.c.l.b16 %v410
    %v974 = vunpack.c.h.b16 %v410
    %v975 = vunpack.c.l.b16 %v411
    %v976 = vunpack.c.l.b16 %v412
    %v977 = vunpack.c.h.b16 %v412
    %v978 = vunpack.c.l.b16 %v413
    %v979 = vunpack.c.h.b16 %v413
    %v980 = vunpack.c.l.b16 %v414
    %v981 = vunpack.c.h.b16 %v414
    %v982 = vunpack.c.l.b16 %v415
    %v983 = vunpack.c.l.b16 %v416
    %v984 = vunpack.c.h.b16 %v416
    %v985 = vunpack.c.l.b16 %v417
    %v986 = vunpack.c.h.b16 %v417
    %v987 = vunpack.c.l.b16 %v418
    %v988 = vunpack.c.h.b16 %v418
    %v989 = vunpack.c.l.b16 %v419
    %v990 = vunpack.c.l.b16 %v420
    %v991 = vunpack.c.h.b16 %v420
    %v992 = vunpack.c.l.b16 %v421
    %v993 = vunpack.c.h.b16 %v421
    %v994 = vunpack.c.l.b16 %v422
    %v995 = vunpack.c.h.b16 %v422
    %v996 = vunpack.c.l.b16 %v423
    %v997 = vunpack.c.l.b16 %v424
    %v998 = vunpack.c.h.b16 %v424
    %v999 = vunpack.c.l.b16 %v425
    %v1000 = vunpack.c.h.b16 %v425
    %v1001 = vunpack.c.l.b16 %v426
    %v1002 = vunpack.c.h.b16 %v426
    %v1003 = vunpack.c.l.b16 %v427
    %v1004 = vpack.c.b16 %v668, %v661
    %v1005 = vpack.c.b16 %v669, %v662
    %v1006 = vpack.c.b16 %v670, %v663
    %v1007 = vpack.c.b16 %v671, %v664
    %v1008 = vpack.c.b16 %v672, %v665
    %v1009 = vpack.c.b16 %v673, %v666
    %v1010 = vpack.c.b16 %v674, %v667
    %v1011 = vpack.c.b16 %v682, %v675
    %v1012 = vpack.c.b16 %v683, %v676
    %v1013 = vpack.c.b16 %v684, %v677
    %v1014 = vpack.c.b16 %v685, %v678
    %v1015 = vpack.c.b16 %v686, %v679
    %v1016 = vpack.c.b16 %v687, %v680
    %v1017 = vpack.c.b16 %v688, %v681
    %v1018 = vpack.c.b16 %v696, %v689
    %v1019 = vpack.c.b16 %v697, %v690
    %v1020 = vpack.c.b16 %v698, %v691
    %v1021 = vpack.c.b16 %v699, %v692
    %v1022 = vpack.c.b16 %v700, %v693
    %v1023 = vpack.c.b16 %v701, %v694
    %v1024 = vpack.c.b16 %v702, %v695
    %v1025 = vpack.c.b16 %v710, %v703
    %v1026 = vpack.c.b16 %v711, %v704
    %v1027 = vpack.c.b16 %v712, %v705
    %v1028 = vpack.c.b16 %v713, %v706
    %v1029 = vpack.c.b16 %v714, %v707
    %v1030 = vpack.c.b16 %v715, %v708
    %v1031 = vpack.c.b16 %v716, %v709
    %v1032 = vpack.c.b16 %v724, %v717
    %v1033 = vpack.c.b16 %v725, %v718
    %v1034 = vpack.c.b16 %v726, %v719
    %v1035 = vpack.c.b16 %v727, %v720
    %v1036 = vpack.c.b16 %v728, %v721
    %v1037 = vpack.c.b16 %v729, %v722
    %v1038 = vpack.c.b16 %v730, %v723
    %v1039 = vpack.c.b16 %v738, %v731
    %v1040 = vpack.c.b16 %v739, %v732
    %v1041 = vpack.c.b16 %v740, %v733
    %v1042 = vpack.c.b16 %v741, %v734
    %v1043 = vpack.c.b16 %v742, %v735
    %v1044 = vpack.c.b16 %v743, %v736
    %v1045 = vpack.c.b16 %v744, %v737
    %v1046 = vpack.c.b16 %v752, %v745
    %v1047 = vpack.c.b16 %v753, %v746
    %v1048 = vpack.c.b16 %v754, %v747
    %v1049 = vpack.c.b16 %v755, %v748
    %v1050 = vpack.c.b16 %v756, %v749
    %v1051 = vpack.c.b16 %v757, %v750
    %v1052 = vpack.c.b16 %v758, %v751
    %v1053 = vpack.c.b16 %v766, %v759
    %v1054 = vpack.c.b16 %v767, %v760
    %v1055 = vpack.c.b16 %v768, %v761
    %v1056 = vpack.c.b16 %v769, %v762
    %v1057 = vpack.c.b16 %v770, %v763
    %v1058 = vpack.c.b16 %v771, %v764
    %v1059 = vpack.c.b16 %v772, %v765
    %v1060 = vpack.c.b16 %v780, %v773
    %v1061 = vpack.c.b16 %v781, %v774
    %v1062 = vpack.c.b16 %v782, %v775
    %v1063 = vpack.c.b16 %v783, %v776
    %v1064 = vpack.c.b16 %v784, %v777
    %v1065 = vpack.c.b16 %v785, %v778
    %v1066 = vpack.c.b16 %v786, %v779
    %v1067 = vpack.c.b16 %v794, %v787
    %v1068 = vpack.c.b16 %v795, %v788
    %v1069 = vpack.c.b16 %v796, %v789
    %v1070 = vpack.c.b16 %v797, %v790
    %v1071 = vpack.c.b16 %v798, %v791
    %v1072 = vpack.c.b16 %v799, %v792
    %v1073 = vpack.c.b16 %v800, %v793
    %v1074 = vpack.c.b16 %v808, %v801
    %v1075 = vpack.c.b16 %v809, %v802
    %v1076 = vpack.c.b16 %v810, %v803
    %v1077 = vpack.c.b16 %v811, %v804
    %v1078 = vpack.c.b16 %v812, %v805
    %v1079 = vpack.c.b16 %v813, %v806
    %v1080 = vpack.c.b16 %v814, %v807
    %v1081 = vpack.c.b16 %v822, %v815
    %v1082 = vpack.c.b16 %v823, %v816
    %v1083 = vpack.c.b16 %v824, %v817
    %v1084 = vpack.c.b16 %v825, %v818
    %v1085 = vpack.c.b16 %v826, %v819
    %v1086 = vpack.c.b16 %v827, %v820
    %v1087 = vpack.c.b16 %v828, %v821
    %v1088 = vpack.c.b16 %v836, %v829
    %v1089 = vpack.c.b16 %v837, %v830
    %v1090 = vpack.c.b16 %v838, %v831
    %v1091 = vpack.c.b16 %v839, %v832
    %v1092 = vpack.c.b16 %v840, %v833
    %v1093 = vpack.c.b16 %v841, %v834
    %v1094 = vpack.c.b16 %v842, %v835
    %v1095 = vpack.c.b16 %v850, %v843
    %v1096 = vpack.c.b16 %v851, %v844
    %v1097 = vpack.c.b16 %v852, %v845
    %v1098 = vpack.c.b16 %v853, %v846
    %v1099 = vpack.c.b16 %v854, %v847
    %v1100 = vpack.c.b16 %v855, %v848
    %v1101 = vpack.c.b16 %v856, %v849
    %v1102 = vpack.c.b16 %v864, %v857
    %v1103 = vpack.c.b16 %v865, %v858
    %v1104 = vpack.c.b16 %v866, %v859
    %v1105 = vpack.c.b16 %v867, %v860
    %v1106 = vpack.c.b16 %v868, %v861
    %v1107 = vpack.c.b16 %v869, %v862
    %v1108 = vpack.c.b16 %v870, %v863
    %v1109 = vpack.c.b16 %v878, %v871
    %v1110 = vpack.c.b16 %v879, %v872
    %v1111 = vpack.c.b16 %v880, %v873
    %v1112 = vpack.c.b16 %v881, %v874
    %v1113 = vpack.c.b16 %v882, %v875
    %v1114 = vpack.c.b16 %v883, %v876
    %v1115 = vpack.c.b16 %v884, %v877
    %v1116 = vpack.c.b16 %v892, %v885
    %v1117 = vpack.c.b16 %v893, %v886
    %v1118 = vpack.c.b16 %v894, %v887
    %v1119 = vpack.c.b16 %v895, %v888
    %v1120 = vpack.c.b16 %v896, %v889
    %v1121 = vpack.c.b16 %v897, %v890
    %v1122 = vpack.c.b16 %v898, %v891
    %v1123 = vpack.c.b16 %v906, %v899
    %v1124 = vpack.c.b16 %v907, %v900
    %v1125 = vpack.c.b16 %v908, %v901
    %v1126 = vpack.c.b16 %v909, %v902
    %v1127 = vpack.c.b16 %v910, %v903
    %v1128 = vpack.c.b16 %v911, %v904
    %v1129 = vpack.c.b16 %v912, %v905
    %v1130 = vpack.c.b16 %v920, %v913
    %v1131 = vpack.c.b16 %v921, %v914
    %v1132 = vpack.c.b16 %v922, %v915
    %v1133 = vpack.c.b16 %v923, %v916
    %v1134 = vpack.c.b16 %v924, %v917
    %v1135 = vpack.c.b16 %v925, %v918
    %v1136 = vpack.c.b16 %v926, %v919
    %v1137 = vpack.c.b16 %v934, %v927
    %v1138 = vpack.c.b16 %v935, %v928
    %v1139 = vpack.c.b16 %v936, %v929
    %v1140 = vpack.c.b16 %v937, %v930
    %v1141 = vpack.c.b16 %v938, %v931
    %v1142 = vpack.c.b16 %v939, %v932
    %v1143 = vpack.c.b16 %v940, %v933
    %v1144 = vpack.c.b16 %v948, %v941
    %v1145 = vpack.c.b16 %v949, %v942
    %v1146 = vpack.c.b16 %v950, %v943
    %v1147 = vpack.c.b16 %v951, %v944
    %v1148 = vpack.c.b16 %v952, %v945
    %v1149 = vpack.c.b16 %v953, %v946
    %v1150 = vpack.c.b16 %v954, %v947
    %v1151 = vpack.c.b16 %v962, %v955
    %v1152 = vpack.c.b16 %v963, %v956
    %v1153 = vpack.c.b16 %v964, %v957
    %v1154 = vpack.c.b16 %v965, %v958
    %v1155 = vpack.c.b16 %v966, %v959
    %v1156 = vpack.c.b16 %v967, %v960
    %v1157 = vpack.c.b16 %v968, %v961
    %v1158 = vpack.c.b16 %v976, %v969
    %v1159 = vpack.c.b16 %v977, %v970
    %v1160 = vpack.c.b16 %v978, %v971
    %v1161 = vpack.c.b16 %v979, %v972
    %v1162 = vpack.c.b16 %v980, %v973
    %v1163 = vpack.c.b16 %v981, %v974
    %v1164 = vpack.c.b16 %v982, %v975
    %v1165 = vpack.c.b16 %v990, %v983
    %v1166 = vpack.c.b16 %v991, %v984
    %v1167 = vpack.c.b16 %v992, %v985
    %v1168 = vpack.c.b16 %v993, %v986
    %v1169 = vpack.c.b16 %v994, %v987
    %v1170 = vpack.c.b16 %v995, %v988
    %v1171 = vpack.c.b16 %v996, %v989
    %v1172 = vpack.c.b16 %v997, %v997
    %v1173 = vpack.c.b16 %v998, %v998
    %v1174 = vpack.c.b16 %v999, %v999
    %v1175 = vpack.c.b16 %v1000, %v1000
    %v1176 = vpack.c.b16 %v1001, %v1001
    %v1177 = vpack.c.b16 %v1002, %v1002
    %v1178 = vpack.c.b16 %v1003, %v1003
    %vm1347 = vcmask 64512
    %v1349 = vsel %vm1347, %v231, 0
    %vm1351 = vcmask 1043456
    %v1353 = vsel %vm1351, %v1172, 0
    %v1356 = vsel %vm1351, %v1173, 0
    %v1359 = vsel %vm1351, %v1174, 0
    %v1362 = vsel %vm1351, %v1175, 0
    %v1365 = vsel %vm1351, %v1176, 0
    %v1368 = vsel %vm1351, %v1177, 0
    %v1371 = vsel %vm1351, %v1178, 0
    %1373 = vmatprep.subr.bf16.mxu0 %v1005
    %1374 = vmatpush1.bf16.msra.mxu0 %v1004
    %1375 = vmatprep.subr.bf16.mxu0 %v1012
    %1376 = vmatpush1.bf16.msra.mxu0 %v1011
    %1377 = vmatprep.subr.bf16.mxu0 %v1019
    %1378 = vmatpush1.bf16.msra.mxu0 %v1018
    %1379 = vmatprep.subr.bf16.mxu0 %v1026
    %1380 = vmatpush1.bf16.msra.mxu0 %v1025
    %1381 = vmatprep.subr.bf16.mxu0 %v1033
    %1382 = vmatpush1.bf16.msra.mxu0 %v1032
    %1383 = vmatprep.subr.bf16.mxu0 %v1040
    %1384 = vmatpush1.bf16.msra.mxu0 %v1039
    %1385 = vmatprep.subr.bf16.mxu0 %v1047
    %1386 = vmatpush1.bf16.msra.mxu0 %v1046
    %1387 = vmatprep.subr.bf16.mxu0 %v1054
    %1388 = vmatpush1.bf16.msra.mxu0 %v1053
    %1389 = vmatprep.subr.bf16.mxu0 %v1061
    %1390 = vmatpush1.bf16.msra.mxu0 %v1060
    %1391 = vmatprep.subr.bf16.mxu0 %v1068
    %1392 = vmatpush1.bf16.msra.mxu0 %v1067
    %1393 = vmatprep.subr.bf16.mxu0 %v1075
    %1394 = vmatpush1.bf16.msra.mxu0 %v1074
    %1395 = vmatprep.subr.bf16.mxu0 %v1082
    %1396 = vmatpush1.bf16.msra.mxu0 %v1081
    %1397 = vmatprep.subr.bf16.mxu0 %v1089
    %1398 = vmatpush1.bf16.msra.mxu0 %v1088
    %1399 = vmatprep.subr.bf16.mxu0 %v1096
    %1400 = vmatpush1.bf16.msra.mxu0 %v1095
    %1401 = vmatprep.subr.bf16.mxu0 %v1103
    %1402 = vmatpush1.bf16.msra.mxu0 %v1102
    %1403 = vmatprep.subr.bf16.mxu0 %v1110
    %1404 = vmatpush1.bf16.msra.mxu0 %v1109
    %1405 = vmatprep.mubr.bf16.mxu0 %v229
    %1406 = vmatmul.mubr.bf16.gmra.mrb[0].mxu0 %v228
    %v1407 = vpop.f32.mrb[0].mxu0
    %v1408 = vadd.f32 %v433, %v1407
    %v1409 = vpop.f32.mrb[0].mxu0
    %v1410 = vadd.f32 %v437, %v1409
    %v1411 = vpop.f32.mrb[0].mxu0
    %v1412 = vpop.f32.mrb[0].mxu0
    %1413 = vdwg.mxu0
    %1414 = vmatprep.subr.bf16.mxu0 %v1117
    %1415 = vmatpush1.bf16.msra.mxu0 %v1116
    %1416 = vmatprep.subr.bf16.mxu0 %v1124
    %1417 = vmatpush1.bf16.msra.mxu0 %v1123
    %1418 = vmatprep.subr.bf16.mxu0 %v1131
    %1419 = vmatpush1.bf16.msra.mxu0 %v1130
    %1420 = vmatprep.subr.bf16.mxu0 %v1138
    %1421 = vmatpush1.bf16.msra.mxu0 %v1137
    %1422 = vmatprep.subr.bf16.mxu0 %v1145
    %1423 = vmatpush1.bf16.msra.mxu0 %v1144
    %1424 = vmatprep.subr.bf16.mxu0 %v1152
    %1425 = vmatpush1.bf16.msra.mxu0 %v1151
    %1426 = vmatprep.subr.bf16.mxu0 %v1159
    %1427 = vmatpush1.bf16.msra.mxu0 %v1158
    %1428 = vmatprep.subr.bf16.mxu0 %v1166
    %1429 = vmatpush1.bf16.msra.mxu0 %v1165
    %1430 = vmatprep.subr.bf16.mxu0 %v1356
    %1431 = vmatpush1.bf16.msra.mxu0 %v1353
    %1432 = vmatprep.subr.bf16.mxu0 0
    %1433 = vmatpush1.bf16.msra.mxu0 0
    %1434 = vmatprep.subr.bf16.mxu0 0
    %1435 = vmatpush1.bf16.msra.mxu0 0
    %1436 = vmatprep.subr.bf16.mxu0 0
    %1437 = vmatpush1.bf16.msra.mxu0 0
    %1438 = vmatprep.subr.bf16.mxu0 0
    %1439 = vmatpush1.bf16.msra.mxu0 0
    %1440 = vmatprep.subr.bf16.mxu0 0
    %1441 = vmatpush1.bf16.msra.mxu0 0
    %1442 = vmatprep.subr.bf16.mxu0 0
    %1443 = vmatpush1.bf16.msra.mxu0 0
    %1444 = vmatprep.subr.bf16.mxu0 0
    %1445 = vmatpush1.bf16.msra.mxu0 0
    %1446 = vmatprep.mubr.bf16.mxu0 %v1349
    %1447 = vmatmul.mubr.bf16.gmra.mrb[0].mxu0 %v230
    %v1448 = vpop.f32.mrb[0].mxu0
    %v1449 = vadd.f32 %v1408, %v1448
    %v1450 = vpop.f32.mrb[0].mxu0
    %v1451 = vadd.f32 %v1410, %v1450
    %v1452 = vpop.f32.mrb[0].mxu0
    %v1453 = vpop.f32.mrb[0].mxu0
    %1454 = vdwg.mxu0
    %1455 = vmatprep.subr.bf16.mxu0 %v1007
    %1456 = vmatpush1.bf16.msra.mxu0 %v1006
    %1457 = vmatprep.subr.bf16.mxu0 %v1014
    %1458 = vmatpush1.bf16.msra.mxu0 %v1013
    %1459 = vmatprep.subr.bf16.mxu0 %v1021
    %1460 = vmatpush1.bf16.msra.mxu0 %v1020
    %1461 = vmatprep.subr.bf16.mxu0 %v1028
    %1462 = vmatpush1.bf16.msra.mxu0 %v1027
    %1463 = vmatprep.subr.bf16.mxu0 %v1035
    %1464 = vmatpush1.bf16.msra.mxu0 %v1034
    %1465 = vmatprep.subr.bf16.mxu0 %v1042
    %1466 = vmatpush1.bf16.msra.mxu0 %v1041
    %1467 = vmatprep.subr.bf16.mxu0 %v1049
    %1468 = vmatpush1.bf16.msra.mxu0 %v1048
    %1469 = vmatprep.subr.bf16.mxu0 %v1056
    %1470 = vmatpush1.bf16.msra.mxu0 %v1055
    %1471 = vmatprep.subr.bf16.mxu0 %v1063
    %1472 = vmatpush1.bf16.msra.mxu0 %v1062
    %1473 = vmatprep.subr.bf16.mxu0 %v1070
    %1474 = vmatpush1.bf16.msra.mxu0 %v1069
    %1475 = vmatprep.subr.bf16.mxu0 %v1077
    %1476 = vmatpush1.bf16.msra.mxu0 %v1076
    %1477 = vmatprep.subr.bf16.mxu0 %v1084
    %1478 = vmatpush1.bf16.msra.mxu0 %v1083
    %1479 = vmatprep.subr.bf16.mxu0 %v1091
    %1480 = vmatpush1.bf16.msra.mxu0 %v1090
    %1481 = vmatprep.subr.bf16.mxu0 %v1098
    %1482 = vmatpush1.bf16.msra.mxu0 %v1097
    %1483 = vmatprep.subr.bf16.mxu0 %v1105
    %1484 = vmatpush1.bf16.msra.mxu0 %v1104
    %1485 = vmatprep.subr.bf16.mxu0 %v1112
    %1486 = vmatpush1.bf16.msra.mxu0 %v1111
    %1487 = vmatprep.mubr.bf16.mxu0 %v229
    %1488 = vmatmul.mubr.bf16.gmra.mrb[0].mxu0 %v228
    %v1489 = vpop.f32.mrb[0].mxu0
    %v1490 = vadd.f32 %v441, %v1489
    %v1491 = vpop.f32.mrb[0].mxu0
    %v1492 = vadd.f32 %v445, %v1491
    %v1493 = vpop.f32.mrb[0].mxu0
    %v1494 = vpop.f32.mrb[0].mxu0
    %1495 = vdwg.mxu0
    %1496 = vmatprep.subr.bf16.mxu0 %v1119
    %1497 = vmatpush1.bf16.msra.mxu0 %v1118
    %1498 = vmatprep.subr.bf16.mxu0 %v1126
    %1499 = vmatpush1.bf16.msra.mxu0 %v1125
    %1500 = vmatprep.subr.bf16.mxu0 %v1133
    %1501 = vmatpush1.bf16.msra.mxu0 %v1132
    %1502 = vmatprep.subr.bf16.mxu0 %v1140
    %1503 = vmatpush1.bf16.msra.mxu0 %v1139
    %1504 = vmatprep.subr.bf16.mxu0 %v1147
    %1505 = vmatpush1.bf16.msra.mxu0 %v1146
    %1506 = vmatprep.subr.bf16.mxu0 %v1154
    %1507 = vmatpush1.bf16.msra.mxu0 %v1153
    %1508 = vmatprep.subr.bf16.mxu0 %v1161
    %1509 = vmatpush1.bf16.msra.mxu0 %v1160
    %1510 = vmatprep.subr.bf16.mxu0 %v1168
    %1511 = vmatpush1.bf16.msra.mxu0 %v1167
    %1512 = vmatprep.subr.bf16.mxu0 %v1362
    %1513 = vmatpush1.bf16.msra.mxu0 %v1359
    %1514 = vmatprep.subr.bf16.mxu0 0
    %1515 = vmatpush1.bf16.msra.mxu0 0
    %1516 = vmatprep.subr.bf16.mxu0 0
    %1517 = vmatpush1.bf16.msra.mxu0 0
    %1518 = vmatprep.subr.bf16.mxu0 0
    %1519 = vmatpush1.bf16.msra.mxu0 0
    %1520 = vmatprep.subr.bf16.mxu0 0
    %1521 = vmatpush1.bf16.msra.mxu0 0
    %1522 = vmatprep.subr.bf16.mxu0 0
    %1523 = vmatpush1.bf16.msra.mxu0 0
    %1524 = vmatprep.subr.bf16.mxu0 0
    %1525 = vmatpush1.bf16.msra.mxu0 0
    %1526 = vmatprep.subr.bf16.mxu0 0
    %1527 = vmatpush1.bf16.msra.mxu0 0
    %1528 = vmatprep.mubr.bf16.mxu0 %v1349
    %1529 = vmatmul.mubr.bf16.gmra.mrb[0].mxu0 %v230
    %v1530 = vpop.f32.mrb[0].mxu0
    %v1531 = vadd.f32 %v1490, %v1530
    %v1532 = vpop.f32.mrb[0].mxu0
    %v1533 = vadd.f32 %v1492, %v1532
    %v1534 = vpop.f32.mrb[0].mxu0
    %v1535 = vpop.f32.mrb[0].mxu0
    %1536 = vdwg.mxu0
    %1537 = vmatprep.subr.bf16.mxu0 %v1009
    %1538 = vmatpush1.bf16.msra.mxu0 %v1008
    %1539 = vmatprep.subr.bf16.mxu0 %v1016
    %1540 = vmatpush1.bf16.msra.mxu0 %v1015
    %1541 = vmatprep.subr.bf16.mxu0 %v1023
    %1542 = vmatpush1.bf16.msra.mxu0 %v1022
    %1543 = vmatprep.subr.bf16.mxu0 %v1030
    %1544 = vmatpush1.bf16.msra.mxu0 %v1029
    %1545 = vmatprep.subr.bf16.mxu0 %v1037
    %1546 = vmatpush1.bf16.msra.mxu0 %v1036
    %1547 = vmatprep.subr.bf16.mxu0 %v1044
    %1548 = vmatpush1.bf16.msra.mxu0 %v1043
    %1549 = vmatprep.subr.bf16.mxu0 %v1051
    %1550 = vmatpush1.bf16.msra.mxu0 %v1050
    %1551 = vmatprep.subr.bf16.mxu0 %v1058
    %1552 = vmatpush1.bf16.msra.mxu0 %v1057
    %1553 = vmatprep.subr.bf16.mxu0 %v1065
    %1554 = vmatpush1.bf16.msra.mxu0 %v1064
    %1555 = vmatprep.subr.bf16.mxu0 %v1072
    %1556 = vmatpush1.bf16.msra.mxu0 %v1071
    %1557 = vmatprep.subr.bf16.mxu0 %v1079
    %1558 = vmatpush1.bf16.msra.mxu0 %v1078
    %1559 = vmatprep.subr.bf16.mxu0 %v1086
    %1560 = vmatpush1.bf16.msra.mxu0 %v1085
    %1561 = vmatprep.subr.bf16.mxu0 %v1093
    %1562 = vmatpush1.bf16.msra.mxu0 %v1092
    %1563 = vmatprep.subr.bf16.mxu0 %v1100
    %1564 = vmatpush1.bf16.msra.mxu0 %v1099
    %1565 = vmatprep.subr.bf16.mxu0 %v1107
    %1566 = vmatpush1.bf16.msra.mxu0 %v1106
    %1567 = vmatprep.subr.bf16.mxu0 %v1114
    %1568 = vmatpush1.bf16.msra.mxu0 %v1113
    %1569 = vmatprep.mubr.bf16.mxu0 %v229
    %1570 = vmatmul.mubr.bf16.gmra.mrb[0].mxu0 %v228
    %v1571 = vpop.f32.mrb[0].mxu0
    %v1572 = vadd.f32 %v449, %v1571
    %v1573 = vpop.f32.mrb[0].mxu0
    %v1574 = vadd.f32 %v453, %v1573
    %v1575 = vpop.f32.mrb[0].mxu0
    %v1576 = vpop.f32.mrb[0].mxu0
    %1577 = vdwg.mxu0
    %1578 = vmatprep.subr.bf16.mxu0 %v1121
    %1579 = vmatpush1.bf16.msra.mxu0 %v1120
    %1580 = vmatprep.subr.bf16.mxu0 %v1128
    %1581 = vmatpush1.bf16.msra.mxu0 %v1127
    %1582 = vmatprep.subr.bf16.mxu0 %v1135
    %1583 = vmatpush1.bf16.msra.mxu0 %v1134
    %1584 = vmatprep.subr.bf16.mxu0 %v1142
    %1585 = vmatpush1.bf16.msra.mxu0 %v1141
    %1586 = vmatprep.subr.bf16.mxu0 %v1149
    %1587 = vmatpush1.bf16.msra.mxu0 %v1148
    %1588 = vmatprep.subr.bf16.mxu0 %v1156
    %1589 = vmatpush1.bf16.msra.mxu0 %v1155
    %1590 = vmatprep.subr.bf16.mxu0 %v1163
    %1591 = vmatpush1.bf16.msra.mxu0 %v1162
    %1592 = vmatprep.subr.bf16.mxu0 %v1170
    %1593 = vmatpush1.bf16.msra.mxu0 %v1169
    %1594 = vmatprep.subr.bf16.mxu0 %v1368
    %1595 = vmatpush1.bf16.msra.mxu0 %v1365
    %1596 = vmatprep.subr.bf16.mxu0 0
    %1597 = vmatpush1.bf16.msra.mxu0 0
    %1598 = vmatprep.subr.bf16.mxu0 0
    %1599 = vmatpush1.bf16.msra.mxu0 0
    %1600 = vmatprep.subr.bf16.mxu0 0
    %1601 = vmatpush1.bf16.msra.mxu0 0
    %1602 = vmatprep.subr.bf16.mxu0 0
    %1603 = vmatpush1.bf16.msra.mxu0 0
    %1604 = vmatprep.subr.bf16.mxu0 0
    %1605 = vmatpush1.bf16.msra.mxu0 0
    %1606 = vmatprep.subr.bf16.mxu0 0
    %1607 = vmatpush1.bf16.msra.mxu0 0
    %1608 = vmatprep.subr.bf16.mxu0 0
    %1609 = vmatpush1.bf16.msra.mxu0 0
    %1610 = vmatprep.mubr.bf16.mxu0 %v1349
    %1611 = vmatmul.mubr.bf16.gmra.mrb[0].mxu0 %v230
    %v1612 = vpop.f32.mrb[0].mxu0
    %v1613 = vadd.f32 %v1572, %v1612
    %v1614 = vpop.f32.mrb[0].mxu0
    %v1615 = vadd.f32 %v1574, %v1614
    %v1616 = vpop.f32.mrb[0].mxu0
    %v1617 = vpop.f32.mrb[0].mxu0
    %1618 = vdwg.mxu0
    %1619 = vmatprep.subr.bf16.mxu0 0
    %1620 = vmatpush1.bf16.msra.mxu0 %v1010
    %1621 = vmatprep.subr.bf16.mxu0 0
    %1622 = vmatpush1.bf16.msra.mxu0 %v1017
    %1623 = vmatprep.subr.bf16.mxu0 0
    %1624 = vmatpush1.bf16.msra.mxu0 %v1024
    %1625 = vmatprep.subr.bf16.mxu0 0
    %1626 = vmatpush1.bf16.msra.mxu0 %v1031
    %1627 = vmatprep.subr.bf16.mxu0 0
    %1628 = vmatpush1.bf16.msra.mxu0 %v1038
    %1629 = vmatprep.subr.bf16.mxu0 0
    %1630 = vmatpush1.bf16.msra.mxu0 %v1045
    %1631 = vmatprep.subr.bf16.mxu0 0
    %1632 = vmatpush1.bf16.msra.mxu0 %v1052
    %1633 = vmatprep.subr.bf16.mxu0 0
    %1634 = vmatpush1.bf16.msra.mxu0 %v1059
    %1635 = vmatprep.subr.bf16.mxu0 0
    %1636 = vmatpush1.bf16.msra.mxu0 %v1066
    %1637 = vmatprep.subr.bf16.mxu0 0
    %1638 = vmatpush1.bf16.msra.mxu0 %v1073
    %1639 = vmatprep.subr.bf16.mxu0 0
    %1640 = vmatpush1.bf16.msra.mxu0 %v1080
    %1641 = vmatprep.subr.bf16.mxu0 0
    %1642 = vmatpush1.bf16.msra.mxu0 %v1087
    %1643 = vmatprep.subr.bf16.mxu0 0
    %1644 = vmatpush1.bf16.msra.mxu0 %v1094
    %1645 = vmatprep.subr.bf16.mxu0 0
    %1646 = vmatpush1.bf16.msra.mxu0 %v1101
    %1647 = vmatprep.subr.bf16.mxu0 0
    %1648 = vmatpush1.bf16.msra.mxu0 %v1108
    %1649 = vmatprep.subr.bf16.mxu0 0
    %1650 = vmatpush1.bf16.msra.mxu0 %v1115
    %1651 = vmatprep.mubr.bf16.mxu0 %v229
    %1652 = vmatmul.mubr.bf16.gmra.mrb[0].mxu0 %v228
    %v1653 = vpop.f32.mrb[0].mxu0
    %v1654 = vadd.f32 %v457, %v1653
    %v1655 = vpop.f32.mrb[0].mxu0
    %v1656 = vpop.f32.mrb[0].mxu0
    %v1657 = vpop.f32.mrb[0].mxu0
    %1658 = vdwg.mxu0
    %1659 = vmatprep.subr.bf16.mxu0 0
    %1660 = vmatpush1.bf16.msra.mxu0 %v1122
    %1661 = vmatprep.subr.bf16.mxu0 0
    %1662 = vmatpush1.bf16.msra.mxu0 %v1129
    %1663 = vmatprep.subr.bf16.mxu0 0
    %1664 = vmatpush1.bf16.msra.mxu0 %v1136
    %1665 = vmatprep.subr.bf16.mxu0 0
    %1666 = vmatpush1.bf16.msra.mxu0 %v1143
    %1667 = vmatprep.subr.bf16.mxu0 0
    %1668 = vmatpush1.bf16.msra.mxu0 %v1150
    %1669 = vmatprep.subr.bf16.mxu0 0
    %1670 = vmatpush1.bf16.msra.mxu0 %v1157
    %1671 = vmatprep.subr.bf16.mxu0 0
    %1672 = vmatpush1.bf16.msra.mxu0 %v1164
    %1673 = vmatprep.subr.bf16.mxu0 0
    %1674 = vmatpush1.bf16.msra.mxu0 %v1171
    %1675 = vmatprep.subr.bf16.mxu0 0
    %1676 = vmatpush1.bf16.msra.mxu0 %v1371
    %1677 = vmatprep.subr.bf16.mxu0 0
    %1678 = vmatpush1.bf16.msra.mxu0 0
    %1679 = vmatprep.subr.bf16.mxu0 0
    %1680 = vmatpush1.bf16.msra.mxu0 0
    %1681 = vmatprep.subr.bf16.mxu0 0
    %1682 = vmatpush1.bf16.msra.mxu0 0
    %1683 = vmatprep.subr.bf16.mxu0 0
    %1684 = vmatpush1.bf16.msra.mxu0 0
    %1685 = vmatprep.subr.bf16.mxu0 0
    %1686 = vmatpush1.bf16.msra.mxu0 0
    %1687 = vmatprep.subr.bf16.mxu0 0
    %1688 = vmatpush1.bf16.msra.mxu0 0
    %1689 = vmatprep.subr.bf16.mxu0 0
    %1690 = vmatpush1.bf16.msra.mxu0 0
    %1691 = vmatprep.mubr.bf16.mxu0 %v1349
    %1692 = vmatmul.mubr.bf16.gmra.mrb[0].mxu0 %v230
    %v1693 = vpop.f32.mrb[0].mxu0
    %v1694 = vadd.f32 %v1654, %v1693
    %v1695 = vpop.f32.mrb[0].mxu0
    %v1696 = vpop.f32.mrb[0].mxu0
    %v1697 = vpop.f32.mrb[0].mxu0
    %1698 = vdwg.mxu0
    %v1706 = vcombine.low %v1449, %v1451
    %v1707 = vcombine.low %v1531, %v1533
    %v1709 = vunpack.c.l.s4 1983009808
    %v1710 = vunpack.c.0.s8 %v1709
    %v1711 = vlaneseq
    %v1712 = vshrl.u32 %v1711, 7
    %v1713 = vsub.s32 %v1710, %v1712
    %v1714 = vrot.slane %v1706, %v1713
    %v1716 = vunpack.c.l.s4 1983009808
    %v1717 = vunpack.c.0.s8 %v1716
    %v1718 = vlaneseq
    %v1719 = vshrl.u32 %v1718, 7
    %v1720 = vsub.s32 %v1717, %v1719
    %v1721 = vrot.slane %v1707, %v1720
    %v1722 = vcombine.low %v1714, %v1721
    %v1723 = vcombine.low %v1613, %v1615
    %v1725 = vunpack.c.l.s4 1983009808
    %v1726 = vunpack.c.0.s8 %v1725
    %v1727 = vlaneseq
    %v1728 = vshrl.u32 %v1727, 7
    %v1729 = vsub.s32 %v1726, %v1728
    %v1730 = vrot.slane %v1723, %v1729
    %v1732 = vunpack.c.l.s4 1983009808
    %v1733 = vunpack.c.0.s8 %v1732
    %v1734 = vlaneseq
    %v1735 = vshrl.u32 %v1734, 7
    %v1736 = vsub.s32 %v1733, %v1735
    %v1737 = vrot.slane %v1694, %v1736
    %v1738 = vcombine.low %v1730, %v1737
    %1741 = vst [vmem:[%s5] sm:$0xff] %v1722
    %vm1742 = vcmask 1041408
    %vm1743 = vcmask 1043458
    %vm1744 = vmor %vm1743, %vm1742
    %vm1745 = vcmask 128004
    %vm1746 = vmor %vm1745, %vm1744
    %1747 = vst.msk [vmem:[%s5 + $0x8] sm:$0x3f] %vm1746, %v1738
    // Predicated region
    $region34: #{generator_forward.15} parent=1 // pred_check
      _
    $region35: #{generator_forward.15} parent=1 // pred_check_branch
      %1749 = sbr.rel (0) target = $region37
    $region36: #{generator_forward.15} parent=1 // pred_region
      _
    $region37: #{generator_forward.15} parent=1 // pred_fallthru
      _
    // Predicated region
    $region38: #{generator_forward.15} parent=1 // pred_check
      _
    $region39: #{generator_forward.15} parent=1 // pred_check_branch
      %1751 = sbr.rel (0) target = $region41
    $region40: #{generator_forward.15} parent=1 // pred_region
      _
    $region41: #{generator_forward.15} parent=1 // pred_fallthru
      _
    %1752 = vsyncpa [#allocation3], 1
    %1753 = vsyncpa [#allocation5], 1

// kernel: generator_forward.17
$region0: #{generator_forward.17}
  #allocation0 [shape = 'u32[]', space=smem, size = 0x4, offset = 0x4, fixed_abs, tag = 'smem constant byte address 0x4 - core index']
  #allocation1 [shape = 'u32[144,128]{1,0:T(1,128)}', space=vmem, size = 0x12000, scoped, tag = 'internal scratch']
  %s0 = inlined_call_operand.vmem [shape: f32[2,784], index: 0, kind: input, shape index: {}]
  %s1 = inlined_call_operand.vmem [shape: f32[2,784], index: 1, kind: input, shape index: {}]
  %s2 = inlined_call_operand.vmem [shape: bf16[784,784], index: 2, kind: input, shape index: {}]
  %s3 = inlined_call_operand.vmem [shape: f32[1,784], index: 3, kind: input, shape index: {}]
  %s4 = inlined_call_operand.vmem [shape: f32[1,784], index: 4, kind: input, shape index: {}]
  %s5 = inlined_call_operand.vmem [shape: f32[2,784], index: 5, kind: output, shape index: {}]
  %s6 = sld [smem:[#allocation0]]
  $region30: #{generator_forward.17} parent=0
    _
  %s8 = ssub.s32 1, %s6
  %s9 = scalar_select 0, %s8, %s6
  // Predicated region
  $region2: #{generator_forward.17} parent=0 // pred_check
    _
  $region3: #{generator_forward.17} parent=0 // pred_check_branch
    %11 = sbr.rel (0) target = $region5
  $region4: #{generator_forward.17} parent=0 // pred_region
    _
  $region5: #{generator_forward.17} parent=0 // pred_fallthru
    _
  // Predicated region
  $region6: #{generator_forward.17} parent=0 // pred_check
    _
  $region7: #{generator_forward.17} parent=0 // pred_check_branch
    %13 = sbr.rel (0) target = $region9
  $region8: #{generator_forward.17} parent=0 // pred_region
    _
  $region9: #{generator_forward.17} parent=0 // pred_fallthru
    _
  // Predicated region
  $region10: #{generator_forward.17} parent=0 // pred_check
    _
  $region11: #{generator_forward.17} parent=0 // pred_check_branch
    %15 = sbr.rel (0) target = $region13
  $region12: #{generator_forward.17} parent=0 // pred_region
    _
  $region13: #{generator_forward.17} parent=0 // pred_fallthru
    _
  // Predicated region
  $region14: #{generator_forward.17} parent=0 // pred_check
    _
  $region15: #{generator_forward.17} parent=0 // pred_check_branch
    %17 = sbr.rel (0) target = $region17
  $region16: #{generator_forward.17} parent=0 // pred_region
    _
  $region17: #{generator_forward.17} parent=0 // pred_fallthru
    _
  // Predicated region
  $region18: #{generator_forward.17} parent=0 // pred_check
    _
  $region19: #{generator_forward.17} parent=0 // pred_check_branch
    %19 = sbr.rel (0) target = $region21
  $region20: #{generator_forward.17} parent=0 // pred_region
    _
  $region21: #{generator_forward.17} parent=0 // pred_fallthru
    _
  %v21 = vld [vmem:[%s0] sm:$0xff]
  %v22 = vld [vmem:[%s0 + $0x8] sm:$0x3f]
  %v23 = vld [vmem:[%s1] ss:$2 sm:$0x7f]
  %v25 = vlaneseq
  %v26 = vshrl.u32 %v25, 7
  %v27 = vsub.s32 0, %v26
  %v28 = vrot.slane %v23, %v27
  %v29 = vlaneseq
  %v30 = vshrl.u32 %v29, 7
  %v31 = vsub.s32 1, %v30
  %v32 = vrot.slane %v23, %v31
  %v33 = vlaneseq
  %v34 = vshrl.u32 %v33, 7
  %v35 = vsub.s32 2, %v34
  %v36 = vrot.slane %v23, %v35
  %v37 = vlaneseq
  %v38 = vshrl.u32 %v37, 7
  %v39 = vsub.s32 3, %v38
  %v40 = vrot.slane %v23, %v39
  %v41 = vlaneseq
  %v42 = vshrl.u32 %v41, 7
  %v43 = vsub.s32 4, %v42
  %v44 = vrot.slane %v23, %v43
  %v45 = vlaneseq
  %v46 = vshrl.u32 %v45, 7
  %v47 = vsub.s32 5, %v46
  %v48 = vrot.slane %v23, %v47
  %v49 = vlaneseq
  %v50 = vshrl.u32 %v49, 7
  %v51 = vsub.s32 6, %v50
  %v52 = vrot.slane %v23, %v51
  %v53 = vcombine.low %v28, %v32
  %v54 = vcombine.low %v36, %v40
  %v56 = vunpack.c.l.s4 1983009808
  %v57 = vunpack.c.0.s8 %v56
  %v58 = vlaneseq
  %v59 = vshrl.u32 %v58, 7
  %v60 = vsub.s32 %v57, %v59
  %v61 = vrot.slane %v53, %v60
  %v63 = vunpack.c.l.s4 1983009808
  %v64 = vunpack.c.0.s8 %v63
  %v65 = vlaneseq
  %v66 = vshrl.u32 %v65, 7
  %v67 = vsub.s32 %v64, %v66
  %v68 = vrot.slane %v54, %v67
  %v69 = vcombine.low %v61, %v68
  %v70 = vcombine.low %v44, %v48
  %v72 = vunpack.c.l.s4 1983009808
  %v73 = vunpack.c.0.s8 %v72
  %v74 = vlaneseq
  %v75 = vshrl.u32 %v74, 7
  %v76 = vsub.s32 %v73, %v75
  %v77 = vrot.slane %v70, %v76
  %v79 = vunpack.c.l.s4 1983009808
  %v80 = vunpack.c.0.s8 %v79
  %v81 = vlaneseq
  %v82 = vshrl.u32 %v81, 7
  %v83 = vsub.s32 %v80, %v82
  %v84 = vrot.slane %v52, %v83
  %v85 = vcombine.low %v77, %v84
  %v88 = vmul.f32 %v21, %v69
  %v89 = vmul.f32 %v22, %v85
  %s90 = scalar_lea.vmem %s1, 1
  %v91 = vld [vmem:[%s90] ss:$2 sm:$0x7f]
  %v93 = vlaneseq
  %v94 = vshrl.u32 %v93, 7
  %v95 = vsub.s32 0, %v94
  %v96 = vrot.slane %v91, %v95
  %v97 = vlaneseq
  %v98 = vshrl.u32 %v97, 7
  %v99 = vsub.s32 1, %v98
  %v100 = vrot.slane %v91, %v99
  %v101 = vlaneseq
  %v102 = vshrl.u32 %v101, 7
  %v103 = vsub.s32 2, %v102
  %v104 = vrot.slane %v91, %v103
  %v105 = vlaneseq
  %v106 = vshrl.u32 %v105, 7
  %v107 = vsub.s32 3, %v106
  %v108 = vrot.slane %v91, %v107
  %v109 = vlaneseq
  %v110 = vshrl.u32 %v109, 7
  %v111 = vsub.s32 4, %v110
  %v112 = vrot.slane %v91, %v111
  %v113 = vlaneseq
  %v114 = vshrl.u32 %v113, 7
  %v115 = vsub.s32 5, %v114
  %v116 = vrot.slane %v91, %v115
  %v117 = vlaneseq
  %v118 = vshrl.u32 %v117, 7
  %v119 = vsub.s32 6, %v118
  %v120 = vrot.slane %v91, %v119
  %v121 = vcombine.low %v96, %v100
  %v122 = vcombine.low %v104, %v108
  %v124 = vunpack.c.l.s4 1983009808
  %v125 = vunpack.c.0.s8 %v124
  %v126 = vlaneseq
  %v127 = vshrl.u32 %v126, 7
  %v128 = vsub.s32 %v125, %v127
  %v129 = vrot.slane %v121, %v128
  %v131 = vunpack.c.l.s4 1983009808
  %v132 = vunpack.c.0.s8 %v131
  %v133 = vlaneseq
  %v134 = vshrl.u32 %v133, 7
  %v135 = vsub.s32 %v132, %v134
  %v136 = vrot.slane %v122, %v135
  %v137 = vcombine.low %v129, %v136
  %v138 = vcombine.low %v112, %v116
  %v140 = vunpack.c.l.s4 1983009808
  %v141 = vunpack.c.0.s8 %v140
  %v142 = vlaneseq
  %v143 = vshrl.u32 %v142, 7
  %v144 = vsub.s32 %v141, %v143
  %v145 = vrot.slane %v138, %v144
  %v147 = vunpack.c.l.s4 1983009808
  %v148 = vunpack.c.0.s8 %v147
  %v149 = vlaneseq
  %v150 = vshrl.u32 %v149, 7
  %v151 = vsub.s32 %v148, %v150
  %v152 = vrot.slane %v120, %v151
  %v153 = vcombine.low %v145, %v152
  %v156 = vadd.f32 %v88, %v137
  %v157 = vadd.f32 %v89, %v153
  %vm158 = vcmp.gt.f32.partialorder %v156, 0.0
  %vm159 = vcmp.gt.f32.partialorder %v157, 0.0
  %v160 = vld [vmem:[%s4] sm:$0x7f]
  %v162 = vlaneseq
  %v163 = vshrl.u32 %v162, 7
  %v164 = vsub.s32 0, %v163
  %v165 = vrot.slane %v160, %v164
  %v166 = vlaneseq
  %v167 = vshrl.u32 %v166, 7
  %v168 = vsub.s32 1, %v167
  %v169 = vrot.slane %v160, %v168
  %v170 = vlaneseq
  %v171 = vshrl.u32 %v170, 7
  %v172 = vsub.s32 2, %v171
  %v173 = vrot.slane %v160, %v172
  %v174 = vlaneseq
  %v175 = vshrl.u32 %v174, 7
  %v176 = vsub.s32 3, %v175
  %v177 = vrot.slane %v160, %v176
  %v178 = vlaneseq
  %v179 = vshrl.u32 %v178, 7
  %v180 = vsub.s32 4, %v179
  %v181 = vrot.slane %v160, %v180
  %v182 = vlaneseq
  %v183 = vshrl.u32 %v182, 7
  %v184 = vsub.s32 5, %v183
  %v185 = vrot.slane %v160, %v184
  %v186 = vlaneseq
  %v187 = vshrl.u32 %v186, 7
  %v188 = vsub.s32 6, %v187
  %v189 = vrot.slane %v160, %v188
  %v199 = vcombine.high %v156, %v156
  %v201 = vunpack.c.l.s4 1983009808
  %v202 = vunpack.c.0.s8 %v201
  %v203 = vlaneseq
  %v204 = vshrl.u32 %v203, 7
  %v205 = vsub.s32 %v202, %v204
  %v206 = vrot.slane %v156, %v205
  %v208 = vunpack.c.l.s4 1983009808
  %v209 = vunpack.c.0.s8 %v208
  %v210 = vlaneseq
  %v211 = vshrl.u32 %v210, 7
  %v212 = vsub.s32 %v209, %v211
  %v213 = vrot.slane %v199, %v212
  %v214 = vcombine.high %v206, %v206
  %v215 = vcombine.high %v213, %v213
  %v216 = vcombine.high %v157, %v157
  %v218 = vunpack.c.l.s4 1983009808
  %v219 = vunpack.c.0.s8 %v218
  %v220 = vlaneseq
  %v221 = vshrl.u32 %v220, 7
  %v222 = vsub.s32 %v219, %v221
  %v223 = vrot.slane %v157, %v222
  %v225 = vunpack.c.l.s4 1983009808
  %v226 = vunpack.c.0.s8 %v225
  %v227 = vlaneseq
  %v228 = vshrl.u32 %v227, 7
  %v229 = vsub.s32 %v226, %v228
  %v230 = vrot.slane %v216, %v229
  %v231 = vcombine.high %v223, %v223
  %v239 = vmul.f32 %v165, %v206
  %v240 = vmul.f32 %v169, %v214
  %v241 = vmul.f32 %v173, %v213
  %v242 = vmul.f32 %v177, %v215
  %v243 = vmul.f32 %v181, %v223
  %v244 = vmul.f32 %v185, %v231
  %v245 = vmul.f32 %v189, %v230
  %v253 = vcombine.low %v239, %v240
  %v254 = vcombine.low %v241, %v242
  %v256 = vunpack.c.l.s4 1983009808
  %v257 = vunpack.c.0.s8 %v256
  %v258 = vlaneseq
  %v259 = vshrl.u32 %v258, 7
  %v260 = vsub.s32 %v257, %v259
  %v261 = vrot.slane %v253, %v260
  %v263 = vunpack.c.l.s4 1983009808
  %v264 = vunpack.c.0.s8 %v263
  %v265 = vlaneseq
  %v266 = vshrl.u32 %v265, 7
  %v267 = vsub.s32 %v264, %v266
  %v268 = vrot.slane %v254, %v267
  %v269 = vcombine.low %v261, %v268
  %v270 = vcombine.low %v243, %v244
  %v272 = vunpack.c.l.s4 1983009808
  %v273 = vunpack.c.0.s8 %v272
  %v274 = vlaneseq
  %v275 = vshrl.u32 %v274, 7
  %v276 = vsub.s32 %v273, %v275
  %v277 = vrot.slane %v270, %v276
  %v279 = vunpack.c.l.s4 1983009808
  %v280 = vunpack.c.0.s8 %v279
  %v281 = vlaneseq
  %v282 = vshrl.u32 %v281, 7
  %v283 = vsub.s32 %v280, %v282
  %v284 = vrot.slane %v245, %v283
  %v285 = vcombine.low %v277, %v284
  %v288 = vsel %vm158, %v156, %v269
  %v289 = vsel %vm159, %v157, %v285
  %v292 = vcombine.high %v288, %v288
  %v294 = vunpack.c.l.s4 1983009808
  %v295 = vunpack.c.0.s8 %v294
  %v296 = vlaneseq
  %v297 = vshrl.u32 %v296, 7
  %v298 = vsub.s32 %v295, %v297
  %v299 = vrot.slane %v288, %v298
  %v301 = vunpack.c.l.s4 1983009808
  %v302 = vunpack.c.0.s8 %v301
  %v303 = vlaneseq
  %v304 = vshrl.u32 %v303, 7
  %v305 = vsub.s32 %v302, %v304
  %v306 = vrot.slane %v292, %v305
  %v307 = vcombine.high %v299, %v299
  %v308 = vcombine.high %v306, %v306
  %v309 = vcombine.high %v289, %v289
  %v311 = vunpack.c.l.s4 1983009808
  %v312 = vunpack.c.0.s8 %v311
  %v313 = vlaneseq
  %v314 = vshrl.u32 %v313, 7
  %v315 = vsub.s32 %v312, %v314
  %v316 = vrot.slane %v289, %v315
  %v318 = vunpack.c.l.s4 1983009808
  %v319 = vunpack.c.0.s8 %v318
  %v320 = vlaneseq
  %v321 = vshrl.u32 %v320, 7
  %v322 = vsub.s32 %v319, %v321
  %v323 = vrot.slane %v309, %v322
  %v324 = vcombine.high %v316, %v316
  %v332 = vpack.c.bf16 %v299, %v299
  %v333 = vpack.c.bf16 %v307, %v307
  %v334 = vpack.c.bf16 %v306, %v306
  %v335 = vpack.c.bf16 %v308, %v308
  %v336 = vpack.c.bf16 %v316, %v316
  %v337 = vpack.c.bf16 %v324, %v324
  %v338 = vpack.c.bf16 %v323, %v323
  %v339 = vld [vmem:[%s2] sm:$0xff]
  %v340 = vld [vmem:[%s2 + $0x8] sm:$0xff]
  %v341 = vld [vmem:[%s2 + $0x10] sm:$0xff]
  %v342 = vld [vmem:[%s2 + $0x18] sm:$0xf]
  %v343 = vld [vmem:[%s2 + $0x1c] sm:$0xff]
  %v344 = vld [vmem:[%s2 + $0x24] sm:$0xff]
  %v345 = vld [vmem:[%s2 + $0x2c] sm:$0xff]
  %v346 = vld [vmem:[%s2 + $0x34] sm:$0xf]
  %v347 = vld [vmem:[%s2 + $0x38] sm:$0xff]
  %v348 = vld [vmem:[%s2 + $0x40] sm:$0xff]
  %v349 = vld [vmem:[%s2 + $0x48] sm:$0xff]
  %v350 = vld [vmem:[%s2 + $0x50] sm:$0xf]
  %v351 = vld [vmem:[%s2 + $0x54] sm:$0xff]
  %v352 = vld [vmem:[%s2 + $0x5c] sm:$0xff]
  %v353 = vld [vmem:[%s2 + $0x64] sm:$0xff]
  %v354 = vld [vmem:[%s2 + $0x6c] sm:$0xf]
  %v355 = vld [vmem:[%s2 + $0x70] sm:$0xff]
  %v356 = vld [vmem:[%s2 + $0x78] sm:$0xff]
  %v357 = vld [vmem:[%s2 + $0x80] sm:$0xff]
  %v358 = vld [vmem:[%s2 + $0x88] sm:$0xf]
  %v359 = vld [vmem:[%s2 + $0x8c] sm:$0xff]
  %v360 = vld [vmem:[%s2 + $0x94] sm:$0xff]
  %v361 = vld [vmem:[%s2 + $0x9c] sm:$0xff]
  %v362 = vld [vmem:[%s2 + $0xa4] sm:$0xf]
  %v363 = vld [vmem:[%s2 + $0xa8] sm:$0xff]
  %v364 = vld [vmem:[%s2 + $0xb0] sm:$0xff]
  %v365 = vld [vmem:[%s2 + $0xb8] sm:$0xff]
  %v366 = vld [vmem:[%s2 + $0xc0] sm:$0xf]
  %v367 = vld [vmem:[%s2 + $0xc4] sm:$0xff]
  %v368 = vld [vmem:[%s2 + $0xcc] sm:$0xff]
  %v369 = vld [vmem:[%s2 + $0xd4] sm:$0xff]
  %v370 = vld [vmem:[%s2 + $0xdc] sm:$0xf]
  %v371 = vld [vmem:[%s2 + $0xe0] sm:$0xff]
  %v372 = vld [vmem:[%s2 + $0xe8] sm:$0xff]
  %v373 = vld [vmem:[%s2 + $0xf0] sm:$0xff]
  %v374 = vld [vmem:[%s2 + $0xf8] sm:$0xf]
  %v375 = vld [vmem:[%s2 + $0xfc] sm:$0xff]
  %v376 = vld [vmem:[%s2 + $0x104] sm:$0xff]
  %v377 = vld [vmem:[%s2 + $0x10c] sm:$0xff]
  %v378 = vld [vmem:[%s2 + $0x114] sm:$0xf]
  %v379 = vld [vmem:[%s2 + $0x118] sm:$0xff]
  %v380 = vld [vmem:[%s2 + $0x120] sm:$0xff]
  %v381 = vld [vmem:[%s2 + $0x128] sm:$0xff]
  %v382 = vld [vmem:[%s2 + $0x130] sm:$0xf]
  %v383 = vld [vmem:[%s2 + $0x134] sm:$0xff]
  %v384 = vld [vmem:[%s2 + $0x13c] sm:$0xff]
  %v385 = vld [vmem:[%s2 + $0x144] sm:$0xff]
  %v386 = vld [vmem:[%s2 + $0x14c] sm:$0xf]
  %v387 = vld [vmem:[%s2 + $0x150] sm:$0xff]
  %v388 = vld [vmem:[%s2 + $0x158] sm:$0xff]
  %v389 = vld [vmem:[%s2 + $0x160] sm:$0xff]
  %v390 = vld [vmem:[%s2 + $0x168] sm:$0xf]
  %v391 = vld [vmem:[%s2 + $0x16c] sm:$0xff]
  %v392 = vld [vmem:[%s2 + $0x174] sm:$0xff]
  %v393 = vld [vmem:[%s2 + $0x17c] sm:$0xff]
  %v394 = vld [vmem:[%s2 + $0x184] sm:$0xf]
  %v395 = vld [vmem:[%s2 + $0x188] sm:$0xff]
  %v396 = vld [vmem:[%s2 + $0x190] sm:$0xff]
  %v397 = vld [vmem:[%s2 + $0x198] sm:$0xff]
  %v398 = vld [vmem:[%s2 + $0x1a0] sm:$0xf]
  %v399 = vld [vmem:[%s2 + $0x1a4] sm:$0xff]
  %v400 = vld [vmem:[%s2 + $0x1ac] sm:$0xff]
  %v401 = vld [vmem:[%s2 + $0x1b4] sm:$0xff]
  %v402 = vld [vmem:[%s2 + $0x1bc] sm:$0xf]
  %v403 = vld [vmem:[%s2 + $0x1c0] sm:$0xff]
  %v404 = vld [vmem:[%s2 + $0x1c8] sm:$0xff]
  %v405 = vld [vmem:[%s2 + $0x1d0] sm:$0xff]
  %v406 = vld [vmem:[%s2 + $0x1d8] sm:$0xf]
  %v407 = vld [vmem:[%s2 + $0x1dc] sm:$0xff]
  %v408 = vld [vmem:[%s2 + $0x1e4] sm:$0xff]
  %v409 = vld [vmem:[%s2 + $0x1ec] sm:$0xff]
  %v410 = vld [vmem:[%s2 + $0x1f4] sm:$0xf]
  %v411 = vld [vmem:[%s2 + $0x1f8] sm:$0xff]
  %v412 = vld [vmem:[%s2 + $0x200] sm:$0xff]
  %v413 = vld [vmem:[%s2 + $0x208] sm:$0xff]
  %v414 = vld [vmem:[%s2 + $0x210] sm:$0xf]
  %v415 = vld [vmem:[%s2 + $0x214] sm:$0xff]
  %v416 = vld [vmem:[%s2 + $0x21c] sm:$0xff]
  %v417 = vld [vmem:[%s2 + $0x224] sm:$0xff]
  %v418 = vld [vmem:[%s2 + $0x22c] sm:$0xf]
  %v419 = vld [vmem:[%s2 + $0x230] sm:$0xff]
  %v420 = vld [vmem:[%s2 + $0x238] sm:$0xff]
  %v421 = vld [vmem:[%s2 + $0x240] sm:$0xff]
  %v422 = vld [vmem:[%s2 + $0x248] sm:$0xf]
  %v423 = vld [vmem:[%s2 + $0x24c] sm:$0xff]
  %v424 = vld [vmem:[%s2 + $0x254] sm:$0xff]
  %v425 = vld [vmem:[%s2 + $0x25c] sm:$0xff]
  %v426 = vld [vmem:[%s2 + $0x264] sm:$0xf]
  %v427 = vld [vmem:[%s2 + $0x268] sm:$0xff]
  %v428 = vld [vmem:[%s2 + $0x270] sm:$0xff]
  %v429 = vld [vmem:[%s2 + $0x278] sm:$0xff]
  %v430 = vld [vmem:[%s2 + $0x280] sm:$0xf]
  %v431 = vld [vmem:[%s2 + $0x284] sm:$0xff]
  %v432 = vld [vmem:[%s2 + $0x28c] sm:$0xff]
  %v433 = vld [vmem:[%s2 + $0x294] sm:$0xff]
  %v434 = vld [vmem:[%s2 + $0x29c] sm:$0xf]
  %v435 = vld [vmem:[%s2 + $0x2a0] sm:$0xff]
  %v436 = vld [vmem:[%s2 + $0x2a8] sm:$0xff]
  %v437 = vld [vmem:[%s2 + $0x2b0] sm:$0xff]
  %v438 = vld [vmem:[%s2 + $0x2b8] sm:$0xf]
  %v439 = vld [vmem:[%s2 + $0x2bc] sm:$0xff]
  %v440 = vld [vmem:[%s2 + $0x2c4] sm:$0xff]
  %v441 = vld [vmem:[%s2 + $0x2cc] sm:$0xff]
  %v442 = vld [vmem:[%s2 + $0x2d4] sm:$0xf]
  %v443 = vld [vmem:[%s2 + $0x2d8] sm:$0xff]
  %v444 = vld [vmem:[%s2 + $0x2e0] sm:$0xff]
  %v445 = vld [vmem:[%s2 + $0x2e8] sm:$0xff]
  %v446 = vld [vmem:[%s2 + $0x2f0] sm:$0xf]
  %v447 = vld [vmem:[%s2 + $0x2f4] sm:$0xff]
  %v448 = vld [vmem:[%s2 + $0x2fc] sm:$0xff]
  %v449 = vld [vmem:[%s2 + $0x304] sm:$0xff]
  %v450 = vld [vmem:[%s2 + $0x30c] sm:$0xf]
  %v451 = vld [vmem:[%s2 + $0x310] sm:$0xff]
  %v452 = vld [vmem:[%s2 + $0x318] sm:$0xff]
  %v453 = vld [vmem:[%s2 + $0x320] sm:$0xff]
  %v454 = vld [vmem:[%s2 + $0x328] sm:$0xf]
  %v455 = vld [vmem:[%s2 + $0x32c] sm:$0xff]
  %v456 = vld [vmem:[%s2 + $0x334] sm:$0xff]
  %v457 = vld [vmem:[%s2 + $0x33c] sm:$0xff]
  %v458 = vld [vmem:[%s2 + $0x344] sm:$0xf]
  %v459 = vld [vmem:[%s2 + $0x348] sm:$0xff]
  %v460 = vld [vmem:[%s2 + $0x350] sm:$0xff]
  %v461 = vld [vmem:[%s2 + $0x358] sm:$0xff]
  %v462 = vld [vmem:[%s2 + $0x360] sm:$0xf]
  %v463 = vld [vmem:[%s2 + $0x364] sm:$0xff]
  %v464 = vld [vmem:[%s2 + $0x36c] sm:$0xff]
  %v465 = vld [vmem:[%s2 + $0x374] sm:$0xff]
  %v466 = vld [vmem:[%s2 + $0x37c] sm:$0xf]
  %v467 = vld [vmem:[%s2 + $0x380] sm:$0xff]
  %v468 = vld [vmem:[%s2 + $0x388] sm:$0xff]
  %v469 = vld [vmem:[%s2 + $0x390] sm:$0xff]
  %v470 = vld [vmem:[%s2 + $0x398] sm:$0xf]
  %v471 = vld [vmem:[%s2 + $0x39c] sm:$0xff]
  %v472 = vld [vmem:[%s2 + $0x3a4] sm:$0xff]
  %v473 = vld [vmem:[%s2 + $0x3ac] sm:$0xff]
  %v474 = vld [vmem:[%s2 + $0x3b4] sm:$0xf]
  %v475 = vld [vmem:[%s2 + $0x3b8] sm:$0xff]
  %v476 = vld [vmem:[%s2 + $0x3c0] sm:$0xff]
  %v477 = vld [vmem:[%s2 + $0x3c8] sm:$0xff]
  %v478 = vld [vmem:[%s2 + $0x3d0] sm:$0xf]
  %v479 = vld [vmem:[%s2 + $0x3d4] sm:$0xff]
  %v480 = vld [vmem:[%s2 + $0x3dc] sm:$0xff]
  %v481 = vld [vmem:[%s2 + $0x3e4] sm:$0xff]
  %v482 = vld [vmem:[%s2 + $0x3ec] sm:$0xf]
  %v483 = vld [vmem:[%s2 + $0x3f0] sm:$0xff]
  %v484 = vld [vmem:[%s2 + $0x3f8] sm:$0xff]
  %v485 = vld [vmem:[%s2 + $0x400] sm:$0xff]
  %v486 = vld [vmem:[%s2 + $0x408] sm:$0xf]
  %v487 = vld [vmem:[%s2 + $0x40c] sm:$0xff]
  %v488 = vld [vmem:[%s2 + $0x414] sm:$0xff]
  %v489 = vld [vmem:[%s2 + $0x41c] sm:$0xff]
  %v490 = vld [vmem:[%s2 + $0x424] sm:$0xf]
  %v491 = vld [vmem:[%s2 + $0x428] sm:$0xff]
  %v492 = vld [vmem:[%s2 + $0x430] sm:$0xff]
  %v493 = vld [vmem:[%s2 + $0x438] sm:$0xff]
  %v494 = vld [vmem:[%s2 + $0x440] sm:$0xf]
  %v495 = vld [vmem:[%s2 + $0x444] sm:$0xff]
  %v496 = vld [vmem:[%s2 + $0x44c] sm:$0xff]
  %v497 = vld [vmem:[%s2 + $0x454] sm:$0xff]
  %v498 = vld [vmem:[%s2 + $0x45c] sm:$0xf]
  %v499 = vld [vmem:[%s2 + $0x460] sm:$0xff]
  %v500 = vld [vmem:[%s2 + $0x468] sm:$0xff]
  %v501 = vld [vmem:[%s2 + $0x470] sm:$0xff]
  %v502 = vld [vmem:[%s2 + $0x478] sm:$0xf]
  %v503 = vld [vmem:[%s2 + $0x47c] sm:$0xff]
  %v504 = vld [vmem:[%s2 + $0x484] sm:$0xff]
  %v505 = vld [vmem:[%s2 + $0x48c] sm:$0xff]
  %v506 = vld [vmem:[%s2 + $0x494] sm:$0xf]
  %v507 = vld [vmem:[%s2 + $0x498] sm:$0xff]
  %v508 = vld [vmem:[%s2 + $0x4a0] sm:$0xff]
  %v509 = vld [vmem:[%s2 + $0x4a8] sm:$0xff]
  %v510 = vld [vmem:[%s2 + $0x4b0] sm:$0xf]
  %v511 = vld [vmem:[%s2 + $0x4b4] sm:$0xff]
  %v512 = vld [vmem:[%s2 + $0x4bc] sm:$0xff]
  %v513 = vld [vmem:[%s2 + $0x4c4] sm:$0xff]
  %v514 = vld [vmem:[%s2 + $0x4cc] sm:$0xf]
  %v515 = vld [vmem:[%s2 + $0x4d0] sm:$0xff]
  %v516 = vld [vmem:[%s2 + $0x4d8] sm:$0xff]
  %v517 = vld [vmem:[%s2 + $0x4e0] sm:$0xff]
  %v518 = vld [vmem:[%s2 + $0x4e8] sm:$0xf]
  %v519 = vld [vmem:[%s2 + $0x4ec] sm:$0xff]
  %v520 = vld [vmem:[%s2 + $0x4f4] sm:$0xff]
  %v521 = vld [vmem:[%s2 + $0x4fc] sm:$0xff]
  %v522 = vld [vmem:[%s2 + $0x504] sm:$0xf]
  %v523 = vld [vmem:[%s2 + $0x508] sm:$0xff]
  %v524 = vld [vmem:[%s2 + $0x510] sm:$0xff]
  %v525 = vld [vmem:[%s2 + $0x518] sm:$0xff]
  %v526 = vld [vmem:[%s2 + $0x520] sm:$0xf]
  %v527 = vld [vmem:[%s2 + $0x524] sm:$0xff]
  %v528 = vld [vmem:[%s2 + $0x52c] sm:$0xff]
  %v529 = vld [vmem:[%s2 + $0x534] sm:$0xff]
  %v530 = vld [vmem:[%s2 + $0x53c] sm:$0xf]
  %v531 = vld [vmem:[%s2 + $0x540] sm:$0xff]
  %v532 = vld [vmem:[%s2 + $0x548] sm:$0xff]
  %v533 = vld [vmem:[%s2 + $0x550] sm:$0xff]
  %v534 = vld [vmem:[%s2 + $0x558] sm:$0xf]
  %v535 = vld [vmem:[%s2 + $0x55c] sm:$0xff]
  %v536 = vld [vmem:[%s2 + $0x564] sm:$0xff]
  %v537 = vld [vmem:[%s2 + $0x56c] sm:$0xff]
  %v538 = vld [vmem:[%s2 + $0x574] sm:$0xf]
  %v539 = vld [vmem:[%s2 + $0x578] sm:$0xff]
  %v540 = vld [vmem:[%s2 + $0x580] sm:$0xff]
  %v541 = vld [vmem:[%s2 + $0x588] sm:$0xff]
  %v542 = vld [vmem:[%s2 + $0x590] sm:$0xf]
  %v543 = vld [vmem:[%s2 + $0x594] sm:$0xff]
  %v544 = vld [vmem:[%s2 + $0x59c] sm:$0xff]
  %v545 = vld [vmem:[%s2 + $0x5a4] sm:$0xff]
  %v546 = vld [vmem:[%s2 + $0x5ac] sm:$0xf]
  %v547 = vld [vmem:[%s2 + $0x5b0] sm:$0xff]
  %v548 = vld [vmem:[%s2 + $0x5b8] sm:$0xff]
  %v549 = vld [vmem:[%s2 + $0x5c0] sm:$0xff]
  %v550 = vld [vmem:[%s2 + $0x5c8] sm:$0xf]
  %v551 = vld [vmem:[%s2 + $0x5cc] sm:$0xff]
  %v552 = vld [vmem:[%s2 + $0x5d4] sm:$0xff]
  %v553 = vld [vmem:[%s2 + $0x5dc] sm:$0xff]
  %v554 = vld [vmem:[%s2 + $0x5e4] sm:$0xf]
  %v555 = vld [vmem:[%s2 + $0x5e8] sm:$0xff]
  %v556 = vld [vmem:[%s2 + $0x5f0] sm:$0xff]
  %v557 = vld [vmem:[%s2 + $0x5f8] sm:$0xff]
  %v558 = vld [vmem:[%s2 + $0x600] sm:$0xf]
  %v559 = vld [vmem:[%s2 + $0x604] sm:$0xff]
  %v560 = vld [vmem:[%s2 + $0x60c] sm:$0xff]
  %v561 = vld [vmem:[%s2 + $0x614] sm:$0xff]
  %v562 = vld [vmem:[%s2 + $0x61c] sm:$0xf]
  %v563 = vld [vmem:[%s2 + $0x620] sm:$0xff]
  %v564 = vld [vmem:[%s2 + $0x628] sm:$0xff]
  %v565 = vld [vmem:[%s2 + $0x630] sm:$0xff]
  %v566 = vld [vmem:[%s2 + $0x638] sm:$0xf]
  %v567 = vld [vmem:[%s2 + $0x63c] sm:$0xff]
  %v568 = vld [vmem:[%s2 + $0x644] sm:$0xff]
  %v569 = vld [vmem:[%s2 + $0x64c] sm:$0xff]
  %v570 = vld [vmem:[%s2 + $0x654] sm:$0xf]
  %v571 = vld [vmem:[%s2 + $0x658] sm:$0xff]
  %v572 = vld [vmem:[%s2 + $0x660] sm:$0xff]
  %v573 = vld [vmem:[%s2 + $0x668] sm:$0xff]
  %v574 = vld [vmem:[%s2 + $0x670] sm:$0xf]
  %v575 = vld [vmem:[%s2 + $0x674] sm:$0xff]
  %v576 = vld [vmem:[%s2 + $0x67c] sm:$0xff]
  %v577 = vld [vmem:[%s2 + $0x684] sm:$0xff]
  %v578 = vld [vmem:[%s2 + $0x68c] sm:$0xf]
  %v579 = vld [vmem:[%s2 + $0x690] sm:$0xff]
  %v580 = vld [vmem:[%s2 + $0x698] sm:$0xff]
  %v581 = vld [vmem:[%s2 + $0x6a0] sm:$0xff]
  %v582 = vld [vmem:[%s2 + $0x6a8] sm:$0xf]
  %v583 = vld [vmem:[%s2 + $0x6ac] sm:$0xff]
  %v584 = vld [vmem:[%s2 + $0x6b4] sm:$0xff]
  %v585 = vld [vmem:[%s2 + $0x6bc] sm:$0xff]
  %v586 = vld [vmem:[%s2 + $0x6c4] sm:$0xf]
  %v587 = vld [vmem:[%s2 + $0x6c8] sm:$0xff]
  %v588 = vld [vmem:[%s2 + $0x6d0] sm:$0xff]
  %v589 = vld [vmem:[%s2 + $0x6d8] sm:$0xff]
  %v590 = vld [vmem:[%s2 + $0x6e0] sm:$0xf]
  %v591 = vld [vmem:[%s2 + $0x6e4] sm:$0xff]
  %v592 = vld [vmem:[%s2 + $0x6ec] sm:$0xff]
  %v593 = vld [vmem:[%s2 + $0x6f4] sm:$0xff]
  %v594 = vld [vmem:[%s2 + $0x6fc] sm:$0xf]
  %v595 = vld [vmem:[%s2 + $0x700] sm:$0xff]
  %v596 = vld [vmem:[%s2 + $0x708] sm:$0xff]
  %v597 = vld [vmem:[%s2 + $0x710] sm:$0xff]
  %v598 = vld [vmem:[%s2 + $0x718] sm:$0xf]
  %v599 = vld [vmem:[%s2 + $0x71c] sm:$0xff]
  %v600 = vld [vmem:[%s2 + $0x724] sm:$0xff]
  %v601 = vld [vmem:[%s2 + $0x72c] sm:$0xff]
  %v602 = vld [vmem:[%s2 + $0x734] sm:$0xf]
  %v603 = vld [vmem:[%s2 + $0x738] sm:$0xff]
  %v604 = vld [vmem:[%s2 + $0x740] sm:$0xff]
  %v605 = vld [vmem:[%s2 + $0x748] sm:$0xff]
  %v606 = vld [vmem:[%s2 + $0x750] sm:$0xf]
  %v607 = vld [vmem:[%s2 + $0x754] sm:$0xff]
  %v608 = vld [vmem:[%s2 + $0x75c] sm:$0xff]
  %v609 = vld [vmem:[%s2 + $0x764] sm:$0xff]
  %v610 = vld [vmem:[%s2 + $0x76c] sm:$0xf]
  %v611 = vld [vmem:[%s2 + $0x770] sm:$0xff]
  %v612 = vld [vmem:[%s2 + $0x778] sm:$0xff]
  %v613 = vld [vmem:[%s2 + $0x780] sm:$0xff]
  %v614 = vld [vmem:[%s2 + $0x788] sm:$0xf]
  %v615 = vld [vmem:[%s2 + $0x78c] sm:$0xff]
  %v616 = vld [vmem:[%s2 + $0x794] sm:$0xff]
  %v617 = vld [vmem:[%s2 + $0x79c] sm:$0xff]
  %v618 = vld [vmem:[%s2 + $0x7a4] sm:$0xf]
  %v619 = vld [vmem:[%s2 + $0x7a8] sm:$0xff]
  %v620 = vld [vmem:[%s2 + $0x7b0] sm:$0xff]
  %v621 = vld [vmem:[%s2 + $0x7b8] sm:$0xff]
  %v622 = vld [vmem:[%s2 + $0x7c0] sm:$0xf]
  %v623 = vld [vmem:[%s2 + $0x7c4] sm:$0xff]
  %v624 = vld [vmem:[%s2 + $0x7cc] sm:$0xff]
  %v625 = vld [vmem:[%s2 + $0x7d4] sm:$0xff]
  %v626 = vld [vmem:[%s2 + $0x7dc] sm:$0xf]
  %v627 = vld [vmem:[%s2 + $0x7e0] sm:$0xff]
  %v628 = vld [vmem:[%s2 + $0x7e8] sm:$0xff]
  %v629 = vld [vmem:[%s2 + $0x7f0] sm:$0xff]
  %v630 = vld [vmem:[%s2 + $0x7f8] sm:$0xf]
  %v631 = vld [vmem:[%s2 + $0x7fc] sm:$0xff]
  %v632 = vld [vmem:[%s2 + $0x804] sm:$0xff]
  %v633 = vld [vmem:[%s2 + $0x80c] sm:$0xff]
  %v634 = vld [vmem:[%s2 + $0x814] sm:$0xf]
  %v635 = vld [vmem:[%s2 + $0x818] sm:$0xff]
  %v636 = vld [vmem:[%s2 + $0x820] sm:$0xff]
  %v637 = vld [vmem:[%s2 + $0x828] sm:$0xff]
  %v638 = vld [vmem:[%s2 + $0x830] sm:$0xf]
  %v639 = vld [vmem:[%s2 + $0x834] sm:$0xff]
  %v640 = vld [vmem:[%s2 + $0x83c] sm:$0xff]
  %v641 = vld [vmem:[%s2 + $0x844] sm:$0xff]
  %v642 = vld [vmem:[%s2 + $0x84c] sm:$0xf]
  %v643 = vld [vmem:[%s2 + $0x850] sm:$0xff]
  %v644 = vld [vmem:[%s2 + $0x858] sm:$0xff]
  %v645 = vld [vmem:[%s2 + $0x860] sm:$0xff]
  %v646 = vld [vmem:[%s2 + $0x868] sm:$0xf]
  %v647 = vld [vmem:[%s2 + $0x86c] sm:$0xff]
  %v648 = vld [vmem:[%s2 + $0x874] sm:$0xff]
  %v649 = vld [vmem:[%s2 + $0x87c] sm:$0xff]
  %v650 = vld [vmem:[%s2 + $0x884] sm:$0xf]
  %v651 = vld [vmem:[%s2 + $0x888] sm:$0xff]
  %v652 = vld [vmem:[%s2 + $0x890] sm:$0xff]
  %v653 = vld [vmem:[%s2 + $0x898] sm:$0xff]
  %v654 = vld [vmem:[%s2 + $0x8a0] sm:$0xf]
  %v655 = vld [vmem:[%s2 + $0x8a4] sm:$0xff]
  %v656 = vld [vmem:[%s2 + $0x8ac] sm:$0xff]
  %v657 = vld [vmem:[%s2 + $0x8b4] sm:$0xff]
  %v658 = vld [vmem:[%s2 + $0x8bc] sm:$0xf]
  %v659 = vld [vmem:[%s2 + $0x8c0] sm:$0xff]
  %v660 = vld [vmem:[%s2 + $0x8c8] sm:$0xff]
  %v661 = vld [vmem:[%s2 + $0x8d0] sm:$0xff]
  %v662 = vld [vmem:[%s2 + $0x8d8] sm:$0xf]
  %v663 = vld [vmem:[%s2 + $0x8dc] sm:$0xff]
  %v664 = vld [vmem:[%s2 + $0x8e4] sm:$0xff]
  %v665 = vld [vmem:[%s2 + $0x8ec] sm:$0xff]
  %v666 = vld [vmem:[%s2 + $0x8f4] sm:$0xf]
  %v667 = vld [vmem:[%s2 + $0x8f8] sm:$0xff]
  %v668 = vld [vmem:[%s2 + $0x900] sm:$0xff]
  %v669 = vld [vmem:[%s2 + $0x908] sm:$0xff]
  %v670 = vld [vmem:[%s2 + $0x910] sm:$0xf]
  %v671 = vld [vmem:[%s2 + $0x914] sm:$0xff]
  %v672 = vld [vmem:[%s2 + $0x91c] sm:$0xff]
  %v673 = vld [vmem:[%s2 + $0x924] sm:$0xff]
  %v674 = vld [vmem:[%s2 + $0x92c] sm:$0xf]
  %v675 = vld [vmem:[%s2 + $0x930] sm:$0xff]
  %v676 = vld [vmem:[%s2 + $0x938] sm:$0xff]
  %v677 = vld [vmem:[%s2 + $0x940] sm:$0xff]
  %v678 = vld [vmem:[%s2 + $0x948] sm:$0xf]
  %v679 = vld [vmem:[%s2 + $0x94c] sm:$0xff]
  %v680 = vld [vmem:[%s2 + $0x954] sm:$0xff]
  %v681 = vld [vmem:[%s2 + $0x95c] sm:$0xff]
  %v682 = vld [vmem:[%s2 + $0x964] sm:$0xf]
  %v683 = vld [vmem:[%s2 + $0x968] sm:$0xff]
  %v684 = vld [vmem:[%s2 + $0x970] sm:$0xff]
  %v685 = vld [vmem:[%s2 + $0x978] sm:$0xff]
  %v686 = vld [vmem:[%s2 + $0x980] sm:$0xf]
  %v687 = vld [vmem:[%s2 + $0x984] sm:$0xff]
  %v688 = vld [vmem:[%s2 + $0x98c] sm:$0xff]
  %v689 = vld [vmem:[%s2 + $0x994] sm:$0xff]
  %v690 = vld [vmem:[%s2 + $0x99c] sm:$0xf]
  %v691 = vld [vmem:[%s2 + $0x9a0] sm:$0xff]
  %v692 = vld [vmem:[%s2 + $0x9a8] sm:$0xff]
  %v693 = vld [vmem:[%s2 + $0x9b0] sm:$0xff]
  %v694 = vld [vmem:[%s2 + $0x9b8] sm:$0xf]
  %v695 = vld [vmem:[%s2 + $0x9bc] sm:$0xff]
  %v696 = vld [vmem:[%s2 + $0x9c4] sm:$0xff]
  %v697 = vld [vmem:[%s2 + $0x9cc] sm:$0xff]
  %v698 = vld [vmem:[%s2 + $0x9d4] sm:$0xf]
  %v699 = vld [vmem:[%s2 + $0x9d8] sm:$0xff]
  %v700 = vld [vmem:[%s2 + $0x9e0] sm:$0xff]
  %v701 = vld [vmem:[%s2 + $0x9e8] sm:$0xff]
  %v702 = vld [vmem:[%s2 + $0x9f0] sm:$0xf]
  %v703 = vld [vmem:[%s2 + $0x9f4] sm:$0xff]
  %v704 = vld [vmem:[%s2 + $0x9fc] sm:$0xff]
  %v705 = vld [vmem:[%s2 + $0xa04] sm:$0xff]
  %v706 = vld [vmem:[%s2 + $0xa0c] sm:$0xf]
  %v707 = vld [vmem:[%s2 + $0xa10] sm:$0xff]
  %v708 = vld [vmem:[%s2 + $0xa18] sm:$0xff]
  %v709 = vld [vmem:[%s2 + $0xa20] sm:$0xff]
  %v710 = vld [vmem:[%s2 + $0xa28] sm:$0xf]
  %v711 = vld [vmem:[%s2 + $0xa2c] sm:$0xff]
  %v712 = vld [vmem:[%s2 + $0xa34] sm:$0xff]
  %v713 = vld [vmem:[%s2 + $0xa3c] sm:$0xff]
  %v714 = vld [vmem:[%s2 + $0xa44] sm:$0xf]
  %v715 = vld [vmem:[%s2 + $0xa48] sm:$0xff]
  %v716 = vld [vmem:[%s2 + $0xa50] sm:$0xff]
  %v717 = vld [vmem:[%s2 + $0xa58] sm:$0xff]
  %v718 = vld [vmem:[%s2 + $0xa60] sm:$0xf]
  %v719 = vld [vmem:[%s2 + $0xa64] sm:$0xff]
  %v720 = vld [vmem:[%s2 + $0xa6c] sm:$0xff]
  %v721 = vld [vmem:[%s2 + $0xa74] sm:$0xff]
  %v722 = vld [vmem:[%s2 + $0xa7c] sm:$0xf]
  %v723 = vld [vmem:[%s2 + $0xa80] sm:$0xff]
  %v724 = vld [vmem:[%s2 + $0xa88] sm:$0xff]
  %v725 = vld [vmem:[%s2 + $0xa90] sm:$0xff]
  %v726 = vld [vmem:[%s2 + $0xa98] sm:$0xf]
  %v727 = vld [vmem:[%s2 + $0xa9c] sm:$0xff]
  %v728 = vld [vmem:[%s2 + $0xaa4] sm:$0xff]
  %v729 = vld [vmem:[%s2 + $0xaac] sm:$0xff]
  %v730 = vld [vmem:[%s2 + $0xab4] sm:$0xf]
  %v731 = vld [vmem:[%s3] sm:$0x7f]
  %v733 = vlaneseq
  %v734 = vshrl.u32 %v733, 7
  %v735 = vsub.s32 0, %v734
  %v736 = vrot.slane %v731, %v735
  %v737 = vlaneseq
  %v738 = vshrl.u32 %v737, 7
  %v739 = vsub.s32 1, %v738
  %v740 = vrot.slane %v731, %v739
  %v741 = vlaneseq
  %v742 = vshrl.u32 %v741, 7
  %v743 = vsub.s32 2, %v742
  %v744 = vrot.slane %v731, %v743
  %v745 = vlaneseq
  %v746 = vshrl.u32 %v745, 7
  %v747 = vsub.s32 3, %v746
  %v748 = vrot.slane %v731, %v747
  %v749 = vlaneseq
  %v750 = vshrl.u32 %v749, 7
  %v751 = vsub.s32 4, %v750
  %v752 = vrot.slane %v731, %v751
  %v753 = vlaneseq
  %v754 = vshrl.u32 %v753, 7
  %v755 = vsub.s32 5, %v754
  %v756 = vrot.slane %v731, %v755
  %v757 = vlaneseq
  %v758 = vshrl.u32 %v757, 7
  %v759 = vsub.s32 6, %v758
  %v760 = vrot.slane %v731, %v759
  %v1160 = vunpack.c.l.b16 %v339
  %v1161 = vunpack.c.h.b16 %v339
  %v1162 = vunpack.c.l.b16 %v340
  %v1163 = vunpack.c.h.b16 %v340
  %v1164 = vunpack.c.l.b16 %v341
  %v1165 = vunpack.c.h.b16 %v341
  %v1166 = vunpack.c.l.b16 %v342
  %v1167 = vunpack.c.l.b16 %v343
  %v1168 = vunpack.c.h.b16 %v343
  %v1169 = vunpack.c.l.b16 %v344
  %v1170 = vunpack.c.h.b16 %v344
  %v1171 = vunpack.c.l.b16 %v345
  %v1172 = vunpack.c.h.b16 %v345
  %v1173 = vunpack.c.l.b16 %v346
  %v1174 = vunpack.c.l.b16 %v347
  %v1175 = vunpack.c.h.b16 %v347
  %v1176 = vunpack.c.l.b16 %v348
  %v1177 = vunpack.c.h.b16 %v348
  %v1178 = vunpack.c.l.b16 %v349
  %v1179 = vunpack.c.h.b16 %v349
  %v1180 = vunpack.c.l.b16 %v350
  %v1181 = vunpack.c.l.b16 %v351
  %v1182 = vunpack.c.h.b16 %v351
  %v1183 = vunpack.c.l.b16 %v352
  %v1184 = vunpack.c.h.b16 %v352
  %v1185 = vunpack.c.l.b16 %v353
  %v1186 = vunpack.c.h.b16 %v353
  %v1187 = vunpack.c.l.b16 %v354
  %v1188 = vunpack.c.l.b16 %v355
  %v1189 = vunpack.c.h.b16 %v355
  %v1190 = vunpack.c.l.b16 %v356
  %v1191 = vunpack.c.h.b16 %v356
  %v1192 = vunpack.c.l.b16 %v357
  %v1193 = vunpack.c.h.b16 %v357
  %v1194 = vunpack.c.l.b16 %v358
  %v1195 = vunpack.c.l.b16 %v359
  %v1196 = vunpack.c.h.b16 %v359
  %v1197 = vunpack.c.l.b16 %v360
  %v1198 = vunpack.c.h.b16 %v360
  %v1199 = vunpack.c.l.b16 %v361
  %v1200 = vunpack.c.h.b16 %v361
  %v1201 = vunpack.c.l.b16 %v362
  %v1202 = vunpack.c.l.b16 %v363
  %v1203 = vunpack.c.h.b16 %v363
  %v1204 = vunpack.c.l.b16 %v364
  %v1205 = vunpack.c.h.b16 %v364
  %v1206 = vunpack.c.l.b16 %v365
  %v1207 = vunpack.c.h.b16 %v365
  %v1208 = vunpack.c.l.b16 %v366
  %v1209 = vunpack.c.l.b16 %v367
  %v1210 = vunpack.c.h.b16 %v367
  %v1211 = vunpack.c.l.b16 %v368
  %v1212 = vunpack.c.h.b16 %v368
  %v1213 = vunpack.c.l.b16 %v369
  %v1214 = vunpack.c.h.b16 %v369
  %v1215 = vunpack.c.l.b16 %v370
  %v1216 = vunpack.c.l.b16 %v371
  %v1217 = vunpack.c.h.b16 %v371
  %v1218 = vunpack.c.l.b16 %v372
  %v1219 = vunpack.c.h.b16 %v372
  %v1220 = vunpack.c.l.b16 %v373
  %v1221 = vunpack.c.h.b16 %v373
  %v1222 = vunpack.c.l.b16 %v374
  %v1223 = vunpack.c.l.b16 %v375
  %v1224 = vunpack.c.h.b16 %v375
  %v1225 = vunpack.c.l.b16 %v376
  %v1226 = vunpack.c.h.b16 %v376
  %v1227 = vunpack.c.l.b16 %v377
  %v1228 = vunpack.c.h.b16 %v377
  %v1229 = vunpack.c.l.b16 %v378
  %v1230 = vunpack.c.l.b16 %v379
  %v1231 = vunpack.c.h.b16 %v379
  %v1232 = vunpack.c.l.b16 %v380
  %v1233 = vunpack.c.h.b16 %v380
  %v1234 = vunpack.c.l.b16 %v381
  %v1235 = vunpack.c.h.b16 %v381
  %v1236 = vunpack.c.l.b16 %v382
  %v1237 = vunpack.c.l.b16 %v383
  %v1238 = vunpack.c.h.b16 %v383
  %v1239 = vunpack.c.l.b16 %v384
  %v1240 = vunpack.c.h.b16 %v384
  %v1241 = vunpack.c.l.b16 %v385
  %v1242 = vunpack.c.h.b16 %v385
  %v1243 = vunpack.c.l.b16 %v386
  %v1244 = vunpack.c.l.b16 %v387
  %v1245 = vunpack.c.h.b16 %v387
  %v1246 = vunpack.c.l.b16 %v388
  %v1247 = vunpack.c.h.b16 %v388
  %v1248 = vunpack.c.l.b16 %v389
  %v1249 = vunpack.c.h.b16 %v389
  %v1250 = vunpack.c.l.b16 %v390
  %v1251 = vunpack.c.l.b16 %v391
  %v1252 = vunpack.c.h.b16 %v391
  %v1253 = vunpack.c.l.b16 %v392
  %v1254 = vunpack.c.h.b16 %v392
  %v1255 = vunpack.c.l.b16 %v393
  %v1256 = vunpack.c.h.b16 %v393
  %v1257 = vunpack.c.l.b16 %v394
  %v1258 = vunpack.c.l.b16 %v395
  %v1259 = vunpack.c.h.b16 %v395
  %v1260 = vunpack.c.l.b16 %v396
  %v1261 = vunpack.c.h.b16 %v396
  %v1262 = vunpack.c.l.b16 %v397
  %v1263 = vunpack.c.h.b16 %v397
  %v1264 = vunpack.c.l.b16 %v398
  %v1265 = vunpack.c.l.b16 %v399
  %v1266 = vunpack.c.h.b16 %v399
  %v1267 = vunpack.c.l.b16 %v400
  %v1268 = vunpack.c.h.b16 %v400
  %v1269 = vunpack.c.l.b16 %v401
  %v1270 = vunpack.c.h.b16 %v401
  %v1271 = vunpack.c.l.b16 %v402
  %v1272 = vunpack.c.l.b16 %v403
  %v1273 = vunpack.c.h.b16 %v403
  %v1274 = vunpack.c.l.b16 %v404
  %v1275 = vunpack.c.h.b16 %v404
  %v1276 = vunpack.c.l.b16 %v405
  %v1277 = vunpack.c.h.b16 %v405
  %v1278 = vunpack.c.l.b16 %v406
  %v1279 = vunpack.c.l.b16 %v407
  %v1280 = vunpack.c.h.b16 %v407
  %v1281 = vunpack.c.l.b16 %v408
  %v1282 = vunpack.c.h.b16 %v408
  %v1283 = vunpack.c.l.b16 %v409
  %v1284 = vunpack.c.h.b16 %v409
  %v1285 = vunpack.c.l.b16 %v410
  %v1286 = vunpack.c.l.b16 %v411
  %v1287 = vunpack.c.h.b16 %v411
  %v1288 = vunpack.c.l.b16 %v412
  %v1289 = vunpack.c.h.b16 %v412
  %v1290 = vunpack.c.l.b16 %v413
  %v1291 = vunpack.c.h.b16 %v413
  %v1292 = vunpack.c.l.b16 %v414
  %v1293 = vunpack.c.l.b16 %v415
  %v1294 = vunpack.c.h.b16 %v415
  %v1295 = vunpack.c.l.b16 %v416
  %v1296 = vunpack.c.h.b16 %v416
  %v1297 = vunpack.c.l.b16 %v417
  %v1298 = vunpack.c.h.b16 %v417
  %v1299 = vunpack.c.l.b16 %v418
  %v1300 = vunpack.c.l.b16 %v419
  %v1301 = vunpack.c.h.b16 %v419
  %v1302 = vunpack.c.l.b16 %v420
  %v1303 = vunpack.c.h.b16 %v420
  %v1304 = vunpack.c.l.b16 %v421
  %v1305 = vunpack.c.h.b16 %v421
  %v1306 = vunpack.c.l.b16 %v422
  %v1307 = vunpack.c.l.b16 %v423
  %v1308 = vunpack.c.h.b16 %v423
  %v1309 = vunpack.c.l.b16 %v424
  %v1310 = vunpack.c.h.b16 %v424
  %v1311 = vunpack.c.l.b16 %v425
  %v1312 = vunpack.c.h.b16 %v425
  %v1313 = vunpack.c.l.b16 %v426
  %v1314 = vunpack.c.l.b16 %v427
  %v1315 = vunpack.c.h.b16 %v427
  %v1316 = vunpack.c.l.b16 %v428
  %v1317 = vunpack.c.h.b16 %v428
  %v1318 = vunpack.c.l.b16 %v429
  %v1319 = vunpack.c.h.b16 %v429
  %v1320 = vunpack.c.l.b16 %v430
  %v1321 = vunpack.c.l.b16 %v431
  %v1322 = vunpack.c.h.b16 %v431
  %v1323 = vunpack.c.l.b16 %v432
  %v1324 = vunpack.c.h.b16 %v432
  %v1325 = vunpack.c.l.b16 %v433
  %v1326 = vunpack.c.h.b16 %v433
  %v1327 = vunpack.c.l.b16 %v434
  %v1328 = vunpack.c.l.b16 %v435
  %v1329 = vunpack.c.h.b16 %v435
  %v1330 = vunpack.c.l.b16 %v436
  %v1331 = vunpack.c.h.b16 %v436
  %v1332 = vunpack.c.l.b16 %v437
  %v1333 = vunpack.c.h.b16 %v437
  %v1334 = vunpack.c.l.b16 %v438
  %v1335 = vunpack.c.l.b16 %v439
  %v1336 = vunpack.c.h.b16 %v439
  %v1337 = vunpack.c.l.b16 %v440
  %v1338 = vunpack.c.h.b16 %v440
  %v1339 = vunpack.c.l.b16 %v441
  %v1340 = vunpack.c.h.b16 %v441
  %v1341 = vunpack.c.l.b16 %v442
  %v1342 = vunpack.c.l.b16 %v443
  %v1343 = vunpack.c.h.b16 %v443
  %v1344 = vunpack.c.l.b16 %v444
  %v1345 = vunpack.c.h.b16 %v444
  %v1346 = vunpack.c.l.b16 %v445
  %v1347 = vunpack.c.h.b16 %v445
  %v1348 = vunpack.c.l.b16 %v446
  %v1349 = vunpack.c.l.b16 %v447
  %v1350 = vunpack.c.h.b16 %v447
  %v1351 = vunpack.c.l.b16 %v448
  %v1352 = vunpack.c.h.b16 %v448
  %v1353 = vunpack.c.l.b16 %v449
  %v1354 = vunpack.c.h.b16 %v449
  %v1355 = vunpack.c.l.b16 %v450
  %v1356 = vunpack.c.l.b16 %v451
  %v1357 = vunpack.c.h.b16 %v451
  %v1358 = vunpack.c.l.b16 %v452
  %v1359 = vunpack.c.h.b16 %v452
  %v1360 = vunpack.c.l.b16 %v453
  %v1361 = vunpack.c.h.b16 %v453
  %v1362 = vunpack.c.l.b16 %v454
  %v1363 = vunpack.c.l.b16 %v455
  %v1364 = vunpack.c.h.b16 %v455
  %v1365 = vunpack.c.l.b16 %v456
  %v1366 = vunpack.c.h.b16 %v456
  %v1367 = vunpack.c.l.b16 %v457
  %v1368 = vunpack.c.h.b16 %v457
  %v1369 = vunpack.c.l.b16 %v458
  %v1370 = vunpack.c.l.b16 %v459
  %v1371 = vunpack.c.h.b16 %v459
  %v1372 = vunpack.c.l.b16 %v460
  %v1373 = vunpack.c.h.b16 %v460
  %v1374 = vunpack.c.l.b16 %v461
  %v1375 = vunpack.c.h.b16 %v461
  %v1376 = vunpack.c.l.b16 %v462
  %v1377 = vunpack.c.l.b16 %v463
  %v1378 = vunpack.c.h.b16 %v463
  %v1379 = vunpack.c.l.b16 %v464
  %v1380 = vunpack.c.h.b16 %v464
  %v1381 = vunpack.c.l.b16 %v465
  %v1382 = vunpack.c.h.b16 %v465
  %v1383 = vunpack.c.l.b16 %v466
  %v1384 = vunpack.c.l.b16 %v467
  %v1385 = vunpack.c.h.b16 %v467
  %v1386 = vunpack.c.l.b16 %v468
  %v1387 = vunpack.c.h.b16 %v468
  %v1388 = vunpack.c.l.b16 %v469
  %v1389 = vunpack.c.h.b16 %v469
  %v1390 = vunpack.c.l.b16 %v470
  %v1391 = vunpack.c.l.b16 %v471
  %v1392 = vunpack.c.h.b16 %v471
  %v1393 = vunpack.c.l.b16 %v472
  %v1394 = vunpack.c.h.b16 %v472
  %v1395 = vunpack.c.l.b16 %v473
  %v1396 = vunpack.c.h.b16 %v473
  %v1397 = vunpack.c.l.b16 %v474
  %v1398 = vunpack.c.l.b16 %v475
  %v1399 = vunpack.c.h.b16 %v475
  %v1400 = vunpack.c.l.b16 %v476
  %v1401 = vunpack.c.h.b16 %v476
  %v1402 = vunpack.c.l.b16 %v477
  %v1403 = vunpack.c.h.b16 %v477
  %v1404 = vunpack.c.l.b16 %v478
  %v1405 = vunpack.c.l.b16 %v479
  %v1406 = vunpack.c.h.b16 %v479
  %v1407 = vunpack.c.l.b16 %v480
  %v1408 = vunpack.c.h.b16 %v480
  %v1409 = vunpack.c.l.b16 %v481
  %v1410 = vunpack.c.h.b16 %v481
  %v1411 = vunpack.c.l.b16 %v482
  %v1412 = vunpack.c.l.b16 %v483
  %v1413 = vunpack.c.h.b16 %v483
  %v1414 = vunpack.c.l.b16 %v484
  %v1415 = vunpack.c.h.b16 %v484
  %v1416 = vunpack.c.l.b16 %v485
  %v1417 = vunpack.c.h.b16 %v485
  %v1418 = vunpack.c.l.b16 %v486
  %v1419 = vunpack.c.l.b16 %v487
  %v1420 = vunpack.c.h.b16 %v487
  %v1421 = vunpack.c.l.b16 %v488
  %v1422 = vunpack.c.h.b16 %v488
  %v1423 = vunpack.c.l.b16 %v489
  %v1424 = vunpack.c.h.b16 %v489
  %v1425 = vunpack.c.l.b16 %v490
  %v1426 = vunpack.c.l.b16 %v491
  %v1427 = vunpack.c.h.b16 %v491
  %v1428 = vunpack.c.l.b16 %v492
  %v1429 = vunpack.c.h.b16 %v492
  %v1430 = vunpack.c.l.b16 %v493
  %v1431 = vunpack.c.h.b16 %v493
  %v1432 = vunpack.c.l.b16 %v494
  %v1433 = vunpack.c.l.b16 %v495
  %v1434 = vunpack.c.h.b16 %v495
  %v1435 = vunpack.c.l.b16 %v496
  %v1436 = vunpack.c.h.b16 %v496
  %v1437 = vunpack.c.l.b16 %v497
  %v1438 = vunpack.c.h.b16 %v497
  %v1439 = vunpack.c.l.b16 %v498
  %v1440 = vunpack.c.l.b16 %v499
  %v1441 = vunpack.c.h.b16 %v499
  %v1442 = vunpack.c.l.b16 %v500
  %v1443 = vunpack.c.h.b16 %v500
  %v1444 = vunpack.c.l.b16 %v501
  %v1445 = vunpack.c.h.b16 %v501
  %v1446 = vunpack.c.l.b16 %v502
  %v1447 = vunpack.c.l.b16 %v503
  %v1448 = vunpack.c.h.b16 %v503
  %v1449 = vunpack.c.l.b16 %v504
  %v1450 = vunpack.c.h.b16 %v504
  %v1451 = vunpack.c.l.b16 %v505
  %v1452 = vunpack.c.h.b16 %v505
  %v1453 = vunpack.c.l.b16 %v506
  %v1454 = vunpack.c.l.b16 %v507
  %v1455 = vunpack.c.h.b16 %v507
  %v1456 = vunpack.c.l.b16 %v508
  %v1457 = vunpack.c.h.b16 %v508
  %v1458 = vunpack.c.l.b16 %v509
  %v1459 = vunpack.c.h.b16 %v509
  %v1460 = vunpack.c.l.b16 %v510
  %v1461 = vunpack.c.l.b16 %v511
  %v1462 = vunpack.c.h.b16 %v511
  %v1463 = vunpack.c.l.b16 %v512
  %v1464 = vunpack.c.h.b16 %v512
  %v1465 = vunpack.c.l.b16 %v513
  %v1466 = vunpack.c.h.b16 %v513
  %v1467 = vunpack.c.l.b16 %v514
  %v1468 = vunpack.c.l.b16 %v515
  %v1469 = vunpack.c.h.b16 %v515
  %v1470 = vunpack.c.l.b16 %v516
  %v1471 = vunpack.c.h.b16 %v516
  %v1472 = vunpack.c.l.b16 %v517
  %v1473 = vunpack.c.h.b16 %v517
  %v1474 = vunpack.c.l.b16 %v518
  %v1475 = vunpack.c.l.b16 %v519
  %v1476 = vunpack.c.h.b16 %v519
  %v1477 = vunpack.c.l.b16 %v520
  %v1478 = vunpack.c.h.b16 %v520
  %v1479 = vunpack.c.l.b16 %v521
  %v1480 = vunpack.c.h.b16 %v521
  %v1481 = vunpack.c.l.b16 %v522
  %v1482 = vunpack.c.l.b16 %v523
  %v1483 = vunpack.c.h.b16 %v523
  %v1484 = vunpack.c.l.b16 %v524
  %v1485 = vunpack.c.h.b16 %v524
  %v1486 = vunpack.c.l.b16 %v525
  %v1487 = vunpack.c.h.b16 %v525
  %v1488 = vunpack.c.l.b16 %v526
  %v1489 = vunpack.c.l.b16 %v527
  %v1490 = vunpack.c.h.b16 %v527
  %v1491 = vunpack.c.l.b16 %v528
  %v1492 = vunpack.c.h.b16 %v528
  %v1493 = vunpack.c.l.b16 %v529
  %v1494 = vunpack.c.h.b16 %v529
  %v1495 = vunpack.c.l.b16 %v530
  %v1496 = vunpack.c.l.b16 %v531
  %v1497 = vunpack.c.h.b16 %v531
  %v1498 = vunpack.c.l.b16 %v532
  %v1499 = vunpack.c.h.b16 %v532
  %v1500 = vunpack.c.l.b16 %v533
  %v1501 = vunpack.c.h.b16 %v533
  %v1502 = vunpack.c.l.b16 %v534
  %v1503 = vunpack.c.l.b16 %v535
  %v1504 = vunpack.c.h.b16 %v535
  %v1505 = vunpack.c.l.b16 %v536
  %v1506 = vunpack.c.h.b16 %v536
  %v1507 = vunpack.c.l.b16 %v537
  %v1508 = vunpack.c.h.b16 %v537
  %v1509 = vunpack.c.l.b16 %v538
  %v1510 = vunpack.c.l.b16 %v539
  %v1511 = vunpack.c.h.b16 %v539
  %v1512 = vunpack.c.l.b16 %v540
  %v1513 = vunpack.c.h.b16 %v540
  %v1514 = vunpack.c.l.b16 %v541
  %v1515 = vunpack.c.h.b16 %v541
  %v1516 = vunpack.c.l.b16 %v542
  %v1517 = vunpack.c.l.b16 %v543
  %v1518 = vunpack.c.h.b16 %v543
  %v1519 = vunpack.c.l.b16 %v544
  %v1520 = vunpack.c.h.b16 %v544
  %v1521 = vunpack.c.l.b16 %v545
  %v1522 = vunpack.c.h.b16 %v545
  %v1523 = vunpack.c.l.b16 %v546
  %v1524 = vunpack.c.l.b16 %v547
  %v1525 = vunpack.c.h.b16 %v547
  %v1526 = vunpack.c.l.b16 %v548
  %v1527 = vunpack.c.h.b16 %v548
  %v1528 = vunpack.c.l.b16 %v549
  %v1529 = vunpack.c.h.b16 %v549
  %v1530 = vunpack.c.l.b16 %v550
  %v1531 = vunpack.c.l.b16 %v551
  %v1532 = vunpack.c.h.b16 %v551
  %v1533 = vunpack.c.l.b16 %v552
  %v1534 = vunpack.c.h.b16 %v552
  %v1535 = vunpack.c.l.b16 %v553
  %v1536 = vunpack.c.h.b16 %v553
  %v1537 = vunpack.c.l.b16 %v554
  %v1538 = vunpack.c.l.b16 %v555
  %v1539 = vunpack.c.h.b16 %v555
  %v1540 = vunpack.c.l.b16 %v556
  %v1541 = vunpack.c.h.b16 %v556
  %v1542 = vunpack.c.l.b16 %v557
  %v1543 = vunpack.c.h.b16 %v557
  %v1544 = vunpack.c.l.b16 %v558
  %v1545 = vunpack.c.l.b16 %v559
  %v1546 = vunpack.c.h.b16 %v559
  %v1547 = vunpack.c.l.b16 %v560
  %v1548 = vunpack.c.h.b16 %v560
  %v1549 = vunpack.c.l.b16 %v561
  %v1550 = vunpack.c.h.b16 %v561
  %v1551 = vunpack.c.l.b16 %v562
  %v1552 = vunpack.c.l.b16 %v563
  %v1553 = vunpack.c.h.b16 %v563
  %v1554 = vunpack.c.l.b16 %v564
  %v1555 = vunpack.c.h.b16 %v564
  %v1556 = vunpack.c.l.b16 %v565
  %v1557 = vunpack.c.h.b16 %v565
  %v1558 = vunpack.c.l.b16 %v566
  %v1559 = vunpack.c.l.b16 %v567
  %v1560 = vunpack.c.h.b16 %v567
  %v1561 = vunpack.c.l.b16 %v568
  %v1562 = vunpack.c.h.b16 %v568
  %v1563 = vunpack.c.l.b16 %v569
  %v1564 = vunpack.c.h.b16 %v569
  %v1565 = vunpack.c.l.b16 %v570
  %v1566 = vunpack.c.l.b16 %v571
  %v1567 = vunpack.c.h.b16 %v571
  %v1568 = vunpack.c.l.b16 %v572
  %v1569 = vunpack.c.h.b16 %v572
  %v1570 = vunpack.c.l.b16 %v573
  %v1571 = vunpack.c.h.b16 %v573
  %v1572 = vunpack.c.l.b16 %v574
  %v1573 = vunpack.c.l.b16 %v575
  %v1574 = vunpack.c.h.b16 %v575
  %v1575 = vunpack.c.l.b16 %v576
  %v1576 = vunpack.c.h.b16 %v576
  %v1577 = vunpack.c.l.b16 %v577
  %v1578 = vunpack.c.h.b16 %v577
  %v1579 = vunpack.c.l.b16 %v578
  %v1580 = vunpack.c.l.b16 %v579
  %v1581 = vunpack.c.h.b16 %v579
  %v1582 = vunpack.c.l.b16 %v580
  %v1583 = vunpack.c.h.b16 %v580
  %v1584 = vunpack.c.l.b16 %v581
  %v1585 = vunpack.c.h.b16 %v581
  %v1586 = vunpack.c.l.b16 %v582
  %v1587 = vunpack.c.l.b16 %v583
  %v1588 = vunpack.c.h.b16 %v583
  %v1589 = vunpack.c.l.b16 %v584
  %v1590 = vunpack.c.h.b16 %v584
  %v1591 = vunpack.c.l.b16 %v585
  %v1592 = vunpack.c.h.b16 %v585
  %v1593 = vunpack.c.l.b16 %v586
  %v1594 = vunpack.c.l.b16 %v587
  %v1595 = vunpack.c.h.b16 %v587
  %v1596 = vunpack.c.l.b16 %v588
  %v1597 = vunpack.c.h.b16 %v588
  %v1598 = vunpack.c.l.b16 %v589
  %v1599 = vunpack.c.h.b16 %v589
  %v1600 = vunpack.c.l.b16 %v590
  %v1601 = vunpack.c.l.b16 %v591
  %v1602 = vunpack.c.h.b16 %v591
  %v1603 = vunpack.c.l.b16 %v592
  %v1604 = vunpack.c.h.b16 %v592
  %v1605 = vunpack.c.l.b16 %v593
  %v1606 = vunpack.c.h.b16 %v593
  %v1607 = vunpack.c.l.b16 %v594
  %v1608 = vunpack.c.l.b16 %v595
  %v1609 = vunpack.c.h.b16 %v595
  %v1610 = vunpack.c.l.b16 %v596
  %v1611 = vunpack.c.h.b16 %v596
  %v1612 = vunpack.c.l.b16 %v597
  %v1613 = vunpack.c.h.b16 %v597
  %v1614 = vunpack.c.l.b16 %v598
  %v1615 = vunpack.c.l.b16 %v599
  %v1616 = vunpack.c.h.b16 %v599
  %v1617 = vunpack.c.l.b16 %v600
  %v1618 = vunpack.c.h.b16 %v600
  %v1619 = vunpack.c.l.b16 %v601
  %v1620 = vunpack.c.h.b16 %v601
  %v1621 = vunpack.c.l.b16 %v602
  %v1622 = vunpack.c.l.b16 %v603
  %v1623 = vunpack.c.h.b16 %v603
  %v1624 = vunpack.c.l.b16 %v604
  %v1625 = vunpack.c.h.b16 %v604
  %v1626 = vunpack.c.l.b16 %v605
  %v1627 = vunpack.c.h.b16 %v605
  %v1628 = vunpack.c.l.b16 %v606
  %v1629 = vunpack.c.l.b16 %v607
  %v1630 = vunpack.c.h.b16 %v607
  %v1631 = vunpack.c.l.b16 %v608
  %v1632 = vunpack.c.h.b16 %v608
  %v1633 = vunpack.c.l.b16 %v609
  %v1634 = vunpack.c.h.b16 %v609
  %v1635 = vunpack.c.l.b16 %v610
  %v1636 = vunpack.c.l.b16 %v611
  %v1637 = vunpack.c.h.b16 %v611
  %v1638 = vunpack.c.l.b16 %v612
  %v1639 = vunpack.c.h.b16 %v612
  %v1640 = vunpack.c.l.b16 %v613
  %v1641 = vunpack.c.h.b16 %v613
  %v1642 = vunpack.c.l.b16 %v614
  %v1643 = vunpack.c.l.b16 %v615
  %v1644 = vunpack.c.h.b16 %v615
  %v1645 = vunpack.c.l.b16 %v616
  %v1646 = vunpack.c.h.b16 %v616
  %v1647 = vunpack.c.l.b16 %v617
  %v1648 = vunpack.c.h.b16 %v617
  %v1649 = vunpack.c.l.b16 %v618
  %v1650 = vunpack.c.l.b16 %v619
  %v1651 = vunpack.c.h.b16 %v619
  %v1652 = vunpack.c.l.b16 %v620
  %v1653 = vunpack.c.h.b16 %v620
  %v1654 = vunpack.c.l.b16 %v621
  %v1655 = vunpack.c.h.b16 %v621
  %v1656 = vunpack.c.l.b16 %v622
  %v1657 = vunpack.c.l.b16 %v623
  %v1658 = vunpack.c.h.b16 %v623
  %v1659 = vunpack.c.l.b16 %v624
  %v1660 = vunpack.c.h.b16 %v624
  %v1661 = vunpack.c.l.b16 %v625
  %v1662 = vunpack.c.h.b16 %v625
  %v1663 = vunpack.c.l.b16 %v626
  %v1664 = vunpack.c.l.b16 %v627
  %v1665 = vunpack.c.h.b16 %v627
  %v1666 = vunpack.c.l.b16 %v628
  %v1667 = vunpack.c.h.b16 %v628
  %v1668 = vunpack.c.l.b16 %v629
  %v1669 = vunpack.c.h.b16 %v629
  %v1670 = vunpack.c.l.b16 %v630
  %v1671 = vunpack.c.l.b16 %v631
  %v1672 = vunpack.c.h.b16 %v631
  %v1673 = vunpack.c.l.b16 %v632
  %v1674 = vunpack.c.h.b16 %v632
  %v1675 = vunpack.c.l.b16 %v633
  %v1676 = vunpack.c.h.b16 %v633
  %v1677 = vunpack.c.l.b16 %v634
  %v1678 = vunpack.c.l.b16 %v635
  %v1679 = vunpack.c.h.b16 %v635
  %v1680 = vunpack.c.l.b16 %v636
  %v1681 = vunpack.c.h.b16 %v636
  %v1682 = vunpack.c.l.b16 %v637
  %v1683 = vunpack.c.h.b16 %v637
  %v1684 = vunpack.c.l.b16 %v638
  %v1685 = vunpack.c.l.b16 %v639
  %v1686 = vunpack.c.h.b16 %v639
  %v1687 = vunpack.c.l.b16 %v640
  %v1688 = vunpack.c.h.b16 %v640
  %v1689 = vunpack.c.l.b16 %v641
  %v1690 = vunpack.c.h.b16 %v641
  %v1691 = vunpack.c.l.b16 %v642
  %v1692 = vunpack.c.l.b16 %v643
  %v1693 = vunpack.c.h.b16 %v643
  %v1694 = vunpack.c.l.b16 %v644
  %v1695 = vunpack.c.h.b16 %v644
  %v1696 = vunpack.c.l.b16 %v645
  %v1697 = vunpack.c.h.b16 %v645
  %v1698 = vunpack.c.l.b16 %v646
  %v1699 = vunpack.c.l.b16 %v647
  %v1700 = vunpack.c.h.b16 %v647
  %v1701 = vunpack.c.l.b16 %v648
  %v1702 = vunpack.c.h.b16 %v648
  %v1703 = vunpack.c.l.b16 %v649
  %v1704 = vunpack.c.h.b16 %v649
  %v1705 = vunpack.c.l.b16 %v650
  %v1706 = vunpack.c.l.b16 %v651
  %v1707 = vunpack.c.h.b16 %v651
  %v1708 = vunpack.c.l.b16 %v652
  %v1709 = vunpack.c.h.b16 %v652
  %v1710 = vunpack.c.l.b16 %v653
  %v1711 = vunpack.c.h.b16 %v653
  %v1712 = vunpack.c.l.b16 %v654
  %v1713 = vunpack.c.l.b16 %v655
  %v1714 = vunpack.c.h.b16 %v655
  %v1715 = vunpack.c.l.b16 %v656
  %v1716 = vunpack.c.h.b16 %v656
  %v1717 = vunpack.c.l.b16 %v657
  %v1718 = vunpack.c.h.b16 %v657
  %v1719 = vunpack.c.l.b16 %v658
  %v1720 = vunpack.c.l.b16 %v659
  %v1721 = vunpack.c.h.b16 %v659
  %v1722 = vunpack.c.l.b16 %v660
  %v1723 = vunpack.c.h.b16 %v660
  %v1724 = vunpack.c.l.b16 %v661
  %v1725 = vunpack.c.h.b16 %v661
  %v1726 = vunpack.c.l.b16 %v662
  %v1727 = vunpack.c.l.b16 %v663
  %v1728 = vunpack.c.h.b16 %v663
  %v1729 = vunpack.c.l.b16 %v664
  %v1730 = vunpack.c.h.b16 %v664
  %v1731 = vunpack.c.l.b16 %v665
  %v1732 = vunpack.c.h.b16 %v665
  %v1733 = vunpack.c.l.b16 %v666
  %v1734 = vunpack.c.l.b16 %v667
  %v1735 = vunpack.c.h.b16 %v667
  %v1736 = vunpack.c.l.b16 %v668
  %v1737 = vunpack.c.h.b16 %v668
  %v1738 = vunpack.c.l.b16 %v669
  %v1739 = vunpack.c.h.b16 %v669
  %v1740 = vunpack.c.l.b16 %v670
  %v1741 = vunpack.c.l.b16 %v671
  %v1742 = vunpack.c.h.b16 %v671
  %v1743 = vunpack.c.l.b16 %v672
  %v1744 = vunpack.c.h.b16 %v672
  %v1745 = vunpack.c.l.b16 %v673
  %v1746 = vunpack.c.h.b16 %v673
  %v1747 = vunpack.c.l.b16 %v674
  %v1748 = vunpack.c.l.b16 %v675
  %v1749 = vunpack.c.h.b16 %v675
  %v1750 = vunpack.c.l.b16 %v676
  %v1751 = vunpack.c.h.b16 %v676
  %v1752 = vunpack.c.l.b16 %v677
  %v1753 = vunpack.c.h.b16 %v677
  %v1754 = vunpack.c.l.b16 %v678
  %v1755 = vunpack.c.l.b16 %v679
  %v1756 = vunpack.c.h.b16 %v679
  %v1757 = vunpack.c.l.b16 %v680
  %v1758 = vunpack.c.h.b16 %v680
  %v1759 = vunpack.c.l.b16 %v681
  %v1760 = vunpack.c.h.b16 %v681
  %v1761 = vunpack.c.l.b16 %v682
  %v1762 = vunpack.c.l.b16 %v683
  %v1763 = vunpack.c.h.b16 %v683
  %v1764 = vunpack.c.l.b16 %v684
  %v1765 = vunpack.c.h.b16 %v684
  %v1766 = vunpack.c.l.b16 %v685
  %v1767 = vunpack.c.h.b16 %v685
  %v1768 = vunpack.c.l.b16 %v686
  %v1769 = vunpack.c.l.b16 %v687
  %v1770 = vunpack.c.h.b16 %v687
  %v1771 = vunpack.c.l.b16 %v688
  %v1772 = vunpack.c.h.b16 %v688
  %v1773 = vunpack.c.l.b16 %v689
  %v1774 = vunpack.c.h.b16 %v689
  %v1775 = vunpack.c.l.b16 %v690
  %v1776 = vunpack.c.l.b16 %v691
  %v1777 = vunpack.c.h.b16 %v691
  %v1778 = vunpack.c.l.b16 %v692
  %v1779 = vunpack.c.h.b16 %v692
  %v1780 = vunpack.c.l.b16 %v693
  %v1781 = vunpack.c.h.b16 %v693
  %v1782 = vunpack.c.l.b16 %v694
  %v1783 = vunpack.c.l.b16 %v695
  %v1784 = vunpack.c.h.b16 %v695
  %v1785 = vunpack.c.l.b16 %v696
  %v1786 = vunpack.c.h.b16 %v696
  %v1787 = vunpack.c.l.b16 %v697
  %v1788 = vunpack.c.h.b16 %v697
  %v1789 = vunpack.c.l.b16 %v698
  %v1790 = vunpack.c.l.b16 %v699
  %v1791 = vunpack.c.h.b16 %v699
  %v1792 = vunpack.c.l.b16 %v700
  %v1793 = vunpack.c.h.b16 %v700
  %v1794 = vunpack.c.l.b16 %v701
  %v1795 = vunpack.c.h.b16 %v701
  %v1796 = vunpack.c.l.b16 %v702
  %v1797 = vunpack.c.l.b16 %v703
  %v1798 = vunpack.c.h.b16 %v703
  %v1799 = vunpack.c.l.b16 %v704
  %v1800 = vunpack.c.h.b16 %v704
  %v1801 = vunpack.c.l.b16 %v705
  %v1802 = vunpack.c.h.b16 %v705
  %v1803 = vunpack.c.l.b16 %v706
  %v1804 = vunpack.c.l.b16 %v707
  %v1805 = vunpack.c.h.b16 %v707
  %v1806 = vunpack.c.l.b16 %v708
  %v1807 = vunpack.c.h.b16 %v708
  %v1808 = vunpack.c.l.b16 %v709
  %v1809 = vunpack.c.h.b16 %v709
  %v1810 = vunpack.c.l.b16 %v710
  %v1811 = vunpack.c.l.b16 %v711
  %v1812 = vunpack.c.h.b16 %v711
  %v1813 = vunpack.c.l.b16 %v712
  %v1814 = vunpack.c.h.b16 %v712
  %v1815 = vunpack.c.l.b16 %v713
  %v1816 = vunpack.c.h.b16 %v713
  %v1817 = vunpack.c.l.b16 %v714
  %v1818 = vunpack.c.l.b16 %v715
  %v1819 = vunpack.c.h.b16 %v715
  %v1820 = vunpack.c.l.b16 %v716
  %v1821 = vunpack.c.h.b16 %v716
  %v1822 = vunpack.c.l.b16 %v717
  %v1823 = vunpack.c.h.b16 %v717
  %v1824 = vunpack.c.l.b16 %v718
  %v1825 = vunpack.c.l.b16 %v719
  %v1826 = vunpack.c.h.b16 %v719
  %v1827 = vunpack.c.l.b16 %v720
  %v1828 = vunpack.c.h.b16 %v720
  %v1829 = vunpack.c.l.b16 %v721
  %v1830 = vunpack.c.h.b16 %v721
  %v1831 = vunpack.c.l.b16 %v722
  %v1832 = vunpack.c.l.b16 %v723
  %v1833 = vunpack.c.h.b16 %v723
  %v1834 = vunpack.c.l.b16 %v724
  %v1835 = vunpack.c.h.b16 %v724
  %v1836 = vunpack.c.l.b16 %v725
  %v1837 = vunpack.c.h.b16 %v725
  %v1838 = vunpack.c.l.b16 %v726
  %v1839 = vunpack.c.l.b16 %v727
  %v1840 = vunpack.c.h.b16 %v727
  %v1841 = vunpack.c.l.b16 %v728
  %v1842 = vunpack.c.h.b16 %v728
  %v1843 = vunpack.c.l.b16 %v729
  %v1844 = vunpack.c.h.b16 %v729
  %v1845 = vunpack.c.l.b16 %v730
  %v1846 = vpack.c.b16 %v1167, %v1160
  %v1847 = vpack.c.b16 %v1168, %v1161
  %v1848 = vpack.c.b16 %v1169, %v1162
  %v1849 = vpack.c.b16 %v1170, %v1163
  %v1850 = vpack.c.b16 %v1171, %v1164
  %v1851 = vpack.c.b16 %v1172, %v1165
  %v1852 = vpack.c.b16 %v1173, %v1166
  %v1853 = vpack.c.b16 %v1181, %v1174
  %v1854 = vpack.c.b16 %v1182, %v1175
  %v1855 = vpack.c.b16 %v1183, %v1176
  %v1856 = vpack.c.b16 %v1184, %v1177
  %v1857 = vpack.c.b16 %v1185, %v1178
  %v1858 = vpack.c.b16 %v1186, %v1179
  %v1859 = vpack.c.b16 %v1187, %v1180
  %v1860 = vpack.c.b16 %v1195, %v1188
  %v1861 = vpack.c.b16 %v1196, %v1189
  %v1862 = vpack.c.b16 %v1197, %v1190
  %v1863 = vpack.c.b16 %v1198, %v1191
  %v1864 = vpack.c.b16 %v1199, %v1192
  %v1865 = vpack.c.b16 %v1200, %v1193
  %v1866 = vpack.c.b16 %v1201, %v1194
  %v1867 = vpack.c.b16 %v1209, %v1202
  %v1868 = vpack.c.b16 %v1210, %v1203
  %v1869 = vpack.c.b16 %v1211, %v1204
  %v1870 = vpack.c.b16 %v1212, %v1205
  %v1871 = vpack.c.b16 %v1213, %v1206
  %v1872 = vpack.c.b16 %v1214, %v1207
  %v1873 = vpack.c.b16 %v1215, %v1208
  %v1874 = vpack.c.b16 %v1223, %v1216
  %v1875 = vpack.c.b16 %v1224, %v1217
  %v1876 = vpack.c.b16 %v1225, %v1218
  %v1877 = vpack.c.b16 %v1226, %v1219
  %v1878 = vpack.c.b16 %v1227, %v1220
  %v1879 = vpack.c.b16 %v1228, %v1221
  %v1880 = vpack.c.b16 %v1229, %v1222
  %v1881 = vpack.c.b16 %v1237, %v1230
  %v1882 = vpack.c.b16 %v1238, %v1231
  %v1883 = vpack.c.b16 %v1239, %v1232
  %v1884 = vpack.c.b16 %v1240, %v1233
  %v1885 = vpack.c.b16 %v1241, %v1234
  %v1886 = vpack.c.b16 %v1242, %v1235
  %v1887 = vpack.c.b16 %v1243, %v1236
  %v1888 = vpack.c.b16 %v1251, %v1244
  %v1889 = vpack.c.b16 %v1252, %v1245
  %v1890 = vpack.c.b16 %v1253, %v1246
  %v1891 = vpack.c.b16 %v1254, %v1247
  %v1892 = vpack.c.b16 %v1255, %v1248
  %v1893 = vpack.c.b16 %v1256, %v1249
  %v1894 = vpack.c.b16 %v1257, %v1250
  %v1895 = vpack.c.b16 %v1265, %v1258
  %v1896 = vpack.c.b16 %v1266, %v1259
  %v1897 = vpack.c.b16 %v1267, %v1260
  %v1898 = vpack.c.b16 %v1268, %v1261
  %v1899 = vpack.c.b16 %v1269, %v1262
  %v1900 = vpack.c.b16 %v1270, %v1263
  %v1901 = vpack.c.b16 %v1271, %v1264
  %v1902 = vpack.c.b16 %v1279, %v1272
  %v1903 = vpack.c.b16 %v1280, %v1273
  %v1904 = vpack.c.b16 %v1281, %v1274
  %v1905 = vpack.c.b16 %v1282, %v1275
  %v1906 = vpack.c.b16 %v1283, %v1276
  %v1907 = vpack.c.b16 %v1284, %v1277
  %v1908 = vpack.c.b16 %v1285, %v1278
  %v1909 = vpack.c.b16 %v1293, %v1286
  %v1910 = vpack.c.b16 %v1294, %v1287
  %v1911 = vpack.c.b16 %v1295, %v1288
  %v1912 = vpack.c.b16 %v1296, %v1289
  %v1913 = vpack.c.b16 %v1297, %v1290
  %v1914 = vpack.c.b16 %v1298, %v1291
  %v1915 = vpack.c.b16 %v1299, %v1292
  %v1916 = vpack.c.b16 %v1307, %v1300
  %v1917 = vpack.c.b16 %v1308, %v1301
  %v1918 = vpack.c.b16 %v1309, %v1302
  %v1919 = vpack.c.b16 %v1310, %v1303
  %v1920 = vpack.c.b16 %v1311, %v1304
  %v1921 = vpack.c.b16 %v1312, %v1305
  %v1922 = vpack.c.b16 %v1313, %v1306
  %v1923 = vpack.c.b16 %v1321, %v1314
  %v1924 = vpack.c.b16 %v1322, %v1315
  %v1925 = vpack.c.b16 %v1323, %v1316
  %v1926 = vpack.c.b16 %v1324, %v1317
  %v1927 = vpack.c.b16 %v1325, %v1318
  %v1928 = vpack.c.b16 %v1326, %v1319
  %v1929 = vpack.c.b16 %v1327, %v1320
  %v1930 = vpack.c.b16 %v1335, %v1328
  %v1931 = vpack.c.b16 %v1336, %v1329
  %v1932 = vpack.c.b16 %v1337, %v1330
  %v1933 = vpack.c.b16 %v1338, %v1331
  %v1934 = vpack.c.b16 %v1339, %v1332
  %v1935 = vpack.c.b16 %v1340, %v1333
  %v1936 = vpack.c.b16 %v1341, %v1334
  %v1937 = vpack.c.b16 %v1349, %v1342
  %v1938 = vpack.c.b16 %v1350, %v1343
  %v1939 = vpack.c.b16 %v1351, %v1344
  %v1940 = vpack.c.b16 %v1352, %v1345
  %v1941 = vpack.c.b16 %v1353, %v1346
  %v1942 = vpack.c.b16 %v1354, %v1347
  %v1943 = vpack.c.b16 %v1355, %v1348
  %v1944 = vpack.c.b16 %v1363, %v1356
  %v1945 = vpack.c.b16 %v1364, %v1357
  %v1946 = vpack.c.b16 %v1365, %v1358
  %v1947 = vpack.c.b16 %v1366, %v1359
  %v1948 = vpack.c.b16 %v1367, %v1360
  %v1949 = vpack.c.b16 %v1368, %v1361
  %v1950 = vpack.c.b16 %v1369, %v1362
  %v1951 = vpack.c.b16 %v1377, %v1370
  %v1952 = vpack.c.b16 %v1378, %v1371
  %v1953 = vpack.c.b16 %v1379, %v1372
  %v1954 = vpack.c.b16 %v1380, %v1373
  %v1955 = vpack.c.b16 %v1381, %v1374
  %v1956 = vpack.c.b16 %v1382, %v1375
  %v1957 = vpack.c.b16 %v1383, %v1376
  %v1958 = vpack.c.b16 %v1391, %v1384
  %v1959 = vpack.c.b16 %v1392, %v1385
  %v1960 = vpack.c.b16 %v1393, %v1386
  %v1961 = vpack.c.b16 %v1394, %v1387
  %v1962 = vpack.c.b16 %v1395, %v1388
  %v1963 = vpack.c.b16 %v1396, %v1389
  %v1964 = vpack.c.b16 %v1397, %v1390
  %v1965 = vpack.c.b16 %v1405, %v1398
  %v1966 = vpack.c.b16 %v1406, %v1399
  %v1967 = vpack.c.b16 %v1407, %v1400
  %v1968 = vpack.c.b16 %v1408, %v1401
  %v1969 = vpack.c.b16 %v1409, %v1402
  %v1970 = vpack.c.b16 %v1410, %v1403
  %v1971 = vpack.c.b16 %v1411, %v1404
  %v1972 = vpack.c.b16 %v1419, %v1412
  %v1973 = vpack.c.b16 %v1420, %v1413
  %v1974 = vpack.c.b16 %v1421, %v1414
  %v1975 = vpack.c.b16 %v1422, %v1415
  %v1976 = vpack.c.b16 %v1423, %v1416
  %v1977 = vpack.c.b16 %v1424, %v1417
  %v1978 = vpack.c.b16 %v1425, %v1418
  %v1979 = vpack.c.b16 %v1433, %v1426
  %v1980 = vpack.c.b16 %v1434, %v1427
  %v1981 = vpack.c.b16 %v1435, %v1428
  %v1982 = vpack.c.b16 %v1436, %v1429
  %v1983 = vpack.c.b16 %v1437, %v1430
  %v1984 = vpack.c.b16 %v1438, %v1431
  %v1985 = vpack.c.b16 %v1439, %v1432
  %v1986 = vpack.c.b16 %v1447, %v1440
  %v1987 = vpack.c.b16 %v1448, %v1441
  %v1988 = vpack.c.b16 %v1449, %v1442
  %v1989 = vpack.c.b16 %v1450, %v1443
  %v1990 = vpack.c.b16 %v1451, %v1444
  %v1991 = vpack.c.b16 %v1452, %v1445
  %v1992 = vpack.c.b16 %v1453, %v1446
  %v1993 = vpack.c.b16 %v1461, %v1454
  %v1994 = vpack.c.b16 %v1462, %v1455
  %v1995 = vpack.c.b16 %v1463, %v1456
  %v1996 = vpack.c.b16 %v1464, %v1457
  %v1997 = vpack.c.b16 %v1465, %v1458
  %v1998 = vpack.c.b16 %v1466, %v1459
  %v1999 = vpack.c.b16 %v1467, %v1460
  %v2000 = vpack.c.b16 %v1475, %v1468
  %v2001 = vpack.c.b16 %v1476, %v1469
  %v2002 = vpack.c.b16 %v1477, %v1470
  %v2003 = vpack.c.b16 %v1478, %v1471
  %v2004 = vpack.c.b16 %v1479, %v1472
  %v2005 = vpack.c.b16 %v1480, %v1473
  %v2006 = vpack.c.b16 %v1481, %v1474
  %v2007 = vpack.c.b16 %v1489, %v1482
  %v2008 = vpack.c.b16 %v1490, %v1483
  %v2009 = vpack.c.b16 %v1491, %v1484
  %v2010 = vpack.c.b16 %v1492, %v1485
  %v2011 = vpack.c.b16 %v1493, %v1486
  %v2012 = vpack.c.b16 %v1494, %v1487
  %v2013 = vpack.c.b16 %v1495, %v1488
  %v2014 = vpack.c.b16 %v1503, %v1496
  %v2015 = vpack.c.b16 %v1504, %v1497
  %v2016 = vpack.c.b16 %v1505, %v1498
  %v2017 = vpack.c.b16 %v1506, %v1499
  %v2018 = vpack.c.b16 %v1507, %v1500
  %v2019 = vpack.c.b16 %v1508, %v1501
  %v2020 = vpack.c.b16 %v1509, %v1502
  %v2021 = vpack.c.b16 %v1517, %v1510
  %v2022 = vpack.c.b16 %v1518, %v1511
  %v2023 = vpack.c.b16 %v1519, %v1512
  %v2024 = vpack.c.b16 %v1520, %v1513
  %v2025 = vpack.c.b16 %v1521, %v1514
  %v2026 = vpack.c.b16 %v1522, %v1515
  %v2027 = vpack.c.b16 %v1523, %v1516
  %v2028 = vpack.c.b16 %v1531, %v1524
  %v2029 = vpack.c.b16 %v1532, %v1525
  %v2030 = vpack.c.b16 %v1533, %v1526
  %v2031 = vpack.c.b16 %v1534, %v1527
  %v2032 = vpack.c.b16 %v1535, %v1528
  %v2033 = vpack.c.b16 %v1536, %v1529
  %v2034 = vpack.c.b16 %v1537, %v1530
  %v2035 = vpack.c.b16 %v1545, %v1538
  %v2036 = vpack.c.b16 %v1546, %v1539
  %v2037 = vpack.c.b16 %v1547, %v1540
  %v2038 = vpack.c.b16 %v1548, %v1541
  %v2039 = vpack.c.b16 %v1549, %v1542
  %v2040 = vpack.c.b16 %v1550, %v1543
  %v2041 = vpack.c.b16 %v1551, %v1544
  %v2042 = vpack.c.b16 %v1559, %v1552
  %v2043 = vpack.c.b16 %v1560, %v1553
  %v2044 = vpack.c.b16 %v1561, %v1554
  %v2045 = vpack.c.b16 %v1562, %v1555
  %v2046 = vpack.c.b16 %v1563, %v1556
  %v2047 = vpack.c.b16 %v1564, %v1557
  %v2048 = vpack.c.b16 %v1565, %v1558
  %v2049 = vpack.c.b16 %v1573, %v1566
  %v2050 = vpack.c.b16 %v1574, %v1567
  %v2051 = vpack.c.b16 %v1575, %v1568
  %v2052 = vpack.c.b16 %v1576, %v1569
  %v2053 = vpack.c.b16 %v1577, %v1570
  %v2054 = vpack.c.b16 %v1578, %v1571
  %v2055 = vpack.c.b16 %v1579, %v1572
  %v2056 = vpack.c.b16 %v1587, %v1580
  %v2057 = vpack.c.b16 %v1588, %v1581
  %v2058 = vpack.c.b16 %v1589, %v1582
  %v2059 = vpack.c.b16 %v1590, %v1583
  %v2060 = vpack.c.b16 %v1591, %v1584
  %v2061 = vpack.c.b16 %v1592, %v1585
  %v2062 = vpack.c.b16 %v1593, %v1586
  %v2063 = vpack.c.b16 %v1601, %v1594
  %v2064 = vpack.c.b16 %v1602, %v1595
  %v2065 = vpack.c.b16 %v1603, %v1596
  %v2066 = vpack.c.b16 %v1604, %v1597
  %v2067 = vpack.c.b16 %v1605, %v1598
  %v2068 = vpack.c.b16 %v1606, %v1599
  %v2069 = vpack.c.b16 %v1607, %v1600
  %v2070 = vpack.c.b16 %v1615, %v1608
  %v2071 = vpack.c.b16 %v1616, %v1609
  %v2072 = vpack.c.b16 %v1617, %v1610
  %v2073 = vpack.c.b16 %v1618, %v1611
  %v2074 = vpack.c.b16 %v1619, %v1612
  %v2075 = vpack.c.b16 %v1620, %v1613
  %v2076 = vpack.c.b16 %v1621, %v1614
  %v2077 = vpack.c.b16 %v1629, %v1622
  %v2078 = vpack.c.b16 %v1630, %v1623
  %v2079 = vpack.c.b16 %v1631, %v1624
  %v2080 = vpack.c.b16 %v1632, %v1625
  %v2081 = vpack.c.b16 %v1633, %v1626
  %v2082 = vpack.c.b16 %v1634, %v1627
  %v2083 = vpack.c.b16 %v1635, %v1628
  %v2084 = vpack.c.b16 %v1643, %v1636
  %v2085 = vpack.c.b16 %v1644, %v1637
  %v2086 = vpack.c.b16 %v1645, %v1638
  %v2087 = vpack.c.b16 %v1646, %v1639
  %v2088 = vpack.c.b16 %v1647, %v1640
  %v2089 = vpack.c.b16 %v1648, %v1641
  %v2090 = vpack.c.b16 %v1649, %v1642
  %v2091 = vpack.c.b16 %v1657, %v1650
  %v2092 = vpack.c.b16 %v1658, %v1651
  %v2093 = vpack.c.b16 %v1659, %v1652
  %v2094 = vpack.c.b16 %v1660, %v1653
  %v2095 = vpack.c.b16 %v1661, %v1654
  %v2096 = vpack.c.b16 %v1662, %v1655
  %v2097 = vpack.c.b16 %v1663, %v1656
  %v2098 = vpack.c.b16 %v1671, %v1664
  %v2099 = vpack.c.b16 %v1672, %v1665
  %v2100 = vpack.c.b16 %v1673, %v1666
  %v2101 = vpack.c.b16 %v1674, %v1667
  %v2102 = vpack.c.b16 %v1675, %v1668
  %v2103 = vpack.c.b16 %v1676, %v1669
  %v2104 = vpack.c.b16 %v1677, %v1670
  %v2105 = vpack.c.b16 %v1685, %v1678
  %v2106 = vpack.c.b16 %v1686, %v1679
  %v2107 = vpack.c.b16 %v1687, %v1680
  %v2108 = vpack.c.b16 %v1688, %v1681
  %v2109 = vpack.c.b16 %v1689, %v1682
  %v2110 = vpack.c.b16 %v1690, %v1683
  %v2111 = vpack.c.b16 %v1691, %v1684
  %v2112 = vpack.c.b16 %v1699, %v1692
  %v2113 = vpack.c.b16 %v1700, %v1693
  %v2114 = vpack.c.b16 %v1701, %v1694
  %v2115 = vpack.c.b16 %v1702, %v1695
  %v2116 = vpack.c.b16 %v1703, %v1696
  %v2117 = vpack.c.b16 %v1704, %v1697
  %v2118 = vpack.c.b16 %v1705, %v1698
  %v2119 = vpack.c.b16 %v1713, %v1706
  %v2120 = vpack.c.b16 %v1714, %v1707
  %v2121 = vpack.c.b16 %v1715, %v1708
  %v2122 = vpack.c.b16 %v1716, %v1709
  %v2123 = vpack.c.b16 %v1717, %v1710
  %v2124 = vpack.c.b16 %v1718, %v1711
  %v2125 = vpack.c.b16 %v1719, %v1712
  %v2126 = vpack.c.b16 %v1727, %v1720
  %v2127 = vpack.c.b16 %v1728, %v1721
  %v2128 = vpack.c.b16 %v1729, %v1722
  %v2129 = vpack.c.b16 %v1730, %v1723
  %v2130 = vpack.c.b16 %v1731, %v1724
  %v2131 = vpack.c.b16 %v1732, %v1725
  %v2132 = vpack.c.b16 %v1733, %v1726
  %v2133 = vpack.c.b16 %v1741, %v1734
  %v2134 = vpack.c.b16 %v1742, %v1735
  %v2135 = vpack.c.b16 %v1743, %v1736
  %v2136 = vpack.c.b16 %v1744, %v1737
  %v2137 = vpack.c.b16 %v1745, %v1738
  %v2138 = vpack.c.b16 %v1746, %v1739
  %v2139 = vpack.c.b16 %v1747, %v1740
  %v2140 = vpack.c.b16 %v1755, %v1748
  %v2141 = vpack.c.b16 %v1756, %v1749
  %v2142 = vpack.c.b16 %v1757, %v1750
  %v2143 = vpack.c.b16 %v1758, %v1751
  %v2144 = vpack.c.b16 %v1759, %v1752
  %v2145 = vpack.c.b16 %v1760, %v1753
  %v2146 = vpack.c.b16 %v1761, %v1754
  %v2147 = vpack.c.b16 %v1769, %v1762
  %v2148 = vpack.c.b16 %v1770, %v1763
  %v2149 = vpack.c.b16 %v1771, %v1764
  %v2150 = vpack.c.b16 %v1772, %v1765
  %v2151 = vpack.c.b16 %v1773, %v1766
  %v2152 = vpack.c.b16 %v1774, %v1767
  %v2153 = vpack.c.b16 %v1775, %v1768
  %v2154 = vpack.c.b16 %v1783, %v1776
  %v2155 = vpack.c.b16 %v1784, %v1777
  %v2156 = vpack.c.b16 %v1785, %v1778
  %v2157 = vpack.c.b16 %v1786, %v1779
  %v2158 = vpack.c.b16 %v1787, %v1780
  %v2159 = vpack.c.b16 %v1788, %v1781
  %v2160 = vpack.c.b16 %v1789, %v1782
  %v2161 = vpack.c.b16 %v1797, %v1790
  %v2162 = vpack.c.b16 %v1798, %v1791
  %v2163 = vpack.c.b16 %v1799, %v1792
  %v2164 = vpack.c.b16 %v1800, %v1793
  %v2165 = vpack.c.b16 %v1801, %v1794
  %v2166 = vpack.c.b16 %v1802, %v1795
  %v2167 = vpack.c.b16 %v1803, %v1796
  %v2168 = vpack.c.b16 %v1811, %v1804
  %v2169 = vpack.c.b16 %v1812, %v1805
  %v2170 = vpack.c.b16 %v1813, %v1806
  %v2171 = vpack.c.b16 %v1814, %v1807
  %v2172 = vpack.c.b16 %v1815, %v1808
  %v2173 = vpack.c.b16 %v1816, %v1809
  %v2174 = vpack.c.b16 %v1817, %v1810
  %v2175 = vpack.c.b16 %v1825, %v1818
  %v2176 = vpack.c.b16 %v1826, %v1819
  %v2177 = vpack.c.b16 %v1827, %v1820
  %v2178 = vpack.c.b16 %v1828, %v1821
  %v2179 = vpack.c.b16 %v1829, %v1822
  %v2180 = vpack.c.b16 %v1830, %v1823
  %v2181 = vpack.c.b16 %v1831, %v1824
  %v2182 = vpack.c.b16 %v1839, %v1832
  %v2183 = vpack.c.b16 %v1840, %v1833
  %v2184 = vpack.c.b16 %v1841, %v1834
  %v2185 = vpack.c.b16 %v1842, %v1835
  %v2186 = vpack.c.b16 %v1843, %v1836
  %v2187 = vpack.c.b16 %v1844, %v1837
  %v2188 = vpack.c.b16 %v1845, %v1838
  %vm2532 = vcmask 130048
  %v2534 = vsel %vm2532, %v338, 0
  %2536 = vmatprep.subr.bf16.mxu0 %v1847
  %2537 = vmatpush1.bf16.msra.mxu0 %v1846
  %2538 = vmatprep.subr.bf16.mxu0 %v1854
  %2539 = vmatpush1.bf16.msra.mxu0 %v1853
  %2540 = vmatprep.subr.bf16.mxu0 %v1861
  %2541 = vmatpush1.bf16.msra.mxu0 %v1860
  %2542 = vmatprep.subr.bf16.mxu0 %v1868
  %2543 = vmatpush1.bf16.msra.mxu0 %v1867
  %2544 = vmatprep.subr.bf16.mxu0 %v1875
  %2545 = vmatpush1.bf16.msra.mxu0 %v1874
  %2546 = vmatprep.subr.bf16.mxu0 %v1882
  %2547 = vmatpush1.bf16.msra.mxu0 %v1881
  %2548 = vmatprep.subr.bf16.mxu0 %v1889
  %2549 = vmatpush1.bf16.msra.mxu0 %v1888
  %2550 = vmatprep.subr.bf16.mxu0 %v1896
  %2551 = vmatpush1.bf16.msra.mxu0 %v1895
  %2552 = vmatprep.subr.bf16.mxu0 %v1903
  %2553 = vmatpush1.bf16.msra.mxu0 %v1902
  %2554 = vmatprep.subr.bf16.mxu0 %v1910
  %2555 = vmatpush1.bf16.msra.mxu0 %v1909
  %2556 = vmatprep.subr.bf16.mxu0 %v1917
  %2557 = vmatpush1.bf16.msra.mxu0 %v1916
  %2558 = vmatprep.subr.bf16.mxu0 %v1924
  %2559 = vmatpush1.bf16.msra.mxu0 %v1923
  %2560 = vmatprep.subr.bf16.mxu0 %v1931
  %2561 = vmatpush1.bf16.msra.mxu0 %v1930
  %2562 = vmatprep.subr.bf16.mxu0 %v1938
  %2563 = vmatpush1.bf16.msra.mxu0 %v1937
  %2564 = vmatprep.subr.bf16.mxu0 %v1945
  %2565 = vmatpush1.bf16.msra.mxu0 %v1944
  %2566 = vmatprep.subr.bf16.mxu0 %v1952
  %2567 = vmatpush1.bf16.msra.mxu0 %v1951
  %2568 = vmatprep.mubr.bf16.mxu0 %v333
  %2569 = vmatmul.mubr.bf16.gmra.mrb[0].mxu0 %v332
  %v2570 = vpop.f32.mrb[0].mxu0
  %v2571 = vadd.f32 %v736, %v2570
  %v2572 = vpop.f32.mrb[0].mxu0
  %v2573 = vadd.f32 %v740, %v2572
  %v2574 = vpop.f32.mrb[0].mxu0
  %v2575 = vpop.f32.mrb[0].mxu0
  %2576 = vdwg.mxu0
  %2577 = vmatprep.subr.bf16.mxu0 %v1959
  %2578 = vmatpush1.bf16.msra.mxu0 %v1958
  %2579 = vmatprep.subr.bf16.mxu0 %v1966
  %2580 = vmatpush1.bf16.msra.mxu0 %v1965
  %2581 = vmatprep.subr.bf16.mxu0 %v1973
  %2582 = vmatpush1.bf16.msra.mxu0 %v1972
  %2583 = vmatprep.subr.bf16.mxu0 %v1980
  %2584 = vmatpush1.bf16.msra.mxu0 %v1979
  %2585 = vmatprep.subr.bf16.mxu0 %v1987
  %2586 = vmatpush1.bf16.msra.mxu0 %v1986
  %2587 = vmatprep.subr.bf16.mxu0 %v1994
  %2588 = vmatpush1.bf16.msra.mxu0 %v1993
  %2589 = vmatprep.subr.bf16.mxu0 %v2001
  %2590 = vmatpush1.bf16.msra.mxu0 %v2000
  %2591 = vmatprep.subr.bf16.mxu0 %v2008
  %2592 = vmatpush1.bf16.msra.mxu0 %v2007
  %2593 = vmatprep.subr.bf16.mxu0 %v2015
  %2594 = vmatpush1.bf16.msra.mxu0 %v2014
  %2595 = vmatprep.subr.bf16.mxu0 %v2022
  %2596 = vmatpush1.bf16.msra.mxu0 %v2021
  %2597 = vmatprep.subr.bf16.mxu0 %v2029
  %2598 = vmatpush1.bf16.msra.mxu0 %v2028
  %2599 = vmatprep.subr.bf16.mxu0 %v2036
  %2600 = vmatpush1.bf16.msra.mxu0 %v2035
  %2601 = vmatprep.subr.bf16.mxu0 %v2043
  %2602 = vmatpush1.bf16.msra.mxu0 %v2042
  %2603 = vmatprep.subr.bf16.mxu0 %v2050
  %2604 = vmatpush1.bf16.msra.mxu0 %v2049
  %2605 = vmatprep.subr.bf16.mxu0 %v2057
  %2606 = vmatpush1.bf16.msra.mxu0 %v2056
  %2607 = vmatprep.subr.bf16.mxu0 %v2064
  %2608 = vmatpush1.bf16.msra.mxu0 %v2063
  %2609 = vmatprep.mubr.bf16.mxu0 %v335
  %2610 = vmatmul.mubr.bf16.gmra.mrb[0].mxu0 %v334
  %v2611 = vpop.f32.mrb[0].mxu0
  %v2612 = vadd.f32 %v2571, %v2611
  %v2613 = vpop.f32.mrb[0].mxu0
  %v2614 = vadd.f32 %v2573, %v2613
  %v2615 = vpop.f32.mrb[0].mxu0
  %v2616 = vpop.f32.mrb[0].mxu0
  %2617 = vdwg.mxu0
  %2618 = vmatprep.subr.bf16.mxu0 %v2071
  %2619 = vmatpush1.bf16.msra.mxu0 %v2070
  %2620 = vmatprep.subr.bf16.mxu0 %v2078
  %2621 = vmatpush1.bf16.msra.mxu0 %v2077
  %2622 = vmatprep.subr.bf16.mxu0 %v2085
  %2623 = vmatpush1.bf16.msra.mxu0 %v2084
  %2624 = vmatprep.subr.bf16.mxu0 %v2092
  %2625 = vmatpush1.bf16.msra.mxu0 %v2091
  %2626 = vmatprep.subr.bf16.mxu0 %v2099
  %2627 = vmatpush1.bf16.msra.mxu0 %v2098
  %2628 = vmatprep.subr.bf16.mxu0 %v2106
  %2629 = vmatpush1.bf16.msra.mxu0 %v2105
  %2630 = vmatprep.subr.bf16.mxu0 %v2113
  %2631 = vmatpush1.bf16.msra.mxu0 %v2112
  %2632 = vmatprep.subr.bf16.mxu0 %v2120
  %2633 = vmatpush1.bf16.msra.mxu0 %v2119
  %2634 = vmatprep.subr.bf16.mxu0 %v2127
  %2635 = vmatpush1.bf16.msra.mxu0 %v2126
  %2636 = vmatprep.subr.bf16.mxu0 %v2134
  %2637 = vmatpush1.bf16.msra.mxu0 %v2133
  %2638 = vmatprep.subr.bf16.mxu0 %v2141
  %2639 = vmatpush1.bf16.msra.mxu0 %v2140
  %2640 = vmatprep.subr.bf16.mxu0 %v2148
  %2641 = vmatpush1.bf16.msra.mxu0 %v2147
  %2642 = vmatprep.subr.bf16.mxu0 %v2155
  %2643 = vmatpush1.bf16.msra.mxu0 %v2154
  %2644 = vmatprep.subr.bf16.mxu0 %v2162
  %2645 = vmatpush1.bf16.msra.mxu0 %v2161
  %2646 = vmatprep.subr.bf16.mxu0 %v2169
  %2647 = vmatpush1.bf16.msra.mxu0 %v2168
  %2648 = vmatprep.subr.bf16.mxu0 %v2176
  %2649 = vmatpush1.bf16.msra.mxu0 %v2175
  %2650 = vmatprep.mubr.bf16.mxu0 %v337
  %2651 = vmatmul.mubr.bf16.gmra.mrb[0].mxu0 %v336
  %v2652 = vpop.f32.mrb[0].mxu0
  %v2653 = vadd.f32 %v2612, %v2652
  %v2654 = vpop.f32.mrb[0].mxu0
  %v2655 = vadd.f32 %v2614, %v2654
  %v2656 = vpop.f32.mrb[0].mxu0
  %v2657 = vpop.f32.mrb[0].mxu0
  %2658 = vdwg.mxu0
  %2659 = vmatprep.subr.bf16.mxu0 %v2183
  %2660 = vmatpush1.bf16.msra.mxu0 %v2182
  %2661 = vmatprep.subr.bf16.mxu0 0
  %2662 = vmatpush1.bf16.msra.mxu0 0
  %2663 = vmatprep.subr.bf16.mxu0 0
  %2664 = vmatpush1.bf16.msra.mxu0 0
  %2665 = vmatprep.subr.bf16.mxu0 0
  %2666 = vmatpush1.bf16.msra.mxu0 0
  %2667 = vmatprep.subr.bf16.mxu0 0
  %2668 = vmatpush1.bf16.msra.mxu0 0
  %2669 = vmatprep.subr.bf16.mxu0 0
  %2670 = vmatpush1.bf16.msra.mxu0 0
  %2671 = vmatprep.subr.bf16.mxu0 0
  %2672 = vmatpush1.bf16.msra.mxu0 0
  %2673 = vmatprep.subr.bf16.mxu0 0
  %2674 = vmatpush1.bf16.msra.mxu0 0
  %2675 = vmatprep.subr.bf16.mxu0 0
  %2676 = vmatpush1.bf16.msra.mxu0 0
  %2677 = vmatprep.subr.bf16.mxu0 0
  %2678 = vmatpush1.bf16.msra.mxu0 0
  %2679 = vmatprep.subr.bf16.mxu0 0
  %2680 = vmatpush1.bf16.msra.mxu0 0
  %2681 = vmatprep.subr.bf16.mxu0 0
  %2682 = vmatpush1.bf16.msra.mxu0 0
  %2683 = vmatprep.subr.bf16.mxu0 0
  %2684 = vmatpush1.bf16.msra.mxu0 0
  %2685 = vmatprep.subr.bf16.mxu0 0
  %2686 = vmatpush1.bf16.msra.mxu0 0
  %2687 = vmatprep.subr.bf16.mxu0 0
  %2688 = vmatpush1.bf16.msra.mxu0 0
  %2689 = vmatprep.subr.bf16.mxu0 0
  %2690 = vmatpush1.bf16.msra.mxu0 0
  %2691 = vmatprep.mubr.bf16.mxu0 0
  %2692 = vmatmul.mubr.bf16.gmra.mrb[0].mxu0 %v2534
  %v2693 = vpop.f32.mrb[0].mxu0
  %v2694 = vadd.f32 %v2653, %v2693
  %v2695 = vpop.f32.mrb[0].mxu0
  %v2696 = vadd.f32 %v2655, %v2695
  %v2697 = vpop.f32.mrb[0].mxu0
  %v2698 = vpop.f32.mrb[0].mxu0
  %2699 = vdwg.mxu0
  %2700 = vmatprep.subr.bf16.mxu0 %v1849
  %2701 = vmatpush1.bf16.msra.mxu0 %v1848
  %2702 = vmatprep.subr.bf16.mxu0 %v1856
  %2703 = vmatpush1.bf16.msra.mxu0 %v1855
  %2704 = vmatprep.subr.bf16.mxu0 %v1863
  %2705 = vmatpush1.bf16.msra.mxu0 %v1862
  %2706 = vmatprep.subr.bf16.mxu0 %v1870
  %2707 = vmatpush1.bf16.msra.mxu0 %v1869
  %2708 = vmatprep.subr.bf16.mxu0 %v1877
  %2709 = vmatpush1.bf16.msra.mxu0 %v1876
  %2710 = vmatprep.subr.bf16.mxu0 %v1884
  %2711 = vmatpush1.bf16.msra.mxu0 %v1883
  %2712 = vmatprep.subr.bf16.mxu0 %v1891
  %2713 = vmatpush1.bf16.msra.mxu0 %v1890
  %2714 = vmatprep.subr.bf16.mxu0 %v1898
  %2715 = vmatpush1.bf16.msra.mxu0 %v1897
  %2716 = vmatprep.subr.bf16.mxu0 %v1905
  %2717 = vmatpush1.bf16.msra.mxu0 %v1904
  %2718 = vmatprep.subr.bf16.mxu0 %v1912
  %2719 = vmatpush1.bf16.msra.mxu0 %v1911
  %2720 = vmatprep.subr.bf16.mxu0 %v1919
  %2721 = vmatpush1.bf16.msra.mxu0 %v1918
  %2722 = vmatprep.subr.bf16.mxu0 %v1926
  %2723 = vmatpush1.bf16.msra.mxu0 %v1925
  %2724 = vmatprep.subr.bf16.mxu0 %v1933
  %2725 = vmatpush1.bf16.msra.mxu0 %v1932
  %2726 = vmatprep.subr.bf16.mxu0 %v1940
  %2727 = vmatpush1.bf16.msra.mxu0 %v1939
  %2728 = vmatprep.subr.bf16.mxu0 %v1947
  %2729 = vmatpush1.bf16.msra.mxu0 %v1946
  %2730 = vmatprep.subr.bf16.mxu0 %v1954
  %2731 = vmatpush1.bf16.msra.mxu0 %v1953
  %2732 = vmatprep.mubr.bf16.mxu0 %v333
  %2733 = vmatmul.mubr.bf16.gmra.mrb[0].mxu0 %v332
  %v2734 = vpop.f32.mrb[0].mxu0
  %v2735 = vadd.f32 %v744, %v2734
  %v2736 = vpop.f32.mrb[0].mxu0
  %v2737 = vadd.f32 %v748, %v2736
  %v2738 = vpop.f32.mrb[0].mxu0
  %v2739 = vpop.f32.mrb[0].mxu0
  %2740 = vdwg.mxu0
  %2741 = vmatprep.subr.bf16.mxu0 %v1961
  %2742 = vmatpush1.bf16.msra.mxu0 %v1960
  %2743 = vmatprep.subr.bf16.mxu0 %v1968
  %2744 = vmatpush1.bf16.msra.mxu0 %v1967
  %2745 = vmatprep.subr.bf16.mxu0 %v1975
  %2746 = vmatpush1.bf16.msra.mxu0 %v1974
  %2747 = vmatprep.subr.bf16.mxu0 %v1982
  %2748 = vmatpush1.bf16.msra.mxu0 %v1981
  %2749 = vmatprep.subr.bf16.mxu0 %v1989
  %2750 = vmatpush1.bf16.msra.mxu0 %v1988
  %2751 = vmatprep.subr.bf16.mxu0 %v1996
  %2752 = vmatpush1.bf16.msra.mxu0 %v1995
  %2753 = vmatprep.subr.bf16.mxu0 %v2003
  %2754 = vmatpush1.bf16.msra.mxu0 %v2002
  %2755 = vmatprep.subr.bf16.mxu0 %v2010
  %2756 = vmatpush1.bf16.msra.mxu0 %v2009
  %2757 = vmatprep.subr.bf16.mxu0 %v2017
  %2758 = vmatpush1.bf16.msra.mxu0 %v2016
  %2759 = vmatprep.subr.bf16.mxu0 %v2024
  %2760 = vmatpush1.bf16.msra.mxu0 %v2023
  %2761 = vmatprep.subr.bf16.mxu0 %v2031
  %2762 = vmatpush1.bf16.msra.mxu0 %v2030
  %2763 = vmatprep.subr.bf16.mxu0 %v2038
  %2764 = vmatpush1.bf16.msra.mxu0 %v2037
  %2765 = vmatprep.subr.bf16.mxu0 %v2045
  %2766 = vmatpush1.bf16.msra.mxu0 %v2044
  %2767 = vmatprep.subr.bf16.mxu0 %v2052
  %2768 = vmatpush1.bf16.msra.mxu0 %v2051
  %2769 = vmatprep.subr.bf16.mxu0 %v2059
  %2770 = vmatpush1.bf16.msra.mxu0 %v2058
  %2771 = vmatprep.subr.bf16.mxu0 %v2066
  %2772 = vmatpush1.bf16.msra.mxu0 %v2065
  %2773 = vmatprep.mubr.bf16.mxu0 %v335
  %2774 = vmatmul.mubr.bf16.gmra.mrb[0].mxu0 %v334
  %v2775 = vpop.f32.mrb[0].mxu0
  %v2776 = vadd.f32 %v2735, %v2775
  %v2777 = vpop.f32.mrb[0].mxu0
  %v2778 = vadd.f32 %v2737, %v2777
  %v2779 = vpop.f32.mrb[0].mxu0
  %v2780 = vpop.f32.mrb[0].mxu0
  %2781 = vdwg.mxu0
  %2782 = vmatprep.subr.bf16.mxu0 %v2073
  %2783 = vmatpush1.bf16.msra.mxu0 %v2072
  %2784 = vmatprep.subr.bf16.mxu0 %v2080
  %2785 = vmatpush1.bf16.msra.mxu0 %v2079
  %2786 = vmatprep.subr.bf16.mxu0 %v2087
  %2787 = vmatpush1.bf16.msra.mxu0 %v2086
  %2788 = vmatprep.subr.bf16.mxu0 %v2094
  %2789 = vmatpush1.bf16.msra.mxu0 %v2093
  %2790 = vmatprep.subr.bf16.mxu0 %v2101
  %2791 = vmatpush1.bf16.msra.mxu0 %v2100
  %2792 = vmatprep.subr.bf16.mxu0 %v2108
  %2793 = vmatpush1.bf16.msra.mxu0 %v2107
  %2794 = vmatprep.subr.bf16.mxu0 %v2115
  %2795 = vmatpush1.bf16.msra.mxu0 %v2114
  %2796 = vmatprep.subr.bf16.mxu0 %v2122
  %2797 = vmatpush1.bf16.msra.mxu0 %v2121
  %2798 = vmatprep.subr.bf16.mxu0 %v2129
  %2799 = vmatpush1.bf16.msra.mxu0 %v2128
  %2800 = vmatprep.subr.bf16.mxu0 %v2136
  %2801 = vmatpush1.bf16.msra.mxu0 %v2135
  %2802 = vmatprep.subr.bf16.mxu0 %v2143
  %2803 = vmatpush1.bf16.msra.mxu0 %v2142
  %2804 = vmatprep.subr.bf16.mxu0 %v2150
  %2805 = vmatpush1.bf16.msra.mxu0 %v2149
  %2806 = vmatprep.subr.bf16.mxu0 %v2157
  %2807 = vmatpush1.bf16.msra.mxu0 %v2156
  %2808 = vmatprep.subr.bf16.mxu0 %v2164
  %2809 = vmatpush1.bf16.msra.mxu0 %v2163
  %2810 = vmatprep.subr.bf16.mxu0 %v2171
  %2811 = vmatpush1.bf16.msra.mxu0 %v2170
  %2812 = vmatprep.subr.bf16.mxu0 %v2178
  %2813 = vmatpush1.bf16.msra.mxu0 %v2177
  %2814 = vmatprep.mubr.bf16.mxu0 %v337
  %2815 = vmatmul.mubr.bf16.gmra.mrb[0].mxu0 %v336
  %v2816 = vpop.f32.mrb[0].mxu0
  %v2817 = vadd.f32 %v2776, %v2816
  %v2818 = vpop.f32.mrb[0].mxu0
  %v2819 = vadd.f32 %v2778, %v2818
  %v2820 = vpop.f32.mrb[0].mxu0
  %v2821 = vpop.f32.mrb[0].mxu0
  %2822 = vdwg.mxu0
  %2823 = vmatprep.subr.bf16.mxu0 %v2185
  %2824 = vmatpush1.bf16.msra.mxu0 %v2184
  %2825 = vmatprep.subr.bf16.mxu0 0
  %2826 = vmatpush1.bf16.msra.mxu0 0
  %2827 = vmatprep.subr.bf16.mxu0 0
  %2828 = vmatpush1.bf16.msra.mxu0 0
  %2829 = vmatprep.subr.bf16.mxu0 0
  %2830 = vmatpush1.bf16.msra.mxu0 0
  %2831 = vmatprep.subr.bf16.mxu0 0
  %2832 = vmatpush1.bf16.msra.mxu0 0
  %2833 = vmatprep.subr.bf16.mxu0 0
  %2834 = vmatpush1.bf16.msra.mxu0 0
  %2835 = vmatprep.subr.bf16.mxu0 0
  %2836 = vmatpush1.bf16.msra.mxu0 0
  %2837 = vmatprep.subr.bf16.mxu0 0
  %2838 = vmatpush1.bf16.msra.mxu0 0
  %2839 = vmatprep.subr.bf16.mxu0 0
  %2840 = vmatpush1.bf16.msra.mxu0 0
  %2841 = vmatprep.subr.bf16.mxu0 0
  %2842 = vmatpush1.bf16.msra.mxu0 0
  %2843 = vmatprep.subr.bf16.mxu0 0
  %2844 = vmatpush1.bf16.msra.mxu0 0
  %2845 = vmatprep.subr.bf16.mxu0 0
  %2846 = vmatpush1.bf16.msra.mxu0 0
  %2847 = vmatprep.subr.bf16.mxu0 0
  %2848 = vmatpush1.bf16.msra.mxu0 0
  %2849 = vmatprep.subr.bf16.mxu0 0
  %2850 = vmatpush1.bf16.msra.mxu0 0
  %2851 = vmatprep.subr.bf16.mxu0 0
  %2852 = vmatpush1.bf16.msra.mxu0 0
  %2853 = vmatprep.subr.bf16.mxu0 0
  %2854 = vmatpush1.bf16.msra.mxu0 0
  %2855 = vmatprep.mubr.bf16.mxu0 0
  %2856 = vmatmul.mubr.bf16.gmra.mrb[0].mxu0 %v2534
  %v2857 = vpop.f32.mrb[0].mxu0
  %v2858 = vadd.f32 %v2817, %v2857
  %v2859 = vpop.f32.mrb[0].mxu0
  %v2860 = vadd.f32 %v2819, %v2859
  %v2861 = vpop.f32.mrb[0].mxu0
  %v2862 = vpop.f32.mrb[0].mxu0
  %2863 = vdwg.mxu0
  %2864 = vmatprep.subr.bf16.mxu0 %v1851
  %2865 = vmatpush1.bf16.msra.mxu0 %v1850
  %2866 = vmatprep.subr.bf16.mxu0 %v1858
  %2867 = vmatpush1.bf16.msra.mxu0 %v1857
  %2868 = vmatprep.subr.bf16.mxu0 %v1865
  %2869 = vmatpush1.bf16.msra.mxu0 %v1864
  %2870 = vmatprep.subr.bf16.mxu0 %v1872
  %2871 = vmatpush1.bf16.msra.mxu0 %v1871
  %2872 = vmatprep.subr.bf16.mxu0 %v1879
  %2873 = vmatpush1.bf16.msra.mxu0 %v1878
  %2874 = vmatprep.subr.bf16.mxu0 %v1886
  %2875 = vmatpush1.bf16.msra.mxu0 %v1885
  %2876 = vmatprep.subr.bf16.mxu0 %v1893
  %2877 = vmatpush1.bf16.msra.mxu0 %v1892
  %2878 = vmatprep.subr.bf16.mxu0 %v1900
  %2879 = vmatpush1.bf16.msra.mxu0 %v1899
  %2880 = vmatprep.subr.bf16.mxu0 %v1907
  %2881 = vmatpush1.bf16.msra.mxu0 %v1906
  %2882 = vmatprep.subr.bf16.mxu0 %v1914
  %2883 = vmatpush1.bf16.msra.mxu0 %v1913
  %2884 = vmatprep.subr.bf16.mxu0 %v1921
  %2885 = vmatpush1.bf16.msra.mxu0 %v1920
  %2886 = vmatprep.subr.bf16.mxu0 %v1928
  %2887 = vmatpush1.bf16.msra.mxu0 %v1927
  %2888 = vmatprep.subr.bf16.mxu0 %v1935
  %2889 = vmatpush1.bf16.msra.mxu0 %v1934
  %2890 = vmatprep.subr.bf16.mxu0 %v1942
  %2891 = vmatpush1.bf16.msra.mxu0 %v1941
  %2892 = vmatprep.subr.bf16.mxu0 %v1949
  %2893 = vmatpush1.bf16.msra.mxu0 %v1948
  %2894 = vmatprep.subr.bf16.mxu0 %v1956
  %2895 = vmatpush1.bf16.msra.mxu0 %v1955
  %2896 = vmatprep.mubr.bf16.mxu0 %v333
  %2897 = vmatmul.mubr.bf16.gmra.mrb[0].mxu0 %v332
  %v2898 = vpop.f32.mrb[0].mxu0
  %v2899 = vadd.f32 %v752, %v2898
  %v2900 = vpop.f32.mrb[0].mxu0
  %v2901 = vadd.f32 %v756, %v2900
  %v2902 = vpop.f32.mrb[0].mxu0
  %v2903 = vpop.f32.mrb[0].mxu0
  %2904 = vdwg.mxu0
  %2905 = vmatprep.subr.bf16.mxu0 %v1963
  %2906 = vmatpush1.bf16.msra.mxu0 %v1962
  %2907 = vmatprep.subr.bf16.mxu0 %v1970
  %2908 = vmatpush1.bf16.msra.mxu0 %v1969
  %2909 = vmatprep.subr.bf16.mxu0 %v1977
  %2910 = vmatpush1.bf16.msra.mxu0 %v1976
  %2911 = vmatprep.subr.bf16.mxu0 %v1984
  %2912 = vmatpush1.bf16.msra.mxu0 %v1983
  %2913 = vmatprep.subr.bf16.mxu0 %v1991
  %2914 = vmatpush1.bf16.msra.mxu0 %v1990
  %2915 = vmatprep.subr.bf16.mxu0 %v1998
  %2916 = vmatpush1.bf16.msra.mxu0 %v1997
  %2917 = vmatprep.subr.bf16.mxu0 %v2005
  %2918 = vmatpush1.bf16.msra.mxu0 %v2004
  %2919 = vmatprep.subr.bf16.mxu0 %v2012
  %2920 = vmatpush1.bf16.msra.mxu0 %v2011
  %2921 = vmatprep.subr.bf16.mxu0 %v2019
  %2922 = vmatpush1.bf16.msra.mxu0 %v2018
  %2923 = vmatprep.subr.bf16.mxu0 %v2026
  %2924 = vmatpush1.bf16.msra.mxu0 %v2025
  %2925 = vmatprep.subr.bf16.mxu0 %v2033
  %2926 = vmatpush1.bf16.msra.mxu0 %v2032
  %2927 = vmatprep.subr.bf16.mxu0 %v2040
  %2928 = vmatpush1.bf16.msra.mxu0 %v2039
  %2929 = vmatprep.subr.bf16.mxu0 %v2047
  %2930 = vmatpush1.bf16.msra.mxu0 %v2046
  %2931 = vmatprep.subr.bf16.mxu0 %v2054
  %2932 = vmatpush1.bf16.msra.mxu0 %v2053
  %2933 = vmatprep.subr.bf16.mxu0 %v2061
  %2934 = vmatpush1.bf16.msra.mxu0 %v2060
  %2935 = vmatprep.subr.bf16.mxu0 %v2068
  %2936 = vmatpush1.bf16.msra.mxu0 %v2067
  %2937 = vmatprep.mubr.bf16.mxu0 %v335
  %2938 = vmatmul.mubr.bf16.gmra.mrb[0].mxu0 %v334
  %v2939 = vpop.f32.mrb[0].mxu0
  %v2940 = vadd.f32 %v2899, %v2939
  %v2941 = vpop.f32.mrb[0].mxu0
  %v2942 = vadd.f32 %v2901, %v2941
  %v2943 = vpop.f32.mrb[0].mxu0
  %v2944 = vpop.f32.mrb[0].mxu0
  %2945 = vdwg.mxu0
  %2946 = vmatprep.subr.bf16.mxu0 %v2075
  %2947 = vmatpush1.bf16.msra.mxu0 %v2074
  %2948 = vmatprep.subr.bf16.mxu0 %v2082
  %2949 = vmatpush1.bf16.msra.mxu0 %v2081
  %2950 = vmatprep.subr.bf16.mxu0 %v2089
  %2951 = vmatpush1.bf16.msra.mxu0 %v2088
  %2952 = vmatprep.subr.bf16.mxu0 %v2096
  %2953 = vmatpush1.bf16.msra.mxu0 %v2095
  %2954 = vmatprep.subr.bf16.mxu0 %v2103
  %2955 = vmatpush1.bf16.msra.mxu0 %v2102
  %2956 = vmatprep.subr.bf16.mxu0 %v2110
  %2957 = vmatpush1.bf16.msra.mxu0 %v2109
  %2958 = vmatprep.subr.bf16.mxu0 %v2117
  %2959 = vmatpush1.bf16.msra.mxu0 %v2116
  %2960 = vmatprep.subr.bf16.mxu0 %v2124
  %2961 = vmatpush1.bf16.msra.mxu0 %v2123
  %2962 = vmatprep.subr.bf16.mxu0 %v2131
  %2963 = vmatpush1.bf16.msra.mxu0 %v2130
  %2964 = vmatprep.subr.bf16.mxu0 %v2138
  %2965 = vmatpush1.bf16.msra.mxu0 %v2137
  %2966 = vmatprep.subr.bf16.mxu0 %v2145
  %2967 = vmatpush1.bf16.msra.mxu0 %v2144
  %2968 = vmatprep.subr.bf16.mxu0 %v2152
  %2969 = vmatpush1.bf16.msra.mxu0 %v2151
  %2970 = vmatprep.subr.bf16.mxu0 %v2159
  %2971 = vmatpush1.bf16.msra.mxu0 %v2158
  %2972 = vmatprep.subr.bf16.mxu0 %v2166
  %2973 = vmatpush1.bf16.msra.mxu0 %v2165
  %2974 = vmatprep.subr.bf16.mxu0 %v2173
  %2975 = vmatpush1.bf16.msra.mxu0 %v2172
  %2976 = vmatprep.subr.bf16.mxu0 %v2180
  %2977 = vmatpush1.bf16.msra.mxu0 %v2179
  %2978 = vmatprep.mubr.bf16.mxu0 %v337
  %2979 = vmatmul.mubr.bf16.gmra.mrb[0].mxu0 %v336
  %v2980 = vpop.f32.mrb[0].mxu0
  %v2981 = vadd.f32 %v2940, %v2980
  %v2982 = vpop.f32.mrb[0].mxu0
  %v2983 = vadd.f32 %v2942, %v2982
  %v2984 = vpop.f32.mrb[0].mxu0
  %v2985 = vpop.f32.mrb[0].mxu0
  %2986 = vdwg.mxu0
  %2987 = vmatprep.subr.bf16.mxu0 %v2187
  %2988 = vmatpush1.bf16.msra.mxu0 %v2186
  %2989 = vmatprep.subr.bf16.mxu0 0
  %2990 = vmatpush1.bf16.msra.mxu0 0
  %2991 = vmatprep.subr.bf16.mxu0 0
  %2992 = vmatpush1.bf16.msra.mxu0 0
  %2993 = vmatprep.subr.bf16.mxu0 0
  %2994 = vmatpush1.bf16.msra.mxu0 0
  %2995 = vmatprep.subr.bf16.mxu0 0
  %2996 = vmatpush1.bf16.msra.mxu0 0
  %2997 = vmatprep.subr.bf16.mxu0 0
  %2998 = vmatpush1.bf16.msra.mxu0 0
  %2999 = vmatprep.subr.bf16.mxu0 0
  %3000 = vmatpush1.bf16.msra.mxu0 0
  %3001 = vmatprep.subr.bf16.mxu0 0
  %3002 = vmatpush1.bf16.msra.mxu0 0
  %3003 = vmatprep.subr.bf16.mxu0 0
  %3004 = vmatpush1.bf16.msra.mxu0 0
  %3005 = vmatprep.subr.bf16.mxu0 0
  %3006 = vmatpush1.bf16.msra.mxu0 0
  %3007 = vmatprep.subr.bf16.mxu0 0
  %3008 = vmatpush1.bf16.msra.mxu0 0
  %3009 = vmatprep.subr.bf16.mxu0 0
  %3010 = vmatpush1.bf16.msra.mxu0 0
  %3011 = vmatprep.subr.bf16.mxu0 0
  %3012 = vmatpush1.bf16.msra.mxu0 0
  %3013 = vmatprep.subr.bf16.mxu0 0
  %3014 = vmatpush1.bf16.msra.mxu0 0
  %3015 = vmatprep.subr.bf16.mxu0 0
  %3016 = vmatpush1.bf16.msra.mxu0 0
  %3017 = vmatprep.subr.bf16.mxu0 0
  %3018 = vmatpush1.bf16.msra.mxu0 0
  %3019 = vmatprep.mubr.bf16.mxu0 0
  %3020 = vmatmul.mubr.bf16.gmra.mrb[0].mxu0 %v2534
  %v3021 = vpop.f32.mrb[0].mxu0
  %v3022 = vadd.f32 %v2981, %v3021
  %v3023 = vpop.f32.mrb[0].mxu0
  %v3024 = vadd.f32 %v2983, %v3023
  %v3025 = vpop.f32.mrb[0].mxu0
  %v3026 = vpop.f32.mrb[0].mxu0
  %3027 = vdwg.mxu0
  %3028 = vmatprep.subr.bf16.mxu0 0
  %3029 = vmatpush1.bf16.msra.mxu0 %v1852
  %3030 = vmatprep.subr.bf16.mxu0 0
  %3031 = vmatpush1.bf16.msra.mxu0 %v1859
  %3032 = vmatprep.subr.bf16.mxu0 0
  %3033 = vmatpush1.bf16.msra.mxu0 %v1866
  %3034 = vmatprep.subr.bf16.mxu0 0
  %3035 = vmatpush1.bf16.msra.mxu0 %v1873
  %3036 = vmatprep.subr.bf16.mxu0 0
  %3037 = vmatpush1.bf16.msra.mxu0 %v1880
  %3038 = vmatprep.subr.bf16.mxu0 0
  %3039 = vmatpush1.bf16.msra.mxu0 %v1887
  %3040 = vmatprep.subr.bf16.mxu0 0
  %3041 = vmatpush1.bf16.msra.mxu0 %v1894
  %3042 = vmatprep.subr.bf16.mxu0 0
  %3043 = vmatpush1.bf16.msra.mxu0 %v1901
  %3044 = vmatprep.subr.bf16.mxu0 0
  %3045 = vmatpush1.bf16.msra.mxu0 %v1908
  %3046 = vmatprep.subr.bf16.mxu0 0
  %3047 = vmatpush1.bf16.msra.mxu0 %v1915
  %3048 = vmatprep.subr.bf16.mxu0 0
  %3049 = vmatpush1.bf16.msra.mxu0 %v1922
  %3050 = vmatprep.subr.bf16.mxu0 0
  %3051 = vmatpush1.bf16.msra.mxu0 %v1929
  %3052 = vmatprep.subr.bf16.mxu0 0
  %3053 = vmatpush1.bf16.msra.mxu0 %v1936
  %3054 = vmatprep.subr.bf16.mxu0 0
  %3055 = vmatpush1.bf16.msra.mxu0 %v1943
  %3056 = vmatprep.subr.bf16.mxu0 0
  %3057 = vmatpush1.bf16.msra.mxu0 %v1950
  %3058 = vmatprep.subr.bf16.mxu0 0
  %3059 = vmatpush1.bf16.msra.mxu0 %v1957
  %3060 = vmatprep.mubr.bf16.mxu0 %v333
  %3061 = vmatmul.mubr.bf16.gmra.mrb[0].mxu0 %v332
  %v3062 = vpop.f32.mrb[0].mxu0
  %v3063 = vadd.f32 %v760, %v3062
  %v3064 = vpop.f32.mrb[0].mxu0
  %v3065 = vpop.f32.mrb[0].mxu0
  %v3066 = vpop.f32.mrb[0].mxu0
  %3067 = vdwg.mxu0
  %3068 = vmatprep.subr.bf16.mxu0 0
  %3069 = vmatpush1.bf16.msra.mxu0 %v1964
  %3070 = vmatprep.subr.bf16.mxu0 0
  %3071 = vmatpush1.bf16.msra.mxu0 %v1971
  %3072 = vmatprep.subr.bf16.mxu0 0
  %3073 = vmatpush1.bf16.msra.mxu0 %v1978
  %3074 = vmatprep.subr.bf16.mxu0 0
  %3075 = vmatpush1.bf16.msra.mxu0 %v1985
  %3076 = vmatprep.subr.bf16.mxu0 0
  %3077 = vmatpush1.bf16.msra.mxu0 %v1992
  %3078 = vmatprep.subr.bf16.mxu0 0
  %3079 = vmatpush1.bf16.msra.mxu0 %v1999
  %3080 = vmatprep.subr.bf16.mxu0 0
  %3081 = vmatpush1.bf16.msra.mxu0 %v2006
  %3082 = vmatprep.subr.bf16.mxu0 0
  %3083 = vmatpush1.bf16.msra.mxu0 %v2013
  %3084 = vmatprep.subr.bf16.mxu0 0
  %3085 = vmatpush1.bf16.msra.mxu0 %v2020
  %3086 = vmatprep.subr.bf16.mxu0 0
  %3087 = vmatpush1.bf16.msra.mxu0 %v2027
  %3088 = vmatprep.subr.bf16.mxu0 0
  %3089 = vmatpush1.bf16.msra.mxu0 %v2034
  %3090 = vmatprep.subr.bf16.mxu0 0
  %3091 = vmatpush1.bf16.msra.mxu0 %v2041
  %3092 = vmatprep.subr.bf16.mxu0 0
  %3093 = vmatpush1.bf16.msra.mxu0 %v2048
  %3094 = vmatprep.subr.bf16.mxu0 0
  %3095 = vmatpush1.bf16.msra.mxu0 %v2055
  %3096 = vmatprep.subr.bf16.mxu0 0
  %3097 = vmatpush1.bf16.msra.mxu0 %v2062
  %3098 = vmatprep.subr.bf16.mxu0 0
  %3099 = vmatpush1.bf16.msra.mxu0 %v2069
  %3100 = vmatprep.mubr.bf16.mxu0 %v335
  %3101 = vmatmul.mubr.bf16.gmra.mrb[0].mxu0 %v334
  %v3102 = vpop.f32.mrb[0].mxu0
  %v3103 = vadd.f32 %v3063, %v3102
  %v3104 = vpop.f32.mrb[0].mxu0
  %v3105 = vpop.f32.mrb[0].mxu0
  %v3106 = vpop.f32.mrb[0].mxu0
  %3107 = vdwg.mxu0
  %3108 = vmatprep.subr.bf16.mxu0 0
  %3109 = vmatpush1.bf16.msra.mxu0 %v2076
  %3110 = vmatprep.subr.bf16.mxu0 0
  %3111 = vmatpush1.bf16.msra.mxu0 %v2083
  %3112 = vmatprep.subr.bf16.mxu0 0
  %3113 = vmatpush1.bf16.msra.mxu0 %v2090
  %3114 = vmatprep.subr.bf16.mxu0 0
  %3115 = vmatpush1.bf16.msra.mxu0 %v2097
  %3116 = vmatprep.subr.bf16.mxu0 0
  %3117 = vmatpush1.bf16.msra.mxu0 %v2104
  %3118 = vmatprep.subr.bf16.mxu0 0
  %3119 = vmatpush1.bf16.msra.mxu0 %v2111
  %3120 = vmatprep.subr.bf16.mxu0 0
  %3121 = vmatpush1.bf16.msra.mxu0 %v2118
  %3122 = vmatprep.subr.bf16.mxu0 0
  %3123 = vmatpush1.bf16.msra.mxu0 %v2125
  %3124 = vmatprep.subr.bf16.mxu0 0
  %3125 = vmatpush1.bf16.msra.mxu0 %v2132
  %3126 = vmatprep.subr.bf16.mxu0 0
  %3127 = vmatpush1.bf16.msra.mxu0 %v2139
  %3128 = vmatprep.subr.bf16.mxu0 0
  %3129 = vmatpush1.bf16.msra.mxu0 %v2146
  %3130 = vmatprep.subr.bf16.mxu0 0
  %3131 = vmatpush1.bf16.msra.mxu0 %v2153
  %3132 = vmatprep.subr.bf16.mxu0 0
  %3133 = vmatpush1.bf16.msra.mxu0 %v2160
  %3134 = vmatprep.subr.bf16.mxu0 0
  %3135 = vmatpush1.bf16.msra.mxu0 %v2167
  %3136 = vmatprep.subr.bf16.mxu0 0
  %3137 = vmatpush1.bf16.msra.mxu0 %v2174
  %3138 = vmatprep.subr.bf16.mxu0 0
  %3139 = vmatpush1.bf16.msra.mxu0 %v2181
  %3140 = vmatprep.mubr.bf16.mxu0 %v337
  %3141 = vmatmul.mubr.bf16.gmra.mrb[0].mxu0 %v336
  %v3142 = vpop.f32.mrb[0].mxu0
  %v3143 = vadd.f32 %v3103, %v3142
  %v3144 = vpop.f32.mrb[0].mxu0
  %v3145 = vpop.f32.mrb[0].mxu0
  %v3146 = vpop.f32.mrb[0].mxu0
  %3147 = vdwg.mxu0
  %3148 = vmatprep.subr.bf16.mxu0 0
  %3149 = vmatpush1.bf16.msra.mxu0 %v2188
  %3150 = vmatprep.subr.bf16.mxu0 0
  %3151 = vmatpush1.bf16.msra.mxu0 0
  %3152 = vmatprep.subr.bf16.mxu0 0
  %3153 = vmatpush1.bf16.msra.mxu0 0
  %3154 = vmatprep.subr.bf16.mxu0 0
  %3155 = vmatpush1.bf16.msra.mxu0 0
  %3156 = vmatprep.subr.bf16.mxu0 0
  %3157 = vmatpush1.bf16.msra.mxu0 0
  %3158 = vmatprep.subr.bf16.mxu0 0
  %3159 = vmatpush1.bf16.msra.mxu0 0
  %3160 = vmatprep.subr.bf16.mxu0 0
  %3161 = vmatpush1.bf16.msra.mxu0 0
  %3162 = vmatprep.subr.bf16.mxu0 0
  %3163 = vmatpush1.bf16.msra.mxu0 0
  %3164 = vmatprep.subr.bf16.mxu0 0
  %3165 = vmatpush1.bf16.msra.mxu0 0
  %3166 = vmatprep.subr.bf16.mxu0 0
  %3167 = vmatpush1.bf16.msra.mxu0 0
  %3168 = vmatprep.subr.bf16.mxu0 0
  %3169 = vmatpush1.bf16.msra.mxu0 0
  %3170 = vmatprep.subr.bf16.mxu0 0
  %3171 = vmatpush1.bf16.msra.mxu0 0
  %3172 = vmatprep.subr.bf16.mxu0 0
  %3173 = vmatpush1.bf16.msra.mxu0 0
  %3174 = vmatprep.subr.bf16.mxu0 0
  %3175 = vmatpush1.bf16.msra.mxu0 0
  %3176 = vmatprep.subr.bf16.mxu0 0
  %3177 = vmatpush1.bf16.msra.mxu0 0
  %3178 = vmatprep.subr.bf16.mxu0 0
  %3179 = vmatpush1.bf16.msra.mxu0 0
  %3180 = vmatprep.mubr.bf16.mxu0 0
  %3181 = vmatmul.mubr.bf16.gmra.mrb[0].mxu0 %v2534
  %v3182 = vpop.f32.mrb[0].mxu0
  %v3183 = vadd.f32 %v3143, %v3182
  %v3184 = vpop.f32.mrb[0].mxu0
  %v3185 = vpop.f32.mrb[0].mxu0
  %v3186 = vpop.f32.mrb[0].mxu0
  %3187 = vdwg.mxu0
  %v3188 = vtanh.pop %v2694
  %v3189 = vtanh.pop %v2696
  %v3190 = vtanh.pop %v2858
  %v3191 = vtanh.pop %v2860
  %v3192 = vtanh.pop %v3022
  %v3193 = vtanh.pop %v3024
  %v3194 = vtanh.pop %v3183
  %v3202 = vcombine.low %v3188, %v3189
  %v3203 = vcombine.low %v3190, %v3191
  %v3205 = vunpack.c.l.s4 1983009808
  %v3206 = vunpack.c.0.s8 %v3205
  %v3207 = vlaneseq
  %v3208 = vshrl.u32 %v3207, 7
  %v3209 = vsub.s32 %v3206, %v3208
  %v3210 = vrot.slane %v3202, %v3209
  %v3212 = vunpack.c.l.s4 1983009808
  %v3213 = vunpack.c.0.s8 %v3212
  %v3214 = vlaneseq
  %v3215 = vshrl.u32 %v3214, 7
  %v3216 = vsub.s32 %v3213, %v3215
  %v3217 = vrot.slane %v3203, %v3216
  %v3218 = vcombine.low %v3210, %v3217
  %v3219 = vcombine.low %v3192, %v3193
  %v3221 = vunpack.c.l.s4 1983009808
  %v3222 = vunpack.c.0.s8 %v3221
  %v3223 = vlaneseq
  %v3224 = vshrl.u32 %v3223, 7
  %v3225 = vsub.s32 %v3222, %v3224
  %v3226 = vrot.slane %v3219, %v3225
  %v3228 = vunpack.c.l.s4 1983009808
  %v3229 = vunpack.c.0.s8 %v3228
  %v3230 = vlaneseq
  %v3231 = vshrl.u32 %v3230, 7
  %v3232 = vsub.s32 %v3229, %v3231
  %v3233 = vrot.slane %v3194, %v3232
  %v3234 = vcombine.low %v3226, %v3233
  %3237 = vst [vmem:[%s5] sm:$0xff] %v3218
  %vm3238 = vcmask 1041408
  %vm3239 = vcmask 1043458
  %vm3240 = vmor %vm3239, %vm3238
  %vm3241 = vcmask 128004
  %vm3242 = vmor %vm3241, %vm3240
  %3243 = vst.msk [vmem:[%s5 + $0x8] sm:$0x3f] %vm3242, %v3234
  // Predicated region
  $region22: #{generator_forward.17} parent=0 // pred_check
    _
  $region23: #{generator_forward.17} parent=0 // pred_check_branch
    %3245 = sbr.rel (0) target = $region25
  $region24: #{generator_forward.17} parent=0 // pred_region
    _
  $region25: #{generator_forward.17} parent=0 // pred_fallthru
    _
  // Predicated region
  $region26: #{generator_forward.17} parent=0 // pred_check
    _
  $region27: #{generator_forward.17} parent=0 // pred_check_branch
    %3247 = sbr.rel (0) target = $region29
  $region28: #{generator_forward.17} parent=0 // pred_region
    _
  $region29: #{generator_forward.17} parent=0 // pred_fallthru
    _

</llo_original>
